<compile_context>
chip_gen: v7x
topology: tpu7x:2x2x1
jax: 0.10.0
libtpu: 0.0.40
codegen_flags: <defaults>
</compile_context>

<pallas_src>
import math
import jax
import jax.numpy as jnp
from jax.experimental import pallas as pl
from jax.experimental.pallas import tpu as pltpu

# ------------------------- model config (small, synthetic) -------------------
TRACKS   = 4          # drums, guitar, bass, strings
N_LAYERS = 2
D_MODEL  = 32
N_HEADS  = 4
D_HEAD   = D_MODEL // N_HEADS
D_FF     = 64
VOCAB    = 100
SEQ      = 8          # config['model']['seq_len'] (max_klen)
MEM_SEQ  = 8
BATCH    = 2
EPS      = 1e-6
DTYPE    = jnp.float32
N_LN     = 3 * N_LAYERS + 1     # ln1/ln2/ln3 per layer + final Decoder.norm


# ------------------------- fused per-track decoder kernel --------------------
def _decoder_kernel(x_ref, mem_ref, smask_ref, tmask_ref,
                    ln_a_ref, ln_b_ref,
                    s_wqkv_ref, s_bqkv_ref, s_wo_ref, s_bo_ref,
                    c_wq_ref, c_bq_ref, c_wkv_ref, c_bkv_ref, c_wo_ref, c_bo_ref,
                    f_w1_ref, f_b1_ref, f_w2_ref, f_b2_ref,
                    o_ref):
    B, S, D = x_ref.shape
    M = mem_ref.shape[1]
    BS, BM = B * S, B * M

    x = x_ref[...].astype(jnp.float32).reshape(BS, D)        # [B*S, D]
    mem = mem_ref[...].astype(jnp.float32).reshape(BM, D)    # [B*M, D]
    self_keep = tmask_ref[...] > 0.0                          # [B, S, S] bool
    src_keep = smask_ref[...] > 0.0                           # [B, S, M] bool

    def layer_norm(h, idx):
        # torch LayerNorm variant: mean / unbiased std; a2*(x-mean)/(std+eps)+b2
        a = ln_a_ref[idx]                                     # [1, D]
        b = ln_b_ref[idx]                                     # [1, D]
        mean = jnp.mean(h, axis=-1, keepdims=True)
        var = jnp.sum((h - mean) ** 2, axis=-1, keepdims=True) / (D - 1)
        inv = pl.reciprocal(jnp.sqrt(var) + EPS, approx=True)
        return a * (h - mean) * inv + b

    def softmax(s):
        m = jnp.max(s, axis=-1, keepdims=True)
        e = jnp.exp(s - m)
        return e * pl.reciprocal(jnp.sum(e, axis=-1, keepdims=True), approx=True)

    scale = 1.0 / math.sqrt(D_HEAD)

    def mha_core(q3, k3, v3, keep):
        # q3: [B, Sq, D]; k3/v3: [B, Sk, D]; keep: [B, Sq, Sk] bool
        heads = []
        for h in range(N_HEADS):                # static unrolled head loop
            lo = h * D_HEAD
            qh = q3[:, :, lo:lo + D_HEAD]
            kh = k3[:, :, lo:lo + D_HEAD]
            vh = v3[:, :, lo:lo + D_HEAD]
            s = jnp.einsum('bqd,bkd->bqk', qh, kh,
                           preferred_element_type=jnp.float32) * scale
            s = jnp.where(keep, s, jnp.float32(-1e9))  # masked_fill(mask==0,-1e9)
            p = softmax(s)
            heads.append(jnp.einsum('bqk,bkd->bqd', p, vh,
                                    preferred_element_type=jnp.float32))
        return jnp.concatenate(heads, axis=-1)             # [B, Sq, D]

    # TODO(synk): the concrete DecoderLayer class is not defined in the reference
    # file; a standard pre-norm self-attn -> src-attn -> FFN layer is used and
    # the relative-position params (r_emb, r_w_bias, r_bias) are unused,
    # matching the config['train']['use_rel_pos'] == False path.
    for l in range(N_LAYERS):
        # --- masked multi-head self-attention (pre-norm residual) ---
        xn = layer_norm(x, 3 * l)
        qkv = (jnp.dot(xn, s_wqkv_ref[l], preferred_element_type=jnp.float32)
               + s_bqkv_ref[l]).reshape(B, S, 3 * D)
        attn = mha_core(qkv[:, :, :D], qkv[:, :, D:2 * D], qkv[:, :, 2 * D:],
                        self_keep)
        attn = (jnp.dot(attn.reshape(BS, D), s_wo_ref[l],
                        preferred_element_type=jnp.float32) + s_bo_ref[l])
        x = x + attn

        # --- cross-attention over encoder memory ---
        xn = layer_norm(x, 3 * l + 1)
        q = (jnp.dot(xn, c_wq_ref[l], preferred_element_type=jnp.float32)
             + c_bq_ref[l]).reshape(B, S, D)
        kv = (jnp.dot(mem, c_wkv_ref[l], preferred_element_type=jnp.float32)
              + c_bkv_ref[l]).reshape(B, M, 2 * D)
        attn = mha_core(q, kv[:, :, :D], kv[:, :, D:], src_keep)
        attn = (jnp.dot(attn.reshape(BS, D), c_wo_ref[l],
                        preferred_element_type=jnp.float32) + c_bo_ref[l])
        x = x + attn

        # --- position-wise feed-forward ---
        xn = layer_norm(x, 3 * l + 2)
        h1 = jnp.maximum(jnp.dot(xn, f_w1_ref[l],
                                 preferred_element_type=jnp.float32)
                         + f_b1_ref[l], 0.0)
        h2 = (jnp.dot(h1, f_w2_ref[l], preferred_element_type=jnp.float32)
              + f_b2_ref[l])
        x = x + h2

    x = layer_norm(x, 3 * N_LAYERS)                      # Decoder.norm
    o_ref[...] = x.reshape(B, S, D).astype(o_ref.dtype)


# ------------------------------- model wrapper --------------------------------
def music_decoder_forward(params, tokens, memory, src_mask, trg_mask):
    T, B, S = tokens.shape
    M = memory.shape[2]
    D = D_MODEL

    # Embeddings: per-track lookup * sqrt(d_model), then sinusoidal PE (eval mode,
    # dropout off).  One small XLA gather/add for all tracks.
    x = jax.vmap(lambda tbl, ids: tbl[ids])(params['emb'], tokens) * math.sqrt(D)
    x = x + params['pe'][None, None, :S, :]

    def track_spec(*dims):
        n = len(dims)
        return pl.BlockSpec((None,) + dims, lambda t, _n=n: (t,) + (0,) * _n)

    in_specs = [
        track_spec(B, S, D),                 # x (embedded + PE)
        track_spec(B, M, D),                 # memory
        track_spec(B, S, M),                 # src_mask
        track_spec(B, S, S),                 # trg_mask
        track_spec(N_LN, 1, D),              # ln_a (3 per layer + final)
        track_spec(N_LN, 1, D),              # ln_b
        track_spec(N_LAYERS, D, 3 * D),      # self-attn W_qkv (fused)
        track_spec(N_LAYERS, 1, 3 * D),      # self-attn b_qkv
        track_spec(N_LAYERS, D, D),          # self-attn W_o
        track_spec(N_LAYERS, 1, D),          # self-attn b_o
        track_spec(N_LAYERS, D, D),          # cross-attn W_q
        track_spec(N_LAYERS, 1, D),          # cross-attn b_q
        track_spec(N_LAYERS, D, 2 * D),      # cross-attn W_kv (fused)
        track_spec(N_LAYERS, 1, 2 * D),      # cross-attn b_kv
        track_spec(N_LAYERS, D, D),          # cross-attn W_o
        track_spec(N_LAYERS, 1, D),          # cross-attn b_o
        track_spec(N_LAYERS, D, D_FF),       # ffn W1
        track_spec(N_LAYERS, 1, D_FF),       # ffn b1
        track_spec(N_LAYERS, D_FF, D),       # ffn W2
        track_spec(N_LAYERS, 1, D),          # ffn b2
    ]

    return pl.pallas_call(
        _decoder_kernel,
        grid=(T,),
        in_specs=in_specs,
        out_specs=track_spec(B, S, D),
        out_shape=jax.ShapeDtypeStruct((T, B, S, D), x.dtype),
        compiler_params=pltpu.CompilerParams(
            dimension_semantics=("parallel",)),   # v7x: 2 tracks per TensorCore
    )(x, memory, src_mask, trg_mask,
      params['ln_a'], params['ln_b'],
      params['s_wqkv'], params['s_bqkv'], params['s_wo'], params['s_bo'],
      params['c_wq'], params['c_bq'], params['c_wkv'], params['c_bkv'],
      params['c_wo'], params['c_bo'],
      params['f_w1'], params['f_b1'], params['f_w2'], params['f_b2'])


# ------------------------------- parameter init -------------------------------
def make_pe(max_len, d_model):
    pos = jnp.arange(max_len, dtype=jnp.float32)[:, None]
    div = jnp.exp(jnp.arange(0, d_model, 2, dtype=jnp.float32)
                  * (-math.log(10000.0) / d_model))
    pe = jnp.zeros((max_len, d_model), DTYPE)
    pe = pe.at[:, 0::2].set(jnp.sin(pos * div))
    pe = pe.at[:, 1::2].set(jnp.cos(pos * div))
    return pe


def init_params(key):
    ks = jax.random.split(key, 12)

    def nrm(k, shape):
        return 0.02 * jax.random.normal(k, shape, DTYPE)

    L, D, F = N_LAYERS, D_MODEL, D_FF
    return {
        'emb':    nrm(ks[0], (TRACKS, VOCAB, D)),
        'pe':     make_pe(SEQ, D),
        'ln_a':   jnp.ones((TRACKS, N_LN, 1, D), DTYPE),
        'ln_b':   jnp.zeros((TRACKS, N_LN, 1, D), DTYPE),
        's_wqkv': nrm(ks[1], (TRACKS, L, D, 3 * D)),
        's_bqkv': jnp.zeros((TRACKS, L, 1, 3 * D), DTYPE),
        's_wo':   nrm(ks[2], (TRACKS, L, D, D)),
        's_bo':   jnp.zeros((TRACKS, L, 1, D), DTYPE),
        'c_wq':   nrm(ks[3], (TRACKS, L, D, D)),
        'c_bq':   jnp.zeros((TRACKS, L, 1, D), DTYPE),
        'c_wkv':  nrm(ks[4], (TRACKS, L, D, 2 * D)),
        'c_bkv':  jnp.zeros((TRACKS, L, 1, 2 * D), DTYPE),
        'c_wo':   nrm(ks[5], (TRACKS, L, D, D)),
        'c_bo':   jnp.zeros((TRACKS, L, 1, D), DTYPE),
        'f_w1':   nrm(ks[6], (TRACKS, L, D, F)),
        'f_b1':   jnp.zeros((TRACKS, L, 1, F), DTYPE),
        'f_w2':   nrm(ks[7], (TRACKS, L, F, D)),
        'f_b2':   jnp.zeros((TRACKS, L, 1, D), DTYPE),
        # Decoder.__init__ relative-position parameters (use_rel_pos=False path,
        # so they are intentionally unused in the forward).
        'r_emb':    nrm(ks[8], (TRACKS, L, N_HEADS, SEQ, D_HEAD)),
        'r_w_bias': nrm(ks[9], (TRACKS, L, N_HEADS, D_HEAD)),
        'r_bias':   nrm(ks[10], (TRACKS, L, N_HEADS, SEQ)),
    }


# ----------------------------------- main --------------------------------------
if __name__ == "__main__":
    root = jax.random.PRNGKey(0)
    k_params, k_tok, k_mem = jax.random.split(root, 3)

    params = init_params(k_params)

    tokens = jax.random.randint(k_tok, (TRACKS, BATCH, SEQ), 0, VOCAB,
                                dtype=jnp.int32)
    memory = jax.random.normal(k_mem, (TRACKS, BATCH, MEM_SEQ, D_MODEL), DTYPE)
    tril = jnp.tril(jnp.ones((SEQ, SEQ), DTYPE))
    trg_mask = jnp.broadcast_to(tril, (TRACKS, BATCH, SEQ, SEQ))       # causal
    src_mask = jnp.ones((TRACKS, BATCH, SEQ, MEM_SEQ), DTYPE)          # full attn

    out = jax.jit(music_decoder_forward)(params, tokens, memory, src_mask,
                                         trg_mask)
    jax.block_until_ready(out)
    assert out.shape == (TRACKS, BATCH, SEQ, D_MODEL)
    assert bool(jnp.all(jnp.isfinite(out)))
    print("KERNEL_OK")
</pallas_src>

<mosaic_0001>
module attributes {stable_mosaic.version = 11 : i64} {
  func.func @_decoder_kernel(%arg0: i32, %arg1: memref<1x2x8x32xf32, #tpu.memory_space<vmem>>, %arg2: memref<1x2x8x32xf32, #tpu.memory_space<vmem>>, %arg3: memref<1x2x8x8xf32, #tpu.memory_space<vmem>>, %arg4: memref<1x2x8x8xf32, #tpu.memory_space<vmem>>, %arg5: memref<1x7x1x32xf32, #tpu.memory_space<vmem>>, %arg6: memref<1x7x1x32xf32, #tpu.memory_space<vmem>>, %arg7: memref<1x2x32x96xf32, #tpu.memory_space<vmem>>, %arg8: memref<1x2x1x96xf32, #tpu.memory_space<vmem>>, %arg9: memref<1x2x32x32xf32, #tpu.memory_space<vmem>>, %arg10: memref<1x2x1x32xf32, #tpu.memory_space<vmem>>, %arg11: memref<1x2x32x32xf32, #tpu.memory_space<vmem>>, %arg12: memref<1x2x1x32xf32, #tpu.memory_space<vmem>>, %arg13: memref<1x2x32x64xf32, #tpu.memory_space<vmem>>, %arg14: memref<1x2x1x64xf32, #tpu.memory_space<vmem>>, %arg15: memref<1x2x32x32xf32, #tpu.memory_space<vmem>>, %arg16: memref<1x2x1x32xf32, #tpu.memory_space<vmem>>, %arg17: memref<1x2x32x64xf32, #tpu.memory_space<vmem>>, %arg18: memref<1x2x1x64xf32, #tpu.memory_space<vmem>>, %arg19: memref<1x2x64x32xf32, #tpu.memory_space<vmem>>, %arg20: memref<1x2x1x32xf32, #tpu.memory_space<vmem>>, %arg21: memref<1x2x8x32xf32, #tpu.memory_space<vmem>>) attributes {dimension_semantics = [#tpu.dimension_semantics<parallel>], iteration_bounds = array<i64: 4>, scalar_prefetch = 0 : i64, scratch_operands = 0 : i64, tpu.core_type = #tpu.core_type<tc>, window_params = [{transform_indices = @transform_0, window_bounds = array<i64: 1, 2, 8, 32>}, {transform_indices = @transform_1, window_bounds = array<i64: 1, 2, 8, 32>}, {transform_indices = @transform_2, window_bounds = array<i64: 1, 2, 8, 8>}, {transform_indices = @transform_3, window_bounds = array<i64: 1, 2, 8, 8>}, {transform_indices = @transform_4, window_bounds = array<i64: 1, 7, 1, 32>}, {transform_indices = @transform_5, window_bounds = array<i64: 1, 7, 1, 32>}, {transform_indices = @transform_6, window_bounds = array<i64: 1, 2, 32, 96>}, {transform_indices = @transform_7, window_bounds = array<i64: 1, 2, 1, 96>}, {transform_indices = @transform_8, window_bounds = array<i64: 1, 2, 32, 32>}, {transform_indices = @transform_9, window_bounds = array<i64: 1, 2, 1, 32>}, {transform_indices = @transform_10, window_bounds = array<i64: 1, 2, 32, 32>}, {transform_indices = @transform_11, window_bounds = array<i64: 1, 2, 1, 32>}, {transform_indices = @transform_12, window_bounds = array<i64: 1, 2, 32, 64>}, {transform_indices = @transform_13, window_bounds = array<i64: 1, 2, 1, 64>}, {transform_indices = @transform_14, window_bounds = array<i64: 1, 2, 32, 32>}, {transform_indices = @transform_15, window_bounds = array<i64: 1, 2, 1, 32>}, {transform_indices = @transform_16, window_bounds = array<i64: 1, 2, 32, 64>}, {transform_indices = @transform_17, window_bounds = array<i64: 1, 2, 1, 64>}, {transform_indices = @transform_18, window_bounds = array<i64: 1, 2, 64, 32>}, {transform_indices = @transform_19, window_bounds = array<i64: 1, 2, 1, 32>}, {transform_indices = @transform_20, window_bounds = array<i64: 1, 2, 8, 32>}]} {
    %c0 = arith.constant 0 : index
    %c0_0 = arith.constant 0 : index
    %c0_1 = arith.constant 0 : index
    %c0_2 = arith.constant 0 : index
    %0 = vector.load %arg1[%c0, %c0_0, %c0_1, %c0_2] : memref<1x2x8x32xf32, #tpu.memory_space<vmem>>, vector<1x2x8x32xf32>
    %1 = vector.shape_cast %0 : vector<1x2x8x32xf32> to vector<2x8x32xf32>
    %2 = vector.shape_cast %1 : vector<2x8x32xf32> to vector<16x32xf32>
    %c0_3 = arith.constant 0 : index
    %c0_4 = arith.constant 0 : index
    %c0_5 = arith.constant 0 : index
    %c0_6 = arith.constant 0 : index
    %3 = vector.load %arg2[%c0_3, %c0_4, %c0_5, %c0_6] : memref<1x2x8x32xf32, #tpu.memory_space<vmem>>, vector<1x2x8x32xf32>
    %4 = vector.shape_cast %3 : vector<1x2x8x32xf32> to vector<2x8x32xf32>
    %5 = vector.shape_cast %4 : vector<2x8x32xf32> to vector<16x32xf32>
    %c0_7 = arith.constant 0 : index
    %c0_8 = arith.constant 0 : index
    %c0_9 = arith.constant 0 : index
    %c0_10 = arith.constant 0 : index
    %6 = vector.load %arg4[%c0_7, %c0_8, %c0_9, %c0_10] : memref<1x2x8x8xf32, #tpu.memory_space<vmem>>, vector<1x2x8x8xf32>
    %7 = vector.shape_cast %6 : vector<1x2x8x8xf32> to vector<2x8x8xf32>
    %cst = arith.constant 0.000000e+00 : f32
    %8 = vector.broadcast %cst : f32 to vector<2x8x8xf32>
    %9 = arith.cmpf ogt, %7, %8 : vector<2x8x8xf32>
    %c0_11 = arith.constant 0 : index
    %c0_12 = arith.constant 0 : index
    %c0_13 = arith.constant 0 : index
    %c0_14 = arith.constant 0 : index
    %10 = vector.load %arg3[%c0_11, %c0_12, %c0_13, %c0_14] : memref<1x2x8x8xf32, #tpu.memory_space<vmem>>, vector<1x2x8x8xf32>
    %11 = vector.shape_cast %10 : vector<1x2x8x8xf32> to vector<2x8x8xf32>
    %cst_15 = arith.constant 0.000000e+00 : f32
    %12 = vector.broadcast %cst_15 : f32 to vector<2x8x8xf32>
    %13 = arith.cmpf ogt, %11, %12 : vector<2x8x8xf32>
    %c0_16 = arith.constant 0 : index
    %c0_17 = arith.constant 0 : index
    %c0_18 = arith.constant 0 : index
    %c0_19 = arith.constant 0 : index
    %14 = vector.load %arg5[%c0_16, %c0_17, %c0_18, %c0_19] : memref<1x7x1x32xf32, #tpu.memory_space<vmem>>, vector<1x1x1x32xf32>
    %15 = vector.shape_cast %14 : vector<1x1x1x32xf32> to vector<1x32xf32>
    %c0_20 = arith.constant 0 : index
    %c0_21 = arith.constant 0 : index
    %c0_22 = arith.constant 0 : index
    %c0_23 = arith.constant 0 : index
    %16 = vector.load %arg6[%c0_20, %c0_21, %c0_22, %c0_23] : memref<1x7x1x32xf32, #tpu.memory_space<vmem>>, vector<1x1x1x32xf32>
    %17 = vector.shape_cast %16 : vector<1x1x1x32xf32> to vector<1x32xf32>
    %cst_24 = arith.constant dense<0.000000e+00> : vector<16xf32>
    %18 = vector.multi_reduction <add>, %2, %cst_24 [1] : vector<16x32xf32> to vector<16xf32>
    %19 = vector.shape_cast %18 : vector<16xf32> to vector<16x1xf32>
    %cst_25 = arith.constant 3.200000e+01 : f32
    %20 = vector.broadcast %cst_25 : f32 to vector<16x1xf32>
    %21 = arith.divf %19, %20 : vector<16x1xf32>
    %22 = vector.broadcast %21 : vector<16x1xf32> to vector<16x32xf32>
    %23 = arith.subf %2, %22 : vector<16x32xf32>
    %24 = arith.mulf %23, %23 : vector<16x32xf32>
    %cst_26 = arith.constant dense<0.000000e+00> : vector<16xf32>
    %25 = vector.multi_reduction <add>, %24, %cst_26 [1] : vector<16x32xf32> to vector<16xf32>
    %26 = vector.shape_cast %25 : vector<16xf32> to vector<16x1xf32>
    %cst_27 = arith.constant 3.100000e+01 : f32
    %27 = vector.broadcast %cst_27 : f32 to vector<16x1xf32>
    %28 = arith.divf %26, %27 : vector<16x1xf32>
    %29 = math.sqrt %28 : vector<16x1xf32>
    %cst_28 = arith.constant 9.99999997E-7 : f32
    %30 = vector.broadcast %cst_28 : f32 to vector<16x1xf32>
    %31 = arith.addf %29, %30 : vector<16x1xf32>
    %32 = tpu.reciprocal %31 {approx = true} : vector<16x1xf32> -> vector<16x1xf32>
    %33 = vector.broadcast %21 : vector<16x1xf32> to vector<16x32xf32>
    %34 = arith.subf %2, %33 : vector<16x32xf32>
    %35 = vector.broadcast %15 : vector<1x32xf32> to vector<16x32xf32>
    %36 = arith.mulf %35, %34 : vector<16x32xf32>
    %37 = vector.broadcast %32 : vector<16x1xf32> to vector<16x32xf32>
    %38 = arith.mulf %36, %37 : vector<16x32xf32>
    %39 = vector.broadcast %17 : vector<1x32xf32> to vector<16x32xf32>
    %40 = arith.addf %38, %39 : vector<16x32xf32>
    %c0_29 = arith.constant 0 : index
    %c0_30 = arith.constant 0 : index
    %c0_31 = arith.constant 0 : index
    %c0_32 = arith.constant 0 : index
    %41 = vector.load %arg7[%c0_29, %c0_30, %c0_31, %c0_32] : memref<1x2x32x96xf32, #tpu.memory_space<vmem>>, vector<1x1x32x96xf32>
    %42 = vector.shape_cast %41 : vector<1x1x32x96xf32> to vector<32x96xf32>
    %cst_33 = arith.constant dense<0.000000e+00> : vector<16x96xf32>
    %43 = tpu.matmul %40, %42, %cst_33 {dimension_numbers = #tpu.dot_dimension_numbers<[1], [0], [0], [1], [0, 0, 1, 1], [], []>} : vector<16x32xf32>, vector<32x96xf32>, vector<16x96xf32> -> vector<16x96xf32>
    %c0_34 = arith.constant 0 : index
    %c0_35 = arith.constant 0 : index
    %c0_36 = arith.constant 0 : index
    %c0_37 = arith.constant 0 : index
    %44 = vector.load %arg8[%c0_34, %c0_35, %c0_36, %c0_37] : memref<1x2x1x96xf32, #tpu.memory_space<vmem>>, vector<1x1x1x96xf32>
    %45 = vector.shape_cast %44 : vector<1x1x1x96xf32> to vector<1x96xf32>
    %46 = vector.broadcast %45 : vector<1x96xf32> to vector<16x96xf32>
    %47 = arith.addf %43, %46 : vector<16x96xf32>
    %48 = vector.shape_cast %47 : vector<16x96xf32> to vector<2x8x96xf32>
    %49 = vector.extract_strided_slice %48 {offsets = [0, 0, 0], sizes = [2, 8, 32], strides = [1, 1, 1]} : vector<2x8x96xf32> to vector<2x8x32xf32>
    %50 = vector.extract_strided_slice %48 {offsets = [0, 0, 32], sizes = [2, 8, 32], strides = [1, 1, 1]} : vector<2x8x96xf32> to vector<2x8x32xf32>
    %51 = vector.extract_strided_slice %48 {offsets = [0, 0, 64], sizes = [2, 8, 32], strides = [1, 1, 1]} : vector<2x8x96xf32> to vector<2x8x32xf32>
    %52 = vector.extract_strided_slice %49 {offsets = [0, 0, 0], sizes = [2, 8, 8], strides = [1, 1, 1]} : vector<2x8x32xf32> to vector<2x8x8xf32>
    %53 = vector.extract_strided_slice %50 {offsets = [0, 0, 0], sizes = [2, 8, 8], strides = [1, 1, 1]} : vector<2x8x32xf32> to vector<2x8x8xf32>
    %54 = vector.extract_strided_slice %51 {offsets = [0, 0, 0], sizes = [2, 8, 8], strides = [1, 1, 1]} : vector<2x8x32xf32> to vector<2x8x8xf32>
    "tpu.trace_start"() <{level = 10 : i32, message = "bqd,bkd->bqk"}> : () -> ()
    %cst_38 = arith.constant dense<0.000000e+00> : vector<2x8x8xf32>
    %55 = tpu.matmul %52, %53, %cst_38 {dimension_numbers = #tpu.dot_dimension_numbers<[2], [2], [1], [1], [0, 0, 0, 1, 1, 1], [0], [0]>} : vector<2x8x8xf32>, vector<2x8x8xf32>, vector<2x8x8xf32> -> vector<2x8x8xf32>
    "tpu.trace_stop"() : () -> ()
    %cst_39 = arith.constant 0.353553385 : f32
    %56 = vector.broadcast %cst_39 : f32 to vector<2x8x8xf32>
    %57 = arith.mulf %55, %56 : vector<2x8x8xf32>
    %cst_40 = arith.constant -1.000000e+09 : f32
    %58 = vector.broadcast %cst_40 : f32 to vector<2x8x8xf32>
    %59 = arith.select %9, %57, %58 : vector<2x8x8xi1>, vector<2x8x8xf32>
    %cst_41 = arith.constant dense<0xFF800000> : vector<2x8xf32>
    %60 = vector.multi_reduction <maximumf>, %59, %cst_41 [2] : vector<2x8x8xf32> to vector<2x8xf32>
    %61 = vector.shape_cast %60 : vector<2x8xf32> to vector<2x8x1xf32>
    %62 = vector.broadcast %61 : vector<2x8x1xf32> to vector<2x8x8xf32>
    %63 = arith.subf %59, %62 : vector<2x8x8xf32>
    %64 = math.exp %63 : vector<2x8x8xf32>
    %cst_42 = arith.constant dense<0.000000e+00> : vector<2x8xf32>
    %65 = vector.multi_reduction <add>, %64, %cst_42 [2] : vector<2x8x8xf32> to vector<2x8xf32>
    %66 = vector.shape_cast %65 : vector<2x8xf32> to vector<2x8x1xf32>
    %67 = tpu.reciprocal %66 {approx = true} : vector<2x8x1xf32> -> vector<2x8x1xf32>
    %68 = vector.broadcast %67 : vector<2x8x1xf32> to vector<2x8x8xf32>
    %69 = arith.mulf %64, %68 : vector<2x8x8xf32>
    "tpu.trace_start"() <{level = 10 : i32, message = "bqk,bkd->bqd"}> : () -> ()
    %cst_43 = arith.constant dense<0.000000e+00> : vector<2x8x8xf32>
    %70 = tpu.matmul %69, %54, %cst_43 {dimension_numbers = #tpu.dot_dimension_numbers<[2], [1], [1], [2], [0, 0, 0, 1, 1, 2], [0], [0]>} : vector<2x8x8xf32>, vector<2x8x8xf32>, vector<2x8x8xf32> -> vector<2x8x8xf32>
    "tpu.trace_stop"() : () -> ()
    %71 = vector.extract_strided_slice %49 {offsets = [0, 0, 8], sizes = [2, 8, 8], strides = [1, 1, 1]} : vector<2x8x32xf32> to vector<2x8x8xf32>
    %72 = vector.extract_strided_slice %50 {offsets = [0, 0, 8], sizes = [2, 8, 8], strides = [1, 1, 1]} : vector<2x8x32xf32> to vector<2x8x8xf32>
    %73 = vector.extract_strided_slice %51 {offsets = [0, 0, 8], sizes = [2, 8, 8], strides = [1, 1, 1]} : vector<2x8x32xf32> to vector<2x8x8xf32>
    "tpu.trace_start"() <{level = 10 : i32, message = "bqd,bkd->bqk"}> : () -> ()
    %cst_44 = arith.constant dense<0.000000e+00> : vector<2x8x8xf32>
    %74 = tpu.matmul %71, %72, %cst_44 {dimension_numbers = #tpu.dot_dimension_numbers<[2], [2], [1], [1], [0, 0, 0, 1, 1, 1], [0], [0]>} : vector<2x8x8xf32>, vector<2x8x8xf32>, vector<2x8x8xf32> -> vector<2x8x8xf32>
    "tpu.trace_stop"() : () -> ()
    %cst_45 = arith.constant 0.353553385 : f32
    %75 = vector.broadcast %cst_45 : f32 to vector<2x8x8xf32>
    %76 = arith.mulf %74, %75 : vector<2x8x8xf32>
    %cst_46 = arith.constant -1.000000e+09 : f32
    %77 = vector.broadcast %cst_46 : f32 to vector<2x8x8xf32>
    %78 = arith.select %9, %76, %77 : vector<2x8x8xi1>, vector<2x8x8xf32>
    %cst_47 = arith.constant dense<0xFF800000> : vector<2x8xf32>
    %79 = vector.multi_reduction <maximumf>, %78, %cst_47 [2] : vector<2x8x8xf32> to vector<2x8xf32>
    %80 = vector.shape_cast %79 : vector<2x8xf32> to vector<2x8x1xf32>
    %81 = vector.broadcast %80 : vector<2x8x1xf32> to vector<2x8x8xf32>
    %82 = arith.subf %78, %81 : vector<2x8x8xf32>
    %83 = math.exp %82 : vector<2x8x8xf32>
    %cst_48 = arith.constant dense<0.000000e+00> : vector<2x8xf32>
    %84 = vector.multi_reduction <add>, %83, %cst_48 [2] : vector<2x8x8xf32> to vector<2x8xf32>
    %85 = vector.shape_cast %84 : vector<2x8xf32> to vector<2x8x1xf32>
    %86 = tpu.reciprocal %85 {approx = true} : vector<2x8x1xf32> -> vector<2x8x1xf32>
    %87 = vector.broadcast %86 : vector<2x8x1xf32> to vector<2x8x8xf32>
    %88 = arith.mulf %83, %87 : vector<2x8x8xf32>
    "tpu.trace_start"() <{level = 10 : i32, message = "bqk,bkd->bqd"}> : () -> ()
    %cst_49 = arith.constant dense<0.000000e+00> : vector<2x8x8xf32>
    %89 = tpu.matmul %88, %73, %cst_49 {dimension_numbers = #tpu.dot_dimension_numbers<[2], [1], [1], [2], [0, 0, 0, 1, 1, 2], [0], [0]>} : vector<2x8x8xf32>, vector<2x8x8xf32>, vector<2x8x8xf32> -> vector<2x8x8xf32>
    "tpu.trace_stop"() : () -> ()
    %90 = vector.extract_strided_slice %49 {offsets = [0, 0, 16], sizes = [2, 8, 8], strides = [1, 1, 1]} : vector<2x8x32xf32> to vector<2x8x8xf32>
    %91 = vector.extract_strided_slice %50 {offsets = [0, 0, 16], sizes = [2, 8, 8], strides = [1, 1, 1]} : vector<2x8x32xf32> to vector<2x8x8xf32>
    %92 = vector.extract_strided_slice %51 {offsets = [0, 0, 16], sizes = [2, 8, 8], strides = [1, 1, 1]} : vector<2x8x32xf32> to vector<2x8x8xf32>
    "tpu.trace_start"() <{level = 10 : i32, message = "bqd,bkd->bqk"}> : () -> ()
    %cst_50 = arith.constant dense<0.000000e+00> : vector<2x8x8xf32>
    %93 = tpu.matmul %90, %91, %cst_50 {dimension_numbers = #tpu.dot_dimension_numbers<[2], [2], [1], [1], [0, 0, 0, 1, 1, 1], [0], [0]>} : vector<2x8x8xf32>, vector<2x8x8xf32>, vector<2x8x8xf32> -> vector<2x8x8xf32>
    "tpu.trace_stop"() : () -> ()
    %cst_51 = arith.constant 0.353553385 : f32
    %94 = vector.broadcast %cst_51 : f32 to vector<2x8x8xf32>
    %95 = arith.mulf %93, %94 : vector<2x8x8xf32>
    %cst_52 = arith.constant -1.000000e+09 : f32
    %96 = vector.broadcast %cst_52 : f32 to vector<2x8x8xf32>
    %97 = arith.select %9, %95, %96 : vector<2x8x8xi1>, vector<2x8x8xf32>
    %cst_53 = arith.constant dense<0xFF800000> : vector<2x8xf32>
    %98 = vector.multi_reduction <maximumf>, %97, %cst_53 [2] : vector<2x8x8xf32> to vector<2x8xf32>
    %99 = vector.shape_cast %98 : vector<2x8xf32> to vector<2x8x1xf32>
    %100 = vector.broadcast %99 : vector<2x8x1xf32> to vector<2x8x8xf32>
    %101 = arith.subf %97, %100 : vector<2x8x8xf32>
    %102 = math.exp %101 : vector<2x8x8xf32>
    %cst_54 = arith.constant dense<0.000000e+00> : vector<2x8xf32>
    %103 = vector.multi_reduction <add>, %102, %cst_54 [2] : vector<2x8x8xf32> to vector<2x8xf32>
    %104 = vector.shape_cast %103 : vector<2x8xf32> to vector<2x8x1xf32>
    %105 = tpu.reciprocal %104 {approx = true} : vector<2x8x1xf32> -> vector<2x8x1xf32>
    %106 = vector.broadcast %105 : vector<2x8x1xf32> to vector<2x8x8xf32>
    %107 = arith.mulf %102, %106 : vector<2x8x8xf32>
    "tpu.trace_start"() <{level = 10 : i32, message = "bqk,bkd->bqd"}> : () -> ()
    %cst_55 = arith.constant dense<0.000000e+00> : vector<2x8x8xf32>
    %108 = tpu.matmul %107, %92, %cst_55 {dimension_numbers = #tpu.dot_dimension_numbers<[2], [1], [1], [2], [0, 0, 0, 1, 1, 2], [0], [0]>} : vector<2x8x8xf32>, vector<2x8x8xf32>, vector<2x8x8xf32> -> vector<2x8x8xf32>
    "tpu.trace_stop"() : () -> ()
    %109 = vector.extract_strided_slice %49 {offsets = [0, 0, 24], sizes = [2, 8, 8], strides = [1, 1, 1]} : vector<2x8x32xf32> to vector<2x8x8xf32>
    %110 = vector.extract_strided_slice %50 {offsets = [0, 0, 24], sizes = [2, 8, 8], strides = [1, 1, 1]} : vector<2x8x32xf32> to vector<2x8x8xf32>
    %111 = vector.extract_strided_slice %51 {offsets = [0, 0, 24], sizes = [2, 8, 8], strides = [1, 1, 1]} : vector<2x8x32xf32> to vector<2x8x8xf32>
    "tpu.trace_start"() <{level = 10 : i32, message = "bqd,bkd->bqk"}> : () -> ()
    %cst_56 = arith.constant dense<0.000000e+00> : vector<2x8x8xf32>
    %112 = tpu.matmul %109, %110, %cst_56 {dimension_numbers = #tpu.dot_dimension_numbers<[2], [2], [1], [1], [0, 0, 0, 1, 1, 1], [0], [0]>} : vector<2x8x8xf32>, vector<2x8x8xf32>, vector<2x8x8xf32> -> vector<2x8x8xf32>
    "tpu.trace_stop"() : () -> ()
    %cst_57 = arith.constant 0.353553385 : f32
    %113 = vector.broadcast %cst_57 : f32 to vector<2x8x8xf32>
    %114 = arith.mulf %112, %113 : vector<2x8x8xf32>
    %cst_58 = arith.constant -1.000000e+09 : f32
    %115 = vector.broadcast %cst_58 : f32 to vector<2x8x8xf32>
    %116 = arith.select %9, %114, %115 : vector<2x8x8xi1>, vector<2x8x8xf32>
    %cst_59 = arith.constant dense<0xFF800000> : vector<2x8xf32>
    %117 = vector.multi_reduction <maximumf>, %116, %cst_59 [2] : vector<2x8x8xf32> to vector<2x8xf32>
    %118 = vector.shape_cast %117 : vector<2x8xf32> to vector<2x8x1xf32>
    %119 = vector.broadcast %118 : vector<2x8x1xf32> to vector<2x8x8xf32>
    %120 = arith.subf %116, %119 : vector<2x8x8xf32>
    %121 = math.exp %120 : vector<2x8x8xf32>
    %cst_60 = arith.constant dense<0.000000e+00> : vector<2x8xf32>
    %122 = vector.multi_reduction <add>, %121, %cst_60 [2] : vector<2x8x8xf32> to vector<2x8xf32>
    %123 = vector.shape_cast %122 : vector<2x8xf32> to vector<2x8x1xf32>
    %124 = tpu.reciprocal %123 {approx = true} : vector<2x8x1xf32> -> vector<2x8x1xf32>
    %125 = vector.broadcast %124 : vector<2x8x1xf32> to vector<2x8x8xf32>
    %126 = arith.mulf %121, %125 : vector<2x8x8xf32>
    "tpu.trace_start"() <{level = 10 : i32, message = "bqk,bkd->bqd"}> : () -> ()
    %cst_61 = arith.constant dense<0.000000e+00> : vector<2x8x8xf32>
    %127 = tpu.matmul %126, %111, %cst_61 {dimension_numbers = #tpu.dot_dimension_numbers<[2], [1], [1], [2], [0, 0, 0, 1, 1, 2], [0], [0]>} : vector<2x8x8xf32>, vector<2x8x8xf32>, vector<2x8x8xf32> -> vector<2x8x8xf32>
    "tpu.trace_stop"() : () -> ()
    %128 = tpu.concatenate %70, %89, %108, %127 in 2 : vector<2x8x8xf32>, vector<2x8x8xf32>, vector<2x8x8xf32>, vector<2x8x8xf32> -> vector<2x8x32xf32>
    %129 = vector.shape_cast %128 : vector<2x8x32xf32> to vector<16x32xf32>
    %c0_62 = arith.constant 0 : index
    %c0_63 = arith.constant 0 : index
    %c0_64 = arith.constant 0 : index
    %c0_65 = arith.constant 0 : index
    %130 = vector.load %arg9[%c0_62, %c0_63, %c0_64, %c0_65] : memref<1x2x32x32xf32, #tpu.memory_space<vmem>>, vector<1x1x32x32xf32>
    %131 = vector.shape_cast %130 : vector<1x1x32x32xf32> to vector<32x32xf32>
    %cst_66 = arith.constant dense<0.000000e+00> : vector<16x32xf32>
    %132 = tpu.matmul %129, %131, %cst_66 {dimension_numbers = #tpu.dot_dimension_numbers<[1], [0], [0], [1], [0, 0, 1, 1], [], []>} : vector<16x32xf32>, vector<32x32xf32>, vector<16x32xf32> -> vector<16x32xf32>
    %c0_67 = arith.constant 0 : index
    %c0_68 = arith.constant 0 : index
    %c0_69 = arith.constant 0 : index
    %c0_70 = arith.constant 0 : index
    %133 = vector.load %arg10[%c0_67, %c0_68, %c0_69, %c0_70] : memref<1x2x1x32xf32, #tpu.memory_space<vmem>>, vector<1x1x1x32xf32>
    %134 = vector.shape_cast %133 : vector<1x1x1x32xf32> to vector<1x32xf32>
    %135 = vector.broadcast %134 : vector<1x32xf32> to vector<16x32xf32>
    %136 = arith.addf %132, %135 : vector<16x32xf32>
    %137 = arith.addf %2, %136 : vector<16x32xf32>
    %c0_71 = arith.constant 0 : index
    %c1 = arith.constant 1 : index
    %c0_72 = arith.constant 0 : index
    %c0_73 = arith.constant 0 : index
    %138 = vector.load %arg5[%c0_71, %c1, %c0_72, %c0_73] : memref<1x7x1x32xf32, #tpu.memory_space<vmem>>, vector<1x1x1x32xf32>
    %139 = vector.shape_cast %138 : vector<1x1x1x32xf32> to vector<1x32xf32>
    %c0_74 = arith.constant 0 : index
    %c1_75 = arith.constant 1 : index
    %c0_76 = arith.constant 0 : index
    %c0_77 = arith.constant 0 : index
    %140 = vector.load %arg6[%c0_74, %c1_75, %c0_76, %c0_77] : memref<1x7x1x32xf32, #tpu.memory_space<vmem>>, vector<1x1x1x32xf32>
    %141 = vector.shape_cast %140 : vector<1x1x1x32xf32> to vector<1x32xf32>
    %cst_78 = arith.constant dense<0.000000e+00> : vector<16xf32>
    %142 = vector.multi_reduction <add>, %137, %cst_78 [1] : vector<16x32xf32> to vector<16xf32>
    %143 = vector.shape_cast %142 : vector<16xf32> to vector<16x1xf32>
    %cst_79 = arith.constant 3.200000e+01 : f32
    %144 = vector.broadcast %cst_79 : f32 to vector<16x1xf32>
    %145 = arith.divf %143, %144 : vector<16x1xf32>
    %146 = vector.broadcast %145 : vector<16x1xf32> to vector<16x32xf32>
    %147 = arith.subf %137, %146 : vector<16x32xf32>
    %148 = arith.mulf %147, %147 : vector<16x32xf32>
    %cst_80 = arith.constant dense<0.000000e+00> : vector<16xf32>
    %149 = vector.multi_reduction <add>, %148, %cst_80 [1] : vector<16x32xf32> to vector<16xf32>
    %150 = vector.shape_cast %149 : vector<16xf32> to vector<16x1xf32>
    %cst_81 = arith.constant 3.100000e+01 : f32
    %151 = vector.broadcast %cst_81 : f32 to vector<16x1xf32>
    %152 = arith.divf %150, %151 : vector<16x1xf32>
    %153 = math.sqrt %152 : vector<16x1xf32>
    %cst_82 = arith.constant 9.99999997E-7 : f32
    %154 = vector.broadcast %cst_82 : f32 to vector<16x1xf32>
    %155 = arith.addf %153, %154 : vector<16x1xf32>
    %156 = tpu.reciprocal %155 {approx = true} : vector<16x1xf32> -> vector<16x1xf32>
    %157 = vector.broadcast %145 : vector<16x1xf32> to vector<16x32xf32>
    %158 = arith.subf %137, %157 : vector<16x32xf32>
    %159 = vector.broadcast %139 : vector<1x32xf32> to vector<16x32xf32>
    %160 = arith.mulf %159, %158 : vector<16x32xf32>
    %161 = vector.broadcast %156 : vector<16x1xf32> to vector<16x32xf32>
    %162 = arith.mulf %160, %161 : vector<16x32xf32>
    %163 = vector.broadcast %141 : vector<1x32xf32> to vector<16x32xf32>
    %164 = arith.addf %162, %163 : vector<16x32xf32>
    %c0_83 = arith.constant 0 : index
    %c0_84 = arith.constant 0 : index
    %c0_85 = arith.constant 0 : index
    %c0_86 = arith.constant 0 : index
    %165 = vector.load %arg11[%c0_83, %c0_84, %c0_85, %c0_86] : memref<1x2x32x32xf32, #tpu.memory_space<vmem>>, vector<1x1x32x32xf32>
    %166 = vector.shape_cast %165 : vector<1x1x32x32xf32> to vector<32x32xf32>
    %cst_87 = arith.constant dense<0.000000e+00> : vector<16x32xf32>
    %167 = tpu.matmul %164, %166, %cst_87 {dimension_numbers = #tpu.dot_dimension_numbers<[1], [0], [0], [1], [0, 0, 1, 1], [], []>} : vector<16x32xf32>, vector<32x32xf32>, vector<16x32xf32> -> vector<16x32xf32>
    %c0_88 = arith.constant 0 : index
    %c0_89 = arith.constant 0 : index
    %c0_90 = arith.constant 0 : index
    %c0_91 = arith.constant 0 : index
    %168 = vector.load %arg12[%c0_88, %c0_89, %c0_90, %c0_91] : memref<1x2x1x32xf32, #tpu.memory_space<vmem>>, vector<1x1x1x32xf32>
    %169 = vector.shape_cast %168 : vector<1x1x1x32xf32> to vector<1x32xf32>
    %170 = vector.broadcast %169 : vector<1x32xf32> to vector<16x32xf32>
    %171 = arith.addf %167, %170 : vector<16x32xf32>
    %172 = vector.shape_cast %171 : vector<16x32xf32> to vector<2x8x32xf32>
    %c0_92 = arith.constant 0 : index
    %c0_93 = arith.constant 0 : index
    %c0_94 = arith.constant 0 : index
    %c0_95 = arith.constant 0 : index
    %173 = vector.load %arg13[%c0_92, %c0_93, %c0_94, %c0_95] : memref<1x2x32x64xf32, #tpu.memory_space<vmem>>, vector<1x1x32x64xf32>
    %174 = vector.shape_cast %173 : vector<1x1x32x64xf32> to vector<32x64xf32>
    %cst_96 = arith.constant dense<0.000000e+00> : vector<16x64xf32>
    %175 = tpu.matmul %5, %174, %cst_96 {dimension_numbers = #tpu.dot_dimension_numbers<[1], [0], [0], [1], [0, 0, 1, 1], [], []>} : vector<16x32xf32>, vector<32x64xf32>, vector<16x64xf32> -> vector<16x64xf32>
    %c0_97 = arith.constant 0 : index
    %c0_98 = arith.constant 0 : index
    %c0_99 = arith.constant 0 : index
    %c0_100 = arith.constant 0 : index
    %176 = vector.load %arg14[%c0_97, %c0_98, %c0_99, %c0_100] : memref<1x2x1x64xf32, #tpu.memory_space<vmem>>, vector<1x1x1x64xf32>
    %177 = vector.shape_cast %176 : vector<1x1x1x64xf32> to vector<1x64xf32>
    %178 = vector.broadcast %177 : vector<1x64xf32> to vector<16x64xf32>
    %179 = arith.addf %175, %178 : vector<16x64xf32>
    %180 = vector.shape_cast %179 : vector<16x64xf32> to vector<2x8x64xf32>
    %181 = vector.extract_strided_slice %180 {offsets = [0, 0, 0], sizes = [2, 8, 32], strides = [1, 1, 1]} : vector<2x8x64xf32> to vector<2x8x32xf32>
    %182 = vector.extract_strided_slice %180 {offsets = [0, 0, 32], sizes = [2, 8, 32], strides = [1, 1, 1]} : vector<2x8x64xf32> to vector<2x8x32xf32>
    %183 = vector.extract_strided_slice %172 {offsets = [0, 0, 0], sizes = [2, 8, 8], strides = [1, 1, 1]} : vector<2x8x32xf32> to vector<2x8x8xf32>
    %184 = vector.extract_strided_slice %181 {offsets = [0, 0, 0], sizes = [2, 8, 8], strides = [1, 1, 1]} : vector<2x8x32xf32> to vector<2x8x8xf32>
    %185 = vector.extract_strided_slice %182 {offsets = [0, 0, 0], sizes = [2, 8, 8], strides = [1, 1, 1]} : vector<2x8x32xf32> to vector<2x8x8xf32>
    "tpu.trace_start"() <{level = 10 : i32, message = "bqd,bkd->bqk"}> : () -> ()
    %cst_101 = arith.constant dense<0.000000e+00> : vector<2x8x8xf32>
    %186 = tpu.matmul %183, %184, %cst_101 {dimension_numbers = #tpu.dot_dimension_numbers<[2], [2], [1], [1], [0, 0, 0, 1, 1, 1], [0], [0]>} : vector<2x8x8xf32>, vector<2x8x8xf32>, vector<2x8x8xf32> -> vector<2x8x8xf32>
    "tpu.trace_stop"() : () -> ()
    %cst_102 = arith.constant 0.353553385 : f32
    %187 = vector.broadcast %cst_102 : f32 to vector<2x8x8xf32>
    %188 = arith.mulf %186, %187 : vector<2x8x8xf32>
    %cst_103 = arith.constant -1.000000e+09 : f32
    %189 = vector.broadcast %cst_103 : f32 to vector<2x8x8xf32>
    %190 = arith.select %13, %188, %189 : vector<2x8x8xi1>, vector<2x8x8xf32>
    %cst_104 = arith.constant dense<0xFF800000> : vector<2x8xf32>
    %191 = vector.multi_reduction <maximumf>, %190, %cst_104 [2] : vector<2x8x8xf32> to vector<2x8xf32>
    %192 = vector.shape_cast %191 : vector<2x8xf32> to vector<2x8x1xf32>
    %193 = vector.broadcast %192 : vector<2x8x1xf32> to vector<2x8x8xf32>
    %194 = arith.subf %190, %193 : vector<2x8x8xf32>
    %195 = math.exp %194 : vector<2x8x8xf32>
    %cst_105 = arith.constant dense<0.000000e+00> : vector<2x8xf32>
    %196 = vector.multi_reduction <add>, %195, %cst_105 [2] : vector<2x8x8xf32> to vector<2x8xf32>
    %197 = vector.shape_cast %196 : vector<2x8xf32> to vector<2x8x1xf32>
    %198 = tpu.reciprocal %197 {approx = true} : vector<2x8x1xf32> -> vector<2x8x1xf32>
    %199 = vector.broadcast %198 : vector<2x8x1xf32> to vector<2x8x8xf32>
    %200 = arith.mulf %195, %199 : vector<2x8x8xf32>
    "tpu.trace_start"() <{level = 10 : i32, message = "bqk,bkd->bqd"}> : () -> ()
    %cst_106 = arith.constant dense<0.000000e+00> : vector<2x8x8xf32>
    %201 = tpu.matmul %200, %185, %cst_106 {dimension_numbers = #tpu.dot_dimension_numbers<[2], [1], [1], [2], [0, 0, 0, 1, 1, 2], [0], [0]>} : vector<2x8x8xf32>, vector<2x8x8xf32>, vector<2x8x8xf32> -> vector<2x8x8xf32>
    "tpu.trace_stop"() : () -> ()
    %202 = vector.extract_strided_slice %172 {offsets = [0, 0, 8], sizes = [2, 8, 8], strides = [1, 1, 1]} : vector<2x8x32xf32> to vector<2x8x8xf32>
    %203 = vector.extract_strided_slice %181 {offsets = [0, 0, 8], sizes = [2, 8, 8], strides = [1, 1, 1]} : vector<2x8x32xf32> to vector<2x8x8xf32>
    %204 = vector.extract_strided_slice %182 {offsets = [0, 0, 8], sizes = [2, 8, 8], strides = [1, 1, 1]} : vector<2x8x32xf32> to vector<2x8x8xf32>
    "tpu.trace_start"() <{level = 10 : i32, message = "bqd,bkd->bqk"}> : () -> ()
    %cst_107 = arith.constant dense<0.000000e+00> : vector<2x8x8xf32>
    %205 = tpu.matmul %202, %203, %cst_107 {dimension_numbers = #tpu.dot_dimension_numbers<[2], [2], [1], [1], [0, 0, 0, 1, 1, 1], [0], [0]>} : vector<2x8x8xf32>, vector<2x8x8xf32>, vector<2x8x8xf32> -> vector<2x8x8xf32>
    "tpu.trace_stop"() : () -> ()
    %cst_108 = arith.constant 0.353553385 : f32
    %206 = vector.broadcast %cst_108 : f32 to vector<2x8x8xf32>
    %207 = arith.mulf %205, %206 : vector<2x8x8xf32>
    %cst_109 = arith.constant -1.000000e+09 : f32
    %208 = vector.broadcast %cst_109 : f32 to vector<2x8x8xf32>
    %209 = arith.select %13, %207, %208 : vector<2x8x8xi1>, vector<2x8x8xf32>
    %cst_110 = arith.constant dense<0xFF800000> : vector<2x8xf32>
    %210 = vector.multi_reduction <maximumf>, %209, %cst_110 [2] : vector<2x8x8xf32> to vector<2x8xf32>
    %211 = vector.shape_cast %210 : vector<2x8xf32> to vector<2x8x1xf32>
    %212 = vector.broadcast %211 : vector<2x8x1xf32> to vector<2x8x8xf32>
    %213 = arith.subf %209, %212 : vector<2x8x8xf32>
    %214 = math.exp %213 : vector<2x8x8xf32>
    %cst_111 = arith.constant dense<0.000000e+00> : vector<2x8xf32>
    %215 = vector.multi_reduction <add>, %214, %cst_111 [2] : vector<2x8x8xf32> to vector<2x8xf32>
    %216 = vector.shape_cast %215 : vector<2x8xf32> to vector<2x8x1xf32>
    %217 = tpu.reciprocal %216 {approx = true} : vector<2x8x1xf32> -> vector<2x8x1xf32>
    %218 = vector.broadcast %217 : vector<2x8x1xf32> to vector<2x8x8xf32>
    %219 = arith.mulf %214, %218 : vector<2x8x8xf32>
    "tpu.trace_start"() <{level = 10 : i32, message = "bqk,bkd->bqd"}> : () -> ()
    %cst_112 = arith.constant dense<0.000000e+00> : vector<2x8x8xf32>
    %220 = tpu.matmul %219, %204, %cst_112 {dimension_numbers = #tpu.dot_dimension_numbers<[2], [1], [1], [2], [0, 0, 0, 1, 1, 2], [0], [0]>} : vector<2x8x8xf32>, vector<2x8x8xf32>, vector<2x8x8xf32> -> vector<2x8x8xf32>
    "tpu.trace_stop"() : () -> ()
    %221 = vector.extract_strided_slice %172 {offsets = [0, 0, 16], sizes = [2, 8, 8], strides = [1, 1, 1]} : vector<2x8x32xf32> to vector<2x8x8xf32>
    %222 = vector.extract_strided_slice %181 {offsets = [0, 0, 16], sizes = [2, 8, 8], strides = [1, 1, 1]} : vector<2x8x32xf32> to vector<2x8x8xf32>
    %223 = vector.extract_strided_slice %182 {offsets = [0, 0, 16], sizes = [2, 8, 8], strides = [1, 1, 1]} : vector<2x8x32xf32> to vector<2x8x8xf32>
    "tpu.trace_start"() <{level = 10 : i32, message = "bqd,bkd->bqk"}> : () -> ()
    %cst_113 = arith.constant dense<0.000000e+00> : vector<2x8x8xf32>
    %224 = tpu.matmul %221, %222, %cst_113 {dimension_numbers = #tpu.dot_dimension_numbers<[2], [2], [1], [1], [0, 0, 0, 1, 1, 1], [0], [0]>} : vector<2x8x8xf32>, vector<2x8x8xf32>, vector<2x8x8xf32> -> vector<2x8x8xf32>
    "tpu.trace_stop"() : () -> ()
    %cst_114 = arith.constant 0.353553385 : f32
    %225 = vector.broadcast %cst_114 : f32 to vector<2x8x8xf32>
    %226 = arith.mulf %224, %225 : vector<2x8x8xf32>
    %cst_115 = arith.constant -1.000000e+09 : f32
    %227 = vector.broadcast %cst_115 : f32 to vector<2x8x8xf32>
    %228 = arith.select %13, %226, %227 : vector<2x8x8xi1>, vector<2x8x8xf32>
    %cst_116 = arith.constant dense<0xFF800000> : vector<2x8xf32>
    %229 = vector.multi_reduction <maximumf>, %228, %cst_116 [2] : vector<2x8x8xf32> to vector<2x8xf32>
    %230 = vector.shape_cast %229 : vector<2x8xf32> to vector<2x8x1xf32>
    %231 = vector.broadcast %230 : vector<2x8x1xf32> to vector<2x8x8xf32>
    %232 = arith.subf %228, %231 : vector<2x8x8xf32>
    %233 = math.exp %232 : vector<2x8x8xf32>
    %cst_117 = arith.constant dense<0.000000e+00> : vector<2x8xf32>
    %234 = vector.multi_reduction <add>, %233, %cst_117 [2] : vector<2x8x8xf32> to vector<2x8xf32>
    %235 = vector.shape_cast %234 : vector<2x8xf32> to vector<2x8x1xf32>
    %236 = tpu.reciprocal %235 {approx = true} : vector<2x8x1xf32> -> vector<2x8x1xf32>
    %237 = vector.broadcast %236 : vector<2x8x1xf32> to vector<2x8x8xf32>
    %238 = arith.mulf %233, %237 : vector<2x8x8xf32>
    "tpu.trace_start"() <{level = 10 : i32, message = "bqk,bkd->bqd"}> : () -> ()
    %cst_118 = arith.constant dense<0.000000e+00> : vector<2x8x8xf32>
    %239 = tpu.matmul %238, %223, %cst_118 {dimension_numbers = #tpu.dot_dimension_numbers<[2], [1], [1], [2], [0, 0, 0, 1, 1, 2], [0], [0]>} : vector<2x8x8xf32>, vector<2x8x8xf32>, vector<2x8x8xf32> -> vector<2x8x8xf32>
    "tpu.trace_stop"() : () -> ()
    %240 = vector.extract_strided_slice %172 {offsets = [0, 0, 24], sizes = [2, 8, 8], strides = [1, 1, 1]} : vector<2x8x32xf32> to vector<2x8x8xf32>
    %241 = vector.extract_strided_slice %181 {offsets = [0, 0, 24], sizes = [2, 8, 8], strides = [1, 1, 1]} : vector<2x8x32xf32> to vector<2x8x8xf32>
    %242 = vector.extract_strided_slice %182 {offsets = [0, 0, 24], sizes = [2, 8, 8], strides = [1, 1, 1]} : vector<2x8x32xf32> to vector<2x8x8xf32>
    "tpu.trace_start"() <{level = 10 : i32, message = "bqd,bkd->bqk"}> : () -> ()
    %cst_119 = arith.constant dense<0.000000e+00> : vector<2x8x8xf32>
    %243 = tpu.matmul %240, %241, %cst_119 {dimension_numbers = #tpu.dot_dimension_numbers<[2], [2], [1], [1], [0, 0, 0, 1, 1, 1], [0], [0]>} : vector<2x8x8xf32>, vector<2x8x8xf32>, vector<2x8x8xf32> -> vector<2x8x8xf32>
    "tpu.trace_stop"() : () -> ()
    %cst_120 = arith.constant 0.353553385 : f32
    %244 = vector.broadcast %cst_120 : f32 to vector<2x8x8xf32>
    %245 = arith.mulf %243, %244 : vector<2x8x8xf32>
    %cst_121 = arith.constant -1.000000e+09 : f32
    %246 = vector.broadcast %cst_121 : f32 to vector<2x8x8xf32>
    %247 = arith.select %13, %245, %246 : vector<2x8x8xi1>, vector<2x8x8xf32>
    %cst_122 = arith.constant dense<0xFF800000> : vector<2x8xf32>
    %248 = vector.multi_reduction <maximumf>, %247, %cst_122 [2] : vector<2x8x8xf32> to vector<2x8xf32>
    %249 = vector.shape_cast %248 : vector<2x8xf32> to vector<2x8x1xf32>
    %250 = vector.broadcast %249 : vector<2x8x1xf32> to vector<2x8x8xf32>
    %251 = arith.subf %247, %250 : vector<2x8x8xf32>
    %252 = math.exp %251 : vector<2x8x8xf32>
    %cst_123 = arith.constant dense<0.000000e+00> : vector<2x8xf32>
    %253 = vector.multi_reduction <add>, %252, %cst_123 [2] : vector<2x8x8xf32> to vector<2x8xf32>
    %254 = vector.shape_cast %253 : vector<2x8xf32> to vector<2x8x1xf32>
    %255 = tpu.reciprocal %254 {approx = true} : vector<2x8x1xf32> -> vector<2x8x1xf32>
    %256 = vector.broadcast %255 : vector<2x8x1xf32> to vector<2x8x8xf32>
    %257 = arith.mulf %252, %256 : vector<2x8x8xf32>
    "tpu.trace_start"() <{level = 10 : i32, message = "bqk,bkd->bqd"}> : () -> ()
    %cst_124 = arith.constant dense<0.000000e+00> : vector<2x8x8xf32>
    %258 = tpu.matmul %257, %242, %cst_124 {dimension_numbers = #tpu.dot_dimension_numbers<[2], [1], [1], [2], [0, 0, 0, 1, 1, 2], [0], [0]>} : vector<2x8x8xf32>, vector<2x8x8xf32>, vector<2x8x8xf32> -> vector<2x8x8xf32>
    "tpu.trace_stop"() : () -> ()
    %259 = tpu.concatenate %201, %220, %239, %258 in 2 : vector<2x8x8xf32>, vector<2x8x8xf32>, vector<2x8x8xf32>, vector<2x8x8xf32> -> vector<2x8x32xf32>
    %260 = vector.shape_cast %259 : vector<2x8x32xf32> to vector<16x32xf32>
    %c0_125 = arith.constant 0 : index
    %c0_126 = arith.constant 0 : index
    %c0_127 = arith.constant 0 : index
    %c0_128 = arith.constant 0 : index
    %261 = vector.load %arg15[%c0_125, %c0_126, %c0_127, %c0_128] : memref<1x2x32x32xf32, #tpu.memory_space<vmem>>, vector<1x1x32x32xf32>
    %262 = vector.shape_cast %261 : vector<1x1x32x32xf32> to vector<32x32xf32>
    %cst_129 = arith.constant dense<0.000000e+00> : vector<16x32xf32>
    %263 = tpu.matmul %260, %262, %cst_129 {dimension_numbers = #tpu.dot_dimension_numbers<[1], [0], [0], [1], [0, 0, 1, 1], [], []>} : vector<16x32xf32>, vector<32x32xf32>, vector<16x32xf32> -> vector<16x32xf32>
    %c0_130 = arith.constant 0 : index
    %c0_131 = arith.constant 0 : index
    %c0_132 = arith.constant 0 : index
    %c0_133 = arith.constant 0 : index
    %264 = vector.load %arg16[%c0_130, %c0_131, %c0_132, %c0_133] : memref<1x2x1x32xf32, #tpu.memory_space<vmem>>, vector<1x1x1x32xf32>
    %265 = vector.shape_cast %264 : vector<1x1x1x32xf32> to vector<1x32xf32>
    %266 = vector.broadcast %265 : vector<1x32xf32> to vector<16x32xf32>
    %267 = arith.addf %263, %266 : vector<16x32xf32>
    %268 = arith.addf %137, %267 : vector<16x32xf32>
    %c0_134 = arith.constant 0 : index
    %c2 = arith.constant 2 : index
    %c0_135 = arith.constant 0 : index
    %c0_136 = arith.constant 0 : index
    %269 = vector.load %arg5[%c0_134, %c2, %c0_135, %c0_136] : memref<1x7x1x32xf32, #tpu.memory_space<vmem>>, vector<1x1x1x32xf32>
    %270 = vector.shape_cast %269 : vector<1x1x1x32xf32> to vector<1x32xf32>
    %c0_137 = arith.constant 0 : index
    %c2_138 = arith.constant 2 : index
    %c0_139 = arith.constant 0 : index
    %c0_140 = arith.constant 0 : index
    %271 = vector.load %arg6[%c0_137, %c2_138, %c0_139, %c0_140] : memref<1x7x1x32xf32, #tpu.memory_space<vmem>>, vector<1x1x1x32xf32>
    %272 = vector.shape_cast %271 : vector<1x1x1x32xf32> to vector<1x32xf32>
    %cst_141 = arith.constant dense<0.000000e+00> : vector<16xf32>
    %273 = vector.multi_reduction <add>, %268, %cst_141 [1] : vector<16x32xf32> to vector<16xf32>
    %274 = vector.shape_cast %273 : vector<16xf32> to vector<16x1xf32>
    %cst_142 = arith.constant 3.200000e+01 : f32
    %275 = vector.broadcast %cst_142 : f32 to vector<16x1xf32>
    %276 = arith.divf %274, %275 : vector<16x1xf32>
    %277 = vector.broadcast %276 : vector<16x1xf32> to vector<16x32xf32>
    %278 = arith.subf %268, %277 : vector<16x32xf32>
    %279 = arith.mulf %278, %278 : vector<16x32xf32>
    %cst_143 = arith.constant dense<0.000000e+00> : vector<16xf32>
    %280 = vector.multi_reduction <add>, %279, %cst_143 [1] : vector<16x32xf32> to vector<16xf32>
    %281 = vector.shape_cast %280 : vector<16xf32> to vector<16x1xf32>
    %cst_144 = arith.constant 3.100000e+01 : f32
    %282 = vector.broadcast %cst_144 : f32 to vector<16x1xf32>
    %283 = arith.divf %281, %282 : vector<16x1xf32>
    %284 = math.sqrt %283 : vector<16x1xf32>
    %cst_145 = arith.constant 9.99999997E-7 : f32
    %285 = vector.broadcast %cst_145 : f32 to vector<16x1xf32>
    %286 = arith.addf %284, %285 : vector<16x1xf32>
    %287 = tpu.reciprocal %286 {approx = true} : vector<16x1xf32> -> vector<16x1xf32>
    %288 = vector.broadcast %276 : vector<16x1xf32> to vector<16x32xf32>
    %289 = arith.subf %268, %288 : vector<16x32xf32>
    %290 = vector.broadcast %270 : vector<1x32xf32> to vector<16x32xf32>
    %291 = arith.mulf %290, %289 : vector<16x32xf32>
    %292 = vector.broadcast %287 : vector<16x1xf32> to vector<16x32xf32>
    %293 = arith.mulf %291, %292 : vector<16x32xf32>
    %294 = vector.broadcast %272 : vector<1x32xf32> to vector<16x32xf32>
    %295 = arith.addf %293, %294 : vector<16x32xf32>
    %c0_146 = arith.constant 0 : index
    %c0_147 = arith.constant 0 : index
    %c0_148 = arith.constant 0 : index
    %c0_149 = arith.constant 0 : index
    %296 = vector.load %arg17[%c0_146, %c0_147, %c0_148, %c0_149] : memref<1x2x32x64xf32, #tpu.memory_space<vmem>>, vector<1x1x32x64xf32>
    %297 = vector.shape_cast %296 : vector<1x1x32x64xf32> to vector<32x64xf32>
    %cst_150 = arith.constant dense<0.000000e+00> : vector<16x64xf32>
    %298 = tpu.matmul %295, %297, %cst_150 {dimension_numbers = #tpu.dot_dimension_numbers<[1], [0], [0], [1], [0, 0, 1, 1], [], []>} : vector<16x32xf32>, vector<32x64xf32>, vector<16x64xf32> -> vector<16x64xf32>
    %c0_151 = arith.constant 0 : index
    %c0_152 = arith.constant 0 : index
    %c0_153 = arith.constant 0 : index
    %c0_154 = arith.constant 0 : index
    %299 = vector.load %arg18[%c0_151, %c0_152, %c0_153, %c0_154] : memref<1x2x1x64xf32, #tpu.memory_space<vmem>>, vector<1x1x1x64xf32>
    %300 = vector.shape_cast %299 : vector<1x1x1x64xf32> to vector<1x64xf32>
    %301 = vector.broadcast %300 : vector<1x64xf32> to vector<16x64xf32>
    %302 = arith.addf %298, %301 : vector<16x64xf32>
    %cst_155 = arith.constant 0.000000e+00 : f32
    %303 = vector.broadcast %cst_155 : f32 to vector<16x64xf32>
    %304 = arith.maximumf %302, %303 : vector<16x64xf32>
    %c0_156 = arith.constant 0 : index
    %c0_157 = arith.constant 0 : index
    %c0_158 = arith.constant 0 : index
    %c0_159 = arith.constant 0 : index
    %305 = vector.load %arg19[%c0_156, %c0_157, %c0_158, %c0_159] : memref<1x2x64x32xf32, #tpu.memory_space<vmem>>, vector<1x1x64x32xf32>
    %306 = vector.shape_cast %305 : vector<1x1x64x32xf32> to vector<64x32xf32>
    %cst_160 = arith.constant dense<0.000000e+00> : vector<16x32xf32>
    %307 = tpu.matmul %304, %306, %cst_160 {dimension_numbers = #tpu.dot_dimension_numbers<[1], [0], [0], [1], [0, 0, 1, 1], [], []>} : vector<16x64xf32>, vector<64x32xf32>, vector<16x32xf32> -> vector<16x32xf32>
    %c0_161 = arith.constant 0 : index
    %c0_162 = arith.constant 0 : index
    %c0_163 = arith.constant 0 : index
    %c0_164 = arith.constant 0 : index
    %308 = vector.load %arg20[%c0_161, %c0_162, %c0_163, %c0_164] : memref<1x2x1x32xf32, #tpu.memory_space<vmem>>, vector<1x1x1x32xf32>
    %309 = vector.shape_cast %308 : vector<1x1x1x32xf32> to vector<1x32xf32>
    %310 = vector.broadcast %309 : vector<1x32xf32> to vector<16x32xf32>
    %311 = arith.addf %307, %310 : vector<16x32xf32>
    %312 = arith.addf %268, %311 : vector<16x32xf32>
    %c0_165 = arith.constant 0 : index
    %c3 = arith.constant 3 : index
    %c0_166 = arith.constant 0 : index
    %c0_167 = arith.constant 0 : index
    %313 = vector.load %arg5[%c0_165, %c3, %c0_166, %c0_167] : memref<1x7x1x32xf32, #tpu.memory_space<vmem>>, vector<1x1x1x32xf32>
    %314 = vector.shape_cast %313 : vector<1x1x1x32xf32> to vector<1x32xf32>
    %c0_168 = arith.constant 0 : index
    %c3_169 = arith.constant 3 : index
    %c0_170 = arith.constant 0 : index
    %c0_171 = arith.constant 0 : index
    %315 = vector.load %arg6[%c0_168, %c3_169, %c0_170, %c0_171] : memref<1x7x1x32xf32, #tpu.memory_space<vmem>>, vector<1x1x1x32xf32>
    %316 = vector.shape_cast %315 : vector<1x1x1x32xf32> to vector<1x32xf32>
    %cst_172 = arith.constant dense<0.000000e+00> : vector<16xf32>
    %317 = vector.multi_reduction <add>, %312, %cst_172 [1] : vector<16x32xf32> to vector<16xf32>
    %318 = vector.shape_cast %317 : vector<16xf32> to vector<16x1xf32>
    %cst_173 = arith.constant 3.200000e+01 : f32
    %319 = vector.broadcast %cst_173 : f32 to vector<16x1xf32>
    %320 = arith.divf %318, %319 : vector<16x1xf32>
    %321 = vector.broadcast %320 : vector<16x1xf32> to vector<16x32xf32>
    %322 = arith.subf %312, %321 : vector<16x32xf32>
    %323 = arith.mulf %322, %322 : vector<16x32xf32>
    %cst_174 = arith.constant dense<0.000000e+00> : vector<16xf32>
    %324 = vector.multi_reduction <add>, %323, %cst_174 [1] : vector<16x32xf32> to vector<16xf32>
    %325 = vector.shape_cast %324 : vector<16xf32> to vector<16x1xf32>
    %cst_175 = arith.constant 3.100000e+01 : f32
    %326 = vector.broadcast %cst_175 : f32 to vector<16x1xf32>
    %327 = arith.divf %325, %326 : vector<16x1xf32>
    %328 = math.sqrt %327 : vector<16x1xf32>
    %cst_176 = arith.constant 9.99999997E-7 : f32
    %329 = vector.broadcast %cst_176 : f32 to vector<16x1xf32>
    %330 = arith.addf %328, %329 : vector<16x1xf32>
    %331 = tpu.reciprocal %330 {approx = true} : vector<16x1xf32> -> vector<16x1xf32>
    %332 = vector.broadcast %320 : vector<16x1xf32> to vector<16x32xf32>
    %333 = arith.subf %312, %332 : vector<16x32xf32>
    %334 = vector.broadcast %314 : vector<1x32xf32> to vector<16x32xf32>
    %335 = arith.mulf %334, %333 : vector<16x32xf32>
    %336 = vector.broadcast %331 : vector<16x1xf32> to vector<16x32xf32>
    %337 = arith.mulf %335, %336 : vector<16x32xf32>
    %338 = vector.broadcast %316 : vector<1x32xf32> to vector<16x32xf32>
    %339 = arith.addf %337, %338 : vector<16x32xf32>
    %c0_177 = arith.constant 0 : index
    %c1_178 = arith.constant 1 : index
    %c0_179 = arith.constant 0 : index
    %c0_180 = arith.constant 0 : index
    %340 = vector.load %arg7[%c0_177, %c1_178, %c0_179, %c0_180] : memref<1x2x32x96xf32, #tpu.memory_space<vmem>>, vector<1x1x32x96xf32>
    %341 = vector.shape_cast %340 : vector<1x1x32x96xf32> to vector<32x96xf32>
    %cst_181 = arith.constant dense<0.000000e+00> : vector<16x96xf32>
    %342 = tpu.matmul %339, %341, %cst_181 {dimension_numbers = #tpu.dot_dimension_numbers<[1], [0], [0], [1], [0, 0, 1, 1], [], []>} : vector<16x32xf32>, vector<32x96xf32>, vector<16x96xf32> -> vector<16x96xf32>
    %c0_182 = arith.constant 0 : index
    %c1_183 = arith.constant 1 : index
    %c0_184 = arith.constant 0 : index
    %c0_185 = arith.constant 0 : index
    %343 = vector.load %arg8[%c0_182, %c1_183, %c0_184, %c0_185] : memref<1x2x1x96xf32, #tpu.memory_space<vmem>>, vector<1x1x1x96xf32>
    %344 = vector.shape_cast %343 : vector<1x1x1x96xf32> to vector<1x96xf32>
    %345 = vector.broadcast %344 : vector<1x96xf32> to vector<16x96xf32>
    %346 = arith.addf %342, %345 : vector<16x96xf32>
    %347 = vector.shape_cast %346 : vector<16x96xf32> to vector<2x8x96xf32>
    %348 = vector.extract_strided_slice %347 {offsets = [0, 0, 0], sizes = [2, 8, 32], strides = [1, 1, 1]} : vector<2x8x96xf32> to vector<2x8x32xf32>
    %349 = vector.extract_strided_slice %347 {offsets = [0, 0, 32], sizes = [2, 8, 32], strides = [1, 1, 1]} : vector<2x8x96xf32> to vector<2x8x32xf32>
    %350 = vector.extract_strided_slice %347 {offsets = [0, 0, 64], sizes = [2, 8, 32], strides = [1, 1, 1]} : vector<2x8x96xf32> to vector<2x8x32xf32>
    %351 = vector.extract_strided_slice %348 {offsets = [0, 0, 0], sizes = [2, 8, 8], strides = [1, 1, 1]} : vector<2x8x32xf32> to vector<2x8x8xf32>
    %352 = vector.extract_strided_slice %349 {offsets = [0, 0, 0], sizes = [2, 8, 8], strides = [1, 1, 1]} : vector<2x8x32xf32> to vector<2x8x8xf32>
    %353 = vector.extract_strided_slice %350 {offsets = [0, 0, 0], sizes = [2, 8, 8], strides = [1, 1, 1]} : vector<2x8x32xf32> to vector<2x8x8xf32>
    "tpu.trace_start"() <{level = 10 : i32, message = "bqd,bkd->bqk"}> : () -> ()
    %cst_186 = arith.constant dense<0.000000e+00> : vector<2x8x8xf32>
    %354 = tpu.matmul %351, %352, %cst_186 {dimension_numbers = #tpu.dot_dimension_numbers<[2], [2], [1], [1], [0, 0, 0, 1, 1, 1], [0], [0]>} : vector<2x8x8xf32>, vector<2x8x8xf32>, vector<2x8x8xf32> -> vector<2x8x8xf32>
    "tpu.trace_stop"() : () -> ()
    %cst_187 = arith.constant 0.353553385 : f32
    %355 = vector.broadcast %cst_187 : f32 to vector<2x8x8xf32>
    %356 = arith.mulf %354, %355 : vector<2x8x8xf32>
    %cst_188 = arith.constant -1.000000e+09 : f32
    %357 = vector.broadcast %cst_188 : f32 to vector<2x8x8xf32>
    %358 = arith.select %9, %356, %357 : vector<2x8x8xi1>, vector<2x8x8xf32>
    %cst_189 = arith.constant dense<0xFF800000> : vector<2x8xf32>
    %359 = vector.multi_reduction <maximumf>, %358, %cst_189 [2] : vector<2x8x8xf32> to vector<2x8xf32>
    %360 = vector.shape_cast %359 : vector<2x8xf32> to vector<2x8x1xf32>
    %361 = vector.broadcast %360 : vector<2x8x1xf32> to vector<2x8x8xf32>
    %362 = arith.subf %358, %361 : vector<2x8x8xf32>
    %363 = math.exp %362 : vector<2x8x8xf32>
    %cst_190 = arith.constant dense<0.000000e+00> : vector<2x8xf32>
    %364 = vector.multi_reduction <add>, %363, %cst_190 [2] : vector<2x8x8xf32> to vector<2x8xf32>
    %365 = vector.shape_cast %364 : vector<2x8xf32> to vector<2x8x1xf32>
    %366 = tpu.reciprocal %365 {approx = true} : vector<2x8x1xf32> -> vector<2x8x1xf32>
    %367 = vector.broadcast %366 : vector<2x8x1xf32> to vector<2x8x8xf32>
    %368 = arith.mulf %363, %367 : vector<2x8x8xf32>
    "tpu.trace_start"() <{level = 10 : i32, message = "bqk,bkd->bqd"}> : () -> ()
    %cst_191 = arith.constant dense<0.000000e+00> : vector<2x8x8xf32>
    %369 = tpu.matmul %368, %353, %cst_191 {dimension_numbers = #tpu.dot_dimension_numbers<[2], [1], [1], [2], [0, 0, 0, 1, 1, 2], [0], [0]>} : vector<2x8x8xf32>, vector<2x8x8xf32>, vector<2x8x8xf32> -> vector<2x8x8xf32>
    "tpu.trace_stop"() : () -> ()
    %370 = vector.extract_strided_slice %348 {offsets = [0, 0, 8], sizes = [2, 8, 8], strides = [1, 1, 1]} : vector<2x8x32xf32> to vector<2x8x8xf32>
    %371 = vector.extract_strided_slice %349 {offsets = [0, 0, 8], sizes = [2, 8, 8], strides = [1, 1, 1]} : vector<2x8x32xf32> to vector<2x8x8xf32>
    %372 = vector.extract_strided_slice %350 {offsets = [0, 0, 8], sizes = [2, 8, 8], strides = [1, 1, 1]} : vector<2x8x32xf32> to vector<2x8x8xf32>
    "tpu.trace_start"() <{level = 10 : i32, message = "bqd,bkd->bqk"}> : () -> ()
    %cst_192 = arith.constant dense<0.000000e+00> : vector<2x8x8xf32>
    %373 = tpu.matmul %370, %371, %cst_192 {dimension_numbers = #tpu.dot_dimension_numbers<[2], [2], [1], [1], [0, 0, 0, 1, 1, 1], [0], [0]>} : vector<2x8x8xf32>, vector<2x8x8xf32>, vector<2x8x8xf32> -> vector<2x8x8xf32>
    "tpu.trace_stop"() : () -> ()
    %cst_193 = arith.constant 0.353553385 : f32
    %374 = vector.broadcast %cst_193 : f32 to vector<2x8x8xf32>
    %375 = arith.mulf %373, %374 : vector<2x8x8xf32>
    %cst_194 = arith.constant -1.000000e+09 : f32
    %376 = vector.broadcast %cst_194 : f32 to vector<2x8x8xf32>
    %377 = arith.select %9, %375, %376 : vector<2x8x8xi1>, vector<2x8x8xf32>
    %cst_195 = arith.constant dense<0xFF800000> : vector<2x8xf32>
    %378 = vector.multi_reduction <maximumf>, %377, %cst_195 [2] : vector<2x8x8xf32> to vector<2x8xf32>
    %379 = vector.shape_cast %378 : vector<2x8xf32> to vector<2x8x1xf32>
    %380 = vector.broadcast %379 : vector<2x8x1xf32> to vector<2x8x8xf32>
    %381 = arith.subf %377, %380 : vector<2x8x8xf32>
    %382 = math.exp %381 : vector<2x8x8xf32>
    %cst_196 = arith.constant dense<0.000000e+00> : vector<2x8xf32>
    %383 = vector.multi_reduction <add>, %382, %cst_196 [2] : vector<2x8x8xf32> to vector<2x8xf32>
    %384 = vector.shape_cast %383 : vector<2x8xf32> to vector<2x8x1xf32>
    %385 = tpu.reciprocal %384 {approx = true} : vector<2x8x1xf32> -> vector<2x8x1xf32>
    %386 = vector.broadcast %385 : vector<2x8x1xf32> to vector<2x8x8xf32>
    %387 = arith.mulf %382, %386 : vector<2x8x8xf32>
    "tpu.trace_start"() <{level = 10 : i32, message = "bqk,bkd->bqd"}> : () -> ()
    %cst_197 = arith.constant dense<0.000000e+00> : vector<2x8x8xf32>
    %388 = tpu.matmul %387, %372, %cst_197 {dimension_numbers = #tpu.dot_dimension_numbers<[2], [1], [1], [2], [0, 0, 0, 1, 1, 2], [0], [0]>} : vector<2x8x8xf32>, vector<2x8x8xf32>, vector<2x8x8xf32> -> vector<2x8x8xf32>
    "tpu.trace_stop"() : () -> ()
    %389 = vector.extract_strided_slice %348 {offsets = [0, 0, 16], sizes = [2, 8, 8], strides = [1, 1, 1]} : vector<2x8x32xf32> to vector<2x8x8xf32>
    %390 = vector.extract_strided_slice %349 {offsets = [0, 0, 16], sizes = [2, 8, 8], strides = [1, 1, 1]} : vector<2x8x32xf32> to vector<2x8x8xf32>
    %391 = vector.extract_strided_slice %350 {offsets = [0, 0, 16], sizes = [2, 8, 8], strides = [1, 1, 1]} : vector<2x8x32xf32> to vector<2x8x8xf32>
    "tpu.trace_start"() <{level = 10 : i32, message = "bqd,bkd->bqk"}> : () -> ()
    %cst_198 = arith.constant dense<0.000000e+00> : vector<2x8x8xf32>
    %392 = tpu.matmul %389, %390, %cst_198 {dimension_numbers = #tpu.dot_dimension_numbers<[2], [2], [1], [1], [0, 0, 0, 1, 1, 1], [0], [0]>} : vector<2x8x8xf32>, vector<2x8x8xf32>, vector<2x8x8xf32> -> vector<2x8x8xf32>
    "tpu.trace_stop"() : () -> ()
    %cst_199 = arith.constant 0.353553385 : f32
    %393 = vector.broadcast %cst_199 : f32 to vector<2x8x8xf32>
    %394 = arith.mulf %392, %393 : vector<2x8x8xf32>
    %cst_200 = arith.constant -1.000000e+09 : f32
    %395 = vector.broadcast %cst_200 : f32 to vector<2x8x8xf32>
    %396 = arith.select %9, %394, %395 : vector<2x8x8xi1>, vector<2x8x8xf32>
    %cst_201 = arith.constant dense<0xFF800000> : vector<2x8xf32>
    %397 = vector.multi_reduction <maximumf>, %396, %cst_201 [2] : vector<2x8x8xf32> to vector<2x8xf32>
    %398 = vector.shape_cast %397 : vector<2x8xf32> to vector<2x8x1xf32>
    %399 = vector.broadcast %398 : vector<2x8x1xf32> to vector<2x8x8xf32>
    %400 = arith.subf %396, %399 : vector<2x8x8xf32>
    %401 = math.exp %400 : vector<2x8x8xf32>
    %cst_202 = arith.constant dense<0.000000e+00> : vector<2x8xf32>
    %402 = vector.multi_reduction <add>, %401, %cst_202 [2] : vector<2x8x8xf32> to vector<2x8xf32>
    %403 = vector.shape_cast %402 : vector<2x8xf32> to vector<2x8x1xf32>
    %404 = tpu.reciprocal %403 {approx = true} : vector<2x8x1xf32> -> vector<2x8x1xf32>
    %405 = vector.broadcast %404 : vector<2x8x1xf32> to vector<2x8x8xf32>
    %406 = arith.mulf %401, %405 : vector<2x8x8xf32>
    "tpu.trace_start"() <{level = 10 : i32, message = "bqk,bkd->bqd"}> : () -> ()
    %cst_203 = arith.constant dense<0.000000e+00> : vector<2x8x8xf32>
    %407 = tpu.matmul %406, %391, %cst_203 {dimension_numbers = #tpu.dot_dimension_numbers<[2], [1], [1], [2], [0, 0, 0, 1, 1, 2], [0], [0]>} : vector<2x8x8xf32>, vector<2x8x8xf32>, vector<2x8x8xf32> -> vector<2x8x8xf32>
    "tpu.trace_stop"() : () -> ()
    %408 = vector.extract_strided_slice %348 {offsets = [0, 0, 24], sizes = [2, 8, 8], strides = [1, 1, 1]} : vector<2x8x32xf32> to vector<2x8x8xf32>
    %409 = vector.extract_strided_slice %349 {offsets = [0, 0, 24], sizes = [2, 8, 8], strides = [1, 1, 1]} : vector<2x8x32xf32> to vector<2x8x8xf32>
    %410 = vector.extract_strided_slice %350 {offsets = [0, 0, 24], sizes = [2, 8, 8], strides = [1, 1, 1]} : vector<2x8x32xf32> to vector<2x8x8xf32>
    "tpu.trace_start"() <{level = 10 : i32, message = "bqd,bkd->bqk"}> : () -> ()
    %cst_204 = arith.constant dense<0.000000e+00> : vector<2x8x8xf32>
    %411 = tpu.matmul %408, %409, %cst_204 {dimension_numbers = #tpu.dot_dimension_numbers<[2], [2], [1], [1], [0, 0, 0, 1, 1, 1], [0], [0]>} : vector<2x8x8xf32>, vector<2x8x8xf32>, vector<2x8x8xf32> -> vector<2x8x8xf32>
    "tpu.trace_stop"() : () -> ()
    %cst_205 = arith.constant 0.353553385 : f32
    %412 = vector.broadcast %cst_205 : f32 to vector<2x8x8xf32>
    %413 = arith.mulf %411, %412 : vector<2x8x8xf32>
    %cst_206 = arith.constant -1.000000e+09 : f32
    %414 = vector.broadcast %cst_206 : f32 to vector<2x8x8xf32>
    %415 = arith.select %9, %413, %414 : vector<2x8x8xi1>, vector<2x8x8xf32>
    %cst_207 = arith.constant dense<0xFF800000> : vector<2x8xf32>
    %416 = vector.multi_reduction <maximumf>, %415, %cst_207 [2] : vector<2x8x8xf32> to vector<2x8xf32>
    %417 = vector.shape_cast %416 : vector<2x8xf32> to vector<2x8x1xf32>
    %418 = vector.broadcast %417 : vector<2x8x1xf32> to vector<2x8x8xf32>
    %419 = arith.subf %415, %418 : vector<2x8x8xf32>
    %420 = math.exp %419 : vector<2x8x8xf32>
    %cst_208 = arith.constant dense<0.000000e+00> : vector<2x8xf32>
    %421 = vector.multi_reduction <add>, %420, %cst_208 [2] : vector<2x8x8xf32> to vector<2x8xf32>
    %422 = vector.shape_cast %421 : vector<2x8xf32> to vector<2x8x1xf32>
    %423 = tpu.reciprocal %422 {approx = true} : vector<2x8x1xf32> -> vector<2x8x1xf32>
    %424 = vector.broadcast %423 : vector<2x8x1xf32> to vector<2x8x8xf32>
    %425 = arith.mulf %420, %424 : vector<2x8x8xf32>
    "tpu.trace_start"() <{level = 10 : i32, message = "bqk,bkd->bqd"}> : () -> ()
    %cst_209 = arith.constant dense<0.000000e+00> : vector<2x8x8xf32>
    %426 = tpu.matmul %425, %410, %cst_209 {dimension_numbers = #tpu.dot_dimension_numbers<[2], [1], [1], [2], [0, 0, 0, 1, 1, 2], [0], [0]>} : vector<2x8x8xf32>, vector<2x8x8xf32>, vector<2x8x8xf32> -> vector<2x8x8xf32>
    "tpu.trace_stop"() : () -> ()
    %427 = tpu.concatenate %369, %388, %407, %426 in 2 : vector<2x8x8xf32>, vector<2x8x8xf32>, vector<2x8x8xf32>, vector<2x8x8xf32> -> vector<2x8x32xf32>
    %428 = vector.shape_cast %427 : vector<2x8x32xf32> to vector<16x32xf32>
    %c0_210 = arith.constant 0 : index
    %c1_211 = arith.constant 1 : index
    %c0_212 = arith.constant 0 : index
    %c0_213 = arith.constant 0 : index
    %429 = vector.load %arg9[%c0_210, %c1_211, %c0_212, %c0_213] : memref<1x2x32x32xf32, #tpu.memory_space<vmem>>, vector<1x1x32x32xf32>
    %430 = vector.shape_cast %429 : vector<1x1x32x32xf32> to vector<32x32xf32>
    %cst_214 = arith.constant dense<0.000000e+00> : vector<16x32xf32>
    %431 = tpu.matmul %428, %430, %cst_214 {dimension_numbers = #tpu.dot_dimension_numbers<[1], [0], [0], [1], [0, 0, 1, 1], [], []>} : vector<16x32xf32>, vector<32x32xf32>, vector<16x32xf32> -> vector<16x32xf32>
    %c0_215 = arith.constant 0 : index
    %c1_216 = arith.constant 1 : index
    %c0_217 = arith.constant 0 : index
    %c0_218 = arith.constant 0 : index
    %432 = vector.load %arg10[%c0_215, %c1_216, %c0_217, %c0_218] : memref<1x2x1x32xf32, #tpu.memory_space<vmem>>, vector<1x1x1x32xf32>
    %433 = vector.shape_cast %432 : vector<1x1x1x32xf32> to vector<1x32xf32>
    %434 = vector.broadcast %433 : vector<1x32xf32> to vector<16x32xf32>
    %435 = arith.addf %431, %434 : vector<16x32xf32>
    %436 = arith.addf %312, %435 : vector<16x32xf32>
    %c0_219 = arith.constant 0 : index
    %c4 = arith.constant 4 : index
    %c0_220 = arith.constant 0 : index
    %c0_221 = arith.constant 0 : index
    %437 = vector.load %arg5[%c0_219, %c4, %c0_220, %c0_221] : memref<1x7x1x32xf32, #tpu.memory_space<vmem>>, vector<1x1x1x32xf32>
    %438 = vector.shape_cast %437 : vector<1x1x1x32xf32> to vector<1x32xf32>
    %c0_222 = arith.constant 0 : index
    %c4_223 = arith.constant 4 : index
    %c0_224 = arith.constant 0 : index
    %c0_225 = arith.constant 0 : index
    %439 = vector.load %arg6[%c0_222, %c4_223, %c0_224, %c0_225] : memref<1x7x1x32xf32, #tpu.memory_space<vmem>>, vector<1x1x1x32xf32>
    %440 = vector.shape_cast %439 : vector<1x1x1x32xf32> to vector<1x32xf32>
    %cst_226 = arith.constant dense<0.000000e+00> : vector<16xf32>
    %441 = vector.multi_reduction <add>, %436, %cst_226 [1] : vector<16x32xf32> to vector<16xf32>
    %442 = vector.shape_cast %441 : vector<16xf32> to vector<16x1xf32>
    %cst_227 = arith.constant 3.200000e+01 : f32
    %443 = vector.broadcast %cst_227 : f32 to vector<16x1xf32>
    %444 = arith.divf %442, %443 : vector<16x1xf32>
    %445 = vector.broadcast %444 : vector<16x1xf32> to vector<16x32xf32>
    %446 = arith.subf %436, %445 : vector<16x32xf32>
    %447 = arith.mulf %446, %446 : vector<16x32xf32>
    %cst_228 = arith.constant dense<0.000000e+00> : vector<16xf32>
    %448 = vector.multi_reduction <add>, %447, %cst_228 [1] : vector<16x32xf32> to vector<16xf32>
    %449 = vector.shape_cast %448 : vector<16xf32> to vector<16x1xf32>
    %cst_229 = arith.constant 3.100000e+01 : f32
    %450 = vector.broadcast %cst_229 : f32 to vector<16x1xf32>
    %451 = arith.divf %449, %450 : vector<16x1xf32>
    %452 = math.sqrt %451 : vector<16x1xf32>
    %cst_230 = arith.constant 9.99999997E-7 : f32
    %453 = vector.broadcast %cst_230 : f32 to vector<16x1xf32>
    %454 = arith.addf %452, %453 : vector<16x1xf32>
    %455 = tpu.reciprocal %454 {approx = true} : vector<16x1xf32> -> vector<16x1xf32>
    %456 = vector.broadcast %444 : vector<16x1xf32> to vector<16x32xf32>
    %457 = arith.subf %436, %456 : vector<16x32xf32>
    %458 = vector.broadcast %438 : vector<1x32xf32> to vector<16x32xf32>
    %459 = arith.mulf %458, %457 : vector<16x32xf32>
    %460 = vector.broadcast %455 : vector<16x1xf32> to vector<16x32xf32>
    %461 = arith.mulf %459, %460 : vector<16x32xf32>
    %462 = vector.broadcast %440 : vector<1x32xf32> to vector<16x32xf32>
    %463 = arith.addf %461, %462 : vector<16x32xf32>
    %c0_231 = arith.constant 0 : index
    %c1_232 = arith.constant 1 : index
    %c0_233 = arith.constant 0 : index
    %c0_234 = arith.constant 0 : index
    %464 = vector.load %arg11[%c0_231, %c1_232, %c0_233, %c0_234] : memref<1x2x32x32xf32, #tpu.memory_space<vmem>>, vector<1x1x32x32xf32>
    %465 = vector.shape_cast %464 : vector<1x1x32x32xf32> to vector<32x32xf32>
    %cst_235 = arith.constant dense<0.000000e+00> : vector<16x32xf32>
    %466 = tpu.matmul %463, %465, %cst_235 {dimension_numbers = #tpu.dot_dimension_numbers<[1], [0], [0], [1], [0, 0, 1, 1], [], []>} : vector<16x32xf32>, vector<32x32xf32>, vector<16x32xf32> -> vector<16x32xf32>
    %c0_236 = arith.constant 0 : index
    %c1_237 = arith.constant 1 : index
    %c0_238 = arith.constant 0 : index
    %c0_239 = arith.constant 0 : index
    %467 = vector.load %arg12[%c0_236, %c1_237, %c0_238, %c0_239] : memref<1x2x1x32xf32, #tpu.memory_space<vmem>>, vector<1x1x1x32xf32>
    %468 = vector.shape_cast %467 : vector<1x1x1x32xf32> to vector<1x32xf32>
    %469 = vector.broadcast %468 : vector<1x32xf32> to vector<16x32xf32>
    %470 = arith.addf %466, %469 : vector<16x32xf32>
    %471 = vector.shape_cast %470 : vector<16x32xf32> to vector<2x8x32xf32>
    %c0_240 = arith.constant 0 : index
    %c1_241 = arith.constant 1 : index
    %c0_242 = arith.constant 0 : index
    %c0_243 = arith.constant 0 : index
    %472 = vector.load %arg13[%c0_240, %c1_241, %c0_242, %c0_243] : memref<1x2x32x64xf32, #tpu.memory_space<vmem>>, vector<1x1x32x64xf32>
    %473 = vector.shape_cast %472 : vector<1x1x32x64xf32> to vector<32x64xf32>
    %cst_244 = arith.constant dense<0.000000e+00> : vector<16x64xf32>
    %474 = tpu.matmul %5, %473, %cst_244 {dimension_numbers = #tpu.dot_dimension_numbers<[1], [0], [0], [1], [0, 0, 1, 1], [], []>} : vector<16x32xf32>, vector<32x64xf32>, vector<16x64xf32> -> vector<16x64xf32>
    %c0_245 = arith.constant 0 : index
    %c1_246 = arith.constant 1 : index
    %c0_247 = arith.constant 0 : index
    %c0_248 = arith.constant 0 : index
    %475 = vector.load %arg14[%c0_245, %c1_246, %c0_247, %c0_248] : memref<1x2x1x64xf32, #tpu.memory_space<vmem>>, vector<1x1x1x64xf32>
    %476 = vector.shape_cast %475 : vector<1x1x1x64xf32> to vector<1x64xf32>
    %477 = vector.broadcast %476 : vector<1x64xf32> to vector<16x64xf32>
    %478 = arith.addf %474, %477 : vector<16x64xf32>
    %479 = vector.shape_cast %478 : vector<16x64xf32> to vector<2x8x64xf32>
    %480 = vector.extract_strided_slice %479 {offsets = [0, 0, 0], sizes = [2, 8, 32], strides = [1, 1, 1]} : vector<2x8x64xf32> to vector<2x8x32xf32>
    %481 = vector.extract_strided_slice %479 {offsets = [0, 0, 32], sizes = [2, 8, 32], strides = [1, 1, 1]} : vector<2x8x64xf32> to vector<2x8x32xf32>
    %482 = vector.extract_strided_slice %471 {offsets = [0, 0, 0], sizes = [2, 8, 8], strides = [1, 1, 1]} : vector<2x8x32xf32> to vector<2x8x8xf32>
    %483 = vector.extract_strided_slice %480 {offsets = [0, 0, 0], sizes = [2, 8, 8], strides = [1, 1, 1]} : vector<2x8x32xf32> to vector<2x8x8xf32>
    %484 = vector.extract_strided_slice %481 {offsets = [0, 0, 0], sizes = [2, 8, 8], strides = [1, 1, 1]} : vector<2x8x32xf32> to vector<2x8x8xf32>
    "tpu.trace_start"() <{level = 10 : i32, message = "bqd,bkd->bqk"}> : () -> ()
    %cst_249 = arith.constant dense<0.000000e+00> : vector<2x8x8xf32>
    %485 = tpu.matmul %482, %483, %cst_249 {dimension_numbers = #tpu.dot_dimension_numbers<[2], [2], [1], [1], [0, 0, 0, 1, 1, 1], [0], [0]>} : vector<2x8x8xf32>, vector<2x8x8xf32>, vector<2x8x8xf32> -> vector<2x8x8xf32>
    "tpu.trace_stop"() : () -> ()
    %cst_250 = arith.constant 0.353553385 : f32
    %486 = vector.broadcast %cst_250 : f32 to vector<2x8x8xf32>
    %487 = arith.mulf %485, %486 : vector<2x8x8xf32>
    %cst_251 = arith.constant -1.000000e+09 : f32
    %488 = vector.broadcast %cst_251 : f32 to vector<2x8x8xf32>
    %489 = arith.select %13, %487, %488 : vector<2x8x8xi1>, vector<2x8x8xf32>
    %cst_252 = arith.constant dense<0xFF800000> : vector<2x8xf32>
    %490 = vector.multi_reduction <maximumf>, %489, %cst_252 [2] : vector<2x8x8xf32> to vector<2x8xf32>
    %491 = vector.shape_cast %490 : vector<2x8xf32> to vector<2x8x1xf32>
    %492 = vector.broadcast %491 : vector<2x8x1xf32> to vector<2x8x8xf32>
    %493 = arith.subf %489, %492 : vector<2x8x8xf32>
    %494 = math.exp %493 : vector<2x8x8xf32>
    %cst_253 = arith.constant dense<0.000000e+00> : vector<2x8xf32>
    %495 = vector.multi_reduction <add>, %494, %cst_253 [2] : vector<2x8x8xf32> to vector<2x8xf32>
    %496 = vector.shape_cast %495 : vector<2x8xf32> to vector<2x8x1xf32>
    %497 = tpu.reciprocal %496 {approx = true} : vector<2x8x1xf32> -> vector<2x8x1xf32>
    %498 = vector.broadcast %497 : vector<2x8x1xf32> to vector<2x8x8xf32>
    %499 = arith.mulf %494, %498 : vector<2x8x8xf32>
    "tpu.trace_start"() <{level = 10 : i32, message = "bqk,bkd->bqd"}> : () -> ()
    %cst_254 = arith.constant dense<0.000000e+00> : vector<2x8x8xf32>
    %500 = tpu.matmul %499, %484, %cst_254 {dimension_numbers = #tpu.dot_dimension_numbers<[2], [1], [1], [2], [0, 0, 0, 1, 1, 2], [0], [0]>} : vector<2x8x8xf32>, vector<2x8x8xf32>, vector<2x8x8xf32> -> vector<2x8x8xf32>
    "tpu.trace_stop"() : () -> ()
    %501 = vector.extract_strided_slice %471 {offsets = [0, 0, 8], sizes = [2, 8, 8], strides = [1, 1, 1]} : vector<2x8x32xf32> to vector<2x8x8xf32>
    %502 = vector.extract_strided_slice %480 {offsets = [0, 0, 8], sizes = [2, 8, 8], strides = [1, 1, 1]} : vector<2x8x32xf32> to vector<2x8x8xf32>
    %503 = vector.extract_strided_slice %481 {offsets = [0, 0, 8], sizes = [2, 8, 8], strides = [1, 1, 1]} : vector<2x8x32xf32> to vector<2x8x8xf32>
    "tpu.trace_start"() <{level = 10 : i32, message = "bqd,bkd->bqk"}> : () -> ()
    %cst_255 = arith.constant dense<0.000000e+00> : vector<2x8x8xf32>
    %504 = tpu.matmul %501, %502, %cst_255 {dimension_numbers = #tpu.dot_dimension_numbers<[2], [2], [1], [1], [0, 0, 0, 1, 1, 1], [0], [0]>} : vector<2x8x8xf32>, vector<2x8x8xf32>, vector<2x8x8xf32> -> vector<2x8x8xf32>
    "tpu.trace_stop"() : () -> ()
    %cst_256 = arith.constant 0.353553385 : f32
    %505 = vector.broadcast %cst_256 : f32 to vector<2x8x8xf32>
    %506 = arith.mulf %504, %505 : vector<2x8x8xf32>
    %cst_257 = arith.constant -1.000000e+09 : f32
    %507 = vector.broadcast %cst_257 : f32 to vector<2x8x8xf32>
    %508 = arith.select %13, %506, %507 : vector<2x8x8xi1>, vector<2x8x8xf32>
    %cst_258 = arith.constant dense<0xFF800000> : vector<2x8xf32>
    %509 = vector.multi_reduction <maximumf>, %508, %cst_258 [2] : vector<2x8x8xf32> to vector<2x8xf32>
    %510 = vector.shape_cast %509 : vector<2x8xf32> to vector<2x8x1xf32>
    %511 = vector.broadcast %510 : vector<2x8x1xf32> to vector<2x8x8xf32>
    %512 = arith.subf %508, %511 : vector<2x8x8xf32>
    %513 = math.exp %512 : vector<2x8x8xf32>
    %cst_259 = arith.constant dense<0.000000e+00> : vector<2x8xf32>
    %514 = vector.multi_reduction <add>, %513, %cst_259 [2] : vector<2x8x8xf32> to vector<2x8xf32>
    %515 = vector.shape_cast %514 : vector<2x8xf32> to vector<2x8x1xf32>
    %516 = tpu.reciprocal %515 {approx = true} : vector<2x8x1xf32> -> vector<2x8x1xf32>
    %517 = vector.broadcast %516 : vector<2x8x1xf32> to vector<2x8x8xf32>
    %518 = arith.mulf %513, %517 : vector<2x8x8xf32>
    "tpu.trace_start"() <{level = 10 : i32, message = "bqk,bkd->bqd"}> : () -> ()
    %cst_260 = arith.constant dense<0.000000e+00> : vector<2x8x8xf32>
    %519 = tpu.matmul %518, %503, %cst_260 {dimension_numbers = #tpu.dot_dimension_numbers<[2], [1], [1], [2], [0, 0, 0, 1, 1, 2], [0], [0]>} : vector<2x8x8xf32>, vector<2x8x8xf32>, vector<2x8x8xf32> -> vector<2x8x8xf32>
    "tpu.trace_stop"() : () -> ()
    %520 = vector.extract_strided_slice %471 {offsets = [0, 0, 16], sizes = [2, 8, 8], strides = [1, 1, 1]} : vector<2x8x32xf32> to vector<2x8x8xf32>
    %521 = vector.extract_strided_slice %480 {offsets = [0, 0, 16], sizes = [2, 8, 8], strides = [1, 1, 1]} : vector<2x8x32xf32> to vector<2x8x8xf32>
    %522 = vector.extract_strided_slice %481 {offsets = [0, 0, 16], sizes = [2, 8, 8], strides = [1, 1, 1]} : vector<2x8x32xf32> to vector<2x8x8xf32>
    "tpu.trace_start"() <{level = 10 : i32, message = "bqd,bkd->bqk"}> : () -> ()
    %cst_261 = arith.constant dense<0.000000e+00> : vector<2x8x8xf32>
    %523 = tpu.matmul %520, %521, %cst_261 {dimension_numbers = #tpu.dot_dimension_numbers<[2], [2], [1], [1], [0, 0, 0, 1, 1, 1], [0], [0]>} : vector<2x8x8xf32>, vector<2x8x8xf32>, vector<2x8x8xf32> -> vector<2x8x8xf32>
    "tpu.trace_stop"() : () -> ()
    %cst_262 = arith.constant 0.353553385 : f32
    %524 = vector.broadcast %cst_262 : f32 to vector<2x8x8xf32>
    %525 = arith.mulf %523, %524 : vector<2x8x8xf32>
    %cst_263 = arith.constant -1.000000e+09 : f32
    %526 = vector.broadcast %cst_263 : f32 to vector<2x8x8xf32>
    %527 = arith.select %13, %525, %526 : vector<2x8x8xi1>, vector<2x8x8xf32>
    %cst_264 = arith.constant dense<0xFF800000> : vector<2x8xf32>
    %528 = vector.multi_reduction <maximumf>, %527, %cst_264 [2] : vector<2x8x8xf32> to vector<2x8xf32>
    %529 = vector.shape_cast %528 : vector<2x8xf32> to vector<2x8x1xf32>
    %530 = vector.broadcast %529 : vector<2x8x1xf32> to vector<2x8x8xf32>
    %531 = arith.subf %527, %530 : vector<2x8x8xf32>
    %532 = math.exp %531 : vector<2x8x8xf32>
    %cst_265 = arith.constant dense<0.000000e+00> : vector<2x8xf32>
    %533 = vector.multi_reduction <add>, %532, %cst_265 [2] : vector<2x8x8xf32> to vector<2x8xf32>
    %534 = vector.shape_cast %533 : vector<2x8xf32> to vector<2x8x1xf32>
    %535 = tpu.reciprocal %534 {approx = true} : vector<2x8x1xf32> -> vector<2x8x1xf32>
    %536 = vector.broadcast %535 : vector<2x8x1xf32> to vector<2x8x8xf32>
    %537 = arith.mulf %532, %536 : vector<2x8x8xf32>
    "tpu.trace_start"() <{level = 10 : i32, message = "bqk,bkd->bqd"}> : () -> ()
    %cst_266 = arith.constant dense<0.000000e+00> : vector<2x8x8xf32>
    %538 = tpu.matmul %537, %522, %cst_266 {dimension_numbers = #tpu.dot_dimension_numbers<[2], [1], [1], [2], [0, 0, 0, 1, 1, 2], [0], [0]>} : vector<2x8x8xf32>, vector<2x8x8xf32>, vector<2x8x8xf32> -> vector<2x8x8xf32>
    "tpu.trace_stop"() : () -> ()
    %539 = vector.extract_strided_slice %471 {offsets = [0, 0, 24], sizes = [2, 8, 8], strides = [1, 1, 1]} : vector<2x8x32xf32> to vector<2x8x8xf32>
    %540 = vector.extract_strided_slice %480 {offsets = [0, 0, 24], sizes = [2, 8, 8], strides = [1, 1, 1]} : vector<2x8x32xf32> to vector<2x8x8xf32>
    %541 = vector.extract_strided_slice %481 {offsets = [0, 0, 24], sizes = [2, 8, 8], strides = [1, 1, 1]} : vector<2x8x32xf32> to vector<2x8x8xf32>
    "tpu.trace_start"() <{level = 10 : i32, message = "bqd,bkd->bqk"}> : () -> ()
    %cst_267 = arith.constant dense<0.000000e+00> : vector<2x8x8xf32>
    %542 = tpu.matmul %539, %540, %cst_267 {dimension_numbers = #tpu.dot_dimension_numbers<[2], [2], [1], [1], [0, 0, 0, 1, 1, 1], [0], [0]>} : vector<2x8x8xf32>, vector<2x8x8xf32>, vector<2x8x8xf32> -> vector<2x8x8xf32>
    "tpu.trace_stop"() : () -> ()
    %cst_268 = arith.constant 0.353553385 : f32
    %543 = vector.broadcast %cst_268 : f32 to vector<2x8x8xf32>
    %544 = arith.mulf %542, %543 : vector<2x8x8xf32>
    %cst_269 = arith.constant -1.000000e+09 : f32
    %545 = vector.broadcast %cst_269 : f32 to vector<2x8x8xf32>
    %546 = arith.select %13, %544, %545 : vector<2x8x8xi1>, vector<2x8x8xf32>
    %cst_270 = arith.constant dense<0xFF800000> : vector<2x8xf32>
    %547 = vector.multi_reduction <maximumf>, %546, %cst_270 [2] : vector<2x8x8xf32> to vector<2x8xf32>
    %548 = vector.shape_cast %547 : vector<2x8xf32> to vector<2x8x1xf32>
    %549 = vector.broadcast %548 : vector<2x8x1xf32> to vector<2x8x8xf32>
    %550 = arith.subf %546, %549 : vector<2x8x8xf32>
    %551 = math.exp %550 : vector<2x8x8xf32>
    %cst_271 = arith.constant dense<0.000000e+00> : vector<2x8xf32>
    %552 = vector.multi_reduction <add>, %551, %cst_271 [2] : vector<2x8x8xf32> to vector<2x8xf32>
    %553 = vector.shape_cast %552 : vector<2x8xf32> to vector<2x8x1xf32>
    %554 = tpu.reciprocal %553 {approx = true} : vector<2x8x1xf32> -> vector<2x8x1xf32>
    %555 = vector.broadcast %554 : vector<2x8x1xf32> to vector<2x8x8xf32>
    %556 = arith.mulf %551, %555 : vector<2x8x8xf32>
    "tpu.trace_start"() <{level = 10 : i32, message = "bqk,bkd->bqd"}> : () -> ()
    %cst_272 = arith.constant dense<0.000000e+00> : vector<2x8x8xf32>
    %557 = tpu.matmul %556, %541, %cst_272 {dimension_numbers = #tpu.dot_dimension_numbers<[2], [1], [1], [2], [0, 0, 0, 1, 1, 2], [0], [0]>} : vector<2x8x8xf32>, vector<2x8x8xf32>, vector<2x8x8xf32> -> vector<2x8x8xf32>
    "tpu.trace_stop"() : () -> ()
    %558 = tpu.concatenate %500, %519, %538, %557 in 2 : vector<2x8x8xf32>, vector<2x8x8xf32>, vector<2x8x8xf32>, vector<2x8x8xf32> -> vector<2x8x32xf32>
    %559 = vector.shape_cast %558 : vector<2x8x32xf32> to vector<16x32xf32>
    %c0_273 = arith.constant 0 : index
    %c1_274 = arith.constant 1 : index
    %c0_275 = arith.constant 0 : index
    %c0_276 = arith.constant 0 : index
    %560 = vector.load %arg15[%c0_273, %c1_274, %c0_275, %c0_276] : memref<1x2x32x32xf32, #tpu.memory_space<vmem>>, vector<1x1x32x32xf32>
    %561 = vector.shape_cast %560 : vector<1x1x32x32xf32> to vector<32x32xf32>
    %cst_277 = arith.constant dense<0.000000e+00> : vector<16x32xf32>
    %562 = tpu.matmul %559, %561, %cst_277 {dimension_numbers = #tpu.dot_dimension_numbers<[1], [0], [0], [1], [0, 0, 1, 1], [], []>} : vector<16x32xf32>, vector<32x32xf32>, vector<16x32xf32> -> vector<16x32xf32>
    %c0_278 = arith.constant 0 : index
    %c1_279 = arith.constant 1 : index
    %c0_280 = arith.constant 0 : index
    %c0_281 = arith.constant 0 : index
    %563 = vector.load %arg16[%c0_278, %c1_279, %c0_280, %c0_281] : memref<1x2x1x32xf32, #tpu.memory_space<vmem>>, vector<1x1x1x32xf32>
    %564 = vector.shape_cast %563 : vector<1x1x1x32xf32> to vector<1x32xf32>
    %565 = vector.broadcast %564 : vector<1x32xf32> to vector<16x32xf32>
    %566 = arith.addf %562, %565 : vector<16x32xf32>
    %567 = arith.addf %436, %566 : vector<16x32xf32>
    %c0_282 = arith.constant 0 : index
    %c5 = arith.constant 5 : index
    %c0_283 = arith.constant 0 : index
    %c0_284 = arith.constant 0 : index
    %568 = vector.load %arg5[%c0_282, %c5, %c0_283, %c0_284] : memref<1x7x1x32xf32, #tpu.memory_space<vmem>>, vector<1x1x1x32xf32>
    %569 = vector.shape_cast %568 : vector<1x1x1x32xf32> to vector<1x32xf32>
    %c0_285 = arith.constant 0 : index
    %c5_286 = arith.constant 5 : index
    %c0_287 = arith.constant 0 : index
    %c0_288 = arith.constant 0 : index
    %570 = vector.load %arg6[%c0_285, %c5_286, %c0_287, %c0_288] : memref<1x7x1x32xf32, #tpu.memory_space<vmem>>, vector<1x1x1x32xf32>
    %571 = vector.shape_cast %570 : vector<1x1x1x32xf32> to vector<1x32xf32>
    %cst_289 = arith.constant dense<0.000000e+00> : vector<16xf32>
    %572 = vector.multi_reduction <add>, %567, %cst_289 [1] : vector<16x32xf32> to vector<16xf32>
    %573 = vector.shape_cast %572 : vector<16xf32> to vector<16x1xf32>
    %cst_290 = arith.constant 3.200000e+01 : f32
    %574 = vector.broadcast %cst_290 : f32 to vector<16x1xf32>
    %575 = arith.divf %573, %574 : vector<16x1xf32>
    %576 = vector.broadcast %575 : vector<16x1xf32> to vector<16x32xf32>
    %577 = arith.subf %567, %576 : vector<16x32xf32>
    %578 = arith.mulf %577, %577 : vector<16x32xf32>
    %cst_291 = arith.constant dense<0.000000e+00> : vector<16xf32>
    %579 = vector.multi_reduction <add>, %578, %cst_291 [1] : vector<16x32xf32> to vector<16xf32>
    %580 = vector.shape_cast %579 : vector<16xf32> to vector<16x1xf32>
    %cst_292 = arith.constant 3.100000e+01 : f32
    %581 = vector.broadcast %cst_292 : f32 to vector<16x1xf32>
    %582 = arith.divf %580, %581 : vector<16x1xf32>
    %583 = math.sqrt %582 : vector<16x1xf32>
    %cst_293 = arith.constant 9.99999997E-7 : f32
    %584 = vector.broadcast %cst_293 : f32 to vector<16x1xf32>
    %585 = arith.addf %583, %584 : vector<16x1xf32>
    %586 = tpu.reciprocal %585 {approx = true} : vector<16x1xf32> -> vector<16x1xf32>
    %587 = vector.broadcast %575 : vector<16x1xf32> to vector<16x32xf32>
    %588 = arith.subf %567, %587 : vector<16x32xf32>
    %589 = vector.broadcast %569 : vector<1x32xf32> to vector<16x32xf32>
    %590 = arith.mulf %589, %588 : vector<16x32xf32>
    %591 = vector.broadcast %586 : vector<16x1xf32> to vector<16x32xf32>
    %592 = arith.mulf %590, %591 : vector<16x32xf32>
    %593 = vector.broadcast %571 : vector<1x32xf32> to vector<16x32xf32>
    %594 = arith.addf %592, %593 : vector<16x32xf32>
    %c0_294 = arith.constant 0 : index
    %c1_295 = arith.constant 1 : index
    %c0_296 = arith.constant 0 : index
    %c0_297 = arith.constant 0 : index
    %595 = vector.load %arg17[%c0_294, %c1_295, %c0_296, %c0_297] : memref<1x2x32x64xf32, #tpu.memory_space<vmem>>, vector<1x1x32x64xf32>
    %596 = vector.shape_cast %595 : vector<1x1x32x64xf32> to vector<32x64xf32>
    %cst_298 = arith.constant dense<0.000000e+00> : vector<16x64xf32>
    %597 = tpu.matmul %594, %596, %cst_298 {dimension_numbers = #tpu.dot_dimension_numbers<[1], [0], [0], [1], [0, 0, 1, 1], [], []>} : vector<16x32xf32>, vector<32x64xf32>, vector<16x64xf32> -> vector<16x64xf32>
    %c0_299 = arith.constant 0 : index
    %c1_300 = arith.constant 1 : index
    %c0_301 = arith.constant 0 : index
    %c0_302 = arith.constant 0 : index
    %598 = vector.load %arg18[%c0_299, %c1_300, %c0_301, %c0_302] : memref<1x2x1x64xf32, #tpu.memory_space<vmem>>, vector<1x1x1x64xf32>
    %599 = vector.shape_cast %598 : vector<1x1x1x64xf32> to vector<1x64xf32>
    %600 = vector.broadcast %599 : vector<1x64xf32> to vector<16x64xf32>
    %601 = arith.addf %597, %600 : vector<16x64xf32>
    %cst_303 = arith.constant 0.000000e+00 : f32
    %602 = vector.broadcast %cst_303 : f32 to vector<16x64xf32>
    %603 = arith.maximumf %601, %602 : vector<16x64xf32>
    %c0_304 = arith.constant 0 : index
    %c1_305 = arith.constant 1 : index
    %c0_306 = arith.constant 0 : index
    %c0_307 = arith.constant 0 : index
    %604 = vector.load %arg19[%c0_304, %c1_305, %c0_306, %c0_307] : memref<1x2x64x32xf32, #tpu.memory_space<vmem>>, vector<1x1x64x32xf32>
    %605 = vector.shape_cast %604 : vector<1x1x64x32xf32> to vector<64x32xf32>
    %cst_308 = arith.constant dense<0.000000e+00> : vector<16x32xf32>
    %606 = tpu.matmul %603, %605, %cst_308 {dimension_numbers = #tpu.dot_dimension_numbers<[1], [0], [0], [1], [0, 0, 1, 1], [], []>} : vector<16x64xf32>, vector<64x32xf32>, vector<16x32xf32> -> vector<16x32xf32>
    %c0_309 = arith.constant 0 : index
    %c1_310 = arith.constant 1 : index
    %c0_311 = arith.constant 0 : index
    %c0_312 = arith.constant 0 : index
    %607 = vector.load %arg20[%c0_309, %c1_310, %c0_311, %c0_312] : memref<1x2x1x32xf32, #tpu.memory_space<vmem>>, vector<1x1x1x32xf32>
    %608 = vector.shape_cast %607 : vector<1x1x1x32xf32> to vector<1x32xf32>
    %609 = vector.broadcast %608 : vector<1x32xf32> to vector<16x32xf32>
    %610 = arith.addf %606, %609 : vector<16x32xf32>
    %611 = arith.addf %567, %610 : vector<16x32xf32>
    %c0_313 = arith.constant 0 : index
    %c6 = arith.constant 6 : index
    %c0_314 = arith.constant 0 : index
    %c0_315 = arith.constant 0 : index
    %612 = vector.load %arg5[%c0_313, %c6, %c0_314, %c0_315] : memref<1x7x1x32xf32, #tpu.memory_space<vmem>>, vector<1x1x1x32xf32>
    %613 = vector.shape_cast %612 : vector<1x1x1x32xf32> to vector<1x32xf32>
    %c0_316 = arith.constant 0 : index
    %c6_317 = arith.constant 6 : index
    %c0_318 = arith.constant 0 : index
    %c0_319 = arith.constant 0 : index
    %614 = vector.load %arg6[%c0_316, %c6_317, %c0_318, %c0_319] : memref<1x7x1x32xf32, #tpu.memory_space<vmem>>, vector<1x1x1x32xf32>
    %615 = vector.shape_cast %614 : vector<1x1x1x32xf32> to vector<1x32xf32>
    %cst_320 = arith.constant dense<0.000000e+00> : vector<16xf32>
    %616 = vector.multi_reduction <add>, %611, %cst_320 [1] : vector<16x32xf32> to vector<16xf32>
    %617 = vector.shape_cast %616 : vector<16xf32> to vector<16x1xf32>
    %cst_321 = arith.constant 3.200000e+01 : f32
    %618 = vector.broadcast %cst_321 : f32 to vector<16x1xf32>
    %619 = arith.divf %617, %618 : vector<16x1xf32>
    %620 = vector.broadcast %619 : vector<16x1xf32> to vector<16x32xf32>
    %621 = arith.subf %611, %620 : vector<16x32xf32>
    %622 = arith.mulf %621, %621 : vector<16x32xf32>
    %cst_322 = arith.constant dense<0.000000e+00> : vector<16xf32>
    %623 = vector.multi_reduction <add>, %622, %cst_322 [1] : vector<16x32xf32> to vector<16xf32>
    %624 = vector.shape_cast %623 : vector<16xf32> to vector<16x1xf32>
    %cst_323 = arith.constant 3.100000e+01 : f32
    %625 = vector.broadcast %cst_323 : f32 to vector<16x1xf32>
    %626 = arith.divf %624, %625 : vector<16x1xf32>
    %627 = math.sqrt %626 : vector<16x1xf32>
    %cst_324 = arith.constant 9.99999997E-7 : f32
    %628 = vector.broadcast %cst_324 : f32 to vector<16x1xf32>
    %629 = arith.addf %627, %628 : vector<16x1xf32>
    %630 = tpu.reciprocal %629 {approx = true} : vector<16x1xf32> -> vector<16x1xf32>
    %631 = vector.broadcast %619 : vector<16x1xf32> to vector<16x32xf32>
    %632 = arith.subf %611, %631 : vector<16x32xf32>
    %633 = vector.broadcast %613 : vector<1x32xf32> to vector<16x32xf32>
    %634 = arith.mulf %633, %632 : vector<16x32xf32>
    %635 = vector.broadcast %630 : vector<16x1xf32> to vector<16x32xf32>
    %636 = arith.mulf %634, %635 : vector<16x32xf32>
    %637 = vector.broadcast %615 : vector<1x32xf32> to vector<16x32xf32>
    %638 = arith.addf %636, %637 : vector<16x32xf32>
    %639 = vector.shape_cast %638 : vector<16x32xf32> to vector<2x8x32xf32>
    %c0_325 = arith.constant 0 : index
    %c0_326 = arith.constant 0 : index
    %c0_327 = arith.constant 0 : index
    %c0_328 = arith.constant 0 : index
    %640 = vector.load %arg21[%c0_325, %c0_326, %c0_327, %c0_328] : memref<1x2x8x32xf32, #tpu.memory_space<vmem>>, vector<1x2x8x32xf32>
    %641 = vector.shape_cast %640 : vector<1x2x8x32xf32> to vector<2x8x32xf32>
    %642 = vector.shape_cast %639 : vector<2x8x32xf32> to vector<1x2x8x32xf32>
    tpu.vector_store %arg21[%c0_325, %c0_326, %c0_327, %c0_328], %642 {strides = array<i32>} : memref<1x2x8x32xf32, #tpu.memory_space<vmem>>, vector<1x2x8x32xf32>,
    return
  }
  func.func @transform_0(%arg0: i32) -> (i32, i32, i32, i32) {
    %c0_i32 = arith.constant 0 : i32
    %c0_i32_0 = arith.constant 0 : i32
    %c0_i32_1 = arith.constant 0 : i32
    %c0_i32_2 = arith.constant 0 : i32
    return %arg0, %c0_i32, %c0_i32_0, %c0_i32_1 : i32, i32, i32, i32
  }
  func.func @transform_1(%arg0: i32) -> (i32, i32, i32, i32) {
    %c0_i32 = arith.constant 0 : i32
    %c0_i32_0 = arith.constant 0 : i32
    %c0_i32_1 = arith.constant 0 : i32
    %c0_i32_2 = arith.constant 0 : i32
    return %arg0, %c0_i32, %c0_i32_0, %c0_i32_1 : i32, i32, i32, i32
  }
  func.func @transform_2(%arg0: i32) -> (i32, i32, i32, i32) {
    %c0_i32 = arith.constant 0 : i32
    %c0_i32_0 = arith.constant 0 : i32
    %c0_i32_1 = arith.constant 0 : i32
    %c0_i32_2 = arith.constant 0 : i32
    return %arg0, %c0_i32, %c0_i32_0, %c0_i32_1 : i32, i32, i32, i32
  }
  func.func @transform_3(%arg0: i32) -> (i32, i32, i32, i32) {
    %c0_i32 = arith.constant 0 : i32
    %c0_i32_0 = arith.constant 0 : i32
    %c0_i32_1 = arith.constant 0 : i32
    %c0_i32_2 = arith.constant 0 : i32
    return %arg0, %c0_i32, %c0_i32_0, %c0_i32_1 : i32, i32, i32, i32
  }
  func.func @transform_4(%arg0: i32) -> (i32, i32, i32, i32) {
    %c0_i32 = arith.constant 0 : i32
    %c0_i32_0 = arith.constant 0 : i32
    %c0_i32_1 = arith.constant 0 : i32
    %c0_i32_2 = arith.constant 0 : i32
    return %arg0, %c0_i32, %c0_i32_0, %c0_i32_1 : i32, i32, i32, i32
  }
  func.func @transform_5(%arg0: i32) -> (i32, i32, i32, i32) {
    %c0_i32 = arith.constant 0 : i32
    %c0_i32_0 = arith.constant 0 : i32
    %c0_i32_1 = arith.constant 0 : i32
    %c0_i32_2 = arith.constant 0 : i32
    return %arg0, %c0_i32, %c0_i32_0, %c0_i32_1 : i32, i32, i32, i32
  }
  func.func @transform_6(%arg0: i32) -> (i32, i32, i32, i32) {
    %c0_i32 = arith.constant 0 : i32
    %c0_i32_0 = arith.constant 0 : i32
    %c0_i32_1 = arith.constant 0 : i32
    %c0_i32_2 = arith.constant 0 : i32
    return %arg0, %c0_i32, %c0_i32_0, %c0_i32_1 : i32, i32, i32, i32
  }
  func.func @transform_7(%arg0: i32) -> (i32, i32, i32, i32) {
    %c0_i32 = arith.constant 0 : i32
    %c0_i32_0 = arith.constant 0 : i32
    %c0_i32_1 = arith.constant 0 : i32
    %c0_i32_2 = arith.constant 0 : i32
    return %arg0, %c0_i32, %c0_i32_0, %c0_i32_1 : i32, i32, i32, i32
  }
  func.func @transform_8(%arg0: i32) -> (i32, i32, i32, i32) {
    %c0_i32 = arith.constant 0 : i32
    %c0_i32_0 = arith.constant 0 : i32
    %c0_i32_1 = arith.constant 0 : i32
    %c0_i32_2 = arith.constant 0 : i32
    return %arg0, %c0_i32, %c0_i32_0, %c0_i32_1 : i32, i32, i32, i32
  }
  func.func @transform_9(%arg0: i32) -> (i32, i32, i32, i32) {
    %c0_i32 = arith.constant 0 : i32
    %c0_i32_0 = arith.constant 0 : i32
    %c0_i32_1 = arith.constant 0 : i32
    %c0_i32_2 = arith.constant 0 : i32
    return %arg0, %c0_i32, %c0_i32_0, %c0_i32_1 : i32, i32, i32, i32
  }
  func.func @transform_10(%arg0: i32) -> (i32, i32, i32, i32) {
    %c0_i32 = arith.constant 0 : i32
    %c0_i32_0 = arith.constant 0 : i32
    %c0_i32_1 = arith.constant 0 : i32
    %c0_i32_2 = arith.constant 0 : i32
    return %arg0, %c0_i32, %c0_i32_0, %c0_i32_1 : i32, i32, i32, i32
  }
  func.func @transform_11(%arg0: i32) -> (i32, i32, i32, i32) {
    %c0_i32 = arith.constant 0 : i32
    %c0_i32_0 = arith.constant 0 : i32
    %c0_i32_1 = arith.constant 0 : i32
    %c0_i32_2 = arith.constant 0 : i32
    return %arg0, %c0_i32, %c0_i32_0, %c0_i32_1 : i32, i32, i32, i32
  }
  func.func @transform_12(%arg0: i32) -> (i32, i32, i32, i32) {
    %c0_i32 = arith.constant 0 : i32
    %c0_i32_0 = arith.constant 0 : i32
    %c0_i32_1 = arith.constant 0 : i32
    %c0_i32_2 = arith.constant 0 : i32
    return %arg0, %c0_i32, %c0_i32_0, %c0_i32_1 : i32, i32, i32, i32
  }
  func.func @transform_13(%arg0: i32) -> (i32, i32, i32, i32) {
    %c0_i32 = arith.constant 0 : i32
    %c0_i32_0 = arith.constant 0 : i32
    %c0_i32_1 = arith.constant 0 : i32
    %c0_i32_2 = arith.constant 0 : i32
    return %arg0, %c0_i32, %c0_i32_0, %c0_i32_1 : i32, i32, i32, i32
  }
  func.func @transform_14(%arg0: i32) -> (i32, i32, i32, i32) {
    %c0_i32 = arith.constant 0 : i32
    %c0_i32_0 = arith.constant 0 : i32
    %c0_i32_1 = arith.constant 0 : i32
    %c0_i32_2 = arith.constant 0 : i32
    return %arg0, %c0_i32, %c0_i32_0, %c0_i32_1 : i32, i32, i32, i32
  }
  func.func @transform_15(%arg0: i32) -> (i32, i32, i32, i32) {
    %c0_i32 = arith.constant 0 : i32
    %c0_i32_0 = arith.constant 0 : i32
    %c0_i32_1 = arith.constant 0 : i32
    %c0_i32_2 = arith.constant 0 : i32
    return %arg0, %c0_i32, %c0_i32_0, %c0_i32_1 : i32, i32, i32, i32
  }
  func.func @transform_16(%arg0: i32) -> (i32, i32, i32, i32) {
    %c0_i32 = arith.constant 0 : i32
    %c0_i32_0 = arith.constant 0 : i32
    %c0_i32_1 = arith.constant 0 : i32
    %c0_i32_2 = arith.constant 0 : i32
    return %arg0, %c0_i32, %c0_i32_0, %c0_i32_1 : i32, i32, i32, i32
  }
  func.func @transform_17(%arg0: i32) -> (i32, i32, i32, i32) {
    %c0_i32 = arith.constant 0 : i32
    %c0_i32_0 = arith.constant 0 : i32
    %c0_i32_1 = arith.constant 0 : i32
    %c0_i32_2 = arith.constant 0 : i32
    return %arg0, %c0_i32, %c0_i32_0, %c0_i32_1 : i32, i32, i32, i32
  }
  func.func @transform_18(%arg0: i32) -> (i32, i32, i32, i32) {
    %c0_i32 = arith.constant 0 : i32
    %c0_i32_0 = arith.constant 0 : i32
    %c0_i32_1 = arith.constant 0 : i32
    %c0_i32_2 = arith.constant 0 : i32
    return %arg0, %c0_i32, %c0_i32_0, %c0_i32_1 : i32, i32, i32, i32
  }
  func.func @transform_19(%arg0: i32) -> (i32, i32, i32, i32) {
    %c0_i32 = arith.constant 0 : i32
    %c0_i32_0 = arith.constant 0 : i32
    %c0_i32_1 = arith.constant 0 : i32
    %c0_i32_2 = arith.constant 0 : i32
    return %arg0, %c0_i32, %c0_i32_0, %c0_i32_1 : i32, i32, i32, i32
  }
  func.func @transform_20(%arg0: i32) -> (i32, i32, i32, i32) {
    %c0_i32 = arith.constant 0 : i32
    %c0_i32_0 = arith.constant 0 : i32
    %c0_i32_1 = arith.constant 0 : i32
    %c0_i32_2 = arith.constant 0 : i32
    return %arg0, %c0_i32, %c0_i32_0, %c0_i32_1 : i32, i32, i32, i32
  }
}

</mosaic_0001>

<llo_original>
// kernel: music_decoder_forward.1
$region0: #{music_decoder_forward.1}
  #allocation0 [shape = 'u32[]', space=smem, size = 0x4, offset = 0x4, fixed_abs, tag = 'smem constant byte address 0x4 - core index']
  #allocation1 [shape = 'u32[144,128]{1,0:T(1,128)}', space=vmem, size = 0x12000, scoped, tag = 'internal scratch']
  %s0 = inlined_call_operand.vmem [shape: f32[4,2,8,32], index: 0, kind: input, shape index: {}]
  %s1 = inlined_call_operand.vmem [shape: f32[4,2,8,32], index: 1, kind: input, shape index: {}]
  %s2 = inlined_call_operand.vmem [shape: f32[4,2,8,8], index: 2, kind: input, shape index: {}]
  %s3 = inlined_call_operand.vmem [shape: f32[4,2,8,8], index: 3, kind: input, shape index: {}]
  %s4 = inlined_call_operand.vmem [shape: f32[4,7,1,32], index: 4, kind: input, shape index: {}]
  %s5 = inlined_call_operand.vmem [shape: f32[4,7,1,32], index: 5, kind: input, shape index: {}]
  %s6 = inlined_call_operand.vmem [shape: f32[4,2,32,96], index: 6, kind: input, shape index: {}]
  %s7 = inlined_call_operand.vmem [shape: f32[4,2,1,96], index: 7, kind: input, shape index: {}]
  %s8 = inlined_call_operand.vmem [shape: f32[4,2,32,32], index: 8, kind: input, shape index: {}]
  %s9 = inlined_call_operand.vmem [shape: f32[4,2,1,32], index: 9, kind: input, shape index: {}]
  %s10 = inlined_call_operand.vmem [shape: f32[4,2,32,32], index: 10, kind: input, shape index: {}]
  %s11 = inlined_call_operand.vmem [shape: f32[4,2,1,32], index: 11, kind: input, shape index: {}]
  %s12 = inlined_call_operand.vmem [shape: f32[4,2,32,64], index: 12, kind: input, shape index: {}]
  %s13 = inlined_call_operand.vmem [shape: f32[4,2,1,64], index: 13, kind: input, shape index: {}]
  %s14 = inlined_call_operand.vmem [shape: f32[4,2,32,32], index: 14, kind: input, shape index: {}]
  %s15 = inlined_call_operand.vmem [shape: f32[4,2,1,32], index: 15, kind: input, shape index: {}]
  %s16 = inlined_call_operand.vmem [shape: f32[4,2,32,64], index: 16, kind: input, shape index: {}]
  %s17 = inlined_call_operand.vmem [shape: f32[4,2,1,64], index: 17, kind: input, shape index: {}]
  %s18 = inlined_call_operand.vmem [shape: f32[4,2,64,32], index: 18, kind: input, shape index: {}]
  %s19 = inlined_call_operand.vmem [shape: f32[4,2,1,32], index: 19, kind: input, shape index: {}]
  %s20 = inlined_call_operand.hbm [shape: f32[4,2,8,32], index: 20, kind: output, shape index: {}]
  %s21 = sld [smem:[#allocation0]]
  $region113: #{music_decoder_forward.1} parent=0
    _
  %s23 = ssub.s32 1, %s21
  %s24 = scalar_select 0, %s23, %s21
  $region1: #{music_decoder_forward.1} parent=0
    #allocation2 [shape = 'u8[16384]{0}', space=vmem, size = 0x4000, scoped, tag = 'output window, operand 0']
    #allocation3 [shape = 's32[2]{0}', space=sflag, size = 0x8, scoped, tag = 'scoped memory for music_decoder_forward.1']
    %25 = vsyncpa [#allocation3], 0
    %s26 = scalar_lea.sflag [#allocation3], 1
    %27 = vsyncpa %s26, 0
    loop: start=0, step=1, limit=6
    $region2: #{music_decoder_forward.1} parent=1 // loop_pre_header
      _
    $region3: #{music_decoder_forward.1} parent=1 // loop_header
      %s29 = sphi 0, %s33
      %p30 = scmp.ge.s32.totalorder %s29, 6
      %s39 = sphi 0, %s41
      %s42 = sphi 0, %s39
      %s43 = sphi 0, %s42
      %s59 = sphi 0, %s43
      %s65 = sphi 0, %s67
      %s68 = sphi 0, %s65
      %s69 = sphi 0, %s68
      %s85 = sphi 0, %s69
      %s91 = sphi 0, %s93
      %s94 = sphi 0, %s91
      %s95 = sphi 0, %s94
      %s111 = sphi 0, %s95
      %s117 = sphi 0, %s119
      %s120 = sphi 0, %s117
      %s121 = sphi 0, %s120
      %s137 = sphi 0, %s121
      %s143 = sphi 0, %s145
      %s146 = sphi 0, %s143
      %s147 = sphi 0, %s146
      %s163 = sphi 0, %s147
      %s169 = sphi 0, %s171
      %s172 = sphi 0, %s169
      %s173 = sphi 0, %s172
      %s189 = sphi 0, %s173
      %s195 = sphi 0, %s197
      %s198 = sphi 0, %s195
      %s199 = sphi 0, %s198
      %s215 = sphi 0, %s199
      %s221 = sphi 0, %s223
      %s224 = sphi 0, %s221
      %s225 = sphi 0, %s224
      %s241 = sphi 0, %s225
      %s247 = sphi 0, %s249
      %s250 = sphi 0, %s247
      %s251 = sphi 0, %s250
      %s267 = sphi 0, %s251
      %s273 = sphi 0, %s275
      %s276 = sphi 0, %s273
      %s277 = sphi 0, %s276
      %s293 = sphi 0, %s277
      %s299 = sphi 0, %s301
      %s302 = sphi 0, %s299
      %s303 = sphi 0, %s302
      %s319 = sphi 0, %s303
      %s325 = sphi 0, %s327
      %s328 = sphi 0, %s325
      %s329 = sphi 0, %s328
      %s345 = sphi 0, %s329
      %s351 = sphi 0, %s353
      %s354 = sphi 0, %s351
      %s355 = sphi 0, %s354
      %s371 = sphi 0, %s355
      %s377 = sphi 0, %s379
      %s380 = sphi 0, %s377
      %s381 = sphi 0, %s380
      %s397 = sphi 0, %s381
      %s403 = sphi 0, %s405
      %s406 = sphi 0, %s403
      %s407 = sphi 0, %s406
      %s423 = sphi 0, %s407
      %s429 = sphi 0, %s431
      %s432 = sphi 0, %s429
      %s433 = sphi 0, %s432
      %s449 = sphi 0, %s433
      %s455 = sphi 0, %s457
      %s458 = sphi 0, %s455
      %s459 = sphi 0, %s458
      %s475 = sphi 0, %s459
      %s481 = sphi 0, %s483
      %s484 = sphi 0, %s481
      %s485 = sphi 0, %s484
      %s501 = sphi 0, %s485
      %s507 = sphi 0, %s509
      %s510 = sphi 0, %s507
      %s511 = sphi 0, %s510
      %s527 = sphi 0, %s511
      %s533 = sphi 0, %s535
      %s536 = sphi 0, %s533
      %s537 = sphi 0, %s536
      %s553 = sphi 0, %s537
      %s559 = sphi 0, %s561
      %s562 = sphi 0, %s559
      %s563 = sphi 0, %s562
      %s579 = sphi 0, %s563
    $region4: #{music_decoder_forward.1} parent=1 // loop_header_branch
      %32 = sbr.rel (%p30) target = $region8
    $region5: #{music_decoder_forward.1} parent=1 // loop_body
      %s34 = ssub.s32 %s29, 1
      %s35 = ssub.s32 %s29, 2
      %s36 = sadd.s32 %s29, 1
      %s37 = ssub.s32 %s29, %s36
      %p38 = scmp.eq.s32.totalorder %s37, 0
      %s40 = sadd.s32 %s39, 1
      %s41 = scalar_select %p38, %s39, %s40
      %p44 = pneg %p38
      %p45 = scmp.eq.s32.totalorder %s29, 3
      %p46 = por %p44, %p45
      %p47 = scmp.ne.s32.totalorder %s39, %s42
      %p48 = scmp.eq.s32.totalorder %s29, 0
      %p49 = por %p47, %p48
      %p50 = scmp.ne.s32.totalorder %s39, %s42
      %p51 = scmp.eq.s32.totalorder %s34, 3
      %p52 = por %p50, %p51
      %p53 = scmp.ne.s32.totalorder %s42, %s43
      %p54 = scmp.eq.s32.totalorder %s34, 0
      %p55 = por %p53, %p54
      %p56 = scmp.ne.s32.totalorder %s42, %s43
      %p57 = scmp.eq.s32.totalorder %s35, 3
      %p58 = por %p56, %p57
      %p60 = scmp.ne.s32.totalorder %s43, %s59
      %p61 = scmp.eq.s32.totalorder %s35, 0
      %p62 = por %p60, %p61
      %s63 = ssub.s32 %s29, %s36
      %p64 = scmp.eq.s32.totalorder %s63, 0
      %s66 = sadd.s32 %s65, 1
      %s67 = scalar_select %p64, %s65, %s66
      %p70 = pneg %p64
      %p71 = scmp.eq.s32.totalorder %s29, 3
      %p72 = por %p70, %p71
      %p73 = scmp.ne.s32.totalorder %s65, %s68
      %p74 = scmp.eq.s32.totalorder %s29, 0
      %p75 = por %p73, %p74
      %p76 = scmp.ne.s32.totalorder %s65, %s68
      %p77 = scmp.eq.s32.totalorder %s34, 3
      %p78 = por %p76, %p77
      %p79 = scmp.ne.s32.totalorder %s68, %s69
      %p80 = scmp.eq.s32.totalorder %s34, 0
      %p81 = por %p79, %p80
      %p82 = scmp.ne.s32.totalorder %s68, %s69
      %p83 = scmp.eq.s32.totalorder %s35, 3
      %p84 = por %p82, %p83
      %p86 = scmp.ne.s32.totalorder %s69, %s85
      %p87 = scmp.eq.s32.totalorder %s35, 0
      %p88 = por %p86, %p87
      %s89 = ssub.s32 %s29, %s36
      %p90 = scmp.eq.s32.totalorder %s89, 0
      %s92 = sadd.s32 %s91, 1
      %s93 = scalar_select %p90, %s91, %s92
      %p96 = pneg %p90
      %p97 = scmp.eq.s32.totalorder %s29, 3
      %p98 = por %p96, %p97
      %p99 = scmp.ne.s32.totalorder %s91, %s94
      %p100 = scmp.eq.s32.totalorder %s29, 0
      %p101 = por %p99, %p100
      %p102 = scmp.ne.s32.totalorder %s91, %s94
      %p103 = scmp.eq.s32.totalorder %s34, 3
      %p104 = por %p102, %p103
      %p105 = scmp.ne.s32.totalorder %s94, %s95
      %p106 = scmp.eq.s32.totalorder %s34, 0
      %p107 = por %p105, %p106
      %p108 = scmp.ne.s32.totalorder %s94, %s95
      %p109 = scmp.eq.s32.totalorder %s35, 3
      %p110 = por %p108, %p109
      %p112 = scmp.ne.s32.totalorder %s95, %s111
      %p113 = scmp.eq.s32.totalorder %s35, 0
      %p114 = por %p112, %p113
      %s115 = ssub.s32 %s29, %s36
      %p116 = scmp.eq.s32.totalorder %s115, 0
      %s118 = sadd.s32 %s117, 1
      %s119 = scalar_select %p116, %s117, %s118
      %p122 = pneg %p116
      %p123 = scmp.eq.s32.totalorder %s29, 3
      %p124 = por %p122, %p123
      %p125 = scmp.ne.s32.totalorder %s117, %s120
      %p126 = scmp.eq.s32.totalorder %s29, 0
      %p127 = por %p125, %p126
      %p128 = scmp.ne.s32.totalorder %s117, %s120
      %p129 = scmp.eq.s32.totalorder %s34, 3
      %p130 = por %p128, %p129
      %p131 = scmp.ne.s32.totalorder %s120, %s121
      %p132 = scmp.eq.s32.totalorder %s34, 0
      %p133 = por %p131, %p132
      %p134 = scmp.ne.s32.totalorder %s120, %s121
      %p135 = scmp.eq.s32.totalorder %s35, 3
      %p136 = por %p134, %p135
      %p138 = scmp.ne.s32.totalorder %s121, %s137
      %p139 = scmp.eq.s32.totalorder %s35, 0
      %p140 = por %p138, %p139
      %s141 = ssub.s32 %s29, %s36
      %p142 = scmp.eq.s32.totalorder %s141, 0
      %s144 = sadd.s32 %s143, 1
      %s145 = scalar_select %p142, %s143, %s144
      %p148 = pneg %p142
      %p149 = scmp.eq.s32.totalorder %s29, 3
      %p150 = por %p148, %p149
      %p151 = scmp.ne.s32.totalorder %s143, %s146
      %p152 = scmp.eq.s32.totalorder %s29, 0
      %p153 = por %p151, %p152
      %p154 = scmp.ne.s32.totalorder %s143, %s146
      %p155 = scmp.eq.s32.totalorder %s34, 3
      %p156 = por %p154, %p155
      %p157 = scmp.ne.s32.totalorder %s146, %s147
      %p158 = scmp.eq.s32.totalorder %s34, 0
      %p159 = por %p157, %p158
      %p160 = scmp.ne.s32.totalorder %s146, %s147
      %p161 = scmp.eq.s32.totalorder %s35, 3
      %p162 = por %p160, %p161
      %p164 = scmp.ne.s32.totalorder %s147, %s163
      %p165 = scmp.eq.s32.totalorder %s35, 0
      %p166 = por %p164, %p165
      %s167 = ssub.s32 %s29, %s36
      %p168 = scmp.eq.s32.totalorder %s167, 0
      %s170 = sadd.s32 %s169, 1
      %s171 = scalar_select %p168, %s169, %s170
      %p174 = pneg %p168
      %p175 = scmp.eq.s32.totalorder %s29, 3
      %p176 = por %p174, %p175
      %p177 = scmp.ne.s32.totalorder %s169, %s172
      %p178 = scmp.eq.s32.totalorder %s29, 0
      %p179 = por %p177, %p178
      %p180 = scmp.ne.s32.totalorder %s169, %s172
      %p181 = scmp.eq.s32.totalorder %s34, 3
      %p182 = por %p180, %p181
      %p183 = scmp.ne.s32.totalorder %s172, %s173
      %p184 = scmp.eq.s32.totalorder %s34, 0
      %p185 = por %p183, %p184
      %p186 = scmp.ne.s32.totalorder %s172, %s173
      %p187 = scmp.eq.s32.totalorder %s35, 3
      %p188 = por %p186, %p187
      %p190 = scmp.ne.s32.totalorder %s173, %s189
      %p191 = scmp.eq.s32.totalorder %s35, 0
      %p192 = por %p190, %p191
      %s193 = ssub.s32 %s29, %s36
      %p194 = scmp.eq.s32.totalorder %s193, 0
      %s196 = sadd.s32 %s195, 1
      %s197 = scalar_select %p194, %s195, %s196
      %p200 = pneg %p194
      %p201 = scmp.eq.s32.totalorder %s29, 3
      %p202 = por %p200, %p201
      %p203 = scmp.ne.s32.totalorder %s195, %s198
      %p204 = scmp.eq.s32.totalorder %s29, 0
      %p205 = por %p203, %p204
      %p206 = scmp.ne.s32.totalorder %s195, %s198
      %p207 = scmp.eq.s32.totalorder %s34, 3
      %p208 = por %p206, %p207
      %p209 = scmp.ne.s32.totalorder %s198, %s199
      %p210 = scmp.eq.s32.totalorder %s34, 0
      %p211 = por %p209, %p210
      %p212 = scmp.ne.s32.totalorder %s198, %s199
      %p213 = scmp.eq.s32.totalorder %s35, 3
      %p214 = por %p212, %p213
      %p216 = scmp.ne.s32.totalorder %s199, %s215
      %p217 = scmp.eq.s32.totalorder %s35, 0
      %p218 = por %p216, %p217
      %s219 = ssub.s32 %s29, %s36
      %p220 = scmp.eq.s32.totalorder %s219, 0
      %s222 = sadd.s32 %s221, 1
      %s223 = scalar_select %p220, %s221, %s222
      %p226 = pneg %p220
      %p227 = scmp.eq.s32.totalorder %s29, 3
      %p228 = por %p226, %p227
      %p229 = scmp.ne.s32.totalorder %s221, %s224
      %p230 = scmp.eq.s32.totalorder %s29, 0
      %p231 = por %p229, %p230
      %p232 = scmp.ne.s32.totalorder %s221, %s224
      %p233 = scmp.eq.s32.totalorder %s34, 3
      %p234 = por %p232, %p233
      %p235 = scmp.ne.s32.totalorder %s224, %s225
      %p236 = scmp.eq.s32.totalorder %s34, 0
      %p237 = por %p235, %p236
      %p238 = scmp.ne.s32.totalorder %s224, %s225
      %p239 = scmp.eq.s32.totalorder %s35, 3
      %p240 = por %p238, %p239
      %p242 = scmp.ne.s32.totalorder %s225, %s241
      %p243 = scmp.eq.s32.totalorder %s35, 0
      %p244 = por %p242, %p243
      %s245 = ssub.s32 %s29, %s36
      %p246 = scmp.eq.s32.totalorder %s245, 0
      %s248 = sadd.s32 %s247, 1
      %s249 = scalar_select %p246, %s247, %s248
      %p252 = pneg %p246
      %p253 = scmp.eq.s32.totalorder %s29, 3
      %p254 = por %p252, %p253
      %p255 = scmp.ne.s32.totalorder %s247, %s250
      %p256 = scmp.eq.s32.totalorder %s29, 0
      %p257 = por %p255, %p256
      %p258 = scmp.ne.s32.totalorder %s247, %s250
      %p259 = scmp.eq.s32.totalorder %s34, 3
      %p260 = por %p258, %p259
      %p261 = scmp.ne.s32.totalorder %s250, %s251
      %p262 = scmp.eq.s32.totalorder %s34, 0
      %p263 = por %p261, %p262
      %p264 = scmp.ne.s32.totalorder %s250, %s251
      %p265 = scmp.eq.s32.totalorder %s35, 3
      %p266 = por %p264, %p265
      %p268 = scmp.ne.s32.totalorder %s251, %s267
      %p269 = scmp.eq.s32.totalorder %s35, 0
      %p270 = por %p268, %p269
      %s271 = ssub.s32 %s29, %s36
      %p272 = scmp.eq.s32.totalorder %s271, 0
      %s274 = sadd.s32 %s273, 1
      %s275 = scalar_select %p272, %s273, %s274
      %p278 = pneg %p272
      %p279 = scmp.eq.s32.totalorder %s29, 3
      %p280 = por %p278, %p279
      %p281 = scmp.ne.s32.totalorder %s273, %s276
      %p282 = scmp.eq.s32.totalorder %s29, 0
      %p283 = por %p281, %p282
      %p284 = scmp.ne.s32.totalorder %s273, %s276
      %p285 = scmp.eq.s32.totalorder %s34, 3
      %p286 = por %p284, %p285
      %p287 = scmp.ne.s32.totalorder %s276, %s277
      %p288 = scmp.eq.s32.totalorder %s34, 0
      %p289 = por %p287, %p288
      %p290 = scmp.ne.s32.totalorder %s276, %s277
      %p291 = scmp.eq.s32.totalorder %s35, 3
      %p292 = por %p290, %p291
      %p294 = scmp.ne.s32.totalorder %s277, %s293
      %p295 = scmp.eq.s32.totalorder %s35, 0
      %p296 = por %p294, %p295
      %s297 = ssub.s32 %s29, %s36
      %p298 = scmp.eq.s32.totalorder %s297, 0
      %s300 = sadd.s32 %s299, 1
      %s301 = scalar_select %p298, %s299, %s300
      %p304 = pneg %p298
      %p305 = scmp.eq.s32.totalorder %s29, 3
      %p306 = por %p304, %p305
      %p307 = scmp.ne.s32.totalorder %s299, %s302
      %p308 = scmp.eq.s32.totalorder %s29, 0
      %p309 = por %p307, %p308
      %p310 = scmp.ne.s32.totalorder %s299, %s302
      %p311 = scmp.eq.s32.totalorder %s34, 3
      %p312 = por %p310, %p311
      %p313 = scmp.ne.s32.totalorder %s302, %s303
      %p314 = scmp.eq.s32.totalorder %s34, 0
      %p315 = por %p313, %p314
      %p316 = scmp.ne.s32.totalorder %s302, %s303
      %p317 = scmp.eq.s32.totalorder %s35, 3
      %p318 = por %p316, %p317
      %p320 = scmp.ne.s32.totalorder %s303, %s319
      %p321 = scmp.eq.s32.totalorder %s35, 0
      %p322 = por %p320, %p321
      %s323 = ssub.s32 %s29, %s36
      %p324 = scmp.eq.s32.totalorder %s323, 0
      %s326 = sadd.s32 %s325, 1
      %s327 = scalar_select %p324, %s325, %s326
      %p330 = pneg %p324
      %p331 = scmp.eq.s32.totalorder %s29, 3
      %p332 = por %p330, %p331
      %p333 = scmp.ne.s32.totalorder %s325, %s328
      %p334 = scmp.eq.s32.totalorder %s29, 0
      %p335 = por %p333, %p334
      %p336 = scmp.ne.s32.totalorder %s325, %s328
      %p337 = scmp.eq.s32.totalorder %s34, 3
      %p338 = por %p336, %p337
      %p339 = scmp.ne.s32.totalorder %s328, %s329
      %p340 = scmp.eq.s32.totalorder %s34, 0
      %p341 = por %p339, %p340
      %p342 = scmp.ne.s32.totalorder %s328, %s329
      %p343 = scmp.eq.s32.totalorder %s35, 3
      %p344 = por %p342, %p343
      %p346 = scmp.ne.s32.totalorder %s329, %s345
      %p347 = scmp.eq.s32.totalorder %s35, 0
      %p348 = por %p346, %p347
      %s349 = ssub.s32 %s29, %s36
      %p350 = scmp.eq.s32.totalorder %s349, 0
      %s352 = sadd.s32 %s351, 1
      %s353 = scalar_select %p350, %s351, %s352
      %p356 = pneg %p350
      %p357 = scmp.eq.s32.totalorder %s29, 3
      %p358 = por %p356, %p357
      %p359 = scmp.ne.s32.totalorder %s351, %s354
      %p360 = scmp.eq.s32.totalorder %s29, 0
      %p361 = por %p359, %p360
      %p362 = scmp.ne.s32.totalorder %s351, %s354
      %p363 = scmp.eq.s32.totalorder %s34, 3
      %p364 = por %p362, %p363
      %p365 = scmp.ne.s32.totalorder %s354, %s355
      %p366 = scmp.eq.s32.totalorder %s34, 0
      %p367 = por %p365, %p366
      %p368 = scmp.ne.s32.totalorder %s354, %s355
      %p369 = scmp.eq.s32.totalorder %s35, 3
      %p370 = por %p368, %p369
      %p372 = scmp.ne.s32.totalorder %s355, %s371
      %p373 = scmp.eq.s32.totalorder %s35, 0
      %p374 = por %p372, %p373
      %s375 = ssub.s32 %s29, %s36
      %p376 = scmp.eq.s32.totalorder %s375, 0
      %s378 = sadd.s32 %s377, 1
      %s379 = scalar_select %p376, %s377, %s378
      %p382 = pneg %p376
      %p383 = scmp.eq.s32.totalorder %s29, 3
      %p384 = por %p382, %p383
      %p385 = scmp.ne.s32.totalorder %s377, %s380
      %p386 = scmp.eq.s32.totalorder %s29, 0
      %p387 = por %p385, %p386
      %p388 = scmp.ne.s32.totalorder %s377, %s380
      %p389 = scmp.eq.s32.totalorder %s34, 3
      %p390 = por %p388, %p389
      %p391 = scmp.ne.s32.totalorder %s380, %s381
      %p392 = scmp.eq.s32.totalorder %s34, 0
      %p393 = por %p391, %p392
      %p394 = scmp.ne.s32.totalorder %s380, %s381
      %p395 = scmp.eq.s32.totalorder %s35, 3
      %p396 = por %p394, %p395
      %p398 = scmp.ne.s32.totalorder %s381, %s397
      %p399 = scmp.eq.s32.totalorder %s35, 0
      %p400 = por %p398, %p399
      %s401 = ssub.s32 %s29, %s36
      %p402 = scmp.eq.s32.totalorder %s401, 0
      %s404 = sadd.s32 %s403, 1
      %s405 = scalar_select %p402, %s403, %s404
      %p408 = pneg %p402
      %p409 = scmp.eq.s32.totalorder %s29, 3
      %p410 = por %p408, %p409
      %p411 = scmp.ne.s32.totalorder %s403, %s406
      %p412 = scmp.eq.s32.totalorder %s29, 0
      %p413 = por %p411, %p412
      %p414 = scmp.ne.s32.totalorder %s403, %s406
      %p415 = scmp.eq.s32.totalorder %s34, 3
      %p416 = por %p414, %p415
      %p417 = scmp.ne.s32.totalorder %s406, %s407
      %p418 = scmp.eq.s32.totalorder %s34, 0
      %p419 = por %p417, %p418
      %p420 = scmp.ne.s32.totalorder %s406, %s407
      %p421 = scmp.eq.s32.totalorder %s35, 3
      %p422 = por %p420, %p421
      %p424 = scmp.ne.s32.totalorder %s407, %s423
      %p425 = scmp.eq.s32.totalorder %s35, 0
      %p426 = por %p424, %p425
      %s427 = ssub.s32 %s29, %s36
      %p428 = scmp.eq.s32.totalorder %s427, 0
      %s430 = sadd.s32 %s429, 1
      %s431 = scalar_select %p428, %s429, %s430
      %p434 = pneg %p428
      %p435 = scmp.eq.s32.totalorder %s29, 3
      %p436 = por %p434, %p435
      %p437 = scmp.ne.s32.totalorder %s429, %s432
      %p438 = scmp.eq.s32.totalorder %s29, 0
      %p439 = por %p437, %p438
      %p440 = scmp.ne.s32.totalorder %s429, %s432
      %p441 = scmp.eq.s32.totalorder %s34, 3
      %p442 = por %p440, %p441
      %p443 = scmp.ne.s32.totalorder %s432, %s433
      %p444 = scmp.eq.s32.totalorder %s34, 0
      %p445 = por %p443, %p444
      %p446 = scmp.ne.s32.totalorder %s432, %s433
      %p447 = scmp.eq.s32.totalorder %s35, 3
      %p448 = por %p446, %p447
      %p450 = scmp.ne.s32.totalorder %s433, %s449
      %p451 = scmp.eq.s32.totalorder %s35, 0
      %p452 = por %p450, %p451
      %s453 = ssub.s32 %s29, %s36
      %p454 = scmp.eq.s32.totalorder %s453, 0
      %s456 = sadd.s32 %s455, 1
      %s457 = scalar_select %p454, %s455, %s456
      %p460 = pneg %p454
      %p461 = scmp.eq.s32.totalorder %s29, 3
      %p462 = por %p460, %p461
      %p463 = scmp.ne.s32.totalorder %s455, %s458
      %p464 = scmp.eq.s32.totalorder %s29, 0
      %p465 = por %p463, %p464
      %p466 = scmp.ne.s32.totalorder %s455, %s458
      %p467 = scmp.eq.s32.totalorder %s34, 3
      %p468 = por %p466, %p467
      %p469 = scmp.ne.s32.totalorder %s458, %s459
      %p470 = scmp.eq.s32.totalorder %s34, 0
      %p471 = por %p469, %p470
      %p472 = scmp.ne.s32.totalorder %s458, %s459
      %p473 = scmp.eq.s32.totalorder %s35, 3
      %p474 = por %p472, %p473
      %p476 = scmp.ne.s32.totalorder %s459, %s475
      %p477 = scmp.eq.s32.totalorder %s35, 0
      %p478 = por %p476, %p477
      %s479 = ssub.s32 %s29, %s36
      %p480 = scmp.eq.s32.totalorder %s479, 0
      %s482 = sadd.s32 %s481, 1
      %s483 = scalar_select %p480, %s481, %s482
      %p486 = pneg %p480
      %p487 = scmp.eq.s32.totalorder %s29, 3
      %p488 = por %p486, %p487
      %p489 = scmp.ne.s32.totalorder %s481, %s484
      %p490 = scmp.eq.s32.totalorder %s29, 0
      %p491 = por %p489, %p490
      %p492 = scmp.ne.s32.totalorder %s481, %s484
      %p493 = scmp.eq.s32.totalorder %s34, 3
      %p494 = por %p492, %p493
      %p495 = scmp.ne.s32.totalorder %s484, %s485
      %p496 = scmp.eq.s32.totalorder %s34, 0
      %p497 = por %p495, %p496
      %p498 = scmp.ne.s32.totalorder %s484, %s485
      %p499 = scmp.eq.s32.totalorder %s35, 3
      %p500 = por %p498, %p499
      %p502 = scmp.ne.s32.totalorder %s485, %s501
      %p503 = scmp.eq.s32.totalorder %s35, 0
      %p504 = por %p502, %p503
      %s505 = ssub.s32 %s29, %s36
      %p506 = scmp.eq.s32.totalorder %s505, 0
      %s508 = sadd.s32 %s507, 1
      %s509 = scalar_select %p506, %s507, %s508
      %p512 = pneg %p506
      %p513 = scmp.eq.s32.totalorder %s29, 3
      %p514 = por %p512, %p513
      %p515 = scmp.ne.s32.totalorder %s507, %s510
      %p516 = scmp.eq.s32.totalorder %s29, 0
      %p517 = por %p515, %p516
      %p518 = scmp.ne.s32.totalorder %s507, %s510
      %p519 = scmp.eq.s32.totalorder %s34, 3
      %p520 = por %p518, %p519
      %p521 = scmp.ne.s32.totalorder %s510, %s511
      %p522 = scmp.eq.s32.totalorder %s34, 0
      %p523 = por %p521, %p522
      %p524 = scmp.ne.s32.totalorder %s510, %s511
      %p525 = scmp.eq.s32.totalorder %s35, 3
      %p526 = por %p524, %p525
      %p528 = scmp.ne.s32.totalorder %s511, %s527
      %p529 = scmp.eq.s32.totalorder %s35, 0
      %p530 = por %p528, %p529
      %s531 = ssub.s32 %s29, %s36
      %p532 = scmp.eq.s32.totalorder %s531, 0
      %s534 = sadd.s32 %s533, 1
      %s535 = scalar_select %p532, %s533, %s534
      %p538 = pneg %p532
      %p539 = scmp.eq.s32.totalorder %s29, 3
      %p540 = por %p538, %p539
      %p541 = scmp.ne.s32.totalorder %s533, %s536
      %p542 = scmp.eq.s32.totalorder %s29, 0
      %p543 = por %p541, %p542
      %p544 = scmp.ne.s32.totalorder %s533, %s536
      %p545 = scmp.eq.s32.totalorder %s34, 3
      %p546 = por %p544, %p545
      %p547 = scmp.ne.s32.totalorder %s536, %s537
      %p548 = scmp.eq.s32.totalorder %s34, 0
      %p549 = por %p547, %p548
      %p550 = scmp.ne.s32.totalorder %s536, %s537
      %p551 = scmp.eq.s32.totalorder %s35, 3
      %p552 = por %p550, %p551
      %p554 = scmp.ne.s32.totalorder %s537, %s553
      %p555 = scmp.eq.s32.totalorder %s35, 0
      %p556 = por %p554, %p555
      %s557 = ssub.s32 %s29, %s36
      %p558 = scmp.eq.s32.totalorder %s557, 0
      %s560 = sadd.s32 %s559, 1
      %s561 = scalar_select %p558, %s559, %s560
      %p564 = pneg %p558
      %p565 = scmp.eq.s32.totalorder %s29, 3
      %p566 = por %p564, %p565
      %p567 = scmp.ne.s32.totalorder %s559, %s562
      %p568 = scmp.eq.s32.totalorder %s29, 0
      %p569 = por %p567, %p568
      %p570 = scmp.ne.s32.totalorder %s559, %s562
      %p571 = scmp.eq.s32.totalorder %s34, 3
      %p572 = por %p570, %p571
      %p573 = scmp.ne.s32.totalorder %s562, %s563
      %p574 = scmp.eq.s32.totalorder %s34, 0
      %p575 = por %p573, %p574
      %p576 = scmp.ne.s32.totalorder %s562, %s563
      %p577 = scmp.eq.s32.totalorder %s35, 3
      %p578 = por %p576, %p577
      %p580 = scmp.ne.s32.totalorder %s563, %s579
      %p581 = scmp.eq.s32.totalorder %s35, 0
      %p582 = por %p580, %p581
      %p583 = scmp.le.s32.totalorder 1, %s29
      %p584 = scmp.lt.s32.totalorder %s29, 5
      %p585 = pnand %p583, %p584
      %p586 = pneg %p585
      // Predicated region
      $region9: #{music_decoder_forward.1} parent=5 // pred_check
        _
      $region10: #{music_decoder_forward.1} parent=5 // pred_check_branch
        %588 = sbr.rel (%p585) target = $region12
      $region11: #{music_decoder_forward.1} parent=5 // pred_region
        %s589 = ssub.s32 %s29, 1
      $region12: #{music_decoder_forward.1} parent=5 // pred_fallthru
        _
      %p590 = scmp.lt.s32.totalorder %s29, 4
      // Predicated region
      $region13: #{music_decoder_forward.1} parent=5 // pred_check
        %p591 = pneg %p590
      $region14: #{music_decoder_forward.1} parent=5 // pred_check_branch
        %593 = sbr.rel (%p591) target = $region16
      $region15: #{music_decoder_forward.1} parent=5 // pred_region
        // Predicated region
        $region17: #{music_decoder_forward.1} parent=15 // pred_check
          %p594 = pneg %p49
        $region18: #{music_decoder_forward.1} parent=15 // pred_check_branch
          %596 = sbr.rel (%p594) target = $region20
        $region19: #{music_decoder_forward.1} parent=15 // pred_region
          %p597 = scmp.lt.s32.totalorder %s29, 3
          %s598 = scalar_select %p597, %s29, 3
          %s599 = smul.addr %s598, 2
          %s600 = smul.addr %s599, 8
          %s601 = scalar_lea.vmem %s0, %s600
        $region20: #{music_decoder_forward.1} parent=15 // pred_fallthru
          _
        // Predicated region
        $region21: #{music_decoder_forward.1} parent=15 // pred_check
          %p602 = pneg %p75
        $region22: #{music_decoder_forward.1} parent=15 // pred_check_branch
          %604 = sbr.rel (%p602) target = $region24
        $region23: #{music_decoder_forward.1} parent=15 // pred_region
          %p605 = scmp.lt.s32.totalorder %s29, 3
          %s606 = scalar_select %p605, %s29, 3
          %s607 = smul.addr %s606, 2
          %s608 = smul.addr %s607, 8
          %s609 = scalar_lea.vmem %s1, %s608
        $region24: #{music_decoder_forward.1} parent=15 // pred_fallthru
          _
        // Predicated region
        $region25: #{music_decoder_forward.1} parent=15 // pred_check
          %p610 = pneg %p101
        $region26: #{music_decoder_forward.1} parent=15 // pred_check_branch
          %612 = sbr.rel (%p610) target = $region28
        $region27: #{music_decoder_forward.1} parent=15 // pred_region
          %p613 = scmp.lt.s32.totalorder %s29, 3
          %s614 = scalar_select %p613, %s29, 3
          %s615 = smul.addr %s614, 2
          %s616 = smul.addr %s615, 8
          %s617 = scalar_lea.vmem %s2, %s616
        $region28: #{music_decoder_forward.1} parent=15 // pred_fallthru
          _
        // Predicated region
        $region29: #{music_decoder_forward.1} parent=15 // pred_check
          %p618 = pneg %p127
        $region30: #{music_decoder_forward.1} parent=15 // pred_check_branch
          %620 = sbr.rel (%p618) target = $region32
        $region31: #{music_decoder_forward.1} parent=15 // pred_region
          %p621 = scmp.lt.s32.totalorder %s29, 3
          %s622 = scalar_select %p621, %s29, 3
          %s623 = smul.addr %s622, 2
          %s624 = smul.addr %s623, 8
          %s625 = scalar_lea.vmem %s3, %s624
        $region32: #{music_decoder_forward.1} parent=15 // pred_fallthru
          _
        // Predicated region
        $region33: #{music_decoder_forward.1} parent=15 // pred_check
          %p626 = pneg %p153
        $region34: #{music_decoder_forward.1} parent=15 // pred_check_branch
          %628 = sbr.rel (%p626) target = $region36
        $region35: #{music_decoder_forward.1} parent=15 // pred_region
          %p629 = scmp.lt.s32.totalorder %s29, 3
          %s630 = scalar_select %p629, %s29, 3
          %s631 = smul.addr %s630, 7
          %s632 = scalar_lea.vmem %s4, %s631
        $region36: #{music_decoder_forward.1} parent=15 // pred_fallthru
          _
        // Predicated region
        $region37: #{music_decoder_forward.1} parent=15 // pred_check
          %p633 = pneg %p179
        $region38: #{music_decoder_forward.1} parent=15 // pred_check_branch
          %635 = sbr.rel (%p633) target = $region40
        $region39: #{music_decoder_forward.1} parent=15 // pred_region
          %p636 = scmp.lt.s32.totalorder %s29, 3
          %s637 = scalar_select %p636, %s29, 3
          %s638 = smul.addr %s637, 7
          %s639 = scalar_lea.vmem %s5, %s638
        $region40: #{music_decoder_forward.1} parent=15 // pred_fallthru
          _
        // Predicated region
        $region41: #{music_decoder_forward.1} parent=15 // pred_check
          %p640 = pneg %p205
        $region42: #{music_decoder_forward.1} parent=15 // pred_check_branch
          %642 = sbr.rel (%p640) target = $region44
        $region43: #{music_decoder_forward.1} parent=15 // pred_region
          %p643 = scmp.lt.s32.totalorder %s29, 3
          %s644 = scalar_select %p643, %s29, 3
          %s645 = smul.addr %s644, 8
          %s646 = smul.addr %s645, 8
          %s647 = scalar_lea.vmem %s6, %s646
        $region44: #{music_decoder_forward.1} parent=15 // pred_fallthru
          _
        // Predicated region
        $region45: #{music_decoder_forward.1} parent=15 // pred_check
          %p648 = pneg %p231
        $region46: #{music_decoder_forward.1} parent=15 // pred_check_branch
          %650 = sbr.rel (%p648) target = $region48
        $region47: #{music_decoder_forward.1} parent=15 // pred_region
          %p651 = scmp.lt.s32.totalorder %s29, 3
          %s652 = scalar_select %p651, %s29, 3
          %s653 = smul.addr %s652, 2
          %s654 = scalar_lea.vmem %s7, %s653
        $region48: #{music_decoder_forward.1} parent=15 // pred_fallthru
          _
        // Predicated region
        $region49: #{music_decoder_forward.1} parent=15 // pred_check
          %p655 = pneg %p257
        $region50: #{music_decoder_forward.1} parent=15 // pred_check_branch
          %657 = sbr.rel (%p655) target = $region52
        $region51: #{music_decoder_forward.1} parent=15 // pred_region
          %p658 = scmp.lt.s32.totalorder %s29, 3
          %s659 = scalar_select %p658, %s29, 3
          %s660 = smul.addr %s659, 8
          %s661 = smul.addr %s660, 8
          %s662 = scalar_lea.vmem %s8, %s661
        $region52: #{music_decoder_forward.1} parent=15 // pred_fallthru
          _
        // Predicated region
        $region53: #{music_decoder_forward.1} parent=15 // pred_check
          %p663 = pneg %p283
        $region54: #{music_decoder_forward.1} parent=15 // pred_check_branch
          %665 = sbr.rel (%p663) target = $region56
        $region55: #{music_decoder_forward.1} parent=15 // pred_region
          %p666 = scmp.lt.s32.totalorder %s29, 3
          %s667 = scalar_select %p666, %s29, 3
          %s668 = smul.addr %s667, 2
          %s669 = scalar_lea.vmem %s9, %s668
        $region56: #{music_decoder_forward.1} parent=15 // pred_fallthru
          _
        // Predicated region
        $region57: #{music_decoder_forward.1} parent=15 // pred_check
          %p670 = pneg %p309
        $region58: #{music_decoder_forward.1} parent=15 // pred_check_branch
          %672 = sbr.rel (%p670) target = $region60
        $region59: #{music_decoder_forward.1} parent=15 // pred_region
          %p673 = scmp.lt.s32.totalorder %s29, 3
          %s674 = scalar_select %p673, %s29, 3
          %s675 = smul.addr %s674, 8
          %s676 = smul.addr %s675, 8
          %s677 = scalar_lea.vmem %s10, %s676
        $region60: #{music_decoder_forward.1} parent=15 // pred_fallthru
          _
        // Predicated region
        $region61: #{music_decoder_forward.1} parent=15 // pred_check
          %p678 = pneg %p335
        $region62: #{music_decoder_forward.1} parent=15 // pred_check_branch
          %680 = sbr.rel (%p678) target = $region64
        $region63: #{music_decoder_forward.1} parent=15 // pred_region
          %p681 = scmp.lt.s32.totalorder %s29, 3
          %s682 = scalar_select %p681, %s29, 3
          %s683 = smul.addr %s682, 2
          %s684 = scalar_lea.vmem %s11, %s683
        $region64: #{music_decoder_forward.1} parent=15 // pred_fallthru
          _
        // Predicated region
        $region65: #{music_decoder_forward.1} parent=15 // pred_check
          %p685 = pneg %p361
        $region66: #{music_decoder_forward.1} parent=15 // pred_check_branch
          %687 = sbr.rel (%p685) target = $region68
        $region67: #{music_decoder_forward.1} parent=15 // pred_region
          %p688 = scmp.lt.s32.totalorder %s29, 3
          %s689 = scalar_select %p688, %s29, 3
          %s690 = smul.addr %s689, 8
          %s691 = smul.addr %s690, 8
          %s692 = scalar_lea.vmem %s12, %s691
        $region68: #{music_decoder_forward.1} parent=15 // pred_fallthru
          _
        // Predicated region
        $region69: #{music_decoder_forward.1} parent=15 // pred_check
          %p693 = pneg %p387
        $region70: #{music_decoder_forward.1} parent=15 // pred_check_branch
          %695 = sbr.rel (%p693) target = $region72
        $region71: #{music_decoder_forward.1} parent=15 // pred_region
          %p696 = scmp.lt.s32.totalorder %s29, 3
          %s697 = scalar_select %p696, %s29, 3
          %s698 = smul.addr %s697, 2
          %s699 = scalar_lea.vmem %s13, %s698
        $region72: #{music_decoder_forward.1} parent=15 // pred_fallthru
          _
        // Predicated region
        $region73: #{music_decoder_forward.1} parent=15 // pred_check
          %p700 = pneg %p413
        $region74: #{music_decoder_forward.1} parent=15 // pred_check_branch
          %702 = sbr.rel (%p700) target = $region76
        $region75: #{music_decoder_forward.1} parent=15 // pred_region
          %p703 = scmp.lt.s32.totalorder %s29, 3
          %s704 = scalar_select %p703, %s29, 3
          %s705 = smul.addr %s704, 8
          %s706 = smul.addr %s705, 8
          %s707 = scalar_lea.vmem %s14, %s706
        $region76: #{music_decoder_forward.1} parent=15 // pred_fallthru
          _
        // Predicated region
        $region77: #{music_decoder_forward.1} parent=15 // pred_check
          %p708 = pneg %p439
        $region78: #{music_decoder_forward.1} parent=15 // pred_check_branch
          %710 = sbr.rel (%p708) target = $region80
        $region79: #{music_decoder_forward.1} parent=15 // pred_region
          %p711 = scmp.lt.s32.totalorder %s29, 3
          %s712 = scalar_select %p711, %s29, 3
          %s713 = smul.addr %s712, 2
          %s714 = scalar_lea.vmem %s15, %s713
        $region80: #{music_decoder_forward.1} parent=15 // pred_fallthru
          _
        // Predicated region
        $region81: #{music_decoder_forward.1} parent=15 // pred_check
          %p715 = pneg %p465
        $region82: #{music_decoder_forward.1} parent=15 // pred_check_branch
          %717 = sbr.rel (%p715) target = $region84
        $region83: #{music_decoder_forward.1} parent=15 // pred_region
          %p718 = scmp.lt.s32.totalorder %s29, 3
          %s719 = scalar_select %p718, %s29, 3
          %s720 = smul.addr %s719, 8
          %s721 = smul.addr %s720, 8
          %s722 = scalar_lea.vmem %s16, %s721
        $region84: #{music_decoder_forward.1} parent=15 // pred_fallthru
          _
        // Predicated region
        $region85: #{music_decoder_forward.1} parent=15 // pred_check
          %p723 = pneg %p491
        $region86: #{music_decoder_forward.1} parent=15 // pred_check_branch
          %725 = sbr.rel (%p723) target = $region88
        $region87: #{music_decoder_forward.1} parent=15 // pred_region
          %p726 = scmp.lt.s32.totalorder %s29, 3
          %s727 = scalar_select %p726, %s29, 3
          %s728 = smul.addr %s727, 2
          %s729 = scalar_lea.vmem %s17, %s728
        $region88: #{music_decoder_forward.1} parent=15 // pred_fallthru
          _
        // Predicated region
        $region89: #{music_decoder_forward.1} parent=15 // pred_check
          %p730 = pneg %p517
        $region90: #{music_decoder_forward.1} parent=15 // pred_check_branch
          %732 = sbr.rel (%p730) target = $region92
        $region91: #{music_decoder_forward.1} parent=15 // pred_region
          %p733 = scmp.lt.s32.totalorder %s29, 3
          %s734 = scalar_select %p733, %s29, 3
          %s735 = smul.addr %s734, 16
          %s736 = smul.addr %s735, 8
          %s737 = scalar_lea.vmem %s18, %s736
        $region92: #{music_decoder_forward.1} parent=15 // pred_fallthru
          _
        // Predicated region
        $region93: #{music_decoder_forward.1} parent=15 // pred_check
          %p738 = pneg %p543
        $region94: #{music_decoder_forward.1} parent=15 // pred_check_branch
          %740 = sbr.rel (%p738) target = $region96
        $region95: #{music_decoder_forward.1} parent=15 // pred_region
          %p741 = scmp.lt.s32.totalorder %s29, 3
          %s742 = scalar_select %p741, %s29, 3
          %s743 = smul.addr %s742, 2
          %s744 = scalar_lea.vmem %s19, %s743
        $region96: #{music_decoder_forward.1} parent=15 // pred_fallthru
          _
      $region16: #{music_decoder_forward.1} parent=5 // pred_fallthru
        _
      %p745 = scmp.le.s32.totalorder 1, %s29
      %p746 = scmp.lt.s32.totalorder %s29, 5
      %p747 = pnand %p745, %p746
      %p748 = pneg %p747
      // Predicated region
      $region97: #{music_decoder_forward.1} parent=5 // pred_check
        _
      $region98: #{music_decoder_forward.1} parent=5 // pred_check_branch
        %750 = sbr.rel (%p747) target = $region100
      $region99: #{music_decoder_forward.1} parent=5 // pred_region
        %s751 = ssub.s32 %s29, 1
        %p752 = scmp.lt.s32.totalorder %s34, 3
        %s753 = scalar_select %p752, %s34, 3
        %s754 = smul.addr %s753, 2
        %s755 = smul.addr %s754, 8
        %s756 = scalar_lea.vmem %s0, %s755
        %p757 = pneg %p55
        %p758 = pneg %p52
        %p759 = scmp.lt.s32.totalorder %s34, 3
        %s760 = scalar_select %p759, %s34, 3
        %s761 = smul.addr %s760, 2
        %s762 = smul.addr %s761, 8
        %s763 = scalar_lea.vmem %s1, %s762
        %p764 = pneg %p81
        %p765 = pneg %p78
        %p766 = scmp.lt.s32.totalorder %s34, 3
        %s767 = scalar_select %p766, %s34, 3
        %s768 = smul.addr %s767, 2
        %s769 = smul.addr %s768, 8
        %s770 = scalar_lea.vmem %s2, %s769
        %p771 = pneg %p107
        %p772 = pneg %p104
        %p773 = scmp.lt.s32.totalorder %s34, 3
        %s774 = scalar_select %p773, %s34, 3
        %s775 = smul.addr %s774, 2
        %s776 = smul.addr %s775, 8
        %s777 = scalar_lea.vmem %s3, %s776
        %p778 = pneg %p133
        %p779 = pneg %p130
        %p780 = scmp.lt.s32.totalorder %s34, 3
        %s781 = scalar_select %p780, %s34, 3
        %s782 = smul.addr %s781, 7
        %s783 = scalar_lea.vmem %s4, %s782
        %p784 = pneg %p159
        %p785 = pneg %p156
        %p786 = scmp.lt.s32.totalorder %s34, 3
        %s787 = scalar_select %p786, %s34, 3
        %s788 = smul.addr %s787, 7
        %s789 = scalar_lea.vmem %s5, %s788
        %p790 = pneg %p185
        %p791 = pneg %p182
        %p792 = scmp.lt.s32.totalorder %s34, 3
        %s793 = scalar_select %p792, %s34, 3
        %s794 = smul.addr %s793, 8
        %s795 = smul.addr %s794, 8
        %s796 = scalar_lea.vmem %s6, %s795
        %p797 = pneg %p211
        %p798 = pneg %p208
        %p799 = scmp.lt.s32.totalorder %s34, 3
        %s800 = scalar_select %p799, %s34, 3
        %s801 = smul.addr %s800, 2
        %s802 = scalar_lea.vmem %s7, %s801
        %p803 = pneg %p237
        %p804 = pneg %p234
        %p805 = scmp.lt.s32.totalorder %s34, 3
        %s806 = scalar_select %p805, %s34, 3
        %s807 = smul.addr %s806, 8
        %s808 = smul.addr %s807, 8
        %s809 = scalar_lea.vmem %s8, %s808
        %p810 = pneg %p263
        %p811 = pneg %p260
        %p812 = scmp.lt.s32.totalorder %s34, 3
        %s813 = scalar_select %p812, %s34, 3
        %s814 = smul.addr %s813, 2
        %s815 = scalar_lea.vmem %s9, %s814
        %p816 = pneg %p289
        %p817 = pneg %p286
        %p818 = scmp.lt.s32.totalorder %s34, 3
        %s819 = scalar_select %p818, %s34, 3
        %s820 = smul.addr %s819, 8
        %s821 = smul.addr %s820, 8
        %s822 = scalar_lea.vmem %s10, %s821
        %p823 = pneg %p315
        %p824 = pneg %p312
        %p825 = scmp.lt.s32.totalorder %s34, 3
        %s826 = scalar_select %p825, %s34, 3
        %s827 = smul.addr %s826, 2
        %s828 = scalar_lea.vmem %s11, %s827
        %p829 = pneg %p341
        %p830 = pneg %p338
        %p831 = scmp.lt.s32.totalorder %s34, 3
        %s832 = scalar_select %p831, %s34, 3
        %s833 = smul.addr %s832, 8
        %s834 = smul.addr %s833, 8
        %s835 = scalar_lea.vmem %s12, %s834
        %p836 = pneg %p367
        %p837 = pneg %p364
        %p838 = scmp.lt.s32.totalorder %s34, 3
        %s839 = scalar_select %p838, %s34, 3
        %s840 = smul.addr %s839, 2
        %s841 = scalar_lea.vmem %s13, %s840
        %p842 = pneg %p393
        %p843 = pneg %p390
        %p844 = scmp.lt.s32.totalorder %s34, 3
        %s845 = scalar_select %p844, %s34, 3
        %s846 = smul.addr %s845, 8
        %s847 = smul.addr %s846, 8
        %s848 = scalar_lea.vmem %s14, %s847
        %p849 = pneg %p419
        %p850 = pneg %p416
        %p851 = scmp.lt.s32.totalorder %s34, 3
        %s852 = scalar_select %p851, %s34, 3
        %s853 = smul.addr %s852, 2
        %s854 = scalar_lea.vmem %s15, %s853
        %p855 = pneg %p445
        %p856 = pneg %p442
        %p857 = scmp.lt.s32.totalorder %s34, 3
        %s858 = scalar_select %p857, %s34, 3
        %s859 = smul.addr %s858, 8
        %s860 = smul.addr %s859, 8
        %s861 = scalar_lea.vmem %s16, %s860
        %p862 = pneg %p471
        %p863 = pneg %p468
        %p864 = scmp.lt.s32.totalorder %s34, 3
        %s865 = scalar_select %p864, %s34, 3
        %s866 = smul.addr %s865, 2
        %s867 = scalar_lea.vmem %s17, %s866
        %p868 = pneg %p497
        %p869 = pneg %p494
        %p870 = scmp.lt.s32.totalorder %s34, 3
        %s871 = scalar_select %p870, %s34, 3
        %s872 = smul.addr %s871, 16
        %s873 = smul.addr %s872, 8
        %s874 = scalar_lea.vmem %s18, %s873
        %p875 = pneg %p523
        %p876 = pneg %p520
        %p877 = scmp.lt.s32.totalorder %s34, 3
        %s878 = scalar_select %p877, %s34, 3
        %s879 = smul.addr %s878, 2
        %s880 = scalar_lea.vmem %s19, %s879
        %p881 = pneg %p549
        %p882 = pneg %p546
        %p883 = pneg %p575
        %p884 = pneg %p572
        %s885 = sand.u32 %s562, 1
        %s886 = scalar_lea.sflag [#allocation3], %s885
        %s887 = sand.u32 %s562, 1
        %s888 = smul.addr %s887, 16
        %s889 = scalar_lea.vmem [#allocation2], %s888
        %p890 = scmp.lt.s32.totalorder %s34, 3
        %s891 = scalar_select %p890, %s34, 3
        %s892 = smul.addr %s891, 2
        %s893 = smul.addr %s892, 8
        %s894 = scalar_lea.vmem %s0, %s893
        %p895 = scmp.lt.s32.totalorder %s34, 3
        %s896 = scalar_select %p895, %s34, 3
        %s897 = smul.addr %s896, 2
        %s898 = smul.addr %s897, 8
        %s899 = scalar_lea.vmem %s1, %s898
        %p900 = scmp.lt.s32.totalorder %s34, 3
        %s901 = scalar_select %p900, %s34, 3
        %s902 = smul.addr %s901, 2
        %s903 = smul.addr %s902, 8
        %s904 = scalar_lea.vmem %s2, %s903
        %p905 = scmp.lt.s32.totalorder %s34, 3
        %s906 = scalar_select %p905, %s34, 3
        %s907 = smul.addr %s906, 2
        %s908 = smul.addr %s907, 8
        %s909 = scalar_lea.vmem %s3, %s908
        %p910 = scmp.lt.s32.totalorder %s34, 3
        %s911 = scalar_select %p910, %s34, 3
        %s912 = smul.addr %s911, 7
        %s913 = scalar_lea.vmem %s4, %s912
        %p914 = scmp.lt.s32.totalorder %s34, 3
        %s915 = scalar_select %p914, %s34, 3
        %s916 = smul.addr %s915, 7
        %s917 = scalar_lea.vmem %s5, %s916
        %p918 = scmp.lt.s32.totalorder %s34, 3
        %s919 = scalar_select %p918, %s34, 3
        %s920 = smul.addr %s919, 8
        %s921 = smul.addr %s920, 8
        %s922 = scalar_lea.vmem %s6, %s921
        %p923 = scmp.lt.s32.totalorder %s34, 3
        %s924 = scalar_select %p923, %s34, 3
        %s925 = smul.addr %s924, 2
        %s926 = scalar_lea.vmem %s7, %s925
        %p927 = scmp.lt.s32.totalorder %s34, 3
        %s928 = scalar_select %p927, %s34, 3
        %s929 = smul.addr %s928, 8
        %s930 = smul.addr %s929, 8
        %s931 = scalar_lea.vmem %s8, %s930
        %p932 = scmp.lt.s32.totalorder %s34, 3
        %s933 = scalar_select %p932, %s34, 3
        %s934 = smul.addr %s933, 2
        %s935 = scalar_lea.vmem %s9, %s934
        %p936 = scmp.lt.s32.totalorder %s34, 3
        %s937 = scalar_select %p936, %s34, 3
        %s938 = smul.addr %s937, 8
        %s939 = smul.addr %s938, 8
        %s940 = scalar_lea.vmem %s10, %s939
        %p941 = scmp.lt.s32.totalorder %s34, 3
        %s942 = scalar_select %p941, %s34, 3
        %s943 = smul.addr %s942, 2
        %s944 = scalar_lea.vmem %s11, %s943
        %p945 = scmp.lt.s32.totalorder %s34, 3
        %s946 = scalar_select %p945, %s34, 3
        %s947 = smul.addr %s946, 8
        %s948 = smul.addr %s947, 8
        %s949 = scalar_lea.vmem %s12, %s948
        %p950 = scmp.lt.s32.totalorder %s34, 3
        %s951 = scalar_select %p950, %s34, 3
        %s952 = smul.addr %s951, 2
        %s953 = scalar_lea.vmem %s13, %s952
        %p954 = scmp.lt.s32.totalorder %s34, 3
        %s955 = scalar_select %p954, %s34, 3
        %s956 = smul.addr %s955, 8
        %s957 = smul.addr %s956, 8
        %s958 = scalar_lea.vmem %s14, %s957
        %p959 = scmp.lt.s32.totalorder %s34, 3
        %s960 = scalar_select %p959, %s34, 3
        %s961 = smul.addr %s960, 2
        %s962 = scalar_lea.vmem %s15, %s961
        %p963 = scmp.lt.s32.totalorder %s34, 3
        %s964 = scalar_select %p963, %s34, 3
        %s965 = smul.addr %s964, 8
        %s966 = smul.addr %s965, 8
        %s967 = scalar_lea.vmem %s16, %s966
        %p968 = scmp.lt.s32.totalorder %s34, 3
        %s969 = scalar_select %p968, %s34, 3
        %s970 = smul.addr %s969, 2
        %s971 = scalar_lea.vmem %s17, %s970
        %p972 = scmp.lt.s32.totalorder %s34, 3
        %s973 = scalar_select %p972, %s34, 3
        %s974 = smul.addr %s973, 16
        %s975 = smul.addr %s974, 8
        %s976 = scalar_lea.vmem %s18, %s975
        %p977 = scmp.lt.s32.totalorder %s34, 3
        %s978 = scalar_select %p977, %s34, 3
        %s979 = smul.addr %s978, 2
        %s980 = scalar_lea.vmem %s19, %s979
        %v981 = vld [vmem:[%s894] sm:$0xff]
        %v982 = vld [vmem:[%s894 + $0x8] sm:$0xff]
        %v983 = vld [vmem:[%s899] sm:$0xff]
        %v984 = vld [vmem:[%s899 + $0x8] sm:$0xff]
        %v985 = vld [vmem:[%s909] sm:$0xff]
        %v986 = vld [vmem:[%s909 + $0x8] sm:$0xff]
        %vm987 = vcmp.gt.f32.partialorder %v985, 0.0
        %vm988 = vcmp.gt.f32.partialorder %v986, 0.0
        %v989 = vld [vmem:[%s904] sm:$0xff]
        %v990 = vld [vmem:[%s904 + $0x8] sm:$0xff]
        %vm991 = vcmp.gt.f32.partialorder %v989, 0.0
        %vm992 = vcmp.gt.f32.partialorder %v990, 0.0
        %v993 = vld [vmem:[%s913] sm:$0x1]
        %v994 = vld [vmem:[%s917] sm:$0x1]
        %vm995 = vcmask 261120
        %v996 = vsel %vm995, %v981, 0.0
        %997 = vadd.xlane.f32.xlu0 %v996
        %v998 = vpop.xlane.xlu0 %997
        %v999 = vsel %vm995, %v982, 0.0
        %1000 = vadd.xlane.f32.xlu0 %v999
        %v1001 = vpop.xlane.xlu0 %1000
        %v1002 = vrcp.pop 32.0
        %v1003 = vmul.f32 %v998, %v1002
        %v1004 = vmul.f32 %v1001, %v1002
        %v1005 = vsub.f32 %v981, %v1003
        %v1006 = vsub.f32 %v982, %v1004
        %v1007 = vmul.f32 %v1005, %v1005
        %v1008 = vmul.f32 %v1006, %v1006
        %v1009 = vsel %vm995, %v1007, 0.0
        %1010 = vadd.xlane.f32.xlu0 %v1009
        %v1011 = vpop.xlane.xlu0 %1010
        %v1012 = vsel %vm995, %v1008, 0.0
        %1013 = vadd.xlane.f32.xlu0 %v1012
        %v1014 = vpop.xlane.xlu0 %1013
        %v1015 = vrcp.pop 31.0
        %v1016 = vmul.f32 %v1011, %v1015
        %v1017 = vmul.f32 %v1014, %v1015
        %v1018 = vrsqrt.pop %v1016
        %v1019 = vmul.f32 %v1016, %v1018
        %vm1020 = vcmp.eq.f32.partialorder %v1016, inf
        %v1021 = vsel %vm1020, %v1016, %v1019
        %vm1022 = vcmp.eq.f32.partialorder %v1016, 0.0
        %v1023 = vand.u32 %v1016, 2147483648
        %v1024 = vsel %vm1022, %v1023, %v1021
        %v1025 = vrsqrt.pop %v1017
        %v1026 = vmul.f32 %v1017, %v1025
        %vm1027 = vcmp.eq.f32.partialorder %v1017, inf
        %v1028 = vsel %vm1027, %v1017, %v1026
        %vm1029 = vcmp.eq.f32.partialorder %v1017, 0.0
        %v1030 = vand.u32 %v1017, 2147483648
        %v1031 = vsel %vm1029, %v1030, %v1028
        %v1032 = vadd.f32 %v1024, 1e-06
        %v1033 = vadd.f32 %v1031, 1e-06
        %v1034 = vrcp.pop %v1032
        %v1035 = vrcp.pop %v1033
        %v1037 = vlaneseq
        %v1038 = vshrl.u32 %v1037, 7
        %v1039 = vsub.s32 0, %v1038
        %v1040 = vrot.slane %v993, %v1039
        %v1042 = vmul.f32 %v1040, %v1005
        %v1043 = vmul.f32 %v1040, %v1006
        %v1044 = vmul.f32 %v1042, %v1034
        %v1045 = vmul.f32 %v1043, %v1035
        %v1047 = vlaneseq
        %v1048 = vshrl.u32 %v1047, 7
        %v1049 = vsub.s32 0, %v1048
        %v1050 = vrot.slane %v994, %v1049
        %v1052 = vadd.f32 %v1044, %v1050
        %v1053 = vadd.f32 %v1045, %v1050
        %v1054 = vld [vmem:[%s922] sm:$0xff]
        %v1055 = vld [vmem:[%s922 + $0x8] sm:$0xff]
        %v1056 = vld [vmem:[%s922 + $0x10] sm:$0xff]
        %v1057 = vld [vmem:[%s922 + $0x18] sm:$0xff]
        %v1058 = vld [vmem:[%s926] sm:$0x1]
        %v1060 = vlaneseq
        %v1061 = vshrl.u32 %v1060, 7
        %v1062 = vsub.s32 0, %v1061
        %v1063 = vrot.slane %v1058, %v1062
        %v1066 = vsel %vm995, %v1052, 0
        %v1069 = vsel %vm995, %v1053, 0
        %1071 = vmatprep.subr.mxu0 0.0
        %1072 = vmatpush1.msra.mxu0 %v1054
        %1073 = vmatprep.subr.mxu0 0.0
        %1074 = vmatpush1.msra.mxu0 %v1055
        %1075 = vmatprep.subr.mxu0 0.0
        %1076 = vmatpush1.msra.mxu0 %v1056
        %1077 = vmatprep.subr.mxu0 0.0
        %1078 = vmatpush1.msra.mxu0 %v1057
        %1079 = vmatprep.subr.mxu0 0.0
        %1080 = vmatpush1.msra.mxu0 0.0
        %1081 = vmatprep.subr.mxu0 0.0
        %1082 = vmatpush1.msra.mxu0 0.0
        %1083 = vmatprep.subr.mxu0 0.0
        %1084 = vmatpush1.msra.mxu0 0.0
        %1085 = vmatprep.subr.mxu0 0.0
        %1086 = vmatpush1.msra.mxu0 0.0
        %1087 = vmatprep.subr.mxu0 0.0
        %1088 = vmatpush1.msra.mxu0 0.0
        %1089 = vmatprep.subr.mxu0 0.0
        %1090 = vmatpush1.msra.mxu0 0.0
        %1091 = vmatprep.subr.mxu0 0.0
        %1092 = vmatpush1.msra.mxu0 0.0
        %1093 = vmatprep.subr.mxu0 0.0
        %1094 = vmatpush1.msra.mxu0 0.0
        %1095 = vmatprep.subr.mxu0 0.0
        %1096 = vmatpush1.msra.mxu0 0.0
        %1097 = vmatprep.subr.mxu0 0.0
        %1098 = vmatpush1.msra.mxu0 0.0
        %1099 = vmatprep.subr.mxu0 0.0
        %1100 = vmatpush1.msra.mxu0 0.0
        %1101 = vmatprep.subr.mxu0 0.0
        %1102 = vmatpush1.msra.mxu0 0.0
        %1103 = vmatprep.subr.mxu0 0.0
        %1104 = vmatpush1.msra.mxu0 0.0
        %1105 = vmatprep.subr.mxu0 0.0
        %1106 = vmatpush1.msra.mxu0 0.0
        %1107 = vmatprep.subr.mxu0 0.0
        %1108 = vmatpush1.msra.mxu0 0.0
        %1109 = vmatprep.subr.mxu0 0.0
        %1110 = vmatpush1.msra.mxu0 0.0
        %1111 = vmatprep.subr.mxu0 0.0
        %1112 = vmatpush1.msra.mxu0 0.0
        %1113 = vmatprep.subr.mxu0 0.0
        %1114 = vmatpush1.msra.mxu0 0.0
        %1115 = vmatprep.subr.mxu0 0.0
        %1116 = vmatpush1.msra.mxu0 0.0
        %1117 = vmatprep.subr.mxu0 0.0
        %1118 = vmatpush1.msra.mxu0 0.0
        %1119 = vmatprep.subr.mxu0 0.0
        %1120 = vmatpush1.msra.mxu0 0.0
        %1121 = vmatprep.subr.mxu0 0.0
        %1122 = vmatpush1.msra.mxu0 0.0
        %1123 = vmatprep.subr.mxu0 0.0
        %1124 = vmatpush1.msra.mxu0 0.0
        %1125 = vmatprep.subr.mxu0 0.0
        %1126 = vmatpush1.msra.mxu0 0.0
        %1127 = vmatprep.subr.mxu0 0.0
        %1128 = vmatpush1.msra.mxu0 0.0
        %1129 = vmatprep.subr.mxu0 0.0
        %1130 = vmatpush1.msra.mxu0 0.0
        %1131 = vmatprep.subr.mxu0 0.0
        %1132 = vmatpush1.msra.mxu0 0.0
        %1133 = vmatprep.subr.mxu0 0.0
        %1134 = vmatpush1.msra.mxu0 0.0
        %1135 = vmatprep.mubr.f32.mxu0 0.0
        %1136 = vmatmul.mubr.f32.gmra.mrb[0].mxu0 %v1066
        %v1137 = vpop.f32.mrb[0].mxu0
        %v1138 = vadd.f32 %v1063, %v1137
        %v1139 = vpop.f32.mrb[0].mxu0
        %1140 = vmatprep.mubr.f32.mxu0 0.0
        %1141 = vmatmul.mubr.f32.gmra.mrb[0].mxu0 %v1069
        %v1142 = vpop.f32.mrb[0].mxu0
        %v1143 = vadd.f32 %v1063, %v1142
        %v1144 = vpop.f32.mrb[0].mxu0
        %1145 = vdwg.mxu0
        %1147 = vrot.lane.b32.xlu0 %v1138, 96
        %v1148 = vpop.permute.xlu0 %1147
        %vm1149 = vcmask 64512
        %v1150 = vsel %vm1149, %v1138, 0
        %v1152 = vsel %vm1149, %v1148, 0
        %1154 = vmatprep.subr.mxu0 0.0
        %1155 = vmatpush1.xpose.msra.mxu0 %v1152
        %1156 = vmatprep.subr.mxu0 0.0
        %1157 = vmatpush1.xpose.msra.mxu0 0.0
        %1158 = vmatprep.subr.mxu0 0.0
        %1159 = vmatpush1.xpose.msra.mxu0 0.0
        %1160 = vmatprep.subr.mxu0 0.0
        %1161 = vmatpush1.xpose.msra.mxu0 0.0
        %1162 = vmatprep.subr.mxu0 0.0
        %1163 = vmatpush1.xpose.msra.mxu0 0.0
        %1164 = vmatprep.subr.mxu0 0.0
        %1165 = vmatpush1.xpose.msra.mxu0 0.0
        %1166 = vmatprep.subr.mxu0 0.0
        %1167 = vmatpush1.xpose.msra.mxu0 0.0
        %1168 = vmatprep.subr.mxu0 0.0
        %1169 = vmatpush1.xpose.msra.mxu0 0.0
        %1170 = vmatprep.subr.mxu0 0.0
        %1171 = vmatpush1.xpose.msra.mxu0 0.0
        %1172 = vmatprep.subr.mxu0 0.0
        %1173 = vmatpush1.xpose.msra.mxu0 0.0
        %1174 = vmatprep.subr.mxu0 0.0
        %1175 = vmatpush1.xpose.msra.mxu0 0.0
        %1176 = vmatprep.subr.mxu0 0.0
        %1177 = vmatpush1.xpose.msra.mxu0 0.0
        %1178 = vmatprep.subr.mxu0 0.0
        %1179 = vmatpush1.xpose.msra.mxu0 0.0
        %1180 = vmatprep.subr.mxu0 0.0
        %1181 = vmatpush1.xpose.msra.mxu0 0.0
        %1182 = vmatprep.subr.mxu0 0.0
        %1183 = vmatpush1.xpose.msra.mxu0 0.0
        %1184 = vmatprep.subr.mxu0 0.0
        %1185 = vmatpush1.xpose.msra.mxu0 0.0
        %1186 = vmatprep.subr.mxu0 0.0
        %1187 = vmatpush1.xpose.msra.mxu0 0.0
        %1188 = vmatprep.subr.mxu0 0.0
        %1189 = vmatpush1.xpose.msra.mxu0 0.0
        %1190 = vmatprep.subr.mxu0 0.0
        %1191 = vmatpush1.xpose.msra.mxu0 0.0
        %1192 = vmatprep.subr.mxu0 0.0
        %1193 = vmatpush1.xpose.msra.mxu0 0.0
        %1194 = vmatprep.subr.mxu0 0.0
        %1195 = vmatpush1.xpose.msra.mxu0 0.0
        %1196 = vmatprep.subr.mxu0 0.0
        %1197 = vmatpush1.xpose.msra.mxu0 0.0
        %1198 = vmatprep.subr.mxu0 0.0
        %1199 = vmatpush1.xpose.msra.mxu0 0.0
        %1200 = vmatprep.subr.mxu0 0.0
        %1201 = vmatpush1.xpose.msra.mxu0 0.0
        %1202 = vmatprep.subr.mxu0 0.0
        %1203 = vmatpush1.xpose.msra.mxu0 0.0
        %1204 = vmatprep.subr.mxu0 0.0
        %1205 = vmatpush1.xpose.msra.mxu0 0.0
        %1206 = vmatprep.subr.mxu0 0.0
        %1207 = vmatpush1.xpose.msra.mxu0 0.0
        %1208 = vmatprep.subr.mxu0 0.0
        %1209 = vmatpush1.xpose.msra.mxu0 0.0
        %1210 = vmatprep.subr.mxu0 0.0
        %1211 = vmatpush1.xpose.msra.mxu0 0.0
        %1212 = vmatprep.subr.mxu0 0.0
        %1213 = vmatpush1.xpose.msra.mxu0 0.0
        %1214 = vmatprep.subr.mxu0 0.0
        %1215 = vmatpush1.xpose.msra.mxu0 0.0
        %1216 = vmatprep.subr.mxu0 0.0
        %1217 = vmatpush1.xpose.msra.mxu0 0.0
        %1218 = vmatprep.mubr.f32.mxu0 0.0
        %1219 = vmatmul.mubr.f32.gmra.mrb[0].mxu0 %v1150
        %v1220 = vpop.f32.mrb[0].mxu0
        %v1221 = vadd.f32 0.0, %v1220
        %v1222 = vpop.f32.mrb[0].mxu0
        %1223 = vdwg.mxu0
        %1225 = vrot.lane.b32.xlu0 %v1143, 96
        %v1226 = vpop.permute.xlu0 %1225
        %v1227 = vsel %vm1149, %v1143, 0
        %v1229 = vsel %vm1149, %v1226, 0
        %1231 = vmatprep.subr.mxu0 0.0
        %1232 = vmatpush1.xpose.msra.mxu0 %v1229
        %1233 = vmatprep.subr.mxu0 0.0
        %1234 = vmatpush1.xpose.msra.mxu0 0.0
        %1235 = vmatprep.subr.mxu0 0.0
        %1236 = vmatpush1.xpose.msra.mxu0 0.0
        %1237 = vmatprep.subr.mxu0 0.0
        %1238 = vmatpush1.xpose.msra.mxu0 0.0
        %1239 = vmatprep.subr.mxu0 0.0
        %1240 = vmatpush1.xpose.msra.mxu0 0.0
        %1241 = vmatprep.subr.mxu0 0.0
        %1242 = vmatpush1.xpose.msra.mxu0 0.0
        %1243 = vmatprep.subr.mxu0 0.0
        %1244 = vmatpush1.xpose.msra.mxu0 0.0
        %1245 = vmatprep.subr.mxu0 0.0
        %1246 = vmatpush1.xpose.msra.mxu0 0.0
        %1247 = vmatprep.subr.mxu0 0.0
        %1248 = vmatpush1.xpose.msra.mxu0 0.0
        %1249 = vmatprep.subr.mxu0 0.0
        %1250 = vmatpush1.xpose.msra.mxu0 0.0
        %1251 = vmatprep.subr.mxu0 0.0
        %1252 = vmatpush1.xpose.msra.mxu0 0.0
        %1253 = vmatprep.subr.mxu0 0.0
        %1254 = vmatpush1.xpose.msra.mxu0 0.0
        %1255 = vmatprep.subr.mxu0 0.0
        %1256 = vmatpush1.xpose.msra.mxu0 0.0
        %1257 = vmatprep.subr.mxu0 0.0
        %1258 = vmatpush1.xpose.msra.mxu0 0.0
        %1259 = vmatprep.subr.mxu0 0.0
        %1260 = vmatpush1.xpose.msra.mxu0 0.0
        %1261 = vmatprep.subr.mxu0 0.0
        %1262 = vmatpush1.xpose.msra.mxu0 0.0
        %1263 = vmatprep.subr.mxu0 0.0
        %1264 = vmatpush1.xpose.msra.mxu0 0.0
        %1265 = vmatprep.subr.mxu0 0.0
        %1266 = vmatpush1.xpose.msra.mxu0 0.0
        %1267 = vmatprep.subr.mxu0 0.0
        %1268 = vmatpush1.xpose.msra.mxu0 0.0
        %1269 = vmatprep.subr.mxu0 0.0
        %1270 = vmatpush1.xpose.msra.mxu0 0.0
        %1271 = vmatprep.subr.mxu0 0.0
        %1272 = vmatpush1.xpose.msra.mxu0 0.0
        %1273 = vmatprep.subr.mxu0 0.0
        %1274 = vmatpush1.xpose.msra.mxu0 0.0
        %1275 = vmatprep.subr.mxu0 0.0
        %1276 = vmatpush1.xpose.msra.mxu0 0.0
        %1277 = vmatprep.subr.mxu0 0.0
        %1278 = vmatpush1.xpose.msra.mxu0 0.0
        %1279 = vmatprep.subr.mxu0 0.0
        %1280 = vmatpush1.xpose.msra.mxu0 0.0
        %1281 = vmatprep.subr.mxu0 0.0
        %1282 = vmatpush1.xpose.msra.mxu0 0.0
        %1283 = vmatprep.subr.mxu0 0.0
        %1284 = vmatpush1.xpose.msra.mxu0 0.0
        %1285 = vmatprep.subr.mxu0 0.0
        %1286 = vmatpush1.xpose.msra.mxu0 0.0
        %1287 = vmatprep.subr.mxu0 0.0
        %1288 = vmatpush1.xpose.msra.mxu0 0.0
        %1289 = vmatprep.subr.mxu0 0.0
        %1290 = vmatpush1.xpose.msra.mxu0 0.0
        %1291 = vmatprep.subr.mxu0 0.0
        %1292 = vmatpush1.xpose.msra.mxu0 0.0
        %1293 = vmatprep.subr.mxu0 0.0
        %1294 = vmatpush1.xpose.msra.mxu0 0.0
        %1295 = vmatprep.mubr.f32.mxu0 0.0
        %1296 = vmatmul.mubr.f32.gmra.mrb[0].mxu0 %v1227
        %v1297 = vpop.f32.mrb[0].mxu0
        %v1298 = vadd.f32 0.0, %v1297
        %v1299 = vpop.f32.mrb[0].mxu0
        %1300 = vdwg.mxu0
        %v1301 = vmul.f32 %v1221, 0.35355338
        %v1302 = vmul.f32 %v1298, 0.35355338
        %v1303 = vsel %vm987, %v1301, -1e+09
        %v1304 = vsel %vm988, %v1302, -1e+09
        %v1305 = vsel %vm1149, %v1303, -inf
        %1306 = vmax.xlane.f32.xlu0 %v1305
        %v1307 = vpop.xlane.xlu0 %1306
        %v1308 = vsel %vm1149, %v1304, -inf
        %1309 = vmax.xlane.f32.xlu0 %v1308
        %v1310 = vpop.xlane.xlu0 %1309
        %v1311 = vsub.f32 %v1303, %v1307
        %v1312 = vsub.f32 %v1304, %v1310
        %v1313 = vmul.f32 %v1311, 1.442695
        %v1314 = vpow.pop %v1313
        %v1315 = vmul.f32 %v1312, 1.442695
        %v1316 = vpow.pop %v1315
        %v1317 = vsel %vm1149, %v1314, 0.0
        %1318 = vadd.xlane.f32.xlu0 %v1317
        %v1319 = vpop.xlane.xlu0 %1318
        %v1320 = vsel %vm1149, %v1316, 0.0
        %1321 = vadd.xlane.f32.xlu0 %v1320
        %v1322 = vpop.xlane.xlu0 %1321
        %v1323 = vrcp.pop %v1319
        %v1324 = vrcp.pop %v1322
        %v1325 = vmul.f32 %v1314, %v1323
        %v1326 = vmul.f32 %v1316, %v1324
        %1327 = vrot.lane.b32.xlu0 %v1138, 64
        %v1328 = vpop.permute.xlu0 %1327
        %v1331 = vsel %vm1149, %v1325, 0
        %1333 = vmatprep.subr.mxu0 0.0
        %1334 = vmatpush1.msra.mxu0 %v1328
        %1335 = vmatprep.subr.mxu0 0.0
        %1336 = vmatpush1.msra.mxu0 0.0
        %1337 = vmatprep.subr.mxu0 0.0
        %1338 = vmatpush1.msra.mxu0 0.0
        %1339 = vmatprep.subr.mxu0 0.0
        %1340 = vmatpush1.msra.mxu0 0.0
        %1341 = vmatprep.subr.mxu0 0.0
        %1342 = vmatpush1.msra.mxu0 0.0
        %1343 = vmatprep.subr.mxu0 0.0
        %1344 = vmatpush1.msra.mxu0 0.0
        %1345 = vmatprep.subr.mxu0 0.0
        %1346 = vmatpush1.msra.mxu0 0.0
        %1347 = vmatprep.subr.mxu0 0.0
        %1348 = vmatpush1.msra.mxu0 0.0
        %1349 = vmatprep.subr.mxu0 0.0
        %1350 = vmatpush1.msra.mxu0 0.0
        %1351 = vmatprep.subr.mxu0 0.0
        %1352 = vmatpush1.msra.mxu0 0.0
        %1353 = vmatprep.subr.mxu0 0.0
        %1354 = vmatpush1.msra.mxu0 0.0
        %1355 = vmatprep.subr.mxu0 0.0
        %1356 = vmatpush1.msra.mxu0 0.0
        %1357 = vmatprep.subr.mxu0 0.0
        %1358 = vmatpush1.msra.mxu0 0.0
        %1359 = vmatprep.subr.mxu0 0.0
        %1360 = vmatpush1.msra.mxu0 0.0
        %1361 = vmatprep.subr.mxu0 0.0
        %1362 = vmatpush1.msra.mxu0 0.0
        %1363 = vmatprep.subr.mxu0 0.0
        %1364 = vmatpush1.msra.mxu0 0.0
        %1365 = vmatprep.subr.mxu0 0.0
        %1366 = vmatpush1.msra.mxu0 0.0
        %1367 = vmatprep.subr.mxu0 0.0
        %1368 = vmatpush1.msra.mxu0 0.0
        %1369 = vmatprep.subr.mxu0 0.0
        %1370 = vmatpush1.msra.mxu0 0.0
        %1371 = vmatprep.subr.mxu0 0.0
        %1372 = vmatpush1.msra.mxu0 0.0
        %1373 = vmatprep.subr.mxu0 0.0
        %1374 = vmatpush1.msra.mxu0 0.0
        %1375 = vmatprep.subr.mxu0 0.0
        %1376 = vmatpush1.msra.mxu0 0.0
        %1377 = vmatprep.subr.mxu0 0.0
        %1378 = vmatpush1.msra.mxu0 0.0
        %1379 = vmatprep.subr.mxu0 0.0
        %1380 = vmatpush1.msra.mxu0 0.0
        %1381 = vmatprep.subr.mxu0 0.0
        %1382 = vmatpush1.msra.mxu0 0.0
        %1383 = vmatprep.subr.mxu0 0.0
        %1384 = vmatpush1.msra.mxu0 0.0
        %1385 = vmatprep.subr.mxu0 0.0
        %1386 = vmatpush1.msra.mxu0 0.0
        %1387 = vmatprep.subr.mxu0 0.0
        %1388 = vmatpush1.msra.mxu0 0.0
        %1389 = vmatprep.subr.mxu0 0.0
        %1390 = vmatpush1.msra.mxu0 0.0
        %1391 = vmatprep.subr.mxu0 0.0
        %1392 = vmatpush1.msra.mxu0 0.0
        %1393 = vmatprep.subr.mxu0 0.0
        %1394 = vmatpush1.msra.mxu0 0.0
        %1395 = vmatprep.subr.mxu0 0.0
        %1396 = vmatpush1.msra.mxu0 0.0
        %1397 = vmatprep.mubr.f32.mxu0 0.0
        %1398 = vmatmul.mubr.f32.gmra.mrb[0].mxu0 %v1331
        %v1399 = vpop.f32.mrb[0].mxu0
        %v1400 = vadd.f32 0.0, %v1399
        %v1401 = vpop.f32.mrb[0].mxu0
        %1402 = vdwg.mxu0
        %1403 = vrot.lane.b32.xlu0 %v1143, 64
        %v1404 = vpop.permute.xlu0 %1403
        %v1407 = vsel %vm1149, %v1326, 0
        %1409 = vmatprep.subr.mxu0 0.0
        %1410 = vmatpush1.msra.mxu0 %v1404
        %1411 = vmatprep.subr.mxu0 0.0
        %1412 = vmatpush1.msra.mxu0 0.0
        %1413 = vmatprep.subr.mxu0 0.0
        %1414 = vmatpush1.msra.mxu0 0.0
        %1415 = vmatprep.subr.mxu0 0.0
        %1416 = vmatpush1.msra.mxu0 0.0
        %1417 = vmatprep.subr.mxu0 0.0
        %1418 = vmatpush1.msra.mxu0 0.0
        %1419 = vmatprep.subr.mxu0 0.0
        %1420 = vmatpush1.msra.mxu0 0.0
        %1421 = vmatprep.subr.mxu0 0.0
        %1422 = vmatpush1.msra.mxu0 0.0
        %1423 = vmatprep.subr.mxu0 0.0
        %1424 = vmatpush1.msra.mxu0 0.0
        %1425 = vmatprep.subr.mxu0 0.0
        %1426 = vmatpush1.msra.mxu0 0.0
        %1427 = vmatprep.subr.mxu0 0.0
        %1428 = vmatpush1.msra.mxu0 0.0
        %1429 = vmatprep.subr.mxu0 0.0
        %1430 = vmatpush1.msra.mxu0 0.0
        %1431 = vmatprep.subr.mxu0 0.0
        %1432 = vmatpush1.msra.mxu0 0.0
        %1433 = vmatprep.subr.mxu0 0.0
        %1434 = vmatpush1.msra.mxu0 0.0
        %1435 = vmatprep.subr.mxu0 0.0
        %1436 = vmatpush1.msra.mxu0 0.0
        %1437 = vmatprep.subr.mxu0 0.0
        %1438 = vmatpush1.msra.mxu0 0.0
        %1439 = vmatprep.subr.mxu0 0.0
        %1440 = vmatpush1.msra.mxu0 0.0
        %1441 = vmatprep.subr.mxu0 0.0
        %1442 = vmatpush1.msra.mxu0 0.0
        %1443 = vmatprep.subr.mxu0 0.0
        %1444 = vmatpush1.msra.mxu0 0.0
        %1445 = vmatprep.subr.mxu0 0.0
        %1446 = vmatpush1.msra.mxu0 0.0
        %1447 = vmatprep.subr.mxu0 0.0
        %1448 = vmatpush1.msra.mxu0 0.0
        %1449 = vmatprep.subr.mxu0 0.0
        %1450 = vmatpush1.msra.mxu0 0.0
        %1451 = vmatprep.subr.mxu0 0.0
        %1452 = vmatpush1.msra.mxu0 0.0
        %1453 = vmatprep.subr.mxu0 0.0
        %1454 = vmatpush1.msra.mxu0 0.0
        %1455 = vmatprep.subr.mxu0 0.0
        %1456 = vmatpush1.msra.mxu0 0.0
        %1457 = vmatprep.subr.mxu0 0.0
        %1458 = vmatpush1.msra.mxu0 0.0
        %1459 = vmatprep.subr.mxu0 0.0
        %1460 = vmatpush1.msra.mxu0 0.0
        %1461 = vmatprep.subr.mxu0 0.0
        %1462 = vmatpush1.msra.mxu0 0.0
        %1463 = vmatprep.subr.mxu0 0.0
        %1464 = vmatpush1.msra.mxu0 0.0
        %1465 = vmatprep.subr.mxu0 0.0
        %1466 = vmatpush1.msra.mxu0 0.0
        %1467 = vmatprep.subr.mxu0 0.0
        %1468 = vmatpush1.msra.mxu0 0.0
        %1469 = vmatprep.subr.mxu0 0.0
        %1470 = vmatpush1.msra.mxu0 0.0
        %1471 = vmatprep.subr.mxu0 0.0
        %1472 = vmatpush1.msra.mxu0 0.0
        %1473 = vmatprep.mubr.f32.mxu0 0.0
        %1474 = vmatmul.mubr.f32.gmra.mrb[0].mxu0 %v1407
        %v1475 = vpop.f32.mrb[0].mxu0
        %v1476 = vadd.f32 0.0, %v1475
        %v1477 = vpop.f32.mrb[0].mxu0
        %1478 = vdwg.mxu0
        %1479 = vrot.lane.b32.xlu0 %v1138, 120
        %v1480 = vpop.permute.xlu0 %1479
        %1481 = vrot.lane.b32.xlu0 %v1138, 88
        %v1482 = vpop.permute.xlu0 %1481
        %v1483 = vsel %vm1149, %v1480, 0
        %v1485 = vsel %vm1149, %v1482, 0
        %1487 = vmatprep.subr.mxu0 0.0
        %1488 = vmatpush1.xpose.msra.mxu0 %v1485
        %1489 = vmatprep.subr.mxu0 0.0
        %1490 = vmatpush1.xpose.msra.mxu0 0.0
        %1491 = vmatprep.subr.mxu0 0.0
        %1492 = vmatpush1.xpose.msra.mxu0 0.0
        %1493 = vmatprep.subr.mxu0 0.0
        %1494 = vmatpush1.xpose.msra.mxu0 0.0
        %1495 = vmatprep.subr.mxu0 0.0
        %1496 = vmatpush1.xpose.msra.mxu0 0.0
        %1497 = vmatprep.subr.mxu0 0.0
        %1498 = vmatpush1.xpose.msra.mxu0 0.0
        %1499 = vmatprep.subr.mxu0 0.0
        %1500 = vmatpush1.xpose.msra.mxu0 0.0
        %1501 = vmatprep.subr.mxu0 0.0
        %1502 = vmatpush1.xpose.msra.mxu0 0.0
        %1503 = vmatprep.subr.mxu0 0.0
        %1504 = vmatpush1.xpose.msra.mxu0 0.0
        %1505 = vmatprep.subr.mxu0 0.0
        %1506 = vmatpush1.xpose.msra.mxu0 0.0
        %1507 = vmatprep.subr.mxu0 0.0
        %1508 = vmatpush1.xpose.msra.mxu0 0.0
        %1509 = vmatprep.subr.mxu0 0.0
        %1510 = vmatpush1.xpose.msra.mxu0 0.0
        %1511 = vmatprep.subr.mxu0 0.0
        %1512 = vmatpush1.xpose.msra.mxu0 0.0
        %1513 = vmatprep.subr.mxu0 0.0
        %1514 = vmatpush1.xpose.msra.mxu0 0.0
        %1515 = vmatprep.subr.mxu0 0.0
        %1516 = vmatpush1.xpose.msra.mxu0 0.0
        %1517 = vmatprep.subr.mxu0 0.0
        %1518 = vmatpush1.xpose.msra.mxu0 0.0
        %1519 = vmatprep.subr.mxu0 0.0
        %1520 = vmatpush1.xpose.msra.mxu0 0.0
        %1521 = vmatprep.subr.mxu0 0.0
        %1522 = vmatpush1.xpose.msra.mxu0 0.0
        %1523 = vmatprep.subr.mxu0 0.0
        %1524 = vmatpush1.xpose.msra.mxu0 0.0
        %1525 = vmatprep.subr.mxu0 0.0
        %1526 = vmatpush1.xpose.msra.mxu0 0.0
        %1527 = vmatprep.subr.mxu0 0.0
        %1528 = vmatpush1.xpose.msra.mxu0 0.0
        %1529 = vmatprep.subr.mxu0 0.0
        %1530 = vmatpush1.xpose.msra.mxu0 0.0
        %1531 = vmatprep.subr.mxu0 0.0
        %1532 = vmatpush1.xpose.msra.mxu0 0.0
        %1533 = vmatprep.subr.mxu0 0.0
        %1534 = vmatpush1.xpose.msra.mxu0 0.0
        %1535 = vmatprep.subr.mxu0 0.0
        %1536 = vmatpush1.xpose.msra.mxu0 0.0
        %1537 = vmatprep.subr.mxu0 0.0
        %1538 = vmatpush1.xpose.msra.mxu0 0.0
        %1539 = vmatprep.subr.mxu0 0.0
        %1540 = vmatpush1.xpose.msra.mxu0 0.0
        %1541 = vmatprep.subr.mxu0 0.0
        %1542 = vmatpush1.xpose.msra.mxu0 0.0
        %1543 = vmatprep.subr.mxu0 0.0
        %1544 = vmatpush1.xpose.msra.mxu0 0.0
        %1545 = vmatprep.subr.mxu0 0.0
        %1546 = vmatpush1.xpose.msra.mxu0 0.0
        %1547 = vmatprep.subr.mxu0 0.0
        %1548 = vmatpush1.xpose.msra.mxu0 0.0
        %1549 = vmatprep.subr.mxu0 0.0
        %1550 = vmatpush1.xpose.msra.mxu0 0.0
        %1551 = vmatprep.mubr.f32.mxu0 0.0
        %1552 = vmatmul.mubr.f32.gmra.mrb[0].mxu0 %v1483
        %v1553 = vpop.f32.mrb[0].mxu0
        %v1554 = vadd.f32 0.0, %v1553
        %v1555 = vpop.f32.mrb[0].mxu0
        %1556 = vdwg.mxu0
        %1557 = vrot.lane.b32.xlu0 %v1143, 120
        %v1558 = vpop.permute.xlu0 %1557
        %1559 = vrot.lane.b32.xlu0 %v1143, 88
        %v1560 = vpop.permute.xlu0 %1559
        %v1561 = vsel %vm1149, %v1558, 0
        %v1563 = vsel %vm1149, %v1560, 0
        %1565 = vmatprep.subr.mxu0 0.0
        %1566 = vmatpush1.xpose.msra.mxu0 %v1563
        %1567 = vmatprep.subr.mxu0 0.0
        %1568 = vmatpush1.xpose.msra.mxu0 0.0
        %1569 = vmatprep.subr.mxu0 0.0
        %1570 = vmatpush1.xpose.msra.mxu0 0.0
        %1571 = vmatprep.subr.mxu0 0.0
        %1572 = vmatpush1.xpose.msra.mxu0 0.0
        %1573 = vmatprep.subr.mxu0 0.0
        %1574 = vmatpush1.xpose.msra.mxu0 0.0
        %1575 = vmatprep.subr.mxu0 0.0
        %1576 = vmatpush1.xpose.msra.mxu0 0.0
        %1577 = vmatprep.subr.mxu0 0.0
        %1578 = vmatpush1.xpose.msra.mxu0 0.0
        %1579 = vmatprep.subr.mxu0 0.0
        %1580 = vmatpush1.xpose.msra.mxu0 0.0
        %1581 = vmatprep.subr.mxu0 0.0
        %1582 = vmatpush1.xpose.msra.mxu0 0.0
        %1583 = vmatprep.subr.mxu0 0.0
        %1584 = vmatpush1.xpose.msra.mxu0 0.0
        %1585 = vmatprep.subr.mxu0 0.0
        %1586 = vmatpush1.xpose.msra.mxu0 0.0
        %1587 = vmatprep.subr.mxu0 0.0
        %1588 = vmatpush1.xpose.msra.mxu0 0.0
        %1589 = vmatprep.subr.mxu0 0.0
        %1590 = vmatpush1.xpose.msra.mxu0 0.0
        %1591 = vmatprep.subr.mxu0 0.0
        %1592 = vmatpush1.xpose.msra.mxu0 0.0
        %1593 = vmatprep.subr.mxu0 0.0
        %1594 = vmatpush1.xpose.msra.mxu0 0.0
        %1595 = vmatprep.subr.mxu0 0.0
        %1596 = vmatpush1.xpose.msra.mxu0 0.0
        %1597 = vmatprep.subr.mxu0 0.0
        %1598 = vmatpush1.xpose.msra.mxu0 0.0
        %1599 = vmatprep.subr.mxu0 0.0
        %1600 = vmatpush1.xpose.msra.mxu0 0.0
        %1601 = vmatprep.subr.mxu0 0.0
        %1602 = vmatpush1.xpose.msra.mxu0 0.0
        %1603 = vmatprep.subr.mxu0 0.0
        %1604 = vmatpush1.xpose.msra.mxu0 0.0
        %1605 = vmatprep.subr.mxu0 0.0
        %1606 = vmatpush1.xpose.msra.mxu0 0.0
        %1607 = vmatprep.subr.mxu0 0.0
        %1608 = vmatpush1.xpose.msra.mxu0 0.0
        %1609 = vmatprep.subr.mxu0 0.0
        %1610 = vmatpush1.xpose.msra.mxu0 0.0
        %1611 = vmatprep.subr.mxu0 0.0
        %1612 = vmatpush1.xpose.msra.mxu0 0.0
        %1613 = vmatprep.subr.mxu0 0.0
        %1614 = vmatpush1.xpose.msra.mxu0 0.0
        %1615 = vmatprep.subr.mxu0 0.0
        %1616 = vmatpush1.xpose.msra.mxu0 0.0
        %1617 = vmatprep.subr.mxu0 0.0
        %1618 = vmatpush1.xpose.msra.mxu0 0.0
        %1619 = vmatprep.subr.mxu0 0.0
        %1620 = vmatpush1.xpose.msra.mxu0 0.0
        %1621 = vmatprep.subr.mxu0 0.0
        %1622 = vmatpush1.xpose.msra.mxu0 0.0
        %1623 = vmatprep.subr.mxu0 0.0
        %1624 = vmatpush1.xpose.msra.mxu0 0.0
        %1625 = vmatprep.subr.mxu0 0.0
        %1626 = vmatpush1.xpose.msra.mxu0 0.0
        %1627 = vmatprep.subr.mxu0 0.0
        %1628 = vmatpush1.xpose.msra.mxu0 0.0
        %1629 = vmatprep.mubr.f32.mxu0 0.0
        %1630 = vmatmul.mubr.f32.gmra.mrb[0].mxu0 %v1561
        %v1631 = vpop.f32.mrb[0].mxu0
        %v1632 = vadd.f32 0.0, %v1631
        %v1633 = vpop.f32.mrb[0].mxu0
        %1634 = vdwg.mxu0
        %v1635 = vmul.f32 %v1554, 0.35355338
        %v1636 = vmul.f32 %v1632, 0.35355338
        %v1637 = vsel %vm987, %v1635, -1e+09
        %v1638 = vsel %vm988, %v1636, -1e+09
        %v1639 = vsel %vm1149, %v1637, -inf
        %1640 = vmax.xlane.f32.xlu0 %v1639
        %v1641 = vpop.xlane.xlu0 %1640
        %v1642 = vsel %vm1149, %v1638, -inf
        %1643 = vmax.xlane.f32.xlu0 %v1642
        %v1644 = vpop.xlane.xlu0 %1643
        %v1645 = vsub.f32 %v1637, %v1641
        %v1646 = vsub.f32 %v1638, %v1644
        %v1647 = vmul.f32 %v1645, 1.442695
        %v1648 = vpow.pop %v1647
        %v1649 = vmul.f32 %v1646, 1.442695
        %v1650 = vpow.pop %v1649
        %v1651 = vsel %vm1149, %v1648, 0.0
        %1652 = vadd.xlane.f32.xlu0 %v1651
        %v1653 = vpop.xlane.xlu0 %1652
        %v1654 = vsel %vm1149, %v1650, 0.0
        %1655 = vadd.xlane.f32.xlu0 %v1654
        %v1656 = vpop.xlane.xlu0 %1655
        %v1657 = vrcp.pop %v1653
        %v1658 = vrcp.pop %v1656
        %v1659 = vmul.f32 %v1648, %v1657
        %v1660 = vmul.f32 %v1650, %v1658
        %1661 = vrot.lane.b32.xlu0 %v1138, 56
        %v1662 = vpop.permute.xlu0 %1661
        %v1665 = vsel %vm1149, %v1659, 0
        %1667 = vmatprep.subr.mxu0 0.0
        %1668 = vmatpush1.msra.mxu0 %v1662
        %1669 = vmatprep.subr.mxu0 0.0
        %1670 = vmatpush1.msra.mxu0 0.0
        %1671 = vmatprep.subr.mxu0 0.0
        %1672 = vmatpush1.msra.mxu0 0.0
        %1673 = vmatprep.subr.mxu0 0.0
        %1674 = vmatpush1.msra.mxu0 0.0
        %1675 = vmatprep.subr.mxu0 0.0
        %1676 = vmatpush1.msra.mxu0 0.0
        %1677 = vmatprep.subr.mxu0 0.0
        %1678 = vmatpush1.msra.mxu0 0.0
        %1679 = vmatprep.subr.mxu0 0.0
        %1680 = vmatpush1.msra.mxu0 0.0
        %1681 = vmatprep.subr.mxu0 0.0
        %1682 = vmatpush1.msra.mxu0 0.0
        %1683 = vmatprep.subr.mxu0 0.0
        %1684 = vmatpush1.msra.mxu0 0.0
        %1685 = vmatprep.subr.mxu0 0.0
        %1686 = vmatpush1.msra.mxu0 0.0
        %1687 = vmatprep.subr.mxu0 0.0
        %1688 = vmatpush1.msra.mxu0 0.0
        %1689 = vmatprep.subr.mxu0 0.0
        %1690 = vmatpush1.msra.mxu0 0.0
        %1691 = vmatprep.subr.mxu0 0.0
        %1692 = vmatpush1.msra.mxu0 0.0
        %1693 = vmatprep.subr.mxu0 0.0
        %1694 = vmatpush1.msra.mxu0 0.0
        %1695 = vmatprep.subr.mxu0 0.0
        %1696 = vmatpush1.msra.mxu0 0.0
        %1697 = vmatprep.subr.mxu0 0.0
        %1698 = vmatpush1.msra.mxu0 0.0
        %1699 = vmatprep.subr.mxu0 0.0
        %1700 = vmatpush1.msra.mxu0 0.0
        %1701 = vmatprep.subr.mxu0 0.0
        %1702 = vmatpush1.msra.mxu0 0.0
        %1703 = vmatprep.subr.mxu0 0.0
        %1704 = vmatpush1.msra.mxu0 0.0
        %1705 = vmatprep.subr.mxu0 0.0
        %1706 = vmatpush1.msra.mxu0 0.0
        %1707 = vmatprep.subr.mxu0 0.0
        %1708 = vmatpush1.msra.mxu0 0.0
        %1709 = vmatprep.subr.mxu0 0.0
        %1710 = vmatpush1.msra.mxu0 0.0
        %1711 = vmatprep.subr.mxu0 0.0
        %1712 = vmatpush1.msra.mxu0 0.0
        %1713 = vmatprep.subr.mxu0 0.0
        %1714 = vmatpush1.msra.mxu0 0.0
        %1715 = vmatprep.subr.mxu0 0.0
        %1716 = vmatpush1.msra.mxu0 0.0
        %1717 = vmatprep.subr.mxu0 0.0
        %1718 = vmatpush1.msra.mxu0 0.0
        %1719 = vmatprep.subr.mxu0 0.0
        %1720 = vmatpush1.msra.mxu0 0.0
        %1721 = vmatprep.subr.mxu0 0.0
        %1722 = vmatpush1.msra.mxu0 0.0
        %1723 = vmatprep.subr.mxu0 0.0
        %1724 = vmatpush1.msra.mxu0 0.0
        %1725 = vmatprep.subr.mxu0 0.0
        %1726 = vmatpush1.msra.mxu0 0.0
        %1727 = vmatprep.subr.mxu0 0.0
        %1728 = vmatpush1.msra.mxu0 0.0
        %1729 = vmatprep.subr.mxu0 0.0
        %1730 = vmatpush1.msra.mxu0 0.0
        %1731 = vmatprep.mubr.f32.mxu0 0.0
        %1732 = vmatmul.mubr.f32.gmra.mrb[0].mxu0 %v1665
        %v1733 = vpop.f32.mrb[0].mxu0
        %v1734 = vadd.f32 0.0, %v1733
        %v1735 = vpop.f32.mrb[0].mxu0
        %1736 = vdwg.mxu0
        %1737 = vrot.lane.b32.xlu0 %v1143, 56
        %v1738 = vpop.permute.xlu0 %1737
        %v1741 = vsel %vm1149, %v1660, 0
        %1743 = vmatprep.subr.mxu0 0.0
        %1744 = vmatpush1.msra.mxu0 %v1738
        %1745 = vmatprep.subr.mxu0 0.0
        %1746 = vmatpush1.msra.mxu0 0.0
        %1747 = vmatprep.subr.mxu0 0.0
        %1748 = vmatpush1.msra.mxu0 0.0
        %1749 = vmatprep.subr.mxu0 0.0
        %1750 = vmatpush1.msra.mxu0 0.0
        %1751 = vmatprep.subr.mxu0 0.0
        %1752 = vmatpush1.msra.mxu0 0.0
        %1753 = vmatprep.subr.mxu0 0.0
        %1754 = vmatpush1.msra.mxu0 0.0
        %1755 = vmatprep.subr.mxu0 0.0
        %1756 = vmatpush1.msra.mxu0 0.0
        %1757 = vmatprep.subr.mxu0 0.0
        %1758 = vmatpush1.msra.mxu0 0.0
        %1759 = vmatprep.subr.mxu0 0.0
        %1760 = vmatpush1.msra.mxu0 0.0
        %1761 = vmatprep.subr.mxu0 0.0
        %1762 = vmatpush1.msra.mxu0 0.0
        %1763 = vmatprep.subr.mxu0 0.0
        %1764 = vmatpush1.msra.mxu0 0.0
        %1765 = vmatprep.subr.mxu0 0.0
        %1766 = vmatpush1.msra.mxu0 0.0
        %1767 = vmatprep.subr.mxu0 0.0
        %1768 = vmatpush1.msra.mxu0 0.0
        %1769 = vmatprep.subr.mxu0 0.0
        %1770 = vmatpush1.msra.mxu0 0.0
        %1771 = vmatprep.subr.mxu0 0.0
        %1772 = vmatpush1.msra.mxu0 0.0
        %1773 = vmatprep.subr.mxu0 0.0
        %1774 = vmatpush1.msra.mxu0 0.0
        %1775 = vmatprep.subr.mxu0 0.0
        %1776 = vmatpush1.msra.mxu0 0.0
        %1777 = vmatprep.subr.mxu0 0.0
        %1778 = vmatpush1.msra.mxu0 0.0
        %1779 = vmatprep.subr.mxu0 0.0
        %1780 = vmatpush1.msra.mxu0 0.0
        %1781 = vmatprep.subr.mxu0 0.0
        %1782 = vmatpush1.msra.mxu0 0.0
        %1783 = vmatprep.subr.mxu0 0.0
        %1784 = vmatpush1.msra.mxu0 0.0
        %1785 = vmatprep.subr.mxu0 0.0
        %1786 = vmatpush1.msra.mxu0 0.0
        %1787 = vmatprep.subr.mxu0 0.0
        %1788 = vmatpush1.msra.mxu0 0.0
        %1789 = vmatprep.subr.mxu0 0.0
        %1790 = vmatpush1.msra.mxu0 0.0
        %1791 = vmatprep.subr.mxu0 0.0
        %1792 = vmatpush1.msra.mxu0 0.0
        %1793 = vmatprep.subr.mxu0 0.0
        %1794 = vmatpush1.msra.mxu0 0.0
        %1795 = vmatprep.subr.mxu0 0.0
        %1796 = vmatpush1.msra.mxu0 0.0
        %1797 = vmatprep.subr.mxu0 0.0
        %1798 = vmatpush1.msra.mxu0 0.0
        %1799 = vmatprep.subr.mxu0 0.0
        %1800 = vmatpush1.msra.mxu0 0.0
        %1801 = vmatprep.subr.mxu0 0.0
        %1802 = vmatpush1.msra.mxu0 0.0
        %1803 = vmatprep.subr.mxu0 0.0
        %1804 = vmatpush1.msra.mxu0 0.0
        %1805 = vmatprep.subr.mxu0 0.0
        %1806 = vmatpush1.msra.mxu0 0.0
        %1807 = vmatprep.mubr.f32.mxu0 0.0
        %1808 = vmatmul.mubr.f32.gmra.mrb[0].mxu0 %v1741
        %v1809 = vpop.f32.mrb[0].mxu0
        %v1810 = vadd.f32 0.0, %v1809
        %v1811 = vpop.f32.mrb[0].mxu0
        %1812 = vdwg.mxu0
        %1813 = vrot.lane.b32.xlu0 %v1138, 112
        %v1814 = vpop.permute.xlu0 %1813
        %1815 = vrot.lane.b32.xlu0 %v1138, 80
        %v1816 = vpop.permute.xlu0 %1815
        %v1817 = vsel %vm1149, %v1814, 0
        %v1819 = vsel %vm1149, %v1816, 0
        %1821 = vmatprep.subr.mxu0 0.0
        %1822 = vmatpush1.xpose.msra.mxu0 %v1819
        %1823 = vmatprep.subr.mxu0 0.0
        %1824 = vmatpush1.xpose.msra.mxu0 0.0
        %1825 = vmatprep.subr.mxu0 0.0
        %1826 = vmatpush1.xpose.msra.mxu0 0.0
        %1827 = vmatprep.subr.mxu0 0.0
        %1828 = vmatpush1.xpose.msra.mxu0 0.0
        %1829 = vmatprep.subr.mxu0 0.0
        %1830 = vmatpush1.xpose.msra.mxu0 0.0
        %1831 = vmatprep.subr.mxu0 0.0
        %1832 = vmatpush1.xpose.msra.mxu0 0.0
        %1833 = vmatprep.subr.mxu0 0.0
        %1834 = vmatpush1.xpose.msra.mxu0 0.0
        %1835 = vmatprep.subr.mxu0 0.0
        %1836 = vmatpush1.xpose.msra.mxu0 0.0
        %1837 = vmatprep.subr.mxu0 0.0
        %1838 = vmatpush1.xpose.msra.mxu0 0.0
        %1839 = vmatprep.subr.mxu0 0.0
        %1840 = vmatpush1.xpose.msra.mxu0 0.0
        %1841 = vmatprep.subr.mxu0 0.0
        %1842 = vmatpush1.xpose.msra.mxu0 0.0
        %1843 = vmatprep.subr.mxu0 0.0
        %1844 = vmatpush1.xpose.msra.mxu0 0.0
        %1845 = vmatprep.subr.mxu0 0.0
        %1846 = vmatpush1.xpose.msra.mxu0 0.0
        %1847 = vmatprep.subr.mxu0 0.0
        %1848 = vmatpush1.xpose.msra.mxu0 0.0
        %1849 = vmatprep.subr.mxu0 0.0
        %1850 = vmatpush1.xpose.msra.mxu0 0.0
        %1851 = vmatprep.subr.mxu0 0.0
        %1852 = vmatpush1.xpose.msra.mxu0 0.0
        %1853 = vmatprep.subr.mxu0 0.0
        %1854 = vmatpush1.xpose.msra.mxu0 0.0
        %1855 = vmatprep.subr.mxu0 0.0
        %1856 = vmatpush1.xpose.msra.mxu0 0.0
        %1857 = vmatprep.subr.mxu0 0.0
        %1858 = vmatpush1.xpose.msra.mxu0 0.0
        %1859 = vmatprep.subr.mxu0 0.0
        %1860 = vmatpush1.xpose.msra.mxu0 0.0
        %1861 = vmatprep.subr.mxu0 0.0
        %1862 = vmatpush1.xpose.msra.mxu0 0.0
        %1863 = vmatprep.subr.mxu0 0.0
        %1864 = vmatpush1.xpose.msra.mxu0 0.0
        %1865 = vmatprep.subr.mxu0 0.0
        %1866 = vmatpush1.xpose.msra.mxu0 0.0
        %1867 = vmatprep.subr.mxu0 0.0
        %1868 = vmatpush1.xpose.msra.mxu0 0.0
        %1869 = vmatprep.subr.mxu0 0.0
        %1870 = vmatpush1.xpose.msra.mxu0 0.0
        %1871 = vmatprep.subr.mxu0 0.0
        %1872 = vmatpush1.xpose.msra.mxu0 0.0
        %1873 = vmatprep.subr.mxu0 0.0
        %1874 = vmatpush1.xpose.msra.mxu0 0.0
        %1875 = vmatprep.subr.mxu0 0.0
        %1876 = vmatpush1.xpose.msra.mxu0 0.0
        %1877 = vmatprep.subr.mxu0 0.0
        %1878 = vmatpush1.xpose.msra.mxu0 0.0
        %1879 = vmatprep.subr.mxu0 0.0
        %1880 = vmatpush1.xpose.msra.mxu0 0.0
        %1881 = vmatprep.subr.mxu0 0.0
        %1882 = vmatpush1.xpose.msra.mxu0 0.0
        %1883 = vmatprep.subr.mxu0 0.0
        %1884 = vmatpush1.xpose.msra.mxu0 0.0
        %1885 = vmatprep.mubr.f32.mxu0 0.0
        %1886 = vmatmul.mubr.f32.gmra.mrb[0].mxu0 %v1817
        %v1887 = vpop.f32.mrb[0].mxu0
        %v1888 = vadd.f32 0.0, %v1887
        %v1889 = vpop.f32.mrb[0].mxu0
        %1890 = vdwg.mxu0
        %1891 = vrot.lane.b32.xlu0 %v1143, 112
        %v1892 = vpop.permute.xlu0 %1891
        %1893 = vrot.lane.b32.xlu0 %v1143, 80
        %v1894 = vpop.permute.xlu0 %1893
        %v1895 = vsel %vm1149, %v1892, 0
        %v1897 = vsel %vm1149, %v1894, 0
        %1899 = vmatprep.subr.mxu0 0.0
        %1900 = vmatpush1.xpose.msra.mxu0 %v1897
        %1901 = vmatprep.subr.mxu0 0.0
        %1902 = vmatpush1.xpose.msra.mxu0 0.0
        %1903 = vmatprep.subr.mxu0 0.0
        %1904 = vmatpush1.xpose.msra.mxu0 0.0
        %1905 = vmatprep.subr.mxu0 0.0
        %1906 = vmatpush1.xpose.msra.mxu0 0.0
        %1907 = vmatprep.subr.mxu0 0.0
        %1908 = vmatpush1.xpose.msra.mxu0 0.0
        %1909 = vmatprep.subr.mxu0 0.0
        %1910 = vmatpush1.xpose.msra.mxu0 0.0
        %1911 = vmatprep.subr.mxu0 0.0
        %1912 = vmatpush1.xpose.msra.mxu0 0.0
        %1913 = vmatprep.subr.mxu0 0.0
        %1914 = vmatpush1.xpose.msra.mxu0 0.0
        %1915 = vmatprep.subr.mxu0 0.0
        %1916 = vmatpush1.xpose.msra.mxu0 0.0
        %1917 = vmatprep.subr.mxu0 0.0
        %1918 = vmatpush1.xpose.msra.mxu0 0.0
        %1919 = vmatprep.subr.mxu0 0.0
        %1920 = vmatpush1.xpose.msra.mxu0 0.0
        %1921 = vmatprep.subr.mxu0 0.0
        %1922 = vmatpush1.xpose.msra.mxu0 0.0
        %1923 = vmatprep.subr.mxu0 0.0
        %1924 = vmatpush1.xpose.msra.mxu0 0.0
        %1925 = vmatprep.subr.mxu0 0.0
        %1926 = vmatpush1.xpose.msra.mxu0 0.0
        %1927 = vmatprep.subr.mxu0 0.0
        %1928 = vmatpush1.xpose.msra.mxu0 0.0
        %1929 = vmatprep.subr.mxu0 0.0
        %1930 = vmatpush1.xpose.msra.mxu0 0.0
        %1931 = vmatprep.subr.mxu0 0.0
        %1932 = vmatpush1.xpose.msra.mxu0 0.0
        %1933 = vmatprep.subr.mxu0 0.0
        %1934 = vmatpush1.xpose.msra.mxu0 0.0
        %1935 = vmatprep.subr.mxu0 0.0
        %1936 = vmatpush1.xpose.msra.mxu0 0.0
        %1937 = vmatprep.subr.mxu0 0.0
        %1938 = vmatpush1.xpose.msra.mxu0 0.0
        %1939 = vmatprep.subr.mxu0 0.0
        %1940 = vmatpush1.xpose.msra.mxu0 0.0
        %1941 = vmatprep.subr.mxu0 0.0
        %1942 = vmatpush1.xpose.msra.mxu0 0.0
        %1943 = vmatprep.subr.mxu0 0.0
        %1944 = vmatpush1.xpose.msra.mxu0 0.0
        %1945 = vmatprep.subr.mxu0 0.0
        %1946 = vmatpush1.xpose.msra.mxu0 0.0
        %1947 = vmatprep.subr.mxu0 0.0
        %1948 = vmatpush1.xpose.msra.mxu0 0.0
        %1949 = vmatprep.subr.mxu0 0.0
        %1950 = vmatpush1.xpose.msra.mxu0 0.0
        %1951 = vmatprep.subr.mxu0 0.0
        %1952 = vmatpush1.xpose.msra.mxu0 0.0
        %1953 = vmatprep.subr.mxu0 0.0
        %1954 = vmatpush1.xpose.msra.mxu0 0.0
        %1955 = vmatprep.subr.mxu0 0.0
        %1956 = vmatpush1.xpose.msra.mxu0 0.0
        %1957 = vmatprep.subr.mxu0 0.0
        %1958 = vmatpush1.xpose.msra.mxu0 0.0
        %1959 = vmatprep.subr.mxu0 0.0
        %1960 = vmatpush1.xpose.msra.mxu0 0.0
        %1961 = vmatprep.subr.mxu0 0.0
        %1962 = vmatpush1.xpose.msra.mxu0 0.0
        %1963 = vmatprep.mubr.f32.mxu0 0.0
        %1964 = vmatmul.mubr.f32.gmra.mrb[0].mxu0 %v1895
        %v1965 = vpop.f32.mrb[0].mxu0
        %v1966 = vadd.f32 0.0, %v1965
        %v1967 = vpop.f32.mrb[0].mxu0
        %1968 = vdwg.mxu0
        %v1969 = vmul.f32 %v1888, 0.35355338
        %v1970 = vmul.f32 %v1966, 0.35355338
        %v1971 = vsel %vm987, %v1969, -1e+09
        %v1972 = vsel %vm988, %v1970, -1e+09
        %v1973 = vsel %vm1149, %v1971, -inf
        %1974 = vmax.xlane.f32.xlu0 %v1973
        %v1975 = vpop.xlane.xlu0 %1974
        %v1976 = vsel %vm1149, %v1972, -inf
        %1977 = vmax.xlane.f32.xlu0 %v1976
        %v1978 = vpop.xlane.xlu0 %1977
        %v1979 = vsub.f32 %v1971, %v1975
        %v1980 = vsub.f32 %v1972, %v1978
        %v1981 = vmul.f32 %v1979, 1.442695
        %v1982 = vpow.pop %v1981
        %v1983 = vmul.f32 %v1980, 1.442695
        %v1984 = vpow.pop %v1983
        %v1985 = vsel %vm1149, %v1982, 0.0
        %1986 = vadd.xlane.f32.xlu0 %v1985
        %v1987 = vpop.xlane.xlu0 %1986
        %v1988 = vsel %vm1149, %v1984, 0.0
        %1989 = vadd.xlane.f32.xlu0 %v1988
        %v1990 = vpop.xlane.xlu0 %1989
        %v1991 = vrcp.pop %v1987
        %v1992 = vrcp.pop %v1990
        %v1993 = vmul.f32 %v1982, %v1991
        %v1994 = vmul.f32 %v1984, %v1992
        %1995 = vrot.lane.b32.xlu0 %v1138, 48
        %v1996 = vpop.permute.xlu0 %1995
        %v1999 = vsel %vm1149, %v1993, 0
        %2001 = vmatprep.subr.mxu0 0.0
        %2002 = vmatpush1.msra.mxu0 %v1996
        %2003 = vmatprep.subr.mxu0 0.0
        %2004 = vmatpush1.msra.mxu0 0.0
        %2005 = vmatprep.subr.mxu0 0.0
        %2006 = vmatpush1.msra.mxu0 0.0
        %2007 = vmatprep.subr.mxu0 0.0
        %2008 = vmatpush1.msra.mxu0 0.0
        %2009 = vmatprep.subr.mxu0 0.0
        %2010 = vmatpush1.msra.mxu0 0.0
        %2011 = vmatprep.subr.mxu0 0.0
        %2012 = vmatpush1.msra.mxu0 0.0
        %2013 = vmatprep.subr.mxu0 0.0
        %2014 = vmatpush1.msra.mxu0 0.0
        %2015 = vmatprep.subr.mxu0 0.0
        %2016 = vmatpush1.msra.mxu0 0.0
        %2017 = vmatprep.subr.mxu0 0.0
        %2018 = vmatpush1.msra.mxu0 0.0
        %2019 = vmatprep.subr.mxu0 0.0
        %2020 = vmatpush1.msra.mxu0 0.0
        %2021 = vmatprep.subr.mxu0 0.0
        %2022 = vmatpush1.msra.mxu0 0.0
        %2023 = vmatprep.subr.mxu0 0.0
        %2024 = vmatpush1.msra.mxu0 0.0
        %2025 = vmatprep.subr.mxu0 0.0
        %2026 = vmatpush1.msra.mxu0 0.0
        %2027 = vmatprep.subr.mxu0 0.0
        %2028 = vmatpush1.msra.mxu0 0.0
        %2029 = vmatprep.subr.mxu0 0.0
        %2030 = vmatpush1.msra.mxu0 0.0
        %2031 = vmatprep.subr.mxu0 0.0
        %2032 = vmatpush1.msra.mxu0 0.0
        %2033 = vmatprep.subr.mxu0 0.0
        %2034 = vmatpush1.msra.mxu0 0.0
        %2035 = vmatprep.subr.mxu0 0.0
        %2036 = vmatpush1.msra.mxu0 0.0
        %2037 = vmatprep.subr.mxu0 0.0
        %2038 = vmatpush1.msra.mxu0 0.0
        %2039 = vmatprep.subr.mxu0 0.0
        %2040 = vmatpush1.msra.mxu0 0.0
        %2041 = vmatprep.subr.mxu0 0.0
        %2042 = vmatpush1.msra.mxu0 0.0
        %2043 = vmatprep.subr.mxu0 0.0
        %2044 = vmatpush1.msra.mxu0 0.0
        %2045 = vmatprep.subr.mxu0 0.0
        %2046 = vmatpush1.msra.mxu0 0.0
        %2047 = vmatprep.subr.mxu0 0.0
        %2048 = vmatpush1.msra.mxu0 0.0
        %2049 = vmatprep.subr.mxu0 0.0
        %2050 = vmatpush1.msra.mxu0 0.0
        %2051 = vmatprep.subr.mxu0 0.0
        %2052 = vmatpush1.msra.mxu0 0.0
        %2053 = vmatprep.subr.mxu0 0.0
        %2054 = vmatpush1.msra.mxu0 0.0
        %2055 = vmatprep.subr.mxu0 0.0
        %2056 = vmatpush1.msra.mxu0 0.0
        %2057 = vmatprep.subr.mxu0 0.0
        %2058 = vmatpush1.msra.mxu0 0.0
        %2059 = vmatprep.subr.mxu0 0.0
        %2060 = vmatpush1.msra.mxu0 0.0
        %2061 = vmatprep.subr.mxu0 0.0
        %2062 = vmatpush1.msra.mxu0 0.0
        %2063 = vmatprep.subr.mxu0 0.0
        %2064 = vmatpush1.msra.mxu0 0.0
        %2065 = vmatprep.mubr.f32.mxu0 0.0
        %2066 = vmatmul.mubr.f32.gmra.mrb[0].mxu0 %v1999
        %v2067 = vpop.f32.mrb[0].mxu0
        %v2068 = vadd.f32 0.0, %v2067
        %v2069 = vpop.f32.mrb[0].mxu0
        %2070 = vdwg.mxu0
        %2071 = vrot.lane.b32.xlu0 %v1143, 48
        %v2072 = vpop.permute.xlu0 %2071
        %v2075 = vsel %vm1149, %v1994, 0
        %2077 = vmatprep.subr.mxu0 0.0
        %2078 = vmatpush1.msra.mxu0 %v2072
        %2079 = vmatprep.subr.mxu0 0.0
        %2080 = vmatpush1.msra.mxu0 0.0
        %2081 = vmatprep.subr.mxu0 0.0
        %2082 = vmatpush1.msra.mxu0 0.0
        %2083 = vmatprep.subr.mxu0 0.0
        %2084 = vmatpush1.msra.mxu0 0.0
        %2085 = vmatprep.subr.mxu0 0.0
        %2086 = vmatpush1.msra.mxu0 0.0
        %2087 = vmatprep.subr.mxu0 0.0
        %2088 = vmatpush1.msra.mxu0 0.0
        %2089 = vmatprep.subr.mxu0 0.0
        %2090 = vmatpush1.msra.mxu0 0.0
        %2091 = vmatprep.subr.mxu0 0.0
        %2092 = vmatpush1.msra.mxu0 0.0
        %2093 = vmatprep.subr.mxu0 0.0
        %2094 = vmatpush1.msra.mxu0 0.0
        %2095 = vmatprep.subr.mxu0 0.0
        %2096 = vmatpush1.msra.mxu0 0.0
        %2097 = vmatprep.subr.mxu0 0.0
        %2098 = vmatpush1.msra.mxu0 0.0
        %2099 = vmatprep.subr.mxu0 0.0
        %2100 = vmatpush1.msra.mxu0 0.0
        %2101 = vmatprep.subr.mxu0 0.0
        %2102 = vmatpush1.msra.mxu0 0.0
        %2103 = vmatprep.subr.mxu0 0.0
        %2104 = vmatpush1.msra.mxu0 0.0
        %2105 = vmatprep.subr.mxu0 0.0
        %2106 = vmatpush1.msra.mxu0 0.0
        %2107 = vmatprep.subr.mxu0 0.0
        %2108 = vmatpush1.msra.mxu0 0.0
        %2109 = vmatprep.subr.mxu0 0.0
        %2110 = vmatpush1.msra.mxu0 0.0
        %2111 = vmatprep.subr.mxu0 0.0
        %2112 = vmatpush1.msra.mxu0 0.0
        %2113 = vmatprep.subr.mxu0 0.0
        %2114 = vmatpush1.msra.mxu0 0.0
        %2115 = vmatprep.subr.mxu0 0.0
        %2116 = vmatpush1.msra.mxu0 0.0
        %2117 = vmatprep.subr.mxu0 0.0
        %2118 = vmatpush1.msra.mxu0 0.0
        %2119 = vmatprep.subr.mxu0 0.0
        %2120 = vmatpush1.msra.mxu0 0.0
        %2121 = vmatprep.subr.mxu0 0.0
        %2122 = vmatpush1.msra.mxu0 0.0
        %2123 = vmatprep.subr.mxu0 0.0
        %2124 = vmatpush1.msra.mxu0 0.0
        %2125 = vmatprep.subr.mxu0 0.0
        %2126 = vmatpush1.msra.mxu0 0.0
        %2127 = vmatprep.subr.mxu0 0.0
        %2128 = vmatpush1.msra.mxu0 0.0
        %2129 = vmatprep.subr.mxu0 0.0
        %2130 = vmatpush1.msra.mxu0 0.0
        %2131 = vmatprep.subr.mxu0 0.0
        %2132 = vmatpush1.msra.mxu0 0.0
        %2133 = vmatprep.subr.mxu0 0.0
        %2134 = vmatpush1.msra.mxu0 0.0
        %2135 = vmatprep.subr.mxu0 0.0
        %2136 = vmatpush1.msra.mxu0 0.0
        %2137 = vmatprep.subr.mxu0 0.0
        %2138 = vmatpush1.msra.mxu0 0.0
        %2139 = vmatprep.subr.mxu0 0.0
        %2140 = vmatpush1.msra.mxu0 0.0
        %2141 = vmatprep.mubr.f32.mxu0 0.0
        %2142 = vmatmul.mubr.f32.gmra.mrb[0].mxu0 %v2075
        %v2143 = vpop.f32.mrb[0].mxu0
        %v2144 = vadd.f32 0.0, %v2143
        %v2145 = vpop.f32.mrb[0].mxu0
        %2146 = vdwg.mxu0
        %2147 = vrot.lane.b32.xlu0 %v1138, 104
        %v2148 = vpop.permute.xlu0 %2147
        %2149 = vrot.lane.b32.xlu0 %v1138, 72
        %v2150 = vpop.permute.xlu0 %2149
        %v2151 = vsel %vm1149, %v2148, 0
        %v2153 = vsel %vm1149, %v2150, 0
        %2155 = vmatprep.subr.mxu0 0.0
        %2156 = vmatpush1.xpose.msra.mxu0 %v2153
        %2157 = vmatprep.subr.mxu0 0.0
        %2158 = vmatpush1.xpose.msra.mxu0 0.0
        %2159 = vmatprep.subr.mxu0 0.0
        %2160 = vmatpush1.xpose.msra.mxu0 0.0
        %2161 = vmatprep.subr.mxu0 0.0
        %2162 = vmatpush1.xpose.msra.mxu0 0.0
        %2163 = vmatprep.subr.mxu0 0.0
        %2164 = vmatpush1.xpose.msra.mxu0 0.0
        %2165 = vmatprep.subr.mxu0 0.0
        %2166 = vmatpush1.xpose.msra.mxu0 0.0
        %2167 = vmatprep.subr.mxu0 0.0
        %2168 = vmatpush1.xpose.msra.mxu0 0.0
        %2169 = vmatprep.subr.mxu0 0.0
        %2170 = vmatpush1.xpose.msra.mxu0 0.0
        %2171 = vmatprep.subr.mxu0 0.0
        %2172 = vmatpush1.xpose.msra.mxu0 0.0
        %2173 = vmatprep.subr.mxu0 0.0
        %2174 = vmatpush1.xpose.msra.mxu0 0.0
        %2175 = vmatprep.subr.mxu0 0.0
        %2176 = vmatpush1.xpose.msra.mxu0 0.0
        %2177 = vmatprep.subr.mxu0 0.0
        %2178 = vmatpush1.xpose.msra.mxu0 0.0
        %2179 = vmatprep.subr.mxu0 0.0
        %2180 = vmatpush1.xpose.msra.mxu0 0.0
        %2181 = vmatprep.subr.mxu0 0.0
        %2182 = vmatpush1.xpose.msra.mxu0 0.0
        %2183 = vmatprep.subr.mxu0 0.0
        %2184 = vmatpush1.xpose.msra.mxu0 0.0
        %2185 = vmatprep.subr.mxu0 0.0
        %2186 = vmatpush1.xpose.msra.mxu0 0.0
        %2187 = vmatprep.subr.mxu0 0.0
        %2188 = vmatpush1.xpose.msra.mxu0 0.0
        %2189 = vmatprep.subr.mxu0 0.0
        %2190 = vmatpush1.xpose.msra.mxu0 0.0
        %2191 = vmatprep.subr.mxu0 0.0
        %2192 = vmatpush1.xpose.msra.mxu0 0.0
        %2193 = vmatprep.subr.mxu0 0.0
        %2194 = vmatpush1.xpose.msra.mxu0 0.0
        %2195 = vmatprep.subr.mxu0 0.0
        %2196 = vmatpush1.xpose.msra.mxu0 0.0
        %2197 = vmatprep.subr.mxu0 0.0
        %2198 = vmatpush1.xpose.msra.mxu0 0.0
        %2199 = vmatprep.subr.mxu0 0.0
        %2200 = vmatpush1.xpose.msra.mxu0 0.0
        %2201 = vmatprep.subr.mxu0 0.0
        %2202 = vmatpush1.xpose.msra.mxu0 0.0
        %2203 = vmatprep.subr.mxu0 0.0
        %2204 = vmatpush1.xpose.msra.mxu0 0.0
        %2205 = vmatprep.subr.mxu0 0.0
        %2206 = vmatpush1.xpose.msra.mxu0 0.0
        %2207 = vmatprep.subr.mxu0 0.0
        %2208 = vmatpush1.xpose.msra.mxu0 0.0
        %2209 = vmatprep.subr.mxu0 0.0
        %2210 = vmatpush1.xpose.msra.mxu0 0.0
        %2211 = vmatprep.subr.mxu0 0.0
        %2212 = vmatpush1.xpose.msra.mxu0 0.0
        %2213 = vmatprep.subr.mxu0 0.0
        %2214 = vmatpush1.xpose.msra.mxu0 0.0
        %2215 = vmatprep.subr.mxu0 0.0
        %2216 = vmatpush1.xpose.msra.mxu0 0.0
        %2217 = vmatprep.subr.mxu0 0.0
        %2218 = vmatpush1.xpose.msra.mxu0 0.0
        %2219 = vmatprep.mubr.f32.mxu0 0.0
        %2220 = vmatmul.mubr.f32.gmra.mrb[0].mxu0 %v2151
        %v2221 = vpop.f32.mrb[0].mxu0
        %v2222 = vadd.f32 0.0, %v2221
        %v2223 = vpop.f32.mrb[0].mxu0
        %2224 = vdwg.mxu0
        %2225 = vrot.lane.b32.xlu0 %v1143, 104
        %v2226 = vpop.permute.xlu0 %2225
        %2227 = vrot.lane.b32.xlu0 %v1143, 72
        %v2228 = vpop.permute.xlu0 %2227
        %v2229 = vsel %vm1149, %v2226, 0
        %v2231 = vsel %vm1149, %v2228, 0
        %2233 = vmatprep.subr.mxu0 0.0
        %2234 = vmatpush1.xpose.msra.mxu0 %v2231
        %2235 = vmatprep.subr.mxu0 0.0
        %2236 = vmatpush1.xpose.msra.mxu0 0.0
        %2237 = vmatprep.subr.mxu0 0.0
        %2238 = vmatpush1.xpose.msra.mxu0 0.0
        %2239 = vmatprep.subr.mxu0 0.0
        %2240 = vmatpush1.xpose.msra.mxu0 0.0
        %2241 = vmatprep.subr.mxu0 0.0
        %2242 = vmatpush1.xpose.msra.mxu0 0.0
        %2243 = vmatprep.subr.mxu0 0.0
        %2244 = vmatpush1.xpose.msra.mxu0 0.0
        %2245 = vmatprep.subr.mxu0 0.0
        %2246 = vmatpush1.xpose.msra.mxu0 0.0
        %2247 = vmatprep.subr.mxu0 0.0
        %2248 = vmatpush1.xpose.msra.mxu0 0.0
        %2249 = vmatprep.subr.mxu0 0.0
        %2250 = vmatpush1.xpose.msra.mxu0 0.0
        %2251 = vmatprep.subr.mxu0 0.0
        %2252 = vmatpush1.xpose.msra.mxu0 0.0
        %2253 = vmatprep.subr.mxu0 0.0
        %2254 = vmatpush1.xpose.msra.mxu0 0.0
        %2255 = vmatprep.subr.mxu0 0.0
        %2256 = vmatpush1.xpose.msra.mxu0 0.0
        %2257 = vmatprep.subr.mxu0 0.0
        %2258 = vmatpush1.xpose.msra.mxu0 0.0
        %2259 = vmatprep.subr.mxu0 0.0
        %2260 = vmatpush1.xpose.msra.mxu0 0.0
        %2261 = vmatprep.subr.mxu0 0.0
        %2262 = vmatpush1.xpose.msra.mxu0 0.0
        %2263 = vmatprep.subr.mxu0 0.0
        %2264 = vmatpush1.xpose.msra.mxu0 0.0
        %2265 = vmatprep.subr.mxu0 0.0
        %2266 = vmatpush1.xpose.msra.mxu0 0.0
        %2267 = vmatprep.subr.mxu0 0.0
        %2268 = vmatpush1.xpose.msra.mxu0 0.0
        %2269 = vmatprep.subr.mxu0 0.0
        %2270 = vmatpush1.xpose.msra.mxu0 0.0
        %2271 = vmatprep.subr.mxu0 0.0
        %2272 = vmatpush1.xpose.msra.mxu0 0.0
        %2273 = vmatprep.subr.mxu0 0.0
        %2274 = vmatpush1.xpose.msra.mxu0 0.0
        %2275 = vmatprep.subr.mxu0 0.0
        %2276 = vmatpush1.xpose.msra.mxu0 0.0
        %2277 = vmatprep.subr.mxu0 0.0
        %2278 = vmatpush1.xpose.msra.mxu0 0.0
        %2279 = vmatprep.subr.mxu0 0.0
        %2280 = vmatpush1.xpose.msra.mxu0 0.0
        %2281 = vmatprep.subr.mxu0 0.0
        %2282 = vmatpush1.xpose.msra.mxu0 0.0
        %2283 = vmatprep.subr.mxu0 0.0
        %2284 = vmatpush1.xpose.msra.mxu0 0.0
        %2285 = vmatprep.subr.mxu0 0.0
        %2286 = vmatpush1.xpose.msra.mxu0 0.0
        %2287 = vmatprep.subr.mxu0 0.0
        %2288 = vmatpush1.xpose.msra.mxu0 0.0
        %2289 = vmatprep.subr.mxu0 0.0
        %2290 = vmatpush1.xpose.msra.mxu0 0.0
        %2291 = vmatprep.subr.mxu0 0.0
        %2292 = vmatpush1.xpose.msra.mxu0 0.0
        %2293 = vmatprep.subr.mxu0 0.0
        %2294 = vmatpush1.xpose.msra.mxu0 0.0
        %2295 = vmatprep.subr.mxu0 0.0
        %2296 = vmatpush1.xpose.msra.mxu0 0.0
        %2297 = vmatprep.mubr.f32.mxu0 0.0
        %2298 = vmatmul.mubr.f32.gmra.mrb[0].mxu0 %v2229
        %v2299 = vpop.f32.mrb[0].mxu0
        %v2300 = vadd.f32 0.0, %v2299
        %v2301 = vpop.f32.mrb[0].mxu0
        %2302 = vdwg.mxu0
        %v2303 = vmul.f32 %v2222, 0.35355338
        %v2304 = vmul.f32 %v2300, 0.35355338
        %v2305 = vsel %vm987, %v2303, -1e+09
        %v2306 = vsel %vm988, %v2304, -1e+09
        %v2307 = vsel %vm1149, %v2305, -inf
        %2308 = vmax.xlane.f32.xlu0 %v2307
        %v2309 = vpop.xlane.xlu0 %2308
        %v2310 = vsel %vm1149, %v2306, -inf
        %2311 = vmax.xlane.f32.xlu0 %v2310
        %v2312 = vpop.xlane.xlu0 %2311
        %v2313 = vsub.f32 %v2305, %v2309
        %v2314 = vsub.f32 %v2306, %v2312
        %v2315 = vmul.f32 %v2313, 1.442695
        %v2316 = vpow.pop %v2315
        %v2317 = vmul.f32 %v2314, 1.442695
        %v2318 = vpow.pop %v2317
        %v2319 = vsel %vm1149, %v2316, 0.0
        %2320 = vadd.xlane.f32.xlu0 %v2319
        %v2321 = vpop.xlane.xlu0 %2320
        %v2322 = vsel %vm1149, %v2318, 0.0
        %2323 = vadd.xlane.f32.xlu0 %v2322
        %v2324 = vpop.xlane.xlu0 %2323
        %v2325 = vrcp.pop %v2321
        %v2326 = vrcp.pop %v2324
        %v2327 = vmul.f32 %v2316, %v2325
        %v2328 = vmul.f32 %v2318, %v2326
        %2329 = vrot.lane.b32.xlu0 %v1138, 40
        %v2330 = vpop.permute.xlu0 %2329
        %v2333 = vsel %vm1149, %v2327, 0
        %2335 = vmatprep.subr.mxu0 0.0
        %2336 = vmatpush1.msra.mxu0 %v2330
        %2337 = vmatprep.subr.mxu0 0.0
        %2338 = vmatpush1.msra.mxu0 0.0
        %2339 = vmatprep.subr.mxu0 0.0
        %2340 = vmatpush1.msra.mxu0 0.0
        %2341 = vmatprep.subr.mxu0 0.0
        %2342 = vmatpush1.msra.mxu0 0.0
        %2343 = vmatprep.subr.mxu0 0.0
        %2344 = vmatpush1.msra.mxu0 0.0
        %2345 = vmatprep.subr.mxu0 0.0
        %2346 = vmatpush1.msra.mxu0 0.0
        %2347 = vmatprep.subr.mxu0 0.0
        %2348 = vmatpush1.msra.mxu0 0.0
        %2349 = vmatprep.subr.mxu0 0.0
        %2350 = vmatpush1.msra.mxu0 0.0
        %2351 = vmatprep.subr.mxu0 0.0
        %2352 = vmatpush1.msra.mxu0 0.0
        %2353 = vmatprep.subr.mxu0 0.0
        %2354 = vmatpush1.msra.mxu0 0.0
        %2355 = vmatprep.subr.mxu0 0.0
        %2356 = vmatpush1.msra.mxu0 0.0
        %2357 = vmatprep.subr.mxu0 0.0
        %2358 = vmatpush1.msra.mxu0 0.0
        %2359 = vmatprep.subr.mxu0 0.0
        %2360 = vmatpush1.msra.mxu0 0.0
        %2361 = vmatprep.subr.mxu0 0.0
        %2362 = vmatpush1.msra.mxu0 0.0
        %2363 = vmatprep.subr.mxu0 0.0
        %2364 = vmatpush1.msra.mxu0 0.0
        %2365 = vmatprep.subr.mxu0 0.0
        %2366 = vmatpush1.msra.mxu0 0.0
        %2367 = vmatprep.subr.mxu0 0.0
        %2368 = vmatpush1.msra.mxu0 0.0
        %2369 = vmatprep.subr.mxu0 0.0
        %2370 = vmatpush1.msra.mxu0 0.0
        %2371 = vmatprep.subr.mxu0 0.0
        %2372 = vmatpush1.msra.mxu0 0.0
        %2373 = vmatprep.subr.mxu0 0.0
        %2374 = vmatpush1.msra.mxu0 0.0
        %2375 = vmatprep.subr.mxu0 0.0
        %2376 = vmatpush1.msra.mxu0 0.0
        %2377 = vmatprep.subr.mxu0 0.0
        %2378 = vmatpush1.msra.mxu0 0.0
        %2379 = vmatprep.subr.mxu0 0.0
        %2380 = vmatpush1.msra.mxu0 0.0
        %2381 = vmatprep.subr.mxu0 0.0
        %2382 = vmatpush1.msra.mxu0 0.0
        %2383 = vmatprep.subr.mxu0 0.0
        %2384 = vmatpush1.msra.mxu0 0.0
        %2385 = vmatprep.subr.mxu0 0.0
        %2386 = vmatpush1.msra.mxu0 0.0
        %2387 = vmatprep.subr.mxu0 0.0
        %2388 = vmatpush1.msra.mxu0 0.0
        %2389 = vmatprep.subr.mxu0 0.0
        %2390 = vmatpush1.msra.mxu0 0.0
        %2391 = vmatprep.subr.mxu0 0.0
        %2392 = vmatpush1.msra.mxu0 0.0
        %2393 = vmatprep.subr.mxu0 0.0
        %2394 = vmatpush1.msra.mxu0 0.0
        %2395 = vmatprep.subr.mxu0 0.0
        %2396 = vmatpush1.msra.mxu0 0.0
        %2397 = vmatprep.subr.mxu0 0.0
        %2398 = vmatpush1.msra.mxu0 0.0
        %2399 = vmatprep.mubr.f32.mxu0 0.0
        %2400 = vmatmul.mubr.f32.gmra.mrb[0].mxu0 %v2333
        %v2401 = vpop.f32.mrb[0].mxu0
        %v2402 = vadd.f32 0.0, %v2401
        %v2403 = vpop.f32.mrb[0].mxu0
        %2404 = vdwg.mxu0
        %2405 = vrot.lane.b32.xlu0 %v1143, 40
        %v2406 = vpop.permute.xlu0 %2405
        %v2409 = vsel %vm1149, %v2328, 0
        %2411 = vmatprep.subr.mxu0 0.0
        %2412 = vmatpush1.msra.mxu0 %v2406
        %2413 = vmatprep.subr.mxu0 0.0
        %2414 = vmatpush1.msra.mxu0 0.0
        %2415 = vmatprep.subr.mxu0 0.0
        %2416 = vmatpush1.msra.mxu0 0.0
        %2417 = vmatprep.subr.mxu0 0.0
        %2418 = vmatpush1.msra.mxu0 0.0
        %2419 = vmatprep.subr.mxu0 0.0
        %2420 = vmatpush1.msra.mxu0 0.0
        %2421 = vmatprep.subr.mxu0 0.0
        %2422 = vmatpush1.msra.mxu0 0.0
        %2423 = vmatprep.subr.mxu0 0.0
        %2424 = vmatpush1.msra.mxu0 0.0
        %2425 = vmatprep.subr.mxu0 0.0
        %2426 = vmatpush1.msra.mxu0 0.0
        %2427 = vmatprep.subr.mxu0 0.0
        %2428 = vmatpush1.msra.mxu0 0.0
        %2429 = vmatprep.subr.mxu0 0.0
        %2430 = vmatpush1.msra.mxu0 0.0
        %2431 = vmatprep.subr.mxu0 0.0
        %2432 = vmatpush1.msra.mxu0 0.0
        %2433 = vmatprep.subr.mxu0 0.0
        %2434 = vmatpush1.msra.mxu0 0.0
        %2435 = vmatprep.subr.mxu0 0.0
        %2436 = vmatpush1.msra.mxu0 0.0
        %2437 = vmatprep.subr.mxu0 0.0
        %2438 = vmatpush1.msra.mxu0 0.0
        %2439 = vmatprep.subr.mxu0 0.0
        %2440 = vmatpush1.msra.mxu0 0.0
        %2441 = vmatprep.subr.mxu0 0.0
        %2442 = vmatpush1.msra.mxu0 0.0
        %2443 = vmatprep.subr.mxu0 0.0
        %2444 = vmatpush1.msra.mxu0 0.0
        %2445 = vmatprep.subr.mxu0 0.0
        %2446 = vmatpush1.msra.mxu0 0.0
        %2447 = vmatprep.subr.mxu0 0.0
        %2448 = vmatpush1.msra.mxu0 0.0
        %2449 = vmatprep.subr.mxu0 0.0
        %2450 = vmatpush1.msra.mxu0 0.0
        %2451 = vmatprep.subr.mxu0 0.0
        %2452 = vmatpush1.msra.mxu0 0.0
        %2453 = vmatprep.subr.mxu0 0.0
        %2454 = vmatpush1.msra.mxu0 0.0
        %2455 = vmatprep.subr.mxu0 0.0
        %2456 = vmatpush1.msra.mxu0 0.0
        %2457 = vmatprep.subr.mxu0 0.0
        %2458 = vmatpush1.msra.mxu0 0.0
        %2459 = vmatprep.subr.mxu0 0.0
        %2460 = vmatpush1.msra.mxu0 0.0
        %2461 = vmatprep.subr.mxu0 0.0
        %2462 = vmatpush1.msra.mxu0 0.0
        %2463 = vmatprep.subr.mxu0 0.0
        %2464 = vmatpush1.msra.mxu0 0.0
        %2465 = vmatprep.subr.mxu0 0.0
        %2466 = vmatpush1.msra.mxu0 0.0
        %2467 = vmatprep.subr.mxu0 0.0
        %2468 = vmatpush1.msra.mxu0 0.0
        %2469 = vmatprep.subr.mxu0 0.0
        %2470 = vmatpush1.msra.mxu0 0.0
        %2471 = vmatprep.subr.mxu0 0.0
        %2472 = vmatpush1.msra.mxu0 0.0
        %2473 = vmatprep.subr.mxu0 0.0
        %2474 = vmatpush1.msra.mxu0 0.0
        %2475 = vmatprep.mubr.f32.mxu0 0.0
        %2476 = vmatmul.mubr.f32.gmra.mrb[0].mxu0 %v2409
        %v2477 = vpop.f32.mrb[0].mxu0
        %v2478 = vadd.f32 0.0, %v2477
        %v2479 = vpop.f32.mrb[0].mxu0
        %2480 = vdwg.mxu0
        %2483 = vrot.lane.b32.xlu0 %v1734, 8
        %v2484 = vpop.permute.xlu0 %2483
        %2485 = vrot.lane.b32.xlu0 %v1810, 8
        %v2486 = vpop.permute.xlu0 %2485
        %2491 = vrot.lane.b32.xlu0 %v2068, 16
        %v2492 = vpop.permute.xlu0 %2491
        %2493 = vrot.lane.b32.xlu0 %v2144, 16
        %v2494 = vpop.permute.xlu0 %2493
        %2499 = vrot.lane.b32.xlu0 %v2402, 24
        %v2500 = vpop.permute.xlu0 %2499
        %2501 = vrot.lane.b32.xlu0 %v2478, 24
        %v2502 = vpop.permute.xlu0 %2501
        %v2505 = vsel %vm1149, %v1400, %v2484
        %v2506 = vsel %vm1149, %v1476, %v2486
        %vm2507 = vcmask 130048
        %v2508 = vsel %vm2507, %v2505, %v2492
        %v2509 = vsel %vm2507, %v2506, %v2494
        %vm2510 = vcmask 195584
        %v2511 = vsel %vm2510, %v2508, %v2500
        %v2512 = vsel %vm2510, %v2509, %v2502
        %v2513 = vld [vmem:[%s931] sm:$0xff]
        %v2514 = vld [vmem:[%s931 + $0x8] sm:$0xff]
        %v2515 = vld [vmem:[%s931 + $0x10] sm:$0xff]
        %v2516 = vld [vmem:[%s931 + $0x18] sm:$0xff]
        %v2517 = vld [vmem:[%s935] sm:$0x1]
        %v2519 = vlaneseq
        %v2520 = vshrl.u32 %v2519, 7
        %v2521 = vsub.s32 0, %v2520
        %v2522 = vrot.slane %v2517, %v2521
        %v2525 = vsel %vm995, %v2511, 0
        %v2528 = vsel %vm995, %v2512, 0
        %2530 = vmatprep.subr.mxu0 0.0
        %2531 = vmatpush1.msra.mxu0 %v2513
        %2532 = vmatprep.subr.mxu0 0.0
        %2533 = vmatpush1.msra.mxu0 %v2514
        %2534 = vmatprep.subr.mxu0 0.0
        %2535 = vmatpush1.msra.mxu0 %v2515
        %2536 = vmatprep.subr.mxu0 0.0
        %2537 = vmatpush1.msra.mxu0 %v2516
        %2538 = vmatprep.subr.mxu0 0.0
        %2539 = vmatpush1.msra.mxu0 0.0
        %2540 = vmatprep.subr.mxu0 0.0
        %2541 = vmatpush1.msra.mxu0 0.0
        %2542 = vmatprep.subr.mxu0 0.0
        %2543 = vmatpush1.msra.mxu0 0.0
        %2544 = vmatprep.subr.mxu0 0.0
        %2545 = vmatpush1.msra.mxu0 0.0
        %2546 = vmatprep.subr.mxu0 0.0
        %2547 = vmatpush1.msra.mxu0 0.0
        %2548 = vmatprep.subr.mxu0 0.0
        %2549 = vmatpush1.msra.mxu0 0.0
        %2550 = vmatprep.subr.mxu0 0.0
        %2551 = vmatpush1.msra.mxu0 0.0
        %2552 = vmatprep.subr.mxu0 0.0
        %2553 = vmatpush1.msra.mxu0 0.0
        %2554 = vmatprep.subr.mxu0 0.0
        %2555 = vmatpush1.msra.mxu0 0.0
        %2556 = vmatprep.subr.mxu0 0.0
        %2557 = vmatpush1.msra.mxu0 0.0
        %2558 = vmatprep.subr.mxu0 0.0
        %2559 = vmatpush1.msra.mxu0 0.0
        %2560 = vmatprep.subr.mxu0 0.0
        %2561 = vmatpush1.msra.mxu0 0.0
        %2562 = vmatprep.subr.mxu0 0.0
        %2563 = vmatpush1.msra.mxu0 0.0
        %2564 = vmatprep.subr.mxu0 0.0
        %2565 = vmatpush1.msra.mxu0 0.0
        %2566 = vmatprep.subr.mxu0 0.0
        %2567 = vmatpush1.msra.mxu0 0.0
        %2568 = vmatprep.subr.mxu0 0.0
        %2569 = vmatpush1.msra.mxu0 0.0
        %2570 = vmatprep.subr.mxu0 0.0
        %2571 = vmatpush1.msra.mxu0 0.0
        %2572 = vmatprep.subr.mxu0 0.0
        %2573 = vmatpush1.msra.mxu0 0.0
        %2574 = vmatprep.subr.mxu0 0.0
        %2575 = vmatpush1.msra.mxu0 0.0
        %2576 = vmatprep.subr.mxu0 0.0
        %2577 = vmatpush1.msra.mxu0 0.0
        %2578 = vmatprep.subr.mxu0 0.0
        %2579 = vmatpush1.msra.mxu0 0.0
        %2580 = vmatprep.subr.mxu0 0.0
        %2581 = vmatpush1.msra.mxu0 0.0
        %2582 = vmatprep.subr.mxu0 0.0
        %2583 = vmatpush1.msra.mxu0 0.0
        %2584 = vmatprep.subr.mxu0 0.0
        %2585 = vmatpush1.msra.mxu0 0.0
        %2586 = vmatprep.subr.mxu0 0.0
        %2587 = vmatpush1.msra.mxu0 0.0
        %2588 = vmatprep.subr.mxu0 0.0
        %2589 = vmatpush1.msra.mxu0 0.0
        %2590 = vmatprep.subr.mxu0 0.0
        %2591 = vmatpush1.msra.mxu0 0.0
        %2592 = vmatprep.subr.mxu0 0.0
        %2593 = vmatpush1.msra.mxu0 0.0
        %2594 = vmatprep.mubr.f32.mxu0 0.0
        %2595 = vmatmul.mubr.f32.gmra.mrb[0].mxu0 %v2525
        %v2596 = vpop.f32.mrb[0].mxu0
        %v2597 = vadd.f32 %v2522, %v2596
        %v2598 = vpop.f32.mrb[0].mxu0
        %2599 = vmatprep.mubr.f32.mxu0 0.0
        %2600 = vmatmul.mubr.f32.gmra.mrb[0].mxu0 %v2528
        %v2601 = vpop.f32.mrb[0].mxu0
        %v2602 = vadd.f32 %v2522, %v2601
        %v2603 = vpop.f32.mrb[0].mxu0
        %2604 = vdwg.mxu0
        %v2605 = vadd.f32 %v981, %v2597
        %v2606 = vadd.f32 %v982, %v2602
        %s2607 = scalar_lea.vmem %s913, 1
        %v2608 = vld [vmem:[%s2607] sm:$0x1]
        %s2609 = scalar_lea.vmem %s917, 1
        %v2610 = vld [vmem:[%s2609] sm:$0x1]
        %v2611 = vsel %vm995, %v2605, 0.0
        %2612 = vadd.xlane.f32.xlu0 %v2611
        %v2613 = vpop.xlane.xlu0 %2612
        %v2614 = vsel %vm995, %v2606, 0.0
        %2615 = vadd.xlane.f32.xlu0 %v2614
        %v2616 = vpop.xlane.xlu0 %2615
        %v2617 = vmul.f32 %v2613, %v1002
        %v2618 = vmul.f32 %v2616, %v1002
        %v2619 = vsub.f32 %v2605, %v2617
        %v2620 = vsub.f32 %v2606, %v2618
        %v2621 = vmul.f32 %v2619, %v2619
        %v2622 = vmul.f32 %v2620, %v2620
        %v2623 = vsel %vm995, %v2621, 0.0
        %2624 = vadd.xlane.f32.xlu0 %v2623
        %v2625 = vpop.xlane.xlu0 %2624
        %v2626 = vsel %vm995, %v2622, 0.0
        %2627 = vadd.xlane.f32.xlu0 %v2626
        %v2628 = vpop.xlane.xlu0 %2627
        %v2629 = vmul.f32 %v2625, %v1015
        %v2630 = vmul.f32 %v2628, %v1015
        %v2631 = vrsqrt.pop %v2629
        %v2632 = vmul.f32 %v2629, %v2631
        %vm2633 = vcmp.eq.f32.partialorder %v2629, inf
        %v2634 = vsel %vm2633, %v2629, %v2632
        %vm2635 = vcmp.eq.f32.partialorder %v2629, 0.0
        %v2636 = vand.u32 %v2629, 2147483648
        %v2637 = vsel %vm2635, %v2636, %v2634
        %v2638 = vrsqrt.pop %v2630
        %v2639 = vmul.f32 %v2630, %v2638
        %vm2640 = vcmp.eq.f32.partialorder %v2630, inf
        %v2641 = vsel %vm2640, %v2630, %v2639
        %vm2642 = vcmp.eq.f32.partialorder %v2630, 0.0
        %v2643 = vand.u32 %v2630, 2147483648
        %v2644 = vsel %vm2642, %v2643, %v2641
        %v2645 = vadd.f32 %v2637, 1e-06
        %v2646 = vadd.f32 %v2644, 1e-06
        %v2647 = vrcp.pop %v2645
        %v2648 = vrcp.pop %v2646
        %v2650 = vlaneseq
        %v2651 = vshrl.u32 %v2650, 7
        %v2652 = vsub.s32 0, %v2651
        %v2653 = vrot.slane %v2608, %v2652
        %v2655 = vmul.f32 %v2653, %v2619
        %v2656 = vmul.f32 %v2653, %v2620
        %v2657 = vmul.f32 %v2655, %v2647
        %v2658 = vmul.f32 %v2656, %v2648
        %v2660 = vlaneseq
        %v2661 = vshrl.u32 %v2660, 7
        %v2662 = vsub.s32 0, %v2661
        %v2663 = vrot.slane %v2610, %v2662
        %v2665 = vadd.f32 %v2657, %v2663
        %v2666 = vadd.f32 %v2658, %v2663
        %v2667 = vld [vmem:[%s940] sm:$0xff]
        %v2668 = vld [vmem:[%s940 + $0x8] sm:$0xff]
        %v2669 = vld [vmem:[%s940 + $0x10] sm:$0xff]
        %v2670 = vld [vmem:[%s940 + $0x18] sm:$0xff]
        %v2671 = vld [vmem:[%s944] sm:$0x1]
        %v2673 = vlaneseq
        %v2674 = vshrl.u32 %v2673, 7
        %v2675 = vsub.s32 0, %v2674
        %v2676 = vrot.slane %v2671, %v2675
        %v2679 = vsel %vm995, %v2665, 0
        %v2682 = vsel %vm995, %v2666, 0
        %2684 = vmatprep.subr.mxu0 0.0
        %2685 = vmatpush1.msra.mxu0 %v2667
        %2686 = vmatprep.subr.mxu0 0.0
        %2687 = vmatpush1.msra.mxu0 %v2668
        %2688 = vmatprep.subr.mxu0 0.0
        %2689 = vmatpush1.msra.mxu0 %v2669
        %2690 = vmatprep.subr.mxu0 0.0
        %2691 = vmatpush1.msra.mxu0 %v2670
        %2692 = vmatprep.subr.mxu0 0.0
        %2693 = vmatpush1.msra.mxu0 0.0
        %2694 = vmatprep.subr.mxu0 0.0
        %2695 = vmatpush1.msra.mxu0 0.0
        %2696 = vmatprep.subr.mxu0 0.0
        %2697 = vmatpush1.msra.mxu0 0.0
        %2698 = vmatprep.subr.mxu0 0.0
        %2699 = vmatpush1.msra.mxu0 0.0
        %2700 = vmatprep.subr.mxu0 0.0
        %2701 = vmatpush1.msra.mxu0 0.0
        %2702 = vmatprep.subr.mxu0 0.0
        %2703 = vmatpush1.msra.mxu0 0.0
        %2704 = vmatprep.subr.mxu0 0.0
        %2705 = vmatpush1.msra.mxu0 0.0
        %2706 = vmatprep.subr.mxu0 0.0
        %2707 = vmatpush1.msra.mxu0 0.0
        %2708 = vmatprep.subr.mxu0 0.0
        %2709 = vmatpush1.msra.mxu0 0.0
        %2710 = vmatprep.subr.mxu0 0.0
        %2711 = vmatpush1.msra.mxu0 0.0
        %2712 = vmatprep.subr.mxu0 0.0
        %2713 = vmatpush1.msra.mxu0 0.0
        %2714 = vmatprep.subr.mxu0 0.0
        %2715 = vmatpush1.msra.mxu0 0.0
        %2716 = vmatprep.subr.mxu0 0.0
        %2717 = vmatpush1.msra.mxu0 0.0
        %2718 = vmatprep.subr.mxu0 0.0
        %2719 = vmatpush1.msra.mxu0 0.0
        %2720 = vmatprep.subr.mxu0 0.0
        %2721 = vmatpush1.msra.mxu0 0.0
        %2722 = vmatprep.subr.mxu0 0.0
        %2723 = vmatpush1.msra.mxu0 0.0
        %2724 = vmatprep.subr.mxu0 0.0
        %2725 = vmatpush1.msra.mxu0 0.0
        %2726 = vmatprep.subr.mxu0 0.0
        %2727 = vmatpush1.msra.mxu0 0.0
        %2728 = vmatprep.subr.mxu0 0.0
        %2729 = vmatpush1.msra.mxu0 0.0
        %2730 = vmatprep.subr.mxu0 0.0
        %2731 = vmatpush1.msra.mxu0 0.0
        %2732 = vmatprep.subr.mxu0 0.0
        %2733 = vmatpush1.msra.mxu0 0.0
        %2734 = vmatprep.subr.mxu0 0.0
        %2735 = vmatpush1.msra.mxu0 0.0
        %2736 = vmatprep.subr.mxu0 0.0
        %2737 = vmatpush1.msra.mxu0 0.0
        %2738 = vmatprep.subr.mxu0 0.0
        %2739 = vmatpush1.msra.mxu0 0.0
        %2740 = vmatprep.subr.mxu0 0.0
        %2741 = vmatpush1.msra.mxu0 0.0
        %2742 = vmatprep.subr.mxu0 0.0
        %2743 = vmatpush1.msra.mxu0 0.0
        %2744 = vmatprep.subr.mxu0 0.0
        %2745 = vmatpush1.msra.mxu0 0.0
        %2746 = vmatprep.subr.mxu0 0.0
        %2747 = vmatpush1.msra.mxu0 0.0
        %2748 = vmatprep.mubr.f32.mxu0 0.0
        %2749 = vmatmul.mubr.f32.gmra.mrb[0].mxu0 %v2679
        %v2750 = vpop.f32.mrb[0].mxu0
        %v2751 = vadd.f32 %v2676, %v2750
        %v2752 = vpop.f32.mrb[0].mxu0
        %2753 = vmatprep.mubr.f32.mxu0 0.0
        %2754 = vmatmul.mubr.f32.gmra.mrb[0].mxu0 %v2682
        %v2755 = vpop.f32.mrb[0].mxu0
        %v2756 = vadd.f32 %v2676, %v2755
        %v2757 = vpop.f32.mrb[0].mxu0
        %2758 = vdwg.mxu0
        %v2759 = vld [vmem:[%s949] sm:$0xff]
        %v2760 = vld [vmem:[%s949 + $0x8] sm:$0xff]
        %v2761 = vld [vmem:[%s949 + $0x10] sm:$0xff]
        %v2762 = vld [vmem:[%s949 + $0x18] sm:$0xff]
        %v2763 = vld [vmem:[%s953] sm:$0x1]
        %v2765 = vlaneseq
        %v2766 = vshrl.u32 %v2765, 7
        %v2767 = vsub.s32 0, %v2766
        %v2768 = vrot.slane %v2763, %v2767
        %v2771 = vsel %vm995, %v983, 0
        %v2774 = vsel %vm995, %v984, 0
        %2776 = vmatprep.subr.mxu0 0.0
        %2777 = vmatpush1.msra.mxu0 %v2759
        %2778 = vmatprep.subr.mxu0 0.0
        %2779 = vmatpush1.msra.mxu0 %v2760
        %2780 = vmatprep.subr.mxu0 0.0
        %2781 = vmatpush1.msra.mxu0 %v2761
        %2782 = vmatprep.subr.mxu0 0.0
        %2783 = vmatpush1.msra.mxu0 %v2762
        %2784 = vmatprep.subr.mxu0 0.0
        %2785 = vmatpush1.msra.mxu0 0.0
        %2786 = vmatprep.subr.mxu0 0.0
        %2787 = vmatpush1.msra.mxu0 0.0
        %2788 = vmatprep.subr.mxu0 0.0
        %2789 = vmatpush1.msra.mxu0 0.0
        %2790 = vmatprep.subr.mxu0 0.0
        %2791 = vmatpush1.msra.mxu0 0.0
        %2792 = vmatprep.subr.mxu0 0.0
        %2793 = vmatpush1.msra.mxu0 0.0
        %2794 = vmatprep.subr.mxu0 0.0
        %2795 = vmatpush1.msra.mxu0 0.0
        %2796 = vmatprep.subr.mxu0 0.0
        %2797 = vmatpush1.msra.mxu0 0.0
        %2798 = vmatprep.subr.mxu0 0.0
        %2799 = vmatpush1.msra.mxu0 0.0
        %2800 = vmatprep.subr.mxu0 0.0
        %2801 = vmatpush1.msra.mxu0 0.0
        %2802 = vmatprep.subr.mxu0 0.0
        %2803 = vmatpush1.msra.mxu0 0.0
        %2804 = vmatprep.subr.mxu0 0.0
        %2805 = vmatpush1.msra.mxu0 0.0
        %2806 = vmatprep.subr.mxu0 0.0
        %2807 = vmatpush1.msra.mxu0 0.0
        %2808 = vmatprep.subr.mxu0 0.0
        %2809 = vmatpush1.msra.mxu0 0.0
        %2810 = vmatprep.subr.mxu0 0.0
        %2811 = vmatpush1.msra.mxu0 0.0
        %2812 = vmatprep.subr.mxu0 0.0
        %2813 = vmatpush1.msra.mxu0 0.0
        %2814 = vmatprep.subr.mxu0 0.0
        %2815 = vmatpush1.msra.mxu0 0.0
        %2816 = vmatprep.subr.mxu0 0.0
        %2817 = vmatpush1.msra.mxu0 0.0
        %2818 = vmatprep.subr.mxu0 0.0
        %2819 = vmatpush1.msra.mxu0 0.0
        %2820 = vmatprep.subr.mxu0 0.0
        %2821 = vmatpush1.msra.mxu0 0.0
        %2822 = vmatprep.subr.mxu0 0.0
        %2823 = vmatpush1.msra.mxu0 0.0
        %2824 = vmatprep.subr.mxu0 0.0
        %2825 = vmatpush1.msra.mxu0 0.0
        %2826 = vmatprep.subr.mxu0 0.0
        %2827 = vmatpush1.msra.mxu0 0.0
        %2828 = vmatprep.subr.mxu0 0.0
        %2829 = vmatpush1.msra.mxu0 0.0
        %2830 = vmatprep.subr.mxu0 0.0
        %2831 = vmatpush1.msra.mxu0 0.0
        %2832 = vmatprep.subr.mxu0 0.0
        %2833 = vmatpush1.msra.mxu0 0.0
        %2834 = vmatprep.subr.mxu0 0.0
        %2835 = vmatpush1.msra.mxu0 0.0
        %2836 = vmatprep.subr.mxu0 0.0
        %2837 = vmatpush1.msra.mxu0 0.0
        %2838 = vmatprep.subr.mxu0 0.0
        %2839 = vmatpush1.msra.mxu0 0.0
        %2840 = vmatprep.mubr.f32.mxu0 0.0
        %2841 = vmatmul.mubr.f32.gmra.mrb[0].mxu0 %v2771
        %v2842 = vpop.f32.mrb[0].mxu0
        %v2843 = vadd.f32 %v2768, %v2842
        %v2844 = vpop.f32.mrb[0].mxu0
        %2845 = vmatprep.mubr.f32.mxu0 0.0
        %2846 = vmatmul.mubr.f32.gmra.mrb[0].mxu0 %v2774
        %v2847 = vpop.f32.mrb[0].mxu0
        %v2848 = vadd.f32 %v2768, %v2847
        %v2849 = vpop.f32.mrb[0].mxu0
        %2850 = vdwg.mxu0
        %v2852 = vsel %vm1149, %v2751, 0
        %v2855 = vsel %vm1149, %v2843, 0
        %2857 = vmatprep.subr.mxu0 0.0
        %2858 = vmatpush1.xpose.msra.mxu0 %v2855
        %2859 = vmatprep.subr.mxu0 0.0
        %2860 = vmatpush1.xpose.msra.mxu0 0.0
        %2861 = vmatprep.subr.mxu0 0.0
        %2862 = vmatpush1.xpose.msra.mxu0 0.0
        %2863 = vmatprep.subr.mxu0 0.0
        %2864 = vmatpush1.xpose.msra.mxu0 0.0
        %2865 = vmatprep.subr.mxu0 0.0
        %2866 = vmatpush1.xpose.msra.mxu0 0.0
        %2867 = vmatprep.subr.mxu0 0.0
        %2868 = vmatpush1.xpose.msra.mxu0 0.0
        %2869 = vmatprep.subr.mxu0 0.0
        %2870 = vmatpush1.xpose.msra.mxu0 0.0
        %2871 = vmatprep.subr.mxu0 0.0
        %2872 = vmatpush1.xpose.msra.mxu0 0.0
        %2873 = vmatprep.subr.mxu0 0.0
        %2874 = vmatpush1.xpose.msra.mxu0 0.0
        %2875 = vmatprep.subr.mxu0 0.0
        %2876 = vmatpush1.xpose.msra.mxu0 0.0
        %2877 = vmatprep.subr.mxu0 0.0
        %2878 = vmatpush1.xpose.msra.mxu0 0.0
        %2879 = vmatprep.subr.mxu0 0.0
        %2880 = vmatpush1.xpose.msra.mxu0 0.0
        %2881 = vmatprep.subr.mxu0 0.0
        %2882 = vmatpush1.xpose.msra.mxu0 0.0
        %2883 = vmatprep.subr.mxu0 0.0
        %2884 = vmatpush1.xpose.msra.mxu0 0.0
        %2885 = vmatprep.subr.mxu0 0.0
        %2886 = vmatpush1.xpose.msra.mxu0 0.0
        %2887 = vmatprep.subr.mxu0 0.0
        %2888 = vmatpush1.xpose.msra.mxu0 0.0
        %2889 = vmatprep.subr.mxu0 0.0
        %2890 = vmatpush1.xpose.msra.mxu0 0.0
        %2891 = vmatprep.subr.mxu0 0.0
        %2892 = vmatpush1.xpose.msra.mxu0 0.0
        %2893 = vmatprep.subr.mxu0 0.0
        %2894 = vmatpush1.xpose.msra.mxu0 0.0
        %2895 = vmatprep.subr.mxu0 0.0
        %2896 = vmatpush1.xpose.msra.mxu0 0.0
        %2897 = vmatprep.subr.mxu0 0.0
        %2898 = vmatpush1.xpose.msra.mxu0 0.0
        %2899 = vmatprep.subr.mxu0 0.0
        %2900 = vmatpush1.xpose.msra.mxu0 0.0
        %2901 = vmatprep.subr.mxu0 0.0
        %2902 = vmatpush1.xpose.msra.mxu0 0.0
        %2903 = vmatprep.subr.mxu0 0.0
        %2904 = vmatpush1.xpose.msra.mxu0 0.0
        %2905 = vmatprep.subr.mxu0 0.0
        %2906 = vmatpush1.xpose.msra.mxu0 0.0
        %2907 = vmatprep.subr.mxu0 0.0
        %2908 = vmatpush1.xpose.msra.mxu0 0.0
        %2909 = vmatprep.subr.mxu0 0.0
        %2910 = vmatpush1.xpose.msra.mxu0 0.0
        %2911 = vmatprep.subr.mxu0 0.0
        %2912 = vmatpush1.xpose.msra.mxu0 0.0
        %2913 = vmatprep.subr.mxu0 0.0
        %2914 = vmatpush1.xpose.msra.mxu0 0.0
        %2915 = vmatprep.subr.mxu0 0.0
        %2916 = vmatpush1.xpose.msra.mxu0 0.0
        %2917 = vmatprep.subr.mxu0 0.0
        %2918 = vmatpush1.xpose.msra.mxu0 0.0
        %2919 = vmatprep.subr.mxu0 0.0
        %2920 = vmatpush1.xpose.msra.mxu0 0.0
        %2921 = vmatprep.mubr.f32.mxu0 0.0
        %2922 = vmatmul.mubr.f32.gmra.mrb[0].mxu0 %v2852
        %v2923 = vpop.f32.mrb[0].mxu0
        %v2924 = vadd.f32 0.0, %v2923
        %v2925 = vpop.f32.mrb[0].mxu0
        %2926 = vdwg.mxu0
        %v2928 = vsel %vm1149, %v2756, 0
        %v2931 = vsel %vm1149, %v2848, 0
        %2933 = vmatprep.subr.mxu0 0.0
        %2934 = vmatpush1.xpose.msra.mxu0 %v2931
        %2935 = vmatprep.subr.mxu0 0.0
        %2936 = vmatpush1.xpose.msra.mxu0 0.0
        %2937 = vmatprep.subr.mxu0 0.0
        %2938 = vmatpush1.xpose.msra.mxu0 0.0
        %2939 = vmatprep.subr.mxu0 0.0
        %2940 = vmatpush1.xpose.msra.mxu0 0.0
        %2941 = vmatprep.subr.mxu0 0.0
        %2942 = vmatpush1.xpose.msra.mxu0 0.0
        %2943 = vmatprep.subr.mxu0 0.0
        %2944 = vmatpush1.xpose.msra.mxu0 0.0
        %2945 = vmatprep.subr.mxu0 0.0
        %2946 = vmatpush1.xpose.msra.mxu0 0.0
        %2947 = vmatprep.subr.mxu0 0.0
        %2948 = vmatpush1.xpose.msra.mxu0 0.0
        %2949 = vmatprep.subr.mxu0 0.0
        %2950 = vmatpush1.xpose.msra.mxu0 0.0
        %2951 = vmatprep.subr.mxu0 0.0
        %2952 = vmatpush1.xpose.msra.mxu0 0.0
        %2953 = vmatprep.subr.mxu0 0.0
        %2954 = vmatpush1.xpose.msra.mxu0 0.0
        %2955 = vmatprep.subr.mxu0 0.0
        %2956 = vmatpush1.xpose.msra.mxu0 0.0
        %2957 = vmatprep.subr.mxu0 0.0
        %2958 = vmatpush1.xpose.msra.mxu0 0.0
        %2959 = vmatprep.subr.mxu0 0.0
        %2960 = vmatpush1.xpose.msra.mxu0 0.0
        %2961 = vmatprep.subr.mxu0 0.0
        %2962 = vmatpush1.xpose.msra.mxu0 0.0
        %2963 = vmatprep.subr.mxu0 0.0
        %2964 = vmatpush1.xpose.msra.mxu0 0.0
        %2965 = vmatprep.subr.mxu0 0.0
        %2966 = vmatpush1.xpose.msra.mxu0 0.0
        %2967 = vmatprep.subr.mxu0 0.0
        %2968 = vmatpush1.xpose.msra.mxu0 0.0
        %2969 = vmatprep.subr.mxu0 0.0
        %2970 = vmatpush1.xpose.msra.mxu0 0.0
        %2971 = vmatprep.subr.mxu0 0.0
        %2972 = vmatpush1.xpose.msra.mxu0 0.0
        %2973 = vmatprep.subr.mxu0 0.0
        %2974 = vmatpush1.xpose.msra.mxu0 0.0
        %2975 = vmatprep.subr.mxu0 0.0
        %2976 = vmatpush1.xpose.msra.mxu0 0.0
        %2977 = vmatprep.subr.mxu0 0.0
        %2978 = vmatpush1.xpose.msra.mxu0 0.0
        %2979 = vmatprep.subr.mxu0 0.0
        %2980 = vmatpush1.xpose.msra.mxu0 0.0
        %2981 = vmatprep.subr.mxu0 0.0
        %2982 = vmatpush1.xpose.msra.mxu0 0.0
        %2983 = vmatprep.subr.mxu0 0.0
        %2984 = vmatpush1.xpose.msra.mxu0 0.0
        %2985 = vmatprep.subr.mxu0 0.0
        %2986 = vmatpush1.xpose.msra.mxu0 0.0
        %2987 = vmatprep.subr.mxu0 0.0
        %2988 = vmatpush1.xpose.msra.mxu0 0.0
        %2989 = vmatprep.subr.mxu0 0.0
        %2990 = vmatpush1.xpose.msra.mxu0 0.0
        %2991 = vmatprep.subr.mxu0 0.0
        %2992 = vmatpush1.xpose.msra.mxu0 0.0
        %2993 = vmatprep.subr.mxu0 0.0
        %2994 = vmatpush1.xpose.msra.mxu0 0.0
        %2995 = vmatprep.subr.mxu0 0.0
        %2996 = vmatpush1.xpose.msra.mxu0 0.0
        %2997 = vmatprep.mubr.f32.mxu0 0.0
        %2998 = vmatmul.mubr.f32.gmra.mrb[0].mxu0 %v2928
        %v2999 = vpop.f32.mrb[0].mxu0
        %v3000 = vadd.f32 0.0, %v2999
        %v3001 = vpop.f32.mrb[0].mxu0
        %3002 = vdwg.mxu0
        %v3003 = vmul.f32 %v2924, 0.35355338
        %v3004 = vmul.f32 %v3000, 0.35355338
        %v3005 = vsel %vm991, %v3003, -1e+09
        %v3006 = vsel %vm992, %v3004, -1e+09
        %v3007 = vsel %vm1149, %v3005, -inf
        %3008 = vmax.xlane.f32.xlu0 %v3007
        %v3009 = vpop.xlane.xlu0 %3008
        %v3010 = vsel %vm1149, %v3006, -inf
        %3011 = vmax.xlane.f32.xlu0 %v3010
        %v3012 = vpop.xlane.xlu0 %3011
        %v3013 = vsub.f32 %v3005, %v3009
        %v3014 = vsub.f32 %v3006, %v3012
        %v3015 = vmul.f32 %v3013, 1.442695
        %v3016 = vpow.pop %v3015
        %v3017 = vmul.f32 %v3014, 1.442695
        %v3018 = vpow.pop %v3017
        %v3019 = vsel %vm1149, %v3016, 0.0
        %3020 = vadd.xlane.f32.xlu0 %v3019
        %v3021 = vpop.xlane.xlu0 %3020
        %v3022 = vsel %vm1149, %v3018, 0.0
        %3023 = vadd.xlane.f32.xlu0 %v3022
        %v3024 = vpop.xlane.xlu0 %3023
        %v3025 = vrcp.pop %v3021
        %v3026 = vrcp.pop %v3024
        %v3027 = vmul.f32 %v3016, %v3025
        %v3028 = vmul.f32 %v3018, %v3026
        %3029 = vrot.lane.b32.xlu0 %v2843, 96
        %v3030 = vpop.permute.xlu0 %3029
        %v3033 = vsel %vm1149, %v3027, 0
        %3035 = vmatprep.subr.mxu0 0.0
        %3036 = vmatpush1.msra.mxu0 %v3030
        %3037 = vmatprep.subr.mxu0 0.0
        %3038 = vmatpush1.msra.mxu0 0.0
        %3039 = vmatprep.subr.mxu0 0.0
        %3040 = vmatpush1.msra.mxu0 0.0
        %3041 = vmatprep.subr.mxu0 0.0
        %3042 = vmatpush1.msra.mxu0 0.0
        %3043 = vmatprep.subr.mxu0 0.0
        %3044 = vmatpush1.msra.mxu0 0.0
        %3045 = vmatprep.subr.mxu0 0.0
        %3046 = vmatpush1.msra.mxu0 0.0
        %3047 = vmatprep.subr.mxu0 0.0
        %3048 = vmatpush1.msra.mxu0 0.0
        %3049 = vmatprep.subr.mxu0 0.0
        %3050 = vmatpush1.msra.mxu0 0.0
        %3051 = vmatprep.subr.mxu0 0.0
        %3052 = vmatpush1.msra.mxu0 0.0
        %3053 = vmatprep.subr.mxu0 0.0
        %3054 = vmatpush1.msra.mxu0 0.0
        %3055 = vmatprep.subr.mxu0 0.0
        %3056 = vmatpush1.msra.mxu0 0.0
        %3057 = vmatprep.subr.mxu0 0.0
        %3058 = vmatpush1.msra.mxu0 0.0
        %3059 = vmatprep.subr.mxu0 0.0
        %3060 = vmatpush1.msra.mxu0 0.0
        %3061 = vmatprep.subr.mxu0 0.0
        %3062 = vmatpush1.msra.mxu0 0.0
        %3063 = vmatprep.subr.mxu0 0.0
        %3064 = vmatpush1.msra.mxu0 0.0
        %3065 = vmatprep.subr.mxu0 0.0
        %3066 = vmatpush1.msra.mxu0 0.0
        %3067 = vmatprep.subr.mxu0 0.0
        %3068 = vmatpush1.msra.mxu0 0.0
        %3069 = vmatprep.subr.mxu0 0.0
        %3070 = vmatpush1.msra.mxu0 0.0
        %3071 = vmatprep.subr.mxu0 0.0
        %3072 = vmatpush1.msra.mxu0 0.0
        %3073 = vmatprep.subr.mxu0 0.0
        %3074 = vmatpush1.msra.mxu0 0.0
        %3075 = vmatprep.subr.mxu0 0.0
        %3076 = vmatpush1.msra.mxu0 0.0
        %3077 = vmatprep.subr.mxu0 0.0
        %3078 = vmatpush1.msra.mxu0 0.0
        %3079 = vmatprep.subr.mxu0 0.0
        %3080 = vmatpush1.msra.mxu0 0.0
        %3081 = vmatprep.subr.mxu0 0.0
        %3082 = vmatpush1.msra.mxu0 0.0
        %3083 = vmatprep.subr.mxu0 0.0
        %3084 = vmatpush1.msra.mxu0 0.0
        %3085 = vmatprep.subr.mxu0 0.0
        %3086 = vmatpush1.msra.mxu0 0.0
        %3087 = vmatprep.subr.mxu0 0.0
        %3088 = vmatpush1.msra.mxu0 0.0
        %3089 = vmatprep.subr.mxu0 0.0
        %3090 = vmatpush1.msra.mxu0 0.0
        %3091 = vmatprep.subr.mxu0 0.0
        %3092 = vmatpush1.msra.mxu0 0.0
        %3093 = vmatprep.subr.mxu0 0.0
        %3094 = vmatpush1.msra.mxu0 0.0
        %3095 = vmatprep.subr.mxu0 0.0
        %3096 = vmatpush1.msra.mxu0 0.0
        %3097 = vmatprep.subr.mxu0 0.0
        %3098 = vmatpush1.msra.mxu0 0.0
        %3099 = vmatprep.mubr.f32.mxu0 0.0
        %3100 = vmatmul.mubr.f32.gmra.mrb[0].mxu0 %v3033
        %v3101 = vpop.f32.mrb[0].mxu0
        %v3102 = vadd.f32 0.0, %v3101
        %v3103 = vpop.f32.mrb[0].mxu0
        %3104 = vdwg.mxu0
        %3105 = vrot.lane.b32.xlu0 %v2848, 96
        %v3106 = vpop.permute.xlu0 %3105
        %v3109 = vsel %vm1149, %v3028, 0
        %3111 = vmatprep.subr.mxu0 0.0
        %3112 = vmatpush1.msra.mxu0 %v3106
        %3113 = vmatprep.subr.mxu0 0.0
        %3114 = vmatpush1.msra.mxu0 0.0
        %3115 = vmatprep.subr.mxu0 0.0
        %3116 = vmatpush1.msra.mxu0 0.0
        %3117 = vmatprep.subr.mxu0 0.0
        %3118 = vmatpush1.msra.mxu0 0.0
        %3119 = vmatprep.subr.mxu0 0.0
        %3120 = vmatpush1.msra.mxu0 0.0
        %3121 = vmatprep.subr.mxu0 0.0
        %3122 = vmatpush1.msra.mxu0 0.0
        %3123 = vmatprep.subr.mxu0 0.0
        %3124 = vmatpush1.msra.mxu0 0.0
        %3125 = vmatprep.subr.mxu0 0.0
        %3126 = vmatpush1.msra.mxu0 0.0
        %3127 = vmatprep.subr.mxu0 0.0
        %3128 = vmatpush1.msra.mxu0 0.0
        %3129 = vmatprep.subr.mxu0 0.0
        %3130 = vmatpush1.msra.mxu0 0.0
        %3131 = vmatprep.subr.mxu0 0.0
        %3132 = vmatpush1.msra.mxu0 0.0
        %3133 = vmatprep.subr.mxu0 0.0
        %3134 = vmatpush1.msra.mxu0 0.0
        %3135 = vmatprep.subr.mxu0 0.0
        %3136 = vmatpush1.msra.mxu0 0.0
        %3137 = vmatprep.subr.mxu0 0.0
        %3138 = vmatpush1.msra.mxu0 0.0
        %3139 = vmatprep.subr.mxu0 0.0
        %3140 = vmatpush1.msra.mxu0 0.0
        %3141 = vmatprep.subr.mxu0 0.0
        %3142 = vmatpush1.msra.mxu0 0.0
        %3143 = vmatprep.subr.mxu0 0.0
        %3144 = vmatpush1.msra.mxu0 0.0
        %3145 = vmatprep.subr.mxu0 0.0
        %3146 = vmatpush1.msra.mxu0 0.0
        %3147 = vmatprep.subr.mxu0 0.0
        %3148 = vmatpush1.msra.mxu0 0.0
        %3149 = vmatprep.subr.mxu0 0.0
        %3150 = vmatpush1.msra.mxu0 0.0
        %3151 = vmatprep.subr.mxu0 0.0
        %3152 = vmatpush1.msra.mxu0 0.0
        %3153 = vmatprep.subr.mxu0 0.0
        %3154 = vmatpush1.msra.mxu0 0.0
        %3155 = vmatprep.subr.mxu0 0.0
        %3156 = vmatpush1.msra.mxu0 0.0
        %3157 = vmatprep.subr.mxu0 0.0
        %3158 = vmatpush1.msra.mxu0 0.0
        %3159 = vmatprep.subr.mxu0 0.0
        %3160 = vmatpush1.msra.mxu0 0.0
        %3161 = vmatprep.subr.mxu0 0.0
        %3162 = vmatpush1.msra.mxu0 0.0
        %3163 = vmatprep.subr.mxu0 0.0
        %3164 = vmatpush1.msra.mxu0 0.0
        %3165 = vmatprep.subr.mxu0 0.0
        %3166 = vmatpush1.msra.mxu0 0.0
        %3167 = vmatprep.subr.mxu0 0.0
        %3168 = vmatpush1.msra.mxu0 0.0
        %3169 = vmatprep.subr.mxu0 0.0
        %3170 = vmatpush1.msra.mxu0 0.0
        %3171 = vmatprep.subr.mxu0 0.0
        %3172 = vmatpush1.msra.mxu0 0.0
        %3173 = vmatprep.subr.mxu0 0.0
        %3174 = vmatpush1.msra.mxu0 0.0
        %3175 = vmatprep.mubr.f32.mxu0 0.0
        %3176 = vmatmul.mubr.f32.gmra.mrb[0].mxu0 %v3109
        %v3177 = vpop.f32.mrb[0].mxu0
        %v3178 = vadd.f32 0.0, %v3177
        %v3179 = vpop.f32.mrb[0].mxu0
        %3180 = vdwg.mxu0
        %3181 = vrot.lane.b32.xlu0 %v2751, 120
        %v3182 = vpop.permute.xlu0 %3181
        %3183 = vrot.lane.b32.xlu0 %v2843, 120
        %v3184 = vpop.permute.xlu0 %3183
        %v3185 = vsel %vm1149, %v3182, 0
        %v3187 = vsel %vm1149, %v3184, 0
        %3189 = vmatprep.subr.mxu0 0.0
        %3190 = vmatpush1.xpose.msra.mxu0 %v3187
        %3191 = vmatprep.subr.mxu0 0.0
        %3192 = vmatpush1.xpose.msra.mxu0 0.0
        %3193 = vmatprep.subr.mxu0 0.0
        %3194 = vmatpush1.xpose.msra.mxu0 0.0
        %3195 = vmatprep.subr.mxu0 0.0
        %3196 = vmatpush1.xpose.msra.mxu0 0.0
        %3197 = vmatprep.subr.mxu0 0.0
        %3198 = vmatpush1.xpose.msra.mxu0 0.0
        %3199 = vmatprep.subr.mxu0 0.0
        %3200 = vmatpush1.xpose.msra.mxu0 0.0
        %3201 = vmatprep.subr.mxu0 0.0
        %3202 = vmatpush1.xpose.msra.mxu0 0.0
        %3203 = vmatprep.subr.mxu0 0.0
        %3204 = vmatpush1.xpose.msra.mxu0 0.0
        %3205 = vmatprep.subr.mxu0 0.0
        %3206 = vmatpush1.xpose.msra.mxu0 0.0
        %3207 = vmatprep.subr.mxu0 0.0
        %3208 = vmatpush1.xpose.msra.mxu0 0.0
        %3209 = vmatprep.subr.mxu0 0.0
        %3210 = vmatpush1.xpose.msra.mxu0 0.0
        %3211 = vmatprep.subr.mxu0 0.0
        %3212 = vmatpush1.xpose.msra.mxu0 0.0
        %3213 = vmatprep.subr.mxu0 0.0
        %3214 = vmatpush1.xpose.msra.mxu0 0.0
        %3215 = vmatprep.subr.mxu0 0.0
        %3216 = vmatpush1.xpose.msra.mxu0 0.0
        %3217 = vmatprep.subr.mxu0 0.0
        %3218 = vmatpush1.xpose.msra.mxu0 0.0
        %3219 = vmatprep.subr.mxu0 0.0
        %3220 = vmatpush1.xpose.msra.mxu0 0.0
        %3221 = vmatprep.subr.mxu0 0.0
        %3222 = vmatpush1.xpose.msra.mxu0 0.0
        %3223 = vmatprep.subr.mxu0 0.0
        %3224 = vmatpush1.xpose.msra.mxu0 0.0
        %3225 = vmatprep.subr.mxu0 0.0
        %3226 = vmatpush1.xpose.msra.mxu0 0.0
        %3227 = vmatprep.subr.mxu0 0.0
        %3228 = vmatpush1.xpose.msra.mxu0 0.0
        %3229 = vmatprep.subr.mxu0 0.0
        %3230 = vmatpush1.xpose.msra.mxu0 0.0
        %3231 = vmatprep.subr.mxu0 0.0
        %3232 = vmatpush1.xpose.msra.mxu0 0.0
        %3233 = vmatprep.subr.mxu0 0.0
        %3234 = vmatpush1.xpose.msra.mxu0 0.0
        %3235 = vmatprep.subr.mxu0 0.0
        %3236 = vmatpush1.xpose.msra.mxu0 0.0
        %3237 = vmatprep.subr.mxu0 0.0
        %3238 = vmatpush1.xpose.msra.mxu0 0.0
        %3239 = vmatprep.subr.mxu0 0.0
        %3240 = vmatpush1.xpose.msra.mxu0 0.0
        %3241 = vmatprep.subr.mxu0 0.0
        %3242 = vmatpush1.xpose.msra.mxu0 0.0
        %3243 = vmatprep.subr.mxu0 0.0
        %3244 = vmatpush1.xpose.msra.mxu0 0.0
        %3245 = vmatprep.subr.mxu0 0.0
        %3246 = vmatpush1.xpose.msra.mxu0 0.0
        %3247 = vmatprep.subr.mxu0 0.0
        %3248 = vmatpush1.xpose.msra.mxu0 0.0
        %3249 = vmatprep.subr.mxu0 0.0
        %3250 = vmatpush1.xpose.msra.mxu0 0.0
        %3251 = vmatprep.subr.mxu0 0.0
        %3252 = vmatpush1.xpose.msra.mxu0 0.0
        %3253 = vmatprep.mubr.f32.mxu0 0.0
        %3254 = vmatmul.mubr.f32.gmra.mrb[0].mxu0 %v3185
        %v3255 = vpop.f32.mrb[0].mxu0
        %v3256 = vadd.f32 0.0, %v3255
        %v3257 = vpop.f32.mrb[0].mxu0
        %3258 = vdwg.mxu0
        %3259 = vrot.lane.b32.xlu0 %v2756, 120
        %v3260 = vpop.permute.xlu0 %3259
        %3261 = vrot.lane.b32.xlu0 %v2848, 120
        %v3262 = vpop.permute.xlu0 %3261
        %v3263 = vsel %vm1149, %v3260, 0
        %v3265 = vsel %vm1149, %v3262, 0
        %3267 = vmatprep.subr.mxu0 0.0
        %3268 = vmatpush1.xpose.msra.mxu0 %v3265
        %3269 = vmatprep.subr.mxu0 0.0
        %3270 = vmatpush1.xpose.msra.mxu0 0.0
        %3271 = vmatprep.subr.mxu0 0.0
        %3272 = vmatpush1.xpose.msra.mxu0 0.0
        %3273 = vmatprep.subr.mxu0 0.0
        %3274 = vmatpush1.xpose.msra.mxu0 0.0
        %3275 = vmatprep.subr.mxu0 0.0
        %3276 = vmatpush1.xpose.msra.mxu0 0.0
        %3277 = vmatprep.subr.mxu0 0.0
        %3278 = vmatpush1.xpose.msra.mxu0 0.0
        %3279 = vmatprep.subr.mxu0 0.0
        %3280 = vmatpush1.xpose.msra.mxu0 0.0
        %3281 = vmatprep.subr.mxu0 0.0
        %3282 = vmatpush1.xpose.msra.mxu0 0.0
        %3283 = vmatprep.subr.mxu0 0.0
        %3284 = vmatpush1.xpose.msra.mxu0 0.0
        %3285 = vmatprep.subr.mxu0 0.0
        %3286 = vmatpush1.xpose.msra.mxu0 0.0
        %3287 = vmatprep.subr.mxu0 0.0
        %3288 = vmatpush1.xpose.msra.mxu0 0.0
        %3289 = vmatprep.subr.mxu0 0.0
        %3290 = vmatpush1.xpose.msra.mxu0 0.0
        %3291 = vmatprep.subr.mxu0 0.0
        %3292 = vmatpush1.xpose.msra.mxu0 0.0
        %3293 = vmatprep.subr.mxu0 0.0
        %3294 = vmatpush1.xpose.msra.mxu0 0.0
        %3295 = vmatprep.subr.mxu0 0.0
        %3296 = vmatpush1.xpose.msra.mxu0 0.0
        %3297 = vmatprep.subr.mxu0 0.0
        %3298 = vmatpush1.xpose.msra.mxu0 0.0
        %3299 = vmatprep.subr.mxu0 0.0
        %3300 = vmatpush1.xpose.msra.mxu0 0.0
        %3301 = vmatprep.subr.mxu0 0.0
        %3302 = vmatpush1.xpose.msra.mxu0 0.0
        %3303 = vmatprep.subr.mxu0 0.0
        %3304 = vmatpush1.xpose.msra.mxu0 0.0
        %3305 = vmatprep.subr.mxu0 0.0
        %3306 = vmatpush1.xpose.msra.mxu0 0.0
        %3307 = vmatprep.subr.mxu0 0.0
        %3308 = vmatpush1.xpose.msra.mxu0 0.0
        %3309 = vmatprep.subr.mxu0 0.0
        %3310 = vmatpush1.xpose.msra.mxu0 0.0
        %3311 = vmatprep.subr.mxu0 0.0
        %3312 = vmatpush1.xpose.msra.mxu0 0.0
        %3313 = vmatprep.subr.mxu0 0.0
        %3314 = vmatpush1.xpose.msra.mxu0 0.0
        %3315 = vmatprep.subr.mxu0 0.0
        %3316 = vmatpush1.xpose.msra.mxu0 0.0
        %3317 = vmatprep.subr.mxu0 0.0
        %3318 = vmatpush1.xpose.msra.mxu0 0.0
        %3319 = vmatprep.subr.mxu0 0.0
        %3320 = vmatpush1.xpose.msra.mxu0 0.0
        %3321 = vmatprep.subr.mxu0 0.0
        %3322 = vmatpush1.xpose.msra.mxu0 0.0
        %3323 = vmatprep.subr.mxu0 0.0
        %3324 = vmatpush1.xpose.msra.mxu0 0.0
        %3325 = vmatprep.subr.mxu0 0.0
        %3326 = vmatpush1.xpose.msra.mxu0 0.0
        %3327 = vmatprep.subr.mxu0 0.0
        %3328 = vmatpush1.xpose.msra.mxu0 0.0
        %3329 = vmatprep.subr.mxu0 0.0
        %3330 = vmatpush1.xpose.msra.mxu0 0.0
        %3331 = vmatprep.mubr.f32.mxu0 0.0
        %3332 = vmatmul.mubr.f32.gmra.mrb[0].mxu0 %v3263
        %v3333 = vpop.f32.mrb[0].mxu0
        %v3334 = vadd.f32 0.0, %v3333
        %v3335 = vpop.f32.mrb[0].mxu0
        %3336 = vdwg.mxu0
        %v3337 = vmul.f32 %v3256, 0.35355338
        %v3338 = vmul.f32 %v3334, 0.35355338
        %v3339 = vsel %vm991, %v3337, -1e+09
        %v3340 = vsel %vm992, %v3338, -1e+09
        %v3341 = vsel %vm1149, %v3339, -inf
        %3342 = vmax.xlane.f32.xlu0 %v3341
        %v3343 = vpop.xlane.xlu0 %3342
        %v3344 = vsel %vm1149, %v3340, -inf
        %3345 = vmax.xlane.f32.xlu0 %v3344
        %v3346 = vpop.xlane.xlu0 %3345
        %v3347 = vsub.f32 %v3339, %v3343
        %v3348 = vsub.f32 %v3340, %v3346
        %v3349 = vmul.f32 %v3347, 1.442695
        %v3350 = vpow.pop %v3349
        %v3351 = vmul.f32 %v3348, 1.442695
        %v3352 = vpow.pop %v3351
        %v3353 = vsel %vm1149, %v3350, 0.0
        %3354 = vadd.xlane.f32.xlu0 %v3353
        %v3355 = vpop.xlane.xlu0 %3354
        %v3356 = vsel %vm1149, %v3352, 0.0
        %3357 = vadd.xlane.f32.xlu0 %v3356
        %v3358 = vpop.xlane.xlu0 %3357
        %v3359 = vrcp.pop %v3355
        %v3360 = vrcp.pop %v3358
        %v3361 = vmul.f32 %v3350, %v3359
        %v3362 = vmul.f32 %v3352, %v3360
        %3363 = vrot.lane.b32.xlu0 %v2843, 88
        %v3364 = vpop.permute.xlu0 %3363
        %v3367 = vsel %vm1149, %v3361, 0
        %3369 = vmatprep.subr.mxu0 0.0
        %3370 = vmatpush1.msra.mxu0 %v3364
        %3371 = vmatprep.subr.mxu0 0.0
        %3372 = vmatpush1.msra.mxu0 0.0
        %3373 = vmatprep.subr.mxu0 0.0
        %3374 = vmatpush1.msra.mxu0 0.0
        %3375 = vmatprep.subr.mxu0 0.0
        %3376 = vmatpush1.msra.mxu0 0.0
        %3377 = vmatprep.subr.mxu0 0.0
        %3378 = vmatpush1.msra.mxu0 0.0
        %3379 = vmatprep.subr.mxu0 0.0
        %3380 = vmatpush1.msra.mxu0 0.0
        %3381 = vmatprep.subr.mxu0 0.0
        %3382 = vmatpush1.msra.mxu0 0.0
        %3383 = vmatprep.subr.mxu0 0.0
        %3384 = vmatpush1.msra.mxu0 0.0
        %3385 = vmatprep.subr.mxu0 0.0
        %3386 = vmatpush1.msra.mxu0 0.0
        %3387 = vmatprep.subr.mxu0 0.0
        %3388 = vmatpush1.msra.mxu0 0.0
        %3389 = vmatprep.subr.mxu0 0.0
        %3390 = vmatpush1.msra.mxu0 0.0
        %3391 = vmatprep.subr.mxu0 0.0
        %3392 = vmatpush1.msra.mxu0 0.0
        %3393 = vmatprep.subr.mxu0 0.0
        %3394 = vmatpush1.msra.mxu0 0.0
        %3395 = vmatprep.subr.mxu0 0.0
        %3396 = vmatpush1.msra.mxu0 0.0
        %3397 = vmatprep.subr.mxu0 0.0
        %3398 = vmatpush1.msra.mxu0 0.0
        %3399 = vmatprep.subr.mxu0 0.0
        %3400 = vmatpush1.msra.mxu0 0.0
        %3401 = vmatprep.subr.mxu0 0.0
        %3402 = vmatpush1.msra.mxu0 0.0
        %3403 = vmatprep.subr.mxu0 0.0
        %3404 = vmatpush1.msra.mxu0 0.0
        %3405 = vmatprep.subr.mxu0 0.0
        %3406 = vmatpush1.msra.mxu0 0.0
        %3407 = vmatprep.subr.mxu0 0.0
        %3408 = vmatpush1.msra.mxu0 0.0
        %3409 = vmatprep.subr.mxu0 0.0
        %3410 = vmatpush1.msra.mxu0 0.0
        %3411 = vmatprep.subr.mxu0 0.0
        %3412 = vmatpush1.msra.mxu0 0.0
        %3413 = vmatprep.subr.mxu0 0.0
        %3414 = vmatpush1.msra.mxu0 0.0
        %3415 = vmatprep.subr.mxu0 0.0
        %3416 = vmatpush1.msra.mxu0 0.0
        %3417 = vmatprep.subr.mxu0 0.0
        %3418 = vmatpush1.msra.mxu0 0.0
        %3419 = vmatprep.subr.mxu0 0.0
        %3420 = vmatpush1.msra.mxu0 0.0
        %3421 = vmatprep.subr.mxu0 0.0
        %3422 = vmatpush1.msra.mxu0 0.0
        %3423 = vmatprep.subr.mxu0 0.0
        %3424 = vmatpush1.msra.mxu0 0.0
        %3425 = vmatprep.subr.mxu0 0.0
        %3426 = vmatpush1.msra.mxu0 0.0
        %3427 = vmatprep.subr.mxu0 0.0
        %3428 = vmatpush1.msra.mxu0 0.0
        %3429 = vmatprep.subr.mxu0 0.0
        %3430 = vmatpush1.msra.mxu0 0.0
        %3431 = vmatprep.subr.mxu0 0.0
        %3432 = vmatpush1.msra.mxu0 0.0
        %3433 = vmatprep.mubr.f32.mxu0 0.0
        %3434 = vmatmul.mubr.f32.gmra.mrb[0].mxu0 %v3367
        %v3435 = vpop.f32.mrb[0].mxu0
        %v3436 = vadd.f32 0.0, %v3435
        %v3437 = vpop.f32.mrb[0].mxu0
        %3438 = vdwg.mxu0
        %3439 = vrot.lane.b32.xlu0 %v2848, 88
        %v3440 = vpop.permute.xlu0 %3439
        %v3443 = vsel %vm1149, %v3362, 0
        %3445 = vmatprep.subr.mxu0 0.0
        %3446 = vmatpush1.msra.mxu0 %v3440
        %3447 = vmatprep.subr.mxu0 0.0
        %3448 = vmatpush1.msra.mxu0 0.0
        %3449 = vmatprep.subr.mxu0 0.0
        %3450 = vmatpush1.msra.mxu0 0.0
        %3451 = vmatprep.subr.mxu0 0.0
        %3452 = vmatpush1.msra.mxu0 0.0
        %3453 = vmatprep.subr.mxu0 0.0
        %3454 = vmatpush1.msra.mxu0 0.0
        %3455 = vmatprep.subr.mxu0 0.0
        %3456 = vmatpush1.msra.mxu0 0.0
        %3457 = vmatprep.subr.mxu0 0.0
        %3458 = vmatpush1.msra.mxu0 0.0
        %3459 = vmatprep.subr.mxu0 0.0
        %3460 = vmatpush1.msra.mxu0 0.0
        %3461 = vmatprep.subr.mxu0 0.0
        %3462 = vmatpush1.msra.mxu0 0.0
        %3463 = vmatprep.subr.mxu0 0.0
        %3464 = vmatpush1.msra.mxu0 0.0
        %3465 = vmatprep.subr.mxu0 0.0
        %3466 = vmatpush1.msra.mxu0 0.0
        %3467 = vmatprep.subr.mxu0 0.0
        %3468 = vmatpush1.msra.mxu0 0.0
        %3469 = vmatprep.subr.mxu0 0.0
        %3470 = vmatpush1.msra.mxu0 0.0
        %3471 = vmatprep.subr.mxu0 0.0
        %3472 = vmatpush1.msra.mxu0 0.0
        %3473 = vmatprep.subr.mxu0 0.0
        %3474 = vmatpush1.msra.mxu0 0.0
        %3475 = vmatprep.subr.mxu0 0.0
        %3476 = vmatpush1.msra.mxu0 0.0
        %3477 = vmatprep.subr.mxu0 0.0
        %3478 = vmatpush1.msra.mxu0 0.0
        %3479 = vmatprep.subr.mxu0 0.0
        %3480 = vmatpush1.msra.mxu0 0.0
        %3481 = vmatprep.subr.mxu0 0.0
        %3482 = vmatpush1.msra.mxu0 0.0
        %3483 = vmatprep.subr.mxu0 0.0
        %3484 = vmatpush1.msra.mxu0 0.0
        %3485 = vmatprep.subr.mxu0 0.0
        %3486 = vmatpush1.msra.mxu0 0.0
        %3487 = vmatprep.subr.mxu0 0.0
        %3488 = vmatpush1.msra.mxu0 0.0
        %3489 = vmatprep.subr.mxu0 0.0
        %3490 = vmatpush1.msra.mxu0 0.0
        %3491 = vmatprep.subr.mxu0 0.0
        %3492 = vmatpush1.msra.mxu0 0.0
        %3493 = vmatprep.subr.mxu0 0.0
        %3494 = vmatpush1.msra.mxu0 0.0
        %3495 = vmatprep.subr.mxu0 0.0
        %3496 = vmatpush1.msra.mxu0 0.0
        %3497 = vmatprep.subr.mxu0 0.0
        %3498 = vmatpush1.msra.mxu0 0.0
        %3499 = vmatprep.subr.mxu0 0.0
        %3500 = vmatpush1.msra.mxu0 0.0
        %3501 = vmatprep.subr.mxu0 0.0
        %3502 = vmatpush1.msra.mxu0 0.0
        %3503 = vmatprep.subr.mxu0 0.0
        %3504 = vmatpush1.msra.mxu0 0.0
        %3505 = vmatprep.subr.mxu0 0.0
        %3506 = vmatpush1.msra.mxu0 0.0
        %3507 = vmatprep.subr.mxu0 0.0
        %3508 = vmatpush1.msra.mxu0 0.0
        %3509 = vmatprep.mubr.f32.mxu0 0.0
        %3510 = vmatmul.mubr.f32.gmra.mrb[0].mxu0 %v3443
        %v3511 = vpop.f32.mrb[0].mxu0
        %v3512 = vadd.f32 0.0, %v3511
        %v3513 = vpop.f32.mrb[0].mxu0
        %3514 = vdwg.mxu0
        %3515 = vrot.lane.b32.xlu0 %v2751, 112
        %v3516 = vpop.permute.xlu0 %3515
        %3517 = vrot.lane.b32.xlu0 %v2843, 112
        %v3518 = vpop.permute.xlu0 %3517
        %v3519 = vsel %vm1149, %v3516, 0
        %v3521 = vsel %vm1149, %v3518, 0
        %3523 = vmatprep.subr.mxu0 0.0
        %3524 = vmatpush1.xpose.msra.mxu0 %v3521
        %3525 = vmatprep.subr.mxu0 0.0
        %3526 = vmatpush1.xpose.msra.mxu0 0.0
        %3527 = vmatprep.subr.mxu0 0.0
        %3528 = vmatpush1.xpose.msra.mxu0 0.0
        %3529 = vmatprep.subr.mxu0 0.0
        %3530 = vmatpush1.xpose.msra.mxu0 0.0
        %3531 = vmatprep.subr.mxu0 0.0
        %3532 = vmatpush1.xpose.msra.mxu0 0.0
        %3533 = vmatprep.subr.mxu0 0.0
        %3534 = vmatpush1.xpose.msra.mxu0 0.0
        %3535 = vmatprep.subr.mxu0 0.0
        %3536 = vmatpush1.xpose.msra.mxu0 0.0
        %3537 = vmatprep.subr.mxu0 0.0
        %3538 = vmatpush1.xpose.msra.mxu0 0.0
        %3539 = vmatprep.subr.mxu0 0.0
        %3540 = vmatpush1.xpose.msra.mxu0 0.0
        %3541 = vmatprep.subr.mxu0 0.0
        %3542 = vmatpush1.xpose.msra.mxu0 0.0
        %3543 = vmatprep.subr.mxu0 0.0
        %3544 = vmatpush1.xpose.msra.mxu0 0.0
        %3545 = vmatprep.subr.mxu0 0.0
        %3546 = vmatpush1.xpose.msra.mxu0 0.0
        %3547 = vmatprep.subr.mxu0 0.0
        %3548 = vmatpush1.xpose.msra.mxu0 0.0
        %3549 = vmatprep.subr.mxu0 0.0
        %3550 = vmatpush1.xpose.msra.mxu0 0.0
        %3551 = vmatprep.subr.mxu0 0.0
        %3552 = vmatpush1.xpose.msra.mxu0 0.0
        %3553 = vmatprep.subr.mxu0 0.0
        %3554 = vmatpush1.xpose.msra.mxu0 0.0
        %3555 = vmatprep.subr.mxu0 0.0
        %3556 = vmatpush1.xpose.msra.mxu0 0.0
        %3557 = vmatprep.subr.mxu0 0.0
        %3558 = vmatpush1.xpose.msra.mxu0 0.0
        %3559 = vmatprep.subr.mxu0 0.0
        %3560 = vmatpush1.xpose.msra.mxu0 0.0
        %3561 = vmatprep.subr.mxu0 0.0
        %3562 = vmatpush1.xpose.msra.mxu0 0.0
        %3563 = vmatprep.subr.mxu0 0.0
        %3564 = vmatpush1.xpose.msra.mxu0 0.0
        %3565 = vmatprep.subr.mxu0 0.0
        %3566 = vmatpush1.xpose.msra.mxu0 0.0
        %3567 = vmatprep.subr.mxu0 0.0
        %3568 = vmatpush1.xpose.msra.mxu0 0.0
        %3569 = vmatprep.subr.mxu0 0.0
        %3570 = vmatpush1.xpose.msra.mxu0 0.0
        %3571 = vmatprep.subr.mxu0 0.0
        %3572 = vmatpush1.xpose.msra.mxu0 0.0
        %3573 = vmatprep.subr.mxu0 0.0
        %3574 = vmatpush1.xpose.msra.mxu0 0.0
        %3575 = vmatprep.subr.mxu0 0.0
        %3576 = vmatpush1.xpose.msra.mxu0 0.0
        %3577 = vmatprep.subr.mxu0 0.0
        %3578 = vmatpush1.xpose.msra.mxu0 0.0
        %3579 = vmatprep.subr.mxu0 0.0
        %3580 = vmatpush1.xpose.msra.mxu0 0.0
        %3581 = vmatprep.subr.mxu0 0.0
        %3582 = vmatpush1.xpose.msra.mxu0 0.0
        %3583 = vmatprep.subr.mxu0 0.0
        %3584 = vmatpush1.xpose.msra.mxu0 0.0
        %3585 = vmatprep.subr.mxu0 0.0
        %3586 = vmatpush1.xpose.msra.mxu0 0.0
        %3587 = vmatprep.mubr.f32.mxu0 0.0
        %3588 = vmatmul.mubr.f32.gmra.mrb[0].mxu0 %v3519
        %v3589 = vpop.f32.mrb[0].mxu0
        %v3590 = vadd.f32 0.0, %v3589
        %v3591 = vpop.f32.mrb[0].mxu0
        %3592 = vdwg.mxu0
        %3593 = vrot.lane.b32.xlu0 %v2756, 112
        %v3594 = vpop.permute.xlu0 %3593
        %3595 = vrot.lane.b32.xlu0 %v2848, 112
        %v3596 = vpop.permute.xlu0 %3595
        %v3597 = vsel %vm1149, %v3594, 0
        %v3599 = vsel %vm1149, %v3596, 0
        %3601 = vmatprep.subr.mxu0 0.0
        %3602 = vmatpush1.xpose.msra.mxu0 %v3599
        %3603 = vmatprep.subr.mxu0 0.0
        %3604 = vmatpush1.xpose.msra.mxu0 0.0
        %3605 = vmatprep.subr.mxu0 0.0
        %3606 = vmatpush1.xpose.msra.mxu0 0.0
        %3607 = vmatprep.subr.mxu0 0.0
        %3608 = vmatpush1.xpose.msra.mxu0 0.0
        %3609 = vmatprep.subr.mxu0 0.0
        %3610 = vmatpush1.xpose.msra.mxu0 0.0
        %3611 = vmatprep.subr.mxu0 0.0
        %3612 = vmatpush1.xpose.msra.mxu0 0.0
        %3613 = vmatprep.subr.mxu0 0.0
        %3614 = vmatpush1.xpose.msra.mxu0 0.0
        %3615 = vmatprep.subr.mxu0 0.0
        %3616 = vmatpush1.xpose.msra.mxu0 0.0
        %3617 = vmatprep.subr.mxu0 0.0
        %3618 = vmatpush1.xpose.msra.mxu0 0.0
        %3619 = vmatprep.subr.mxu0 0.0
        %3620 = vmatpush1.xpose.msra.mxu0 0.0
        %3621 = vmatprep.subr.mxu0 0.0
        %3622 = vmatpush1.xpose.msra.mxu0 0.0
        %3623 = vmatprep.subr.mxu0 0.0
        %3624 = vmatpush1.xpose.msra.mxu0 0.0
        %3625 = vmatprep.subr.mxu0 0.0
        %3626 = vmatpush1.xpose.msra.mxu0 0.0
        %3627 = vmatprep.subr.mxu0 0.0
        %3628 = vmatpush1.xpose.msra.mxu0 0.0
        %3629 = vmatprep.subr.mxu0 0.0
        %3630 = vmatpush1.xpose.msra.mxu0 0.0
        %3631 = vmatprep.subr.mxu0 0.0
        %3632 = vmatpush1.xpose.msra.mxu0 0.0
        %3633 = vmatprep.subr.mxu0 0.0
        %3634 = vmatpush1.xpose.msra.mxu0 0.0
        %3635 = vmatprep.subr.mxu0 0.0
        %3636 = vmatpush1.xpose.msra.mxu0 0.0
        %3637 = vmatprep.subr.mxu0 0.0
        %3638 = vmatpush1.xpose.msra.mxu0 0.0
        %3639 = vmatprep.subr.mxu0 0.0
        %3640 = vmatpush1.xpose.msra.mxu0 0.0
        %3641 = vmatprep.subr.mxu0 0.0
        %3642 = vmatpush1.xpose.msra.mxu0 0.0
        %3643 = vmatprep.subr.mxu0 0.0
        %3644 = vmatpush1.xpose.msra.mxu0 0.0
        %3645 = vmatprep.subr.mxu0 0.0
        %3646 = vmatpush1.xpose.msra.mxu0 0.0
        %3647 = vmatprep.subr.mxu0 0.0
        %3648 = vmatpush1.xpose.msra.mxu0 0.0
        %3649 = vmatprep.subr.mxu0 0.0
        %3650 = vmatpush1.xpose.msra.mxu0 0.0
        %3651 = vmatprep.subr.mxu0 0.0
        %3652 = vmatpush1.xpose.msra.mxu0 0.0
        %3653 = vmatprep.subr.mxu0 0.0
        %3654 = vmatpush1.xpose.msra.mxu0 0.0
        %3655 = vmatprep.subr.mxu0 0.0
        %3656 = vmatpush1.xpose.msra.mxu0 0.0
        %3657 = vmatprep.subr.mxu0 0.0
        %3658 = vmatpush1.xpose.msra.mxu0 0.0
        %3659 = vmatprep.subr.mxu0 0.0
        %3660 = vmatpush1.xpose.msra.mxu0 0.0
        %3661 = vmatprep.subr.mxu0 0.0
        %3662 = vmatpush1.xpose.msra.mxu0 0.0
        %3663 = vmatprep.subr.mxu0 0.0
        %3664 = vmatpush1.xpose.msra.mxu0 0.0
        %3665 = vmatprep.mubr.f32.mxu0 0.0
        %3666 = vmatmul.mubr.f32.gmra.mrb[0].mxu0 %v3597
        %v3667 = vpop.f32.mrb[0].mxu0
        %v3668 = vadd.f32 0.0, %v3667
        %v3669 = vpop.f32.mrb[0].mxu0
        %3670 = vdwg.mxu0
        %v3671 = vmul.f32 %v3590, 0.35355338
        %v3672 = vmul.f32 %v3668, 0.35355338
        %v3673 = vsel %vm991, %v3671, -1e+09
        %v3674 = vsel %vm992, %v3672, -1e+09
        %v3675 = vsel %vm1149, %v3673, -inf
        %3676 = vmax.xlane.f32.xlu0 %v3675
        %v3677 = vpop.xlane.xlu0 %3676
        %v3678 = vsel %vm1149, %v3674, -inf
        %3679 = vmax.xlane.f32.xlu0 %v3678
        %v3680 = vpop.xlane.xlu0 %3679
        %v3681 = vsub.f32 %v3673, %v3677
        %v3682 = vsub.f32 %v3674, %v3680
        %v3683 = vmul.f32 %v3681, 1.442695
        %v3684 = vpow.pop %v3683
        %v3685 = vmul.f32 %v3682, 1.442695
        %v3686 = vpow.pop %v3685
        %v3687 = vsel %vm1149, %v3684, 0.0
        %3688 = vadd.xlane.f32.xlu0 %v3687
        %v3689 = vpop.xlane.xlu0 %3688
        %v3690 = vsel %vm1149, %v3686, 0.0
        %3691 = vadd.xlane.f32.xlu0 %v3690
        %v3692 = vpop.xlane.xlu0 %3691
        %v3693 = vrcp.pop %v3689
        %v3694 = vrcp.pop %v3692
        %v3695 = vmul.f32 %v3684, %v3693
        %v3696 = vmul.f32 %v3686, %v3694
        %3697 = vrot.lane.b32.xlu0 %v2843, 80
        %v3698 = vpop.permute.xlu0 %3697
        %v3701 = vsel %vm1149, %v3695, 0
        %3703 = vmatprep.subr.mxu0 0.0
        %3704 = vmatpush1.msra.mxu0 %v3698
        %3705 = vmatprep.subr.mxu0 0.0
        %3706 = vmatpush1.msra.mxu0 0.0
        %3707 = vmatprep.subr.mxu0 0.0
        %3708 = vmatpush1.msra.mxu0 0.0
        %3709 = vmatprep.subr.mxu0 0.0
        %3710 = vmatpush1.msra.mxu0 0.0
        %3711 = vmatprep.subr.mxu0 0.0
        %3712 = vmatpush1.msra.mxu0 0.0
        %3713 = vmatprep.subr.mxu0 0.0
        %3714 = vmatpush1.msra.mxu0 0.0
        %3715 = vmatprep.subr.mxu0 0.0
        %3716 = vmatpush1.msra.mxu0 0.0
        %3717 = vmatprep.subr.mxu0 0.0
        %3718 = vmatpush1.msra.mxu0 0.0
        %3719 = vmatprep.subr.mxu0 0.0
        %3720 = vmatpush1.msra.mxu0 0.0
        %3721 = vmatprep.subr.mxu0 0.0
        %3722 = vmatpush1.msra.mxu0 0.0
        %3723 = vmatprep.subr.mxu0 0.0
        %3724 = vmatpush1.msra.mxu0 0.0
        %3725 = vmatprep.subr.mxu0 0.0
        %3726 = vmatpush1.msra.mxu0 0.0
        %3727 = vmatprep.subr.mxu0 0.0
        %3728 = vmatpush1.msra.mxu0 0.0
        %3729 = vmatprep.subr.mxu0 0.0
        %3730 = vmatpush1.msra.mxu0 0.0
        %3731 = vmatprep.subr.mxu0 0.0
        %3732 = vmatpush1.msra.mxu0 0.0
        %3733 = vmatprep.subr.mxu0 0.0
        %3734 = vmatpush1.msra.mxu0 0.0
        %3735 = vmatprep.subr.mxu0 0.0
        %3736 = vmatpush1.msra.mxu0 0.0
        %3737 = vmatprep.subr.mxu0 0.0
        %3738 = vmatpush1.msra.mxu0 0.0
        %3739 = vmatprep.subr.mxu0 0.0
        %3740 = vmatpush1.msra.mxu0 0.0
        %3741 = vmatprep.subr.mxu0 0.0
        %3742 = vmatpush1.msra.mxu0 0.0
        %3743 = vmatprep.subr.mxu0 0.0
        %3744 = vmatpush1.msra.mxu0 0.0
        %3745 = vmatprep.subr.mxu0 0.0
        %3746 = vmatpush1.msra.mxu0 0.0
        %3747 = vmatprep.subr.mxu0 0.0
        %3748 = vmatpush1.msra.mxu0 0.0
        %3749 = vmatprep.subr.mxu0 0.0
        %3750 = vmatpush1.msra.mxu0 0.0
        %3751 = vmatprep.subr.mxu0 0.0
        %3752 = vmatpush1.msra.mxu0 0.0
        %3753 = vmatprep.subr.mxu0 0.0
        %3754 = vmatpush1.msra.mxu0 0.0
        %3755 = vmatprep.subr.mxu0 0.0
        %3756 = vmatpush1.msra.mxu0 0.0
        %3757 = vmatprep.subr.mxu0 0.0
        %3758 = vmatpush1.msra.mxu0 0.0
        %3759 = vmatprep.subr.mxu0 0.0
        %3760 = vmatpush1.msra.mxu0 0.0
        %3761 = vmatprep.subr.mxu0 0.0
        %3762 = vmatpush1.msra.mxu0 0.0
        %3763 = vmatprep.subr.mxu0 0.0
        %3764 = vmatpush1.msra.mxu0 0.0
        %3765 = vmatprep.subr.mxu0 0.0
        %3766 = vmatpush1.msra.mxu0 0.0
        %3767 = vmatprep.mubr.f32.mxu0 0.0
        %3768 = vmatmul.mubr.f32.gmra.mrb[0].mxu0 %v3701
        %v3769 = vpop.f32.mrb[0].mxu0
        %v3770 = vadd.f32 0.0, %v3769
        %v3771 = vpop.f32.mrb[0].mxu0
        %3772 = vdwg.mxu0
        %3773 = vrot.lane.b32.xlu0 %v2848, 80
        %v3774 = vpop.permute.xlu0 %3773
        %v3777 = vsel %vm1149, %v3696, 0
        %3779 = vmatprep.subr.mxu0 0.0
        %3780 = vmatpush1.msra.mxu0 %v3774
        %3781 = vmatprep.subr.mxu0 0.0
        %3782 = vmatpush1.msra.mxu0 0.0
        %3783 = vmatprep.subr.mxu0 0.0
        %3784 = vmatpush1.msra.mxu0 0.0
        %3785 = vmatprep.subr.mxu0 0.0
        %3786 = vmatpush1.msra.mxu0 0.0
        %3787 = vmatprep.subr.mxu0 0.0
        %3788 = vmatpush1.msra.mxu0 0.0
        %3789 = vmatprep.subr.mxu0 0.0
        %3790 = vmatpush1.msra.mxu0 0.0
        %3791 = vmatprep.subr.mxu0 0.0
        %3792 = vmatpush1.msra.mxu0 0.0
        %3793 = vmatprep.subr.mxu0 0.0
        %3794 = vmatpush1.msra.mxu0 0.0
        %3795 = vmatprep.subr.mxu0 0.0
        %3796 = vmatpush1.msra.mxu0 0.0
        %3797 = vmatprep.subr.mxu0 0.0
        %3798 = vmatpush1.msra.mxu0 0.0
        %3799 = vmatprep.subr.mxu0 0.0
        %3800 = vmatpush1.msra.mxu0 0.0
        %3801 = vmatprep.subr.mxu0 0.0
        %3802 = vmatpush1.msra.mxu0 0.0
        %3803 = vmatprep.subr.mxu0 0.0
        %3804 = vmatpush1.msra.mxu0 0.0
        %3805 = vmatprep.subr.mxu0 0.0
        %3806 = vmatpush1.msra.mxu0 0.0
        %3807 = vmatprep.subr.mxu0 0.0
        %3808 = vmatpush1.msra.mxu0 0.0
        %3809 = vmatprep.subr.mxu0 0.0
        %3810 = vmatpush1.msra.mxu0 0.0
        %3811 = vmatprep.subr.mxu0 0.0
        %3812 = vmatpush1.msra.mxu0 0.0
        %3813 = vmatprep.subr.mxu0 0.0
        %3814 = vmatpush1.msra.mxu0 0.0
        %3815 = vmatprep.subr.mxu0 0.0
        %3816 = vmatpush1.msra.mxu0 0.0
        %3817 = vmatprep.subr.mxu0 0.0
        %3818 = vmatpush1.msra.mxu0 0.0
        %3819 = vmatprep.subr.mxu0 0.0
        %3820 = vmatpush1.msra.mxu0 0.0
        %3821 = vmatprep.subr.mxu0 0.0
        %3822 = vmatpush1.msra.mxu0 0.0
        %3823 = vmatprep.subr.mxu0 0.0
        %3824 = vmatpush1.msra.mxu0 0.0
        %3825 = vmatprep.subr.mxu0 0.0
        %3826 = vmatpush1.msra.mxu0 0.0
        %3827 = vmatprep.subr.mxu0 0.0
        %3828 = vmatpush1.msra.mxu0 0.0
        %3829 = vmatprep.subr.mxu0 0.0
        %3830 = vmatpush1.msra.mxu0 0.0
        %3831 = vmatprep.subr.mxu0 0.0
        %3832 = vmatpush1.msra.mxu0 0.0
        %3833 = vmatprep.subr.mxu0 0.0
        %3834 = vmatpush1.msra.mxu0 0.0
        %3835 = vmatprep.subr.mxu0 0.0
        %3836 = vmatpush1.msra.mxu0 0.0
        %3837 = vmatprep.subr.mxu0 0.0
        %3838 = vmatpush1.msra.mxu0 0.0
        %3839 = vmatprep.subr.mxu0 0.0
        %3840 = vmatpush1.msra.mxu0 0.0
        %3841 = vmatprep.subr.mxu0 0.0
        %3842 = vmatpush1.msra.mxu0 0.0
        %3843 = vmatprep.mubr.f32.mxu0 0.0
        %3844 = vmatmul.mubr.f32.gmra.mrb[0].mxu0 %v3777
        %v3845 = vpop.f32.mrb[0].mxu0
        %v3846 = vadd.f32 0.0, %v3845
        %v3847 = vpop.f32.mrb[0].mxu0
        %3848 = vdwg.mxu0
        %3849 = vrot.lane.b32.xlu0 %v2751, 104
        %v3850 = vpop.permute.xlu0 %3849
        %3851 = vrot.lane.b32.xlu0 %v2843, 104
        %v3852 = vpop.permute.xlu0 %3851
        %v3853 = vsel %vm1149, %v3850, 0
        %v3855 = vsel %vm1149, %v3852, 0
        %3857 = vmatprep.subr.mxu0 0.0
        %3858 = vmatpush1.xpose.msra.mxu0 %v3855
        %3859 = vmatprep.subr.mxu0 0.0
        %3860 = vmatpush1.xpose.msra.mxu0 0.0
        %3861 = vmatprep.subr.mxu0 0.0
        %3862 = vmatpush1.xpose.msra.mxu0 0.0
        %3863 = vmatprep.subr.mxu0 0.0
        %3864 = vmatpush1.xpose.msra.mxu0 0.0
        %3865 = vmatprep.subr.mxu0 0.0
        %3866 = vmatpush1.xpose.msra.mxu0 0.0
        %3867 = vmatprep.subr.mxu0 0.0
        %3868 = vmatpush1.xpose.msra.mxu0 0.0
        %3869 = vmatprep.subr.mxu0 0.0
        %3870 = vmatpush1.xpose.msra.mxu0 0.0
        %3871 = vmatprep.subr.mxu0 0.0
        %3872 = vmatpush1.xpose.msra.mxu0 0.0
        %3873 = vmatprep.subr.mxu0 0.0
        %3874 = vmatpush1.xpose.msra.mxu0 0.0
        %3875 = vmatprep.subr.mxu0 0.0
        %3876 = vmatpush1.xpose.msra.mxu0 0.0
        %3877 = vmatprep.subr.mxu0 0.0
        %3878 = vmatpush1.xpose.msra.mxu0 0.0
        %3879 = vmatprep.subr.mxu0 0.0
        %3880 = vmatpush1.xpose.msra.mxu0 0.0
        %3881 = vmatprep.subr.mxu0 0.0
        %3882 = vmatpush1.xpose.msra.mxu0 0.0
        %3883 = vmatprep.subr.mxu0 0.0
        %3884 = vmatpush1.xpose.msra.mxu0 0.0
        %3885 = vmatprep.subr.mxu0 0.0
        %3886 = vmatpush1.xpose.msra.mxu0 0.0
        %3887 = vmatprep.subr.mxu0 0.0
        %3888 = vmatpush1.xpose.msra.mxu0 0.0
        %3889 = vmatprep.subr.mxu0 0.0
        %3890 = vmatpush1.xpose.msra.mxu0 0.0
        %3891 = vmatprep.subr.mxu0 0.0
        %3892 = vmatpush1.xpose.msra.mxu0 0.0
        %3893 = vmatprep.subr.mxu0 0.0
        %3894 = vmatpush1.xpose.msra.mxu0 0.0
        %3895 = vmatprep.subr.mxu0 0.0
        %3896 = vmatpush1.xpose.msra.mxu0 0.0
        %3897 = vmatprep.subr.mxu0 0.0
        %3898 = vmatpush1.xpose.msra.mxu0 0.0
        %3899 = vmatprep.subr.mxu0 0.0
        %3900 = vmatpush1.xpose.msra.mxu0 0.0
        %3901 = vmatprep.subr.mxu0 0.0
        %3902 = vmatpush1.xpose.msra.mxu0 0.0
        %3903 = vmatprep.subr.mxu0 0.0
        %3904 = vmatpush1.xpose.msra.mxu0 0.0
        %3905 = vmatprep.subr.mxu0 0.0
        %3906 = vmatpush1.xpose.msra.mxu0 0.0
        %3907 = vmatprep.subr.mxu0 0.0
        %3908 = vmatpush1.xpose.msra.mxu0 0.0
        %3909 = vmatprep.subr.mxu0 0.0
        %3910 = vmatpush1.xpose.msra.mxu0 0.0
        %3911 = vmatprep.subr.mxu0 0.0
        %3912 = vmatpush1.xpose.msra.mxu0 0.0
        %3913 = vmatprep.subr.mxu0 0.0
        %3914 = vmatpush1.xpose.msra.mxu0 0.0
        %3915 = vmatprep.subr.mxu0 0.0
        %3916 = vmatpush1.xpose.msra.mxu0 0.0
        %3917 = vmatprep.subr.mxu0 0.0
        %3918 = vmatpush1.xpose.msra.mxu0 0.0
        %3919 = vmatprep.subr.mxu0 0.0
        %3920 = vmatpush1.xpose.msra.mxu0 0.0
        %3921 = vmatprep.mubr.f32.mxu0 0.0
        %3922 = vmatmul.mubr.f32.gmra.mrb[0].mxu0 %v3853
        %v3923 = vpop.f32.mrb[0].mxu0
        %v3924 = vadd.f32 0.0, %v3923
        %v3925 = vpop.f32.mrb[0].mxu0
        %3926 = vdwg.mxu0
        %3927 = vrot.lane.b32.xlu0 %v2756, 104
        %v3928 = vpop.permute.xlu0 %3927
        %3929 = vrot.lane.b32.xlu0 %v2848, 104
        %v3930 = vpop.permute.xlu0 %3929
        %v3931 = vsel %vm1149, %v3928, 0
        %v3933 = vsel %vm1149, %v3930, 0
        %3935 = vmatprep.subr.mxu0 0.0
        %3936 = vmatpush1.xpose.msra.mxu0 %v3933
        %3937 = vmatprep.subr.mxu0 0.0
        %3938 = vmatpush1.xpose.msra.mxu0 0.0
        %3939 = vmatprep.subr.mxu0 0.0
        %3940 = vmatpush1.xpose.msra.mxu0 0.0
        %3941 = vmatprep.subr.mxu0 0.0
        %3942 = vmatpush1.xpose.msra.mxu0 0.0
        %3943 = vmatprep.subr.mxu0 0.0
        %3944 = vmatpush1.xpose.msra.mxu0 0.0
        %3945 = vmatprep.subr.mxu0 0.0
        %3946 = vmatpush1.xpose.msra.mxu0 0.0
        %3947 = vmatprep.subr.mxu0 0.0
        %3948 = vmatpush1.xpose.msra.mxu0 0.0
        %3949 = vmatprep.subr.mxu0 0.0
        %3950 = vmatpush1.xpose.msra.mxu0 0.0
        %3951 = vmatprep.subr.mxu0 0.0
        %3952 = vmatpush1.xpose.msra.mxu0 0.0
        %3953 = vmatprep.subr.mxu0 0.0
        %3954 = vmatpush1.xpose.msra.mxu0 0.0
        %3955 = vmatprep.subr.mxu0 0.0
        %3956 = vmatpush1.xpose.msra.mxu0 0.0
        %3957 = vmatprep.subr.mxu0 0.0
        %3958 = vmatpush1.xpose.msra.mxu0 0.0
        %3959 = vmatprep.subr.mxu0 0.0
        %3960 = vmatpush1.xpose.msra.mxu0 0.0
        %3961 = vmatprep.subr.mxu0 0.0
        %3962 = vmatpush1.xpose.msra.mxu0 0.0
        %3963 = vmatprep.subr.mxu0 0.0
        %3964 = vmatpush1.xpose.msra.mxu0 0.0
        %3965 = vmatprep.subr.mxu0 0.0
        %3966 = vmatpush1.xpose.msra.mxu0 0.0
        %3967 = vmatprep.subr.mxu0 0.0
        %3968 = vmatpush1.xpose.msra.mxu0 0.0
        %3969 = vmatprep.subr.mxu0 0.0
        %3970 = vmatpush1.xpose.msra.mxu0 0.0
        %3971 = vmatprep.subr.mxu0 0.0
        %3972 = vmatpush1.xpose.msra.mxu0 0.0
        %3973 = vmatprep.subr.mxu0 0.0
        %3974 = vmatpush1.xpose.msra.mxu0 0.0
        %3975 = vmatprep.subr.mxu0 0.0
        %3976 = vmatpush1.xpose.msra.mxu0 0.0
        %3977 = vmatprep.subr.mxu0 0.0
        %3978 = vmatpush1.xpose.msra.mxu0 0.0
        %3979 = vmatprep.subr.mxu0 0.0
        %3980 = vmatpush1.xpose.msra.mxu0 0.0
        %3981 = vmatprep.subr.mxu0 0.0
        %3982 = vmatpush1.xpose.msra.mxu0 0.0
        %3983 = vmatprep.subr.mxu0 0.0
        %3984 = vmatpush1.xpose.msra.mxu0 0.0
        %3985 = vmatprep.subr.mxu0 0.0
        %3986 = vmatpush1.xpose.msra.mxu0 0.0
        %3987 = vmatprep.subr.mxu0 0.0
        %3988 = vmatpush1.xpose.msra.mxu0 0.0
        %3989 = vmatprep.subr.mxu0 0.0
        %3990 = vmatpush1.xpose.msra.mxu0 0.0
        %3991 = vmatprep.subr.mxu0 0.0
        %3992 = vmatpush1.xpose.msra.mxu0 0.0
        %3993 = vmatprep.subr.mxu0 0.0
        %3994 = vmatpush1.xpose.msra.mxu0 0.0
        %3995 = vmatprep.subr.mxu0 0.0
        %3996 = vmatpush1.xpose.msra.mxu0 0.0
        %3997 = vmatprep.subr.mxu0 0.0
        %3998 = vmatpush1.xpose.msra.mxu0 0.0
        %3999 = vmatprep.mubr.f32.mxu0 0.0
        %4000 = vmatmul.mubr.f32.gmra.mrb[0].mxu0 %v3931
        %v4001 = vpop.f32.mrb[0].mxu0
        %v4002 = vadd.f32 0.0, %v4001
        %v4003 = vpop.f32.mrb[0].mxu0
        %4004 = vdwg.mxu0
        %v4005 = vmul.f32 %v3924, 0.35355338
        %v4006 = vmul.f32 %v4002, 0.35355338
        %v4007 = vsel %vm991, %v4005, -1e+09
        %v4008 = vsel %vm992, %v4006, -1e+09
        %v4009 = vsel %vm1149, %v4007, -inf
        %4010 = vmax.xlane.f32.xlu0 %v4009
        %v4011 = vpop.xlane.xlu0 %4010
        %v4012 = vsel %vm1149, %v4008, -inf
        %4013 = vmax.xlane.f32.xlu0 %v4012
        %v4014 = vpop.xlane.xlu0 %4013
        %v4015 = vsub.f32 %v4007, %v4011
        %v4016 = vsub.f32 %v4008, %v4014
        %v4017 = vmul.f32 %v4015, 1.442695
        %v4018 = vpow.pop %v4017
        %v4019 = vmul.f32 %v4016, 1.442695
        %v4020 = vpow.pop %v4019
        %v4021 = vsel %vm1149, %v4018, 0.0
        %4022 = vadd.xlane.f32.xlu0 %v4021
        %v4023 = vpop.xlane.xlu0 %4022
        %v4024 = vsel %vm1149, %v4020, 0.0
        %4025 = vadd.xlane.f32.xlu0 %v4024
        %v4026 = vpop.xlane.xlu0 %4025
        %v4027 = vrcp.pop %v4023
        %v4028 = vrcp.pop %v4026
        %v4029 = vmul.f32 %v4018, %v4027
        %v4030 = vmul.f32 %v4020, %v4028
        %4031 = vrot.lane.b32.xlu0 %v2843, 72
        %v4032 = vpop.permute.xlu0 %4031
        %v4035 = vsel %vm1149, %v4029, 0
        %4037 = vmatprep.subr.mxu0 0.0
        %4038 = vmatpush1.msra.mxu0 %v4032
        %4039 = vmatprep.subr.mxu0 0.0
        %4040 = vmatpush1.msra.mxu0 0.0
        %4041 = vmatprep.subr.mxu0 0.0
        %4042 = vmatpush1.msra.mxu0 0.0
        %4043 = vmatprep.subr.mxu0 0.0
        %4044 = vmatpush1.msra.mxu0 0.0
        %4045 = vmatprep.subr.mxu0 0.0
        %4046 = vmatpush1.msra.mxu0 0.0
        %4047 = vmatprep.subr.mxu0 0.0
        %4048 = vmatpush1.msra.mxu0 0.0
        %4049 = vmatprep.subr.mxu0 0.0
        %4050 = vmatpush1.msra.mxu0 0.0
        %4051 = vmatprep.subr.mxu0 0.0
        %4052 = vmatpush1.msra.mxu0 0.0
        %4053 = vmatprep.subr.mxu0 0.0
        %4054 = vmatpush1.msra.mxu0 0.0
        %4055 = vmatprep.subr.mxu0 0.0
        %4056 = vmatpush1.msra.mxu0 0.0
        %4057 = vmatprep.subr.mxu0 0.0
        %4058 = vmatpush1.msra.mxu0 0.0
        %4059 = vmatprep.subr.mxu0 0.0
        %4060 = vmatpush1.msra.mxu0 0.0
        %4061 = vmatprep.subr.mxu0 0.0
        %4062 = vmatpush1.msra.mxu0 0.0
        %4063 = vmatprep.subr.mxu0 0.0
        %4064 = vmatpush1.msra.mxu0 0.0
        %4065 = vmatprep.subr.mxu0 0.0
        %4066 = vmatpush1.msra.mxu0 0.0
        %4067 = vmatprep.subr.mxu0 0.0
        %4068 = vmatpush1.msra.mxu0 0.0
        %4069 = vmatprep.subr.mxu0 0.0
        %4070 = vmatpush1.msra.mxu0 0.0
        %4071 = vmatprep.subr.mxu0 0.0
        %4072 = vmatpush1.msra.mxu0 0.0
        %4073 = vmatprep.subr.mxu0 0.0
        %4074 = vmatpush1.msra.mxu0 0.0
        %4075 = vmatprep.subr.mxu0 0.0
        %4076 = vmatpush1.msra.mxu0 0.0
        %4077 = vmatprep.subr.mxu0 0.0
        %4078 = vmatpush1.msra.mxu0 0.0
        %4079 = vmatprep.subr.mxu0 0.0
        %4080 = vmatpush1.msra.mxu0 0.0
        %4081 = vmatprep.subr.mxu0 0.0
        %4082 = vmatpush1.msra.mxu0 0.0
        %4083 = vmatprep.subr.mxu0 0.0
        %4084 = vmatpush1.msra.mxu0 0.0
        %4085 = vmatprep.subr.mxu0 0.0
        %4086 = vmatpush1.msra.mxu0 0.0
        %4087 = vmatprep.subr.mxu0 0.0
        %4088 = vmatpush1.msra.mxu0 0.0
        %4089 = vmatprep.subr.mxu0 0.0
        %4090 = vmatpush1.msra.mxu0 0.0
        %4091 = vmatprep.subr.mxu0 0.0
        %4092 = vmatpush1.msra.mxu0 0.0
        %4093 = vmatprep.subr.mxu0 0.0
        %4094 = vmatpush1.msra.mxu0 0.0
        %4095 = vmatprep.subr.mxu0 0.0
        %4096 = vmatpush1.msra.mxu0 0.0
        %4097 = vmatprep.subr.mxu0 0.0
        %4098 = vmatpush1.msra.mxu0 0.0
        %4099 = vmatprep.subr.mxu0 0.0
        %4100 = vmatpush1.msra.mxu0 0.0
        %4101 = vmatprep.mubr.f32.mxu0 0.0
        %4102 = vmatmul.mubr.f32.gmra.mrb[0].mxu0 %v4035
        %v4103 = vpop.f32.mrb[0].mxu0
        %v4104 = vadd.f32 0.0, %v4103
        %v4105 = vpop.f32.mrb[0].mxu0
        %4106 = vdwg.mxu0
        %4107 = vrot.lane.b32.xlu0 %v2848, 72
        %v4108 = vpop.permute.xlu0 %4107
        %v4111 = vsel %vm1149, %v4030, 0
        %4113 = vmatprep.subr.mxu0 0.0
        %4114 = vmatpush1.msra.mxu0 %v4108
        %4115 = vmatprep.subr.mxu0 0.0
        %4116 = vmatpush1.msra.mxu0 0.0
        %4117 = vmatprep.subr.mxu0 0.0
        %4118 = vmatpush1.msra.mxu0 0.0
        %4119 = vmatprep.subr.mxu0 0.0
        %4120 = vmatpush1.msra.mxu0 0.0
        %4121 = vmatprep.subr.mxu0 0.0
        %4122 = vmatpush1.msra.mxu0 0.0
        %4123 = vmatprep.subr.mxu0 0.0
        %4124 = vmatpush1.msra.mxu0 0.0
        %4125 = vmatprep.subr.mxu0 0.0
        %4126 = vmatpush1.msra.mxu0 0.0
        %4127 = vmatprep.subr.mxu0 0.0
        %4128 = vmatpush1.msra.mxu0 0.0
        %4129 = vmatprep.subr.mxu0 0.0
        %4130 = vmatpush1.msra.mxu0 0.0
        %4131 = vmatprep.subr.mxu0 0.0
        %4132 = vmatpush1.msra.mxu0 0.0
        %4133 = vmatprep.subr.mxu0 0.0
        %4134 = vmatpush1.msra.mxu0 0.0
        %4135 = vmatprep.subr.mxu0 0.0
        %4136 = vmatpush1.msra.mxu0 0.0
        %4137 = vmatprep.subr.mxu0 0.0
        %4138 = vmatpush1.msra.mxu0 0.0
        %4139 = vmatprep.subr.mxu0 0.0
        %4140 = vmatpush1.msra.mxu0 0.0
        %4141 = vmatprep.subr.mxu0 0.0
        %4142 = vmatpush1.msra.mxu0 0.0
        %4143 = vmatprep.subr.mxu0 0.0
        %4144 = vmatpush1.msra.mxu0 0.0
        %4145 = vmatprep.subr.mxu0 0.0
        %4146 = vmatpush1.msra.mxu0 0.0
        %4147 = vmatprep.subr.mxu0 0.0
        %4148 = vmatpush1.msra.mxu0 0.0
        %4149 = vmatprep.subr.mxu0 0.0
        %4150 = vmatpush1.msra.mxu0 0.0
        %4151 = vmatprep.subr.mxu0 0.0
        %4152 = vmatpush1.msra.mxu0 0.0
        %4153 = vmatprep.subr.mxu0 0.0
        %4154 = vmatpush1.msra.mxu0 0.0
        %4155 = vmatprep.subr.mxu0 0.0
        %4156 = vmatpush1.msra.mxu0 0.0
        %4157 = vmatprep.subr.mxu0 0.0
        %4158 = vmatpush1.msra.mxu0 0.0
        %4159 = vmatprep.subr.mxu0 0.0
        %4160 = vmatpush1.msra.mxu0 0.0
        %4161 = vmatprep.subr.mxu0 0.0
        %4162 = vmatpush1.msra.mxu0 0.0
        %4163 = vmatprep.subr.mxu0 0.0
        %4164 = vmatpush1.msra.mxu0 0.0
        %4165 = vmatprep.subr.mxu0 0.0
        %4166 = vmatpush1.msra.mxu0 0.0
        %4167 = vmatprep.subr.mxu0 0.0
        %4168 = vmatpush1.msra.mxu0 0.0
        %4169 = vmatprep.subr.mxu0 0.0
        %4170 = vmatpush1.msra.mxu0 0.0
        %4171 = vmatprep.subr.mxu0 0.0
        %4172 = vmatpush1.msra.mxu0 0.0
        %4173 = vmatprep.subr.mxu0 0.0
        %4174 = vmatpush1.msra.mxu0 0.0
        %4175 = vmatprep.subr.mxu0 0.0
        %4176 = vmatpush1.msra.mxu0 0.0
        %4177 = vmatprep.mubr.f32.mxu0 0.0
        %4178 = vmatmul.mubr.f32.gmra.mrb[0].mxu0 %v4111
        %v4179 = vpop.f32.mrb[0].mxu0
        %v4180 = vadd.f32 0.0, %v4179
        %v4181 = vpop.f32.mrb[0].mxu0
        %4182 = vdwg.mxu0
        %4185 = vrot.lane.b32.xlu0 %v3436, 8
        %v4186 = vpop.permute.xlu0 %4185
        %4187 = vrot.lane.b32.xlu0 %v3512, 8
        %v4188 = vpop.permute.xlu0 %4187
        %4193 = vrot.lane.b32.xlu0 %v3770, 16
        %v4194 = vpop.permute.xlu0 %4193
        %4195 = vrot.lane.b32.xlu0 %v3846, 16
        %v4196 = vpop.permute.xlu0 %4195
        %4201 = vrot.lane.b32.xlu0 %v4104, 24
        %v4202 = vpop.permute.xlu0 %4201
        %4203 = vrot.lane.b32.xlu0 %v4180, 24
        %v4204 = vpop.permute.xlu0 %4203
        %v4207 = vsel %vm1149, %v3102, %v4186
        %v4208 = vsel %vm1149, %v3178, %v4188
        %v4209 = vsel %vm2507, %v4207, %v4194
        %v4210 = vsel %vm2507, %v4208, %v4196
        %v4211 = vsel %vm2510, %v4209, %v4202
        %v4212 = vsel %vm2510, %v4210, %v4204
        %v4213 = vld [vmem:[%s958] sm:$0xff]
        %v4214 = vld [vmem:[%s958 + $0x8] sm:$0xff]
        %v4215 = vld [vmem:[%s958 + $0x10] sm:$0xff]
        %v4216 = vld [vmem:[%s958 + $0x18] sm:$0xff]
        %v4217 = vld [vmem:[%s962] sm:$0x1]
        %v4219 = vlaneseq
        %v4220 = vshrl.u32 %v4219, 7
        %v4221 = vsub.s32 0, %v4220
        %v4222 = vrot.slane %v4217, %v4221
        %v4225 = vsel %vm995, %v4211, 0
        %v4228 = vsel %vm995, %v4212, 0
        %4230 = vmatprep.subr.mxu0 0.0
        %4231 = vmatpush1.msra.mxu0 %v4213
        %4232 = vmatprep.subr.mxu0 0.0
        %4233 = vmatpush1.msra.mxu0 %v4214
        %4234 = vmatprep.subr.mxu0 0.0
        %4235 = vmatpush1.msra.mxu0 %v4215
        %4236 = vmatprep.subr.mxu0 0.0
        %4237 = vmatpush1.msra.mxu0 %v4216
        %4238 = vmatprep.subr.mxu0 0.0
        %4239 = vmatpush1.msra.mxu0 0.0
        %4240 = vmatprep.subr.mxu0 0.0
        %4241 = vmatpush1.msra.mxu0 0.0
        %4242 = vmatprep.subr.mxu0 0.0
        %4243 = vmatpush1.msra.mxu0 0.0
        %4244 = vmatprep.subr.mxu0 0.0
        %4245 = vmatpush1.msra.mxu0 0.0
        %4246 = vmatprep.subr.mxu0 0.0
        %4247 = vmatpush1.msra.mxu0 0.0
        %4248 = vmatprep.subr.mxu0 0.0
        %4249 = vmatpush1.msra.mxu0 0.0
        %4250 = vmatprep.subr.mxu0 0.0
        %4251 = vmatpush1.msra.mxu0 0.0
        %4252 = vmatprep.subr.mxu0 0.0
        %4253 = vmatpush1.msra.mxu0 0.0
        %4254 = vmatprep.subr.mxu0 0.0
        %4255 = vmatpush1.msra.mxu0 0.0
        %4256 = vmatprep.subr.mxu0 0.0
        %4257 = vmatpush1.msra.mxu0 0.0
        %4258 = vmatprep.subr.mxu0 0.0
        %4259 = vmatpush1.msra.mxu0 0.0
        %4260 = vmatprep.subr.mxu0 0.0
        %4261 = vmatpush1.msra.mxu0 0.0
        %4262 = vmatprep.subr.mxu0 0.0
        %4263 = vmatpush1.msra.mxu0 0.0
        %4264 = vmatprep.subr.mxu0 0.0
        %4265 = vmatpush1.msra.mxu0 0.0
        %4266 = vmatprep.subr.mxu0 0.0
        %4267 = vmatpush1.msra.mxu0 0.0
        %4268 = vmatprep.subr.mxu0 0.0
        %4269 = vmatpush1.msra.mxu0 0.0
        %4270 = vmatprep.subr.mxu0 0.0
        %4271 = vmatpush1.msra.mxu0 0.0
        %4272 = vmatprep.subr.mxu0 0.0
        %4273 = vmatpush1.msra.mxu0 0.0
        %4274 = vmatprep.subr.mxu0 0.0
        %4275 = vmatpush1.msra.mxu0 0.0
        %4276 = vmatprep.subr.mxu0 0.0
        %4277 = vmatpush1.msra.mxu0 0.0
        %4278 = vmatprep.subr.mxu0 0.0
        %4279 = vmatpush1.msra.mxu0 0.0
        %4280 = vmatprep.subr.mxu0 0.0
        %4281 = vmatpush1.msra.mxu0 0.0
        %4282 = vmatprep.subr.mxu0 0.0
        %4283 = vmatpush1.msra.mxu0 0.0
        %4284 = vmatprep.subr.mxu0 0.0
        %4285 = vmatpush1.msra.mxu0 0.0
        %4286 = vmatprep.subr.mxu0 0.0
        %4287 = vmatpush1.msra.mxu0 0.0
        %4288 = vmatprep.subr.mxu0 0.0
        %4289 = vmatpush1.msra.mxu0 0.0
        %4290 = vmatprep.subr.mxu0 0.0
        %4291 = vmatpush1.msra.mxu0 0.0
        %4292 = vmatprep.subr.mxu0 0.0
        %4293 = vmatpush1.msra.mxu0 0.0
        %4294 = vmatprep.mubr.f32.mxu0 0.0
        %4295 = vmatmul.mubr.f32.gmra.mrb[0].mxu0 %v4225
        %v4296 = vpop.f32.mrb[0].mxu0
        %v4297 = vadd.f32 %v4222, %v4296
        %v4298 = vpop.f32.mrb[0].mxu0
        %4299 = vmatprep.mubr.f32.mxu0 0.0
        %4300 = vmatmul.mubr.f32.gmra.mrb[0].mxu0 %v4228
        %v4301 = vpop.f32.mrb[0].mxu0
        %v4302 = vadd.f32 %v4222, %v4301
        %v4303 = vpop.f32.mrb[0].mxu0
        %4304 = vdwg.mxu0
        %v4305 = vadd.f32 %v2605, %v4297
        %v4306 = vadd.f32 %v2606, %v4302
        %s4307 = scalar_lea.vmem %s913, 2
        %v4308 = vld [vmem:[%s4307] sm:$0x1]
        %s4309 = scalar_lea.vmem %s917, 2
        %v4310 = vld [vmem:[%s4309] sm:$0x1]
        %v4311 = vsel %vm995, %v4305, 0.0
        %4312 = vadd.xlane.f32.xlu0 %v4311
        %v4313 = vpop.xlane.xlu0 %4312
        %v4314 = vsel %vm995, %v4306, 0.0
        %4315 = vadd.xlane.f32.xlu0 %v4314
        %v4316 = vpop.xlane.xlu0 %4315
        %v4317 = vmul.f32 %v4313, %v1002
        %v4318 = vmul.f32 %v4316, %v1002
        %v4319 = vsub.f32 %v4305, %v4317
        %v4320 = vsub.f32 %v4306, %v4318
        %v4321 = vmul.f32 %v4319, %v4319
        %v4322 = vmul.f32 %v4320, %v4320
        %v4323 = vsel %vm995, %v4321, 0.0
        %4324 = vadd.xlane.f32.xlu0 %v4323
        %v4325 = vpop.xlane.xlu0 %4324
        %v4326 = vsel %vm995, %v4322, 0.0
        %4327 = vadd.xlane.f32.xlu0 %v4326
        %v4328 = vpop.xlane.xlu0 %4327
        %v4329 = vmul.f32 %v4325, %v1015
        %v4330 = vmul.f32 %v4328, %v1015
        %v4331 = vrsqrt.pop %v4329
        %v4332 = vmul.f32 %v4329, %v4331
        %vm4333 = vcmp.eq.f32.partialorder %v4329, inf
        %v4334 = vsel %vm4333, %v4329, %v4332
        %vm4335 = vcmp.eq.f32.partialorder %v4329, 0.0
        %v4336 = vand.u32 %v4329, 2147483648
        %v4337 = vsel %vm4335, %v4336, %v4334
        %v4338 = vrsqrt.pop %v4330
        %v4339 = vmul.f32 %v4330, %v4338
        %vm4340 = vcmp.eq.f32.partialorder %v4330, inf
        %v4341 = vsel %vm4340, %v4330, %v4339
        %vm4342 = vcmp.eq.f32.partialorder %v4330, 0.0
        %v4343 = vand.u32 %v4330, 2147483648
        %v4344 = vsel %vm4342, %v4343, %v4341
        %v4345 = vadd.f32 %v4337, 1e-06
        %v4346 = vadd.f32 %v4344, 1e-06
        %v4347 = vrcp.pop %v4345
        %v4348 = vrcp.pop %v4346
        %v4350 = vlaneseq
        %v4351 = vshrl.u32 %v4350, 7
        %v4352 = vsub.s32 0, %v4351
        %v4353 = vrot.slane %v4308, %v4352
        %v4355 = vmul.f32 %v4353, %v4319
        %v4356 = vmul.f32 %v4353, %v4320
        %v4357 = vmul.f32 %v4355, %v4347
        %v4358 = vmul.f32 %v4356, %v4348
        %v4360 = vlaneseq
        %v4361 = vshrl.u32 %v4360, 7
        %v4362 = vsub.s32 0, %v4361
        %v4363 = vrot.slane %v4310, %v4362
        %v4365 = vadd.f32 %v4357, %v4363
        %v4366 = vadd.f32 %v4358, %v4363
        %v4367 = vld [vmem:[%s967] sm:$0xff]
        %v4368 = vld [vmem:[%s967 + $0x8] sm:$0xff]
        %v4369 = vld [vmem:[%s967 + $0x10] sm:$0xff]
        %v4370 = vld [vmem:[%s967 + $0x18] sm:$0xff]
        %v4371 = vld [vmem:[%s971] sm:$0x1]
        %v4373 = vlaneseq
        %v4374 = vshrl.u32 %v4373, 7
        %v4375 = vsub.s32 0, %v4374
        %v4376 = vrot.slane %v4371, %v4375
        %v4379 = vsel %vm995, %v4365, 0
        %v4382 = vsel %vm995, %v4366, 0
        %4384 = vmatprep.subr.mxu0 0.0
        %4385 = vmatpush1.msra.mxu0 %v4367
        %4386 = vmatprep.subr.mxu0 0.0
        %4387 = vmatpush1.msra.mxu0 %v4368
        %4388 = vmatprep.subr.mxu0 0.0
        %4389 = vmatpush1.msra.mxu0 %v4369
        %4390 = vmatprep.subr.mxu0 0.0
        %4391 = vmatpush1.msra.mxu0 %v4370
        %4392 = vmatprep.subr.mxu0 0.0
        %4393 = vmatpush1.msra.mxu0 0.0
        %4394 = vmatprep.subr.mxu0 0.0
        %4395 = vmatpush1.msra.mxu0 0.0
        %4396 = vmatprep.subr.mxu0 0.0
        %4397 = vmatpush1.msra.mxu0 0.0
        %4398 = vmatprep.subr.mxu0 0.0
        %4399 = vmatpush1.msra.mxu0 0.0
        %4400 = vmatprep.subr.mxu0 0.0
        %4401 = vmatpush1.msra.mxu0 0.0
        %4402 = vmatprep.subr.mxu0 0.0
        %4403 = vmatpush1.msra.mxu0 0.0
        %4404 = vmatprep.subr.mxu0 0.0
        %4405 = vmatpush1.msra.mxu0 0.0
        %4406 = vmatprep.subr.mxu0 0.0
        %4407 = vmatpush1.msra.mxu0 0.0
        %4408 = vmatprep.subr.mxu0 0.0
        %4409 = vmatpush1.msra.mxu0 0.0
        %4410 = vmatprep.subr.mxu0 0.0
        %4411 = vmatpush1.msra.mxu0 0.0
        %4412 = vmatprep.subr.mxu0 0.0
        %4413 = vmatpush1.msra.mxu0 0.0
        %4414 = vmatprep.subr.mxu0 0.0
        %4415 = vmatpush1.msra.mxu0 0.0
        %4416 = vmatprep.subr.mxu0 0.0
        %4417 = vmatpush1.msra.mxu0 0.0
        %4418 = vmatprep.subr.mxu0 0.0
        %4419 = vmatpush1.msra.mxu0 0.0
        %4420 = vmatprep.subr.mxu0 0.0
        %4421 = vmatpush1.msra.mxu0 0.0
        %4422 = vmatprep.subr.mxu0 0.0
        %4423 = vmatpush1.msra.mxu0 0.0
        %4424 = vmatprep.subr.mxu0 0.0
        %4425 = vmatpush1.msra.mxu0 0.0
        %4426 = vmatprep.subr.mxu0 0.0
        %4427 = vmatpush1.msra.mxu0 0.0
        %4428 = vmatprep.subr.mxu0 0.0
        %4429 = vmatpush1.msra.mxu0 0.0
        %4430 = vmatprep.subr.mxu0 0.0
        %4431 = vmatpush1.msra.mxu0 0.0
        %4432 = vmatprep.subr.mxu0 0.0
        %4433 = vmatpush1.msra.mxu0 0.0
        %4434 = vmatprep.subr.mxu0 0.0
        %4435 = vmatpush1.msra.mxu0 0.0
        %4436 = vmatprep.subr.mxu0 0.0
        %4437 = vmatpush1.msra.mxu0 0.0
        %4438 = vmatprep.subr.mxu0 0.0
        %4439 = vmatpush1.msra.mxu0 0.0
        %4440 = vmatprep.subr.mxu0 0.0
        %4441 = vmatpush1.msra.mxu0 0.0
        %4442 = vmatprep.subr.mxu0 0.0
        %4443 = vmatpush1.msra.mxu0 0.0
        %4444 = vmatprep.subr.mxu0 0.0
        %4445 = vmatpush1.msra.mxu0 0.0
        %4446 = vmatprep.subr.mxu0 0.0
        %4447 = vmatpush1.msra.mxu0 0.0
        %4448 = vmatprep.mubr.f32.mxu0 0.0
        %4449 = vmatmul.mubr.f32.gmra.mrb[0].mxu0 %v4379
        %v4450 = vpop.f32.mrb[0].mxu0
        %v4451 = vadd.f32 %v4376, %v4450
        %v4452 = vpop.f32.mrb[0].mxu0
        %4453 = vmatprep.mubr.f32.mxu0 0.0
        %4454 = vmatmul.mubr.f32.gmra.mrb[0].mxu0 %v4382
        %v4455 = vpop.f32.mrb[0].mxu0
        %v4456 = vadd.f32 %v4376, %v4455
        %v4457 = vpop.f32.mrb[0].mxu0
        %4458 = vdwg.mxu0
        %v4459 = vmax.f32 %v4451, 0.0
        %v4460 = vmax.f32 %v4456, 0.0
        %v4461 = vld [vmem:[%s976] sm:$0xff]
        %v4462 = vld [vmem:[%s976 + $0x8] sm:$0xff]
        %v4463 = vld [vmem:[%s976 + $0x10] sm:$0xff]
        %v4464 = vld [vmem:[%s976 + $0x18] sm:$0xff]
        %v4465 = vld [vmem:[%s976 + $0x20] sm:$0xff]
        %v4466 = vld [vmem:[%s976 + $0x28] sm:$0xff]
        %v4467 = vld [vmem:[%s976 + $0x30] sm:$0xff]
        %v4468 = vld [vmem:[%s976 + $0x38] sm:$0xff]
        %v4469 = vld [vmem:[%s980] sm:$0x1]
        %v4471 = vlaneseq
        %v4472 = vshrl.u32 %v4471, 7
        %v4473 = vsub.s32 0, %v4472
        %v4474 = vrot.slane %v4469, %v4473
        %vm4476 = vcmask 523264
        %v4478 = vsel %vm4476, %v4459, 0
        %v4481 = vsel %vm4476, %v4460, 0
        %4483 = vmatprep.subr.mxu0 0.0
        %4484 = vmatpush1.msra.mxu0 %v4461
        %4485 = vmatprep.subr.mxu0 0.0
        %4486 = vmatpush1.msra.mxu0 %v4462
        %4487 = vmatprep.subr.mxu0 0.0
        %4488 = vmatpush1.msra.mxu0 %v4463
        %4489 = vmatprep.subr.mxu0 0.0
        %4490 = vmatpush1.msra.mxu0 %v4464
        %4491 = vmatprep.subr.mxu0 0.0
        %4492 = vmatpush1.msra.mxu0 %v4465
        %4493 = vmatprep.subr.mxu0 0.0
        %4494 = vmatpush1.msra.mxu0 %v4466
        %4495 = vmatprep.subr.mxu0 0.0
        %4496 = vmatpush1.msra.mxu0 %v4467
        %4497 = vmatprep.subr.mxu0 0.0
        %4498 = vmatpush1.msra.mxu0 %v4468
        %4499 = vmatprep.subr.mxu0 0.0
        %4500 = vmatpush1.msra.mxu0 0.0
        %4501 = vmatprep.subr.mxu0 0.0
        %4502 = vmatpush1.msra.mxu0 0.0
        %4503 = vmatprep.subr.mxu0 0.0
        %4504 = vmatpush1.msra.mxu0 0.0
        %4505 = vmatprep.subr.mxu0 0.0
        %4506 = vmatpush1.msra.mxu0 0.0
        %4507 = vmatprep.subr.mxu0 0.0
        %4508 = vmatpush1.msra.mxu0 0.0
        %4509 = vmatprep.subr.mxu0 0.0
        %4510 = vmatpush1.msra.mxu0 0.0
        %4511 = vmatprep.subr.mxu0 0.0
        %4512 = vmatpush1.msra.mxu0 0.0
        %4513 = vmatprep.subr.mxu0 0.0
        %4514 = vmatpush1.msra.mxu0 0.0
        %4515 = vmatprep.subr.mxu0 0.0
        %4516 = vmatpush1.msra.mxu0 0.0
        %4517 = vmatprep.subr.mxu0 0.0
        %4518 = vmatpush1.msra.mxu0 0.0
        %4519 = vmatprep.subr.mxu0 0.0
        %4520 = vmatpush1.msra.mxu0 0.0
        %4521 = vmatprep.subr.mxu0 0.0
        %4522 = vmatpush1.msra.mxu0 0.0
        %4523 = vmatprep.subr.mxu0 0.0
        %4524 = vmatpush1.msra.mxu0 0.0
        %4525 = vmatprep.subr.mxu0 0.0
        %4526 = vmatpush1.msra.mxu0 0.0
        %4527 = vmatprep.subr.mxu0 0.0
        %4528 = vmatpush1.msra.mxu0 0.0
        %4529 = vmatprep.subr.mxu0 0.0
        %4530 = vmatpush1.msra.mxu0 0.0
        %4531 = vmatprep.subr.mxu0 0.0
        %4532 = vmatpush1.msra.mxu0 0.0
        %4533 = vmatprep.subr.mxu0 0.0
        %4534 = vmatpush1.msra.mxu0 0.0
        %4535 = vmatprep.subr.mxu0 0.0
        %4536 = vmatpush1.msra.mxu0 0.0
        %4537 = vmatprep.subr.mxu0 0.0
        %4538 = vmatpush1.msra.mxu0 0.0
        %4539 = vmatprep.subr.mxu0 0.0
        %4540 = vmatpush1.msra.mxu0 0.0
        %4541 = vmatprep.subr.mxu0 0.0
        %4542 = vmatpush1.msra.mxu0 0.0
        %4543 = vmatprep.subr.mxu0 0.0
        %4544 = vmatpush1.msra.mxu0 0.0
        %4545 = vmatprep.subr.mxu0 0.0
        %4546 = vmatpush1.msra.mxu0 0.0
        %4547 = vmatprep.mubr.f32.mxu0 0.0
        %4548 = vmatmul.mubr.f32.gmra.mrb[0].mxu0 %v4478
        %v4549 = vpop.f32.mrb[0].mxu0
        %v4550 = vadd.f32 %v4474, %v4549
        %v4551 = vpop.f32.mrb[0].mxu0
        %4552 = vmatprep.mubr.f32.mxu0 0.0
        %4553 = vmatmul.mubr.f32.gmra.mrb[0].mxu0 %v4481
        %v4554 = vpop.f32.mrb[0].mxu0
        %v4555 = vadd.f32 %v4474, %v4554
        %v4556 = vpop.f32.mrb[0].mxu0
        %4557 = vdwg.mxu0
        %v4558 = vadd.f32 %v4305, %v4550
        %v4559 = vadd.f32 %v4306, %v4555
        %s4560 = scalar_lea.vmem %s913, 3
        %v4561 = vld [vmem:[%s4560] sm:$0x1]
        %s4562 = scalar_lea.vmem %s917, 3
        %v4563 = vld [vmem:[%s4562] sm:$0x1]
        %v4564 = vsel %vm995, %v4558, 0.0
        %4565 = vadd.xlane.f32.xlu0 %v4564
        %v4566 = vpop.xlane.xlu0 %4565
        %v4567 = vsel %vm995, %v4559, 0.0
        %4568 = vadd.xlane.f32.xlu0 %v4567
        %v4569 = vpop.xlane.xlu0 %4568
        %v4570 = vmul.f32 %v4566, %v1002
        %v4571 = vmul.f32 %v4569, %v1002
        %v4572 = vsub.f32 %v4558, %v4570
        %v4573 = vsub.f32 %v4559, %v4571
        %v4574 = vmul.f32 %v4572, %v4572
        %v4575 = vmul.f32 %v4573, %v4573
        %v4576 = vsel %vm995, %v4574, 0.0
        %4577 = vadd.xlane.f32.xlu0 %v4576
        %v4578 = vpop.xlane.xlu0 %4577
        %v4579 = vsel %vm995, %v4575, 0.0
        %4580 = vadd.xlane.f32.xlu0 %v4579
        %v4581 = vpop.xlane.xlu0 %4580
        %v4582 = vmul.f32 %v4578, %v1015
        %v4583 = vmul.f32 %v4581, %v1015
        %v4584 = vrsqrt.pop %v4582
        %v4585 = vmul.f32 %v4582, %v4584
        %vm4586 = vcmp.eq.f32.partialorder %v4582, inf
        %v4587 = vsel %vm4586, %v4582, %v4585
        %vm4588 = vcmp.eq.f32.partialorder %v4582, 0.0
        %v4589 = vand.u32 %v4582, 2147483648
        %v4590 = vsel %vm4588, %v4589, %v4587
        %v4591 = vrsqrt.pop %v4583
        %v4592 = vmul.f32 %v4583, %v4591
        %vm4593 = vcmp.eq.f32.partialorder %v4583, inf
        %v4594 = vsel %vm4593, %v4583, %v4592
        %vm4595 = vcmp.eq.f32.partialorder %v4583, 0.0
        %v4596 = vand.u32 %v4583, 2147483648
        %v4597 = vsel %vm4595, %v4596, %v4594
        %v4598 = vadd.f32 %v4590, 1e-06
        %v4599 = vadd.f32 %v4597, 1e-06
        %v4600 = vrcp.pop %v4598
        %v4601 = vrcp.pop %v4599
        %v4603 = vlaneseq
        %v4604 = vshrl.u32 %v4603, 7
        %v4605 = vsub.s32 0, %v4604
        %v4606 = vrot.slane %v4561, %v4605
        %v4608 = vmul.f32 %v4606, %v4572
        %v4609 = vmul.f32 %v4606, %v4573
        %v4610 = vmul.f32 %v4608, %v4600
        %v4611 = vmul.f32 %v4609, %v4601
        %v4613 = vlaneseq
        %v4614 = vshrl.u32 %v4613, 7
        %v4615 = vsub.s32 0, %v4614
        %v4616 = vrot.slane %v4563, %v4615
        %v4618 = vadd.f32 %v4610, %v4616
        %v4619 = vadd.f32 %v4611, %v4616
        %s4620 = scalar_lea.vmem %s922, 32
        %v4621 = vld [vmem:[%s4620] sm:$0xff]
        %v4622 = vld [vmem:[%s4620 + $0x8] sm:$0xff]
        %v4623 = vld [vmem:[%s4620 + $0x10] sm:$0xff]
        %v4624 = vld [vmem:[%s4620 + $0x18] sm:$0xff]
        %s4625 = scalar_lea.vmem %s926, 1
        %v4626 = vld [vmem:[%s4625] sm:$0x1]
        %v4628 = vlaneseq
        %v4629 = vshrl.u32 %v4628, 7
        %v4630 = vsub.s32 0, %v4629
        %v4631 = vrot.slane %v4626, %v4630
        %v4634 = vsel %vm995, %v4618, 0
        %v4637 = vsel %vm995, %v4619, 0
        %4639 = vmatprep.subr.mxu0 0.0
        %4640 = vmatpush1.msra.mxu0 %v4621
        %4641 = vmatprep.subr.mxu0 0.0
        %4642 = vmatpush1.msra.mxu0 %v4622
        %4643 = vmatprep.subr.mxu0 0.0
        %4644 = vmatpush1.msra.mxu0 %v4623
        %4645 = vmatprep.subr.mxu0 0.0
        %4646 = vmatpush1.msra.mxu0 %v4624
        %4647 = vmatprep.subr.mxu0 0.0
        %4648 = vmatpush1.msra.mxu0 0.0
        %4649 = vmatprep.subr.mxu0 0.0
        %4650 = vmatpush1.msra.mxu0 0.0
        %4651 = vmatprep.subr.mxu0 0.0
        %4652 = vmatpush1.msra.mxu0 0.0
        %4653 = vmatprep.subr.mxu0 0.0
        %4654 = vmatpush1.msra.mxu0 0.0
        %4655 = vmatprep.subr.mxu0 0.0
        %4656 = vmatpush1.msra.mxu0 0.0
        %4657 = vmatprep.subr.mxu0 0.0
        %4658 = vmatpush1.msra.mxu0 0.0
        %4659 = vmatprep.subr.mxu0 0.0
        %4660 = vmatpush1.msra.mxu0 0.0
        %4661 = vmatprep.subr.mxu0 0.0
        %4662 = vmatpush1.msra.mxu0 0.0
        %4663 = vmatprep.subr.mxu0 0.0
        %4664 = vmatpush1.msra.mxu0 0.0
        %4665 = vmatprep.subr.mxu0 0.0
        %4666 = vmatpush1.msra.mxu0 0.0
        %4667 = vmatprep.subr.mxu0 0.0
        %4668 = vmatpush1.msra.mxu0 0.0
        %4669 = vmatprep.subr.mxu0 0.0
        %4670 = vmatpush1.msra.mxu0 0.0
        %4671 = vmatprep.subr.mxu0 0.0
        %4672 = vmatpush1.msra.mxu0 0.0
        %4673 = vmatprep.subr.mxu0 0.0
        %4674 = vmatpush1.msra.mxu0 0.0
        %4675 = vmatprep.subr.mxu0 0.0
        %4676 = vmatpush1.msra.mxu0 0.0
        %4677 = vmatprep.subr.mxu0 0.0
        %4678 = vmatpush1.msra.mxu0 0.0
        %4679 = vmatprep.subr.mxu0 0.0
        %4680 = vmatpush1.msra.mxu0 0.0
        %4681 = vmatprep.subr.mxu0 0.0
        %4682 = vmatpush1.msra.mxu0 0.0
        %4683 = vmatprep.subr.mxu0 0.0
        %4684 = vmatpush1.msra.mxu0 0.0
        %4685 = vmatprep.subr.mxu0 0.0
        %4686 = vmatpush1.msra.mxu0 0.0
        %4687 = vmatprep.subr.mxu0 0.0
        %4688 = vmatpush1.msra.mxu0 0.0
        %4689 = vmatprep.subr.mxu0 0.0
        %4690 = vmatpush1.msra.mxu0 0.0
        %4691 = vmatprep.subr.mxu0 0.0
        %4692 = vmatpush1.msra.mxu0 0.0
        %4693 = vmatprep.subr.mxu0 0.0
        %4694 = vmatpush1.msra.mxu0 0.0
        %4695 = vmatprep.subr.mxu0 0.0
        %4696 = vmatpush1.msra.mxu0 0.0
        %4697 = vmatprep.subr.mxu0 0.0
        %4698 = vmatpush1.msra.mxu0 0.0
        %4699 = vmatprep.subr.mxu0 0.0
        %4700 = vmatpush1.msra.mxu0 0.0
        %4701 = vmatprep.subr.mxu0 0.0
        %4702 = vmatpush1.msra.mxu0 0.0
        %4703 = vmatprep.mubr.f32.mxu0 0.0
        %4704 = vmatmul.mubr.f32.gmra.mrb[0].mxu0 %v4634
        %v4705 = vpop.f32.mrb[0].mxu0
        %v4706 = vadd.f32 %v4631, %v4705
        %v4707 = vpop.f32.mrb[0].mxu0
        %4708 = vmatprep.mubr.f32.mxu0 0.0
        %4709 = vmatmul.mubr.f32.gmra.mrb[0].mxu0 %v4637
        %v4710 = vpop.f32.mrb[0].mxu0
        %v4711 = vadd.f32 %v4631, %v4710
        %v4712 = vpop.f32.mrb[0].mxu0
        %4713 = vdwg.mxu0
        %4715 = vrot.lane.b32.xlu0 %v4706, 96
        %v4716 = vpop.permute.xlu0 %4715
        %v4717 = vsel %vm1149, %v4706, 0
        %v4719 = vsel %vm1149, %v4716, 0
        %4721 = vmatprep.subr.mxu0 0.0
        %4722 = vmatpush1.xpose.msra.mxu0 %v4719
        %4723 = vmatprep.subr.mxu0 0.0
        %4724 = vmatpush1.xpose.msra.mxu0 0.0
        %4725 = vmatprep.subr.mxu0 0.0
        %4726 = vmatpush1.xpose.msra.mxu0 0.0
        %4727 = vmatprep.subr.mxu0 0.0
        %4728 = vmatpush1.xpose.msra.mxu0 0.0
        %4729 = vmatprep.subr.mxu0 0.0
        %4730 = vmatpush1.xpose.msra.mxu0 0.0
        %4731 = vmatprep.subr.mxu0 0.0
        %4732 = vmatpush1.xpose.msra.mxu0 0.0
        %4733 = vmatprep.subr.mxu0 0.0
        %4734 = vmatpush1.xpose.msra.mxu0 0.0
        %4735 = vmatprep.subr.mxu0 0.0
        %4736 = vmatpush1.xpose.msra.mxu0 0.0
        %4737 = vmatprep.subr.mxu0 0.0
        %4738 = vmatpush1.xpose.msra.mxu0 0.0
        %4739 = vmatprep.subr.mxu0 0.0
        %4740 = vmatpush1.xpose.msra.mxu0 0.0
        %4741 = vmatprep.subr.mxu0 0.0
        %4742 = vmatpush1.xpose.msra.mxu0 0.0
        %4743 = vmatprep.subr.mxu0 0.0
        %4744 = vmatpush1.xpose.msra.mxu0 0.0
        %4745 = vmatprep.subr.mxu0 0.0
        %4746 = vmatpush1.xpose.msra.mxu0 0.0
        %4747 = vmatprep.subr.mxu0 0.0
        %4748 = vmatpush1.xpose.msra.mxu0 0.0
        %4749 = vmatprep.subr.mxu0 0.0
        %4750 = vmatpush1.xpose.msra.mxu0 0.0
        %4751 = vmatprep.subr.mxu0 0.0
        %4752 = vmatpush1.xpose.msra.mxu0 0.0
        %4753 = vmatprep.subr.mxu0 0.0
        %4754 = vmatpush1.xpose.msra.mxu0 0.0
        %4755 = vmatprep.subr.mxu0 0.0
        %4756 = vmatpush1.xpose.msra.mxu0 0.0
        %4757 = vmatprep.subr.mxu0 0.0
        %4758 = vmatpush1.xpose.msra.mxu0 0.0
        %4759 = vmatprep.subr.mxu0 0.0
        %4760 = vmatpush1.xpose.msra.mxu0 0.0
        %4761 = vmatprep.subr.mxu0 0.0
        %4762 = vmatpush1.xpose.msra.mxu0 0.0
        %4763 = vmatprep.subr.mxu0 0.0
        %4764 = vmatpush1.xpose.msra.mxu0 0.0
        %4765 = vmatprep.subr.mxu0 0.0
        %4766 = vmatpush1.xpose.msra.mxu0 0.0
        %4767 = vmatprep.subr.mxu0 0.0
        %4768 = vmatpush1.xpose.msra.mxu0 0.0
        %4769 = vmatprep.subr.mxu0 0.0
        %4770 = vmatpush1.xpose.msra.mxu0 0.0
        %4771 = vmatprep.subr.mxu0 0.0
        %4772 = vmatpush1.xpose.msra.mxu0 0.0
        %4773 = vmatprep.subr.mxu0 0.0
        %4774 = vmatpush1.xpose.msra.mxu0 0.0
        %4775 = vmatprep.subr.mxu0 0.0
        %4776 = vmatpush1.xpose.msra.mxu0 0.0
        %4777 = vmatprep.subr.mxu0 0.0
        %4778 = vmatpush1.xpose.msra.mxu0 0.0
        %4779 = vmatprep.subr.mxu0 0.0
        %4780 = vmatpush1.xpose.msra.mxu0 0.0
        %4781 = vmatprep.subr.mxu0 0.0
        %4782 = vmatpush1.xpose.msra.mxu0 0.0
        %4783 = vmatprep.subr.mxu0 0.0
        %4784 = vmatpush1.xpose.msra.mxu0 0.0
        %4785 = vmatprep.mubr.f32.mxu0 0.0
        %4786 = vmatmul.mubr.f32.gmra.mrb[0].mxu0 %v4717
        %v4787 = vpop.f32.mrb[0].mxu0
        %v4788 = vadd.f32 0.0, %v4787
        %v4789 = vpop.f32.mrb[0].mxu0
        %4790 = vdwg.mxu0
        %4792 = vrot.lane.b32.xlu0 %v4711, 96
        %v4793 = vpop.permute.xlu0 %4792
        %v4794 = vsel %vm1149, %v4711, 0
        %v4796 = vsel %vm1149, %v4793, 0
        %4798 = vmatprep.subr.mxu0 0.0
        %4799 = vmatpush1.xpose.msra.mxu0 %v4796
        %4800 = vmatprep.subr.mxu0 0.0
        %4801 = vmatpush1.xpose.msra.mxu0 0.0
        %4802 = vmatprep.subr.mxu0 0.0
        %4803 = vmatpush1.xpose.msra.mxu0 0.0
        %4804 = vmatprep.subr.mxu0 0.0
        %4805 = vmatpush1.xpose.msra.mxu0 0.0
        %4806 = vmatprep.subr.mxu0 0.0
        %4807 = vmatpush1.xpose.msra.mxu0 0.0
        %4808 = vmatprep.subr.mxu0 0.0
        %4809 = vmatpush1.xpose.msra.mxu0 0.0
        %4810 = vmatprep.subr.mxu0 0.0
        %4811 = vmatpush1.xpose.msra.mxu0 0.0
        %4812 = vmatprep.subr.mxu0 0.0
        %4813 = vmatpush1.xpose.msra.mxu0 0.0
        %4814 = vmatprep.subr.mxu0 0.0
        %4815 = vmatpush1.xpose.msra.mxu0 0.0
        %4816 = vmatprep.subr.mxu0 0.0
        %4817 = vmatpush1.xpose.msra.mxu0 0.0
        %4818 = vmatprep.subr.mxu0 0.0
        %4819 = vmatpush1.xpose.msra.mxu0 0.0
        %4820 = vmatprep.subr.mxu0 0.0
        %4821 = vmatpush1.xpose.msra.mxu0 0.0
        %4822 = vmatprep.subr.mxu0 0.0
        %4823 = vmatpush1.xpose.msra.mxu0 0.0
        %4824 = vmatprep.subr.mxu0 0.0
        %4825 = vmatpush1.xpose.msra.mxu0 0.0
        %4826 = vmatprep.subr.mxu0 0.0
        %4827 = vmatpush1.xpose.msra.mxu0 0.0
        %4828 = vmatprep.subr.mxu0 0.0
        %4829 = vmatpush1.xpose.msra.mxu0 0.0
        %4830 = vmatprep.subr.mxu0 0.0
        %4831 = vmatpush1.xpose.msra.mxu0 0.0
        %4832 = vmatprep.subr.mxu0 0.0
        %4833 = vmatpush1.xpose.msra.mxu0 0.0
        %4834 = vmatprep.subr.mxu0 0.0
        %4835 = vmatpush1.xpose.msra.mxu0 0.0
        %4836 = vmatprep.subr.mxu0 0.0
        %4837 = vmatpush1.xpose.msra.mxu0 0.0
        %4838 = vmatprep.subr.mxu0 0.0
        %4839 = vmatpush1.xpose.msra.mxu0 0.0
        %4840 = vmatprep.subr.mxu0 0.0
        %4841 = vmatpush1.xpose.msra.mxu0 0.0
        %4842 = vmatprep.subr.mxu0 0.0
        %4843 = vmatpush1.xpose.msra.mxu0 0.0
        %4844 = vmatprep.subr.mxu0 0.0
        %4845 = vmatpush1.xpose.msra.mxu0 0.0
        %4846 = vmatprep.subr.mxu0 0.0
        %4847 = vmatpush1.xpose.msra.mxu0 0.0
        %4848 = vmatprep.subr.mxu0 0.0
        %4849 = vmatpush1.xpose.msra.mxu0 0.0
        %4850 = vmatprep.subr.mxu0 0.0
        %4851 = vmatpush1.xpose.msra.mxu0 0.0
        %4852 = vmatprep.subr.mxu0 0.0
        %4853 = vmatpush1.xpose.msra.mxu0 0.0
        %4854 = vmatprep.subr.mxu0 0.0
        %4855 = vmatpush1.xpose.msra.mxu0 0.0
        %4856 = vmatprep.subr.mxu0 0.0
        %4857 = vmatpush1.xpose.msra.mxu0 0.0
        %4858 = vmatprep.subr.mxu0 0.0
        %4859 = vmatpush1.xpose.msra.mxu0 0.0
        %4860 = vmatprep.subr.mxu0 0.0
        %4861 = vmatpush1.xpose.msra.mxu0 0.0
        %4862 = vmatprep.mubr.f32.mxu0 0.0
        %4863 = vmatmul.mubr.f32.gmra.mrb[0].mxu0 %v4794
        %v4864 = vpop.f32.mrb[0].mxu0
        %v4865 = vadd.f32 0.0, %v4864
        %v4866 = vpop.f32.mrb[0].mxu0
        %4867 = vdwg.mxu0
        %v4868 = vmul.f32 %v4788, 0.35355338
        %v4869 = vmul.f32 %v4865, 0.35355338
        %v4870 = vsel %vm987, %v4868, -1e+09
        %v4871 = vsel %vm988, %v4869, -1e+09
        %v4872 = vsel %vm1149, %v4870, -inf
        %4873 = vmax.xlane.f32.xlu0 %v4872
        %v4874 = vpop.xlane.xlu0 %4873
        %v4875 = vsel %vm1149, %v4871, -inf
        %4876 = vmax.xlane.f32.xlu0 %v4875
        %v4877 = vpop.xlane.xlu0 %4876
        %v4878 = vsub.f32 %v4870, %v4874
        %v4879 = vsub.f32 %v4871, %v4877
        %v4880 = vmul.f32 %v4878, 1.442695
        %v4881 = vpow.pop %v4880
        %v4882 = vmul.f32 %v4879, 1.442695
        %v4883 = vpow.pop %v4882
        %v4884 = vsel %vm1149, %v4881, 0.0
        %4885 = vadd.xlane.f32.xlu0 %v4884
        %v4886 = vpop.xlane.xlu0 %4885
        %v4887 = vsel %vm1149, %v4883, 0.0
        %4888 = vadd.xlane.f32.xlu0 %v4887
        %v4889 = vpop.xlane.xlu0 %4888
        %v4890 = vrcp.pop %v4886
        %v4891 = vrcp.pop %v4889
        %v4892 = vmul.f32 %v4881, %v4890
        %v4893 = vmul.f32 %v4883, %v4891
        %4894 = vrot.lane.b32.xlu0 %v4706, 64
        %v4895 = vpop.permute.xlu0 %4894
        %v4898 = vsel %vm1149, %v4892, 0
        %4900 = vmatprep.subr.mxu0 0.0
        %4901 = vmatpush1.msra.mxu0 %v4895
        %4902 = vmatprep.subr.mxu0 0.0
        %4903 = vmatpush1.msra.mxu0 0.0
        %4904 = vmatprep.subr.mxu0 0.0
        %4905 = vmatpush1.msra.mxu0 0.0
        %4906 = vmatprep.subr.mxu0 0.0
        %4907 = vmatpush1.msra.mxu0 0.0
        %4908 = vmatprep.subr.mxu0 0.0
        %4909 = vmatpush1.msra.mxu0 0.0
        %4910 = vmatprep.subr.mxu0 0.0
        %4911 = vmatpush1.msra.mxu0 0.0
        %4912 = vmatprep.subr.mxu0 0.0
        %4913 = vmatpush1.msra.mxu0 0.0
        %4914 = vmatprep.subr.mxu0 0.0
        %4915 = vmatpush1.msra.mxu0 0.0
        %4916 = vmatprep.subr.mxu0 0.0
        %4917 = vmatpush1.msra.mxu0 0.0
        %4918 = vmatprep.subr.mxu0 0.0
        %4919 = vmatpush1.msra.mxu0 0.0
        %4920 = vmatprep.subr.mxu0 0.0
        %4921 = vmatpush1.msra.mxu0 0.0
        %4922 = vmatprep.subr.mxu0 0.0
        %4923 = vmatpush1.msra.mxu0 0.0
        %4924 = vmatprep.subr.mxu0 0.0
        %4925 = vmatpush1.msra.mxu0 0.0
        %4926 = vmatprep.subr.mxu0 0.0
        %4927 = vmatpush1.msra.mxu0 0.0
        %4928 = vmatprep.subr.mxu0 0.0
        %4929 = vmatpush1.msra.mxu0 0.0
        %4930 = vmatprep.subr.mxu0 0.0
        %4931 = vmatpush1.msra.mxu0 0.0
        %4932 = vmatprep.subr.mxu0 0.0
        %4933 = vmatpush1.msra.mxu0 0.0
        %4934 = vmatprep.subr.mxu0 0.0
        %4935 = vmatpush1.msra.mxu0 0.0
        %4936 = vmatprep.subr.mxu0 0.0
        %4937 = vmatpush1.msra.mxu0 0.0
        %4938 = vmatprep.subr.mxu0 0.0
        %4939 = vmatpush1.msra.mxu0 0.0
        %4940 = vmatprep.subr.mxu0 0.0
        %4941 = vmatpush1.msra.mxu0 0.0
        %4942 = vmatprep.subr.mxu0 0.0
        %4943 = vmatpush1.msra.mxu0 0.0
        %4944 = vmatprep.subr.mxu0 0.0
        %4945 = vmatpush1.msra.mxu0 0.0
        %4946 = vmatprep.subr.mxu0 0.0
        %4947 = vmatpush1.msra.mxu0 0.0
        %4948 = vmatprep.subr.mxu0 0.0
        %4949 = vmatpush1.msra.mxu0 0.0
        %4950 = vmatprep.subr.mxu0 0.0
        %4951 = vmatpush1.msra.mxu0 0.0
        %4952 = vmatprep.subr.mxu0 0.0
        %4953 = vmatpush1.msra.mxu0 0.0
        %4954 = vmatprep.subr.mxu0 0.0
        %4955 = vmatpush1.msra.mxu0 0.0
        %4956 = vmatprep.subr.mxu0 0.0
        %4957 = vmatpush1.msra.mxu0 0.0
        %4958 = vmatprep.subr.mxu0 0.0
        %4959 = vmatpush1.msra.mxu0 0.0
        %4960 = vmatprep.subr.mxu0 0.0
        %4961 = vmatpush1.msra.mxu0 0.0
        %4962 = vmatprep.subr.mxu0 0.0
        %4963 = vmatpush1.msra.mxu0 0.0
        %4964 = vmatprep.mubr.f32.mxu0 0.0
        %4965 = vmatmul.mubr.f32.gmra.mrb[0].mxu0 %v4898
        %v4966 = vpop.f32.mrb[0].mxu0
        %v4967 = vadd.f32 0.0, %v4966
        %v4968 = vpop.f32.mrb[0].mxu0
        %4969 = vdwg.mxu0
        %4970 = vrot.lane.b32.xlu0 %v4711, 64
        %v4971 = vpop.permute.xlu0 %4970
        %v4974 = vsel %vm1149, %v4893, 0
        %4976 = vmatprep.subr.mxu0 0.0
        %4977 = vmatpush1.msra.mxu0 %v4971
        %4978 = vmatprep.subr.mxu0 0.0
        %4979 = vmatpush1.msra.mxu0 0.0
        %4980 = vmatprep.subr.mxu0 0.0
        %4981 = vmatpush1.msra.mxu0 0.0
        %4982 = vmatprep.subr.mxu0 0.0
        %4983 = vmatpush1.msra.mxu0 0.0
        %4984 = vmatprep.subr.mxu0 0.0
        %4985 = vmatpush1.msra.mxu0 0.0
        %4986 = vmatprep.subr.mxu0 0.0
        %4987 = vmatpush1.msra.mxu0 0.0
        %4988 = vmatprep.subr.mxu0 0.0
        %4989 = vmatpush1.msra.mxu0 0.0
        %4990 = vmatprep.subr.mxu0 0.0
        %4991 = vmatpush1.msra.mxu0 0.0
        %4992 = vmatprep.subr.mxu0 0.0
        %4993 = vmatpush1.msra.mxu0 0.0
        %4994 = vmatprep.subr.mxu0 0.0
        %4995 = vmatpush1.msra.mxu0 0.0
        %4996 = vmatprep.subr.mxu0 0.0
        %4997 = vmatpush1.msra.mxu0 0.0
        %4998 = vmatprep.subr.mxu0 0.0
        %4999 = vmatpush1.msra.mxu0 0.0
        %5000 = vmatprep.subr.mxu0 0.0
        %5001 = vmatpush1.msra.mxu0 0.0
        %5002 = vmatprep.subr.mxu0 0.0
        %5003 = vmatpush1.msra.mxu0 0.0
        %5004 = vmatprep.subr.mxu0 0.0
        %5005 = vmatpush1.msra.mxu0 0.0
        %5006 = vmatprep.subr.mxu0 0.0
        %5007 = vmatpush1.msra.mxu0 0.0
        %5008 = vmatprep.subr.mxu0 0.0
        %5009 = vmatpush1.msra.mxu0 0.0
        %5010 = vmatprep.subr.mxu0 0.0
        %5011 = vmatpush1.msra.mxu0 0.0
        %5012 = vmatprep.subr.mxu0 0.0
        %5013 = vmatpush1.msra.mxu0 0.0
        %5014 = vmatprep.subr.mxu0 0.0
        %5015 = vmatpush1.msra.mxu0 0.0
        %5016 = vmatprep.subr.mxu0 0.0
        %5017 = vmatpush1.msra.mxu0 0.0
        %5018 = vmatprep.subr.mxu0 0.0
        %5019 = vmatpush1.msra.mxu0 0.0
        %5020 = vmatprep.subr.mxu0 0.0
        %5021 = vmatpush1.msra.mxu0 0.0
        %5022 = vmatprep.subr.mxu0 0.0
        %5023 = vmatpush1.msra.mxu0 0.0
        %5024 = vmatprep.subr.mxu0 0.0
        %5025 = vmatpush1.msra.mxu0 0.0
        %5026 = vmatprep.subr.mxu0 0.0
        %5027 = vmatpush1.msra.mxu0 0.0
        %5028 = vmatprep.subr.mxu0 0.0
        %5029 = vmatpush1.msra.mxu0 0.0
        %5030 = vmatprep.subr.mxu0 0.0
        %5031 = vmatpush1.msra.mxu0 0.0
        %5032 = vmatprep.subr.mxu0 0.0
        %5033 = vmatpush1.msra.mxu0 0.0
        %5034 = vmatprep.subr.mxu0 0.0
        %5035 = vmatpush1.msra.mxu0 0.0
        %5036 = vmatprep.subr.mxu0 0.0
        %5037 = vmatpush1.msra.mxu0 0.0
        %5038 = vmatprep.subr.mxu0 0.0
        %5039 = vmatpush1.msra.mxu0 0.0
        %5040 = vmatprep.mubr.f32.mxu0 0.0
        %5041 = vmatmul.mubr.f32.gmra.mrb[0].mxu0 %v4974
        %v5042 = vpop.f32.mrb[0].mxu0
        %v5043 = vadd.f32 0.0, %v5042
        %v5044 = vpop.f32.mrb[0].mxu0
        %5045 = vdwg.mxu0
        %5046 = vrot.lane.b32.xlu0 %v4706, 120
        %v5047 = vpop.permute.xlu0 %5046
        %5048 = vrot.lane.b32.xlu0 %v4706, 88
        %v5049 = vpop.permute.xlu0 %5048
        %v5050 = vsel %vm1149, %v5047, 0
        %v5052 = vsel %vm1149, %v5049, 0
        %5054 = vmatprep.subr.mxu0 0.0
        %5055 = vmatpush1.xpose.msra.mxu0 %v5052
        %5056 = vmatprep.subr.mxu0 0.0
        %5057 = vmatpush1.xpose.msra.mxu0 0.0
        %5058 = vmatprep.subr.mxu0 0.0
        %5059 = vmatpush1.xpose.msra.mxu0 0.0
        %5060 = vmatprep.subr.mxu0 0.0
        %5061 = vmatpush1.xpose.msra.mxu0 0.0
        %5062 = vmatprep.subr.mxu0 0.0
        %5063 = vmatpush1.xpose.msra.mxu0 0.0
        %5064 = vmatprep.subr.mxu0 0.0
        %5065 = vmatpush1.xpose.msra.mxu0 0.0
        %5066 = vmatprep.subr.mxu0 0.0
        %5067 = vmatpush1.xpose.msra.mxu0 0.0
        %5068 = vmatprep.subr.mxu0 0.0
        %5069 = vmatpush1.xpose.msra.mxu0 0.0
        %5070 = vmatprep.subr.mxu0 0.0
        %5071 = vmatpush1.xpose.msra.mxu0 0.0
        %5072 = vmatprep.subr.mxu0 0.0
        %5073 = vmatpush1.xpose.msra.mxu0 0.0
        %5074 = vmatprep.subr.mxu0 0.0
        %5075 = vmatpush1.xpose.msra.mxu0 0.0
        %5076 = vmatprep.subr.mxu0 0.0
        %5077 = vmatpush1.xpose.msra.mxu0 0.0
        %5078 = vmatprep.subr.mxu0 0.0
        %5079 = vmatpush1.xpose.msra.mxu0 0.0
        %5080 = vmatprep.subr.mxu0 0.0
        %5081 = vmatpush1.xpose.msra.mxu0 0.0
        %5082 = vmatprep.subr.mxu0 0.0
        %5083 = vmatpush1.xpose.msra.mxu0 0.0
        %5084 = vmatprep.subr.mxu0 0.0
        %5085 = vmatpush1.xpose.msra.mxu0 0.0
        %5086 = vmatprep.subr.mxu0 0.0
        %5087 = vmatpush1.xpose.msra.mxu0 0.0
        %5088 = vmatprep.subr.mxu0 0.0
        %5089 = vmatpush1.xpose.msra.mxu0 0.0
        %5090 = vmatprep.subr.mxu0 0.0
        %5091 = vmatpush1.xpose.msra.mxu0 0.0
        %5092 = vmatprep.subr.mxu0 0.0
        %5093 = vmatpush1.xpose.msra.mxu0 0.0
        %5094 = vmatprep.subr.mxu0 0.0
        %5095 = vmatpush1.xpose.msra.mxu0 0.0
        %5096 = vmatprep.subr.mxu0 0.0
        %5097 = vmatpush1.xpose.msra.mxu0 0.0
        %5098 = vmatprep.subr.mxu0 0.0
        %5099 = vmatpush1.xpose.msra.mxu0 0.0
        %5100 = vmatprep.subr.mxu0 0.0
        %5101 = vmatpush1.xpose.msra.mxu0 0.0
        %5102 = vmatprep.subr.mxu0 0.0
        %5103 = vmatpush1.xpose.msra.mxu0 0.0
        %5104 = vmatprep.subr.mxu0 0.0
        %5105 = vmatpush1.xpose.msra.mxu0 0.0
        %5106 = vmatprep.subr.mxu0 0.0
        %5107 = vmatpush1.xpose.msra.mxu0 0.0
        %5108 = vmatprep.subr.mxu0 0.0
        %5109 = vmatpush1.xpose.msra.mxu0 0.0
        %5110 = vmatprep.subr.mxu0 0.0
        %5111 = vmatpush1.xpose.msra.mxu0 0.0
        %5112 = vmatprep.subr.mxu0 0.0
        %5113 = vmatpush1.xpose.msra.mxu0 0.0
        %5114 = vmatprep.subr.mxu0 0.0
        %5115 = vmatpush1.xpose.msra.mxu0 0.0
        %5116 = vmatprep.subr.mxu0 0.0
        %5117 = vmatpush1.xpose.msra.mxu0 0.0
        %5118 = vmatprep.mubr.f32.mxu0 0.0
        %5119 = vmatmul.mubr.f32.gmra.mrb[0].mxu0 %v5050
        %v5120 = vpop.f32.mrb[0].mxu0
        %v5121 = vadd.f32 0.0, %v5120
        %v5122 = vpop.f32.mrb[0].mxu0
        %5123 = vdwg.mxu0
        %5124 = vrot.lane.b32.xlu0 %v4711, 120
        %v5125 = vpop.permute.xlu0 %5124
        %5126 = vrot.lane.b32.xlu0 %v4711, 88
        %v5127 = vpop.permute.xlu0 %5126
        %v5128 = vsel %vm1149, %v5125, 0
        %v5130 = vsel %vm1149, %v5127, 0
        %5132 = vmatprep.subr.mxu0 0.0
        %5133 = vmatpush1.xpose.msra.mxu0 %v5130
        %5134 = vmatprep.subr.mxu0 0.0
        %5135 = vmatpush1.xpose.msra.mxu0 0.0
        %5136 = vmatprep.subr.mxu0 0.0
        %5137 = vmatpush1.xpose.msra.mxu0 0.0
        %5138 = vmatprep.subr.mxu0 0.0
        %5139 = vmatpush1.xpose.msra.mxu0 0.0
        %5140 = vmatprep.subr.mxu0 0.0
        %5141 = vmatpush1.xpose.msra.mxu0 0.0
        %5142 = vmatprep.subr.mxu0 0.0
        %5143 = vmatpush1.xpose.msra.mxu0 0.0
        %5144 = vmatprep.subr.mxu0 0.0
        %5145 = vmatpush1.xpose.msra.mxu0 0.0
        %5146 = vmatprep.subr.mxu0 0.0
        %5147 = vmatpush1.xpose.msra.mxu0 0.0
        %5148 = vmatprep.subr.mxu0 0.0
        %5149 = vmatpush1.xpose.msra.mxu0 0.0
        %5150 = vmatprep.subr.mxu0 0.0
        %5151 = vmatpush1.xpose.msra.mxu0 0.0
        %5152 = vmatprep.subr.mxu0 0.0
        %5153 = vmatpush1.xpose.msra.mxu0 0.0
        %5154 = vmatprep.subr.mxu0 0.0
        %5155 = vmatpush1.xpose.msra.mxu0 0.0
        %5156 = vmatprep.subr.mxu0 0.0
        %5157 = vmatpush1.xpose.msra.mxu0 0.0
        %5158 = vmatprep.subr.mxu0 0.0
        %5159 = vmatpush1.xpose.msra.mxu0 0.0
        %5160 = vmatprep.subr.mxu0 0.0
        %5161 = vmatpush1.xpose.msra.mxu0 0.0
        %5162 = vmatprep.subr.mxu0 0.0
        %5163 = vmatpush1.xpose.msra.mxu0 0.0
        %5164 = vmatprep.subr.mxu0 0.0
        %5165 = vmatpush1.xpose.msra.mxu0 0.0
        %5166 = vmatprep.subr.mxu0 0.0
        %5167 = vmatpush1.xpose.msra.mxu0 0.0
        %5168 = vmatprep.subr.mxu0 0.0
        %5169 = vmatpush1.xpose.msra.mxu0 0.0
        %5170 = vmatprep.subr.mxu0 0.0
        %5171 = vmatpush1.xpose.msra.mxu0 0.0
        %5172 = vmatprep.subr.mxu0 0.0
        %5173 = vmatpush1.xpose.msra.mxu0 0.0
        %5174 = vmatprep.subr.mxu0 0.0
        %5175 = vmatpush1.xpose.msra.mxu0 0.0
        %5176 = vmatprep.subr.mxu0 0.0
        %5177 = vmatpush1.xpose.msra.mxu0 0.0
        %5178 = vmatprep.subr.mxu0 0.0
        %5179 = vmatpush1.xpose.msra.mxu0 0.0
        %5180 = vmatprep.subr.mxu0 0.0
        %5181 = vmatpush1.xpose.msra.mxu0 0.0
        %5182 = vmatprep.subr.mxu0 0.0
        %5183 = vmatpush1.xpose.msra.mxu0 0.0
        %5184 = vmatprep.subr.mxu0 0.0
        %5185 = vmatpush1.xpose.msra.mxu0 0.0
        %5186 = vmatprep.subr.mxu0 0.0
        %5187 = vmatpush1.xpose.msra.mxu0 0.0
        %5188 = vmatprep.subr.mxu0 0.0
        %5189 = vmatpush1.xpose.msra.mxu0 0.0
        %5190 = vmatprep.subr.mxu0 0.0
        %5191 = vmatpush1.xpose.msra.mxu0 0.0
        %5192 = vmatprep.subr.mxu0 0.0
        %5193 = vmatpush1.xpose.msra.mxu0 0.0
        %5194 = vmatprep.subr.mxu0 0.0
        %5195 = vmatpush1.xpose.msra.mxu0 0.0
        %5196 = vmatprep.mubr.f32.mxu0 0.0
        %5197 = vmatmul.mubr.f32.gmra.mrb[0].mxu0 %v5128
        %v5198 = vpop.f32.mrb[0].mxu0
        %v5199 = vadd.f32 0.0, %v5198
        %v5200 = vpop.f32.mrb[0].mxu0
        %5201 = vdwg.mxu0
        %v5202 = vmul.f32 %v5121, 0.35355338
        %v5203 = vmul.f32 %v5199, 0.35355338
        %v5204 = vsel %vm987, %v5202, -1e+09
        %v5205 = vsel %vm988, %v5203, -1e+09
        %v5206 = vsel %vm1149, %v5204, -inf
        %5207 = vmax.xlane.f32.xlu0 %v5206
        %v5208 = vpop.xlane.xlu0 %5207
        %v5209 = vsel %vm1149, %v5205, -inf
        %5210 = vmax.xlane.f32.xlu0 %v5209
        %v5211 = vpop.xlane.xlu0 %5210
        %v5212 = vsub.f32 %v5204, %v5208
        %v5213 = vsub.f32 %v5205, %v5211
        %v5214 = vmul.f32 %v5212, 1.442695
        %v5215 = vpow.pop %v5214
        %v5216 = vmul.f32 %v5213, 1.442695
        %v5217 = vpow.pop %v5216
        %v5218 = vsel %vm1149, %v5215, 0.0
        %5219 = vadd.xlane.f32.xlu0 %v5218
        %v5220 = vpop.xlane.xlu0 %5219
        %v5221 = vsel %vm1149, %v5217, 0.0
        %5222 = vadd.xlane.f32.xlu0 %v5221
        %v5223 = vpop.xlane.xlu0 %5222
        %v5224 = vrcp.pop %v5220
        %v5225 = vrcp.pop %v5223
        %v5226 = vmul.f32 %v5215, %v5224
        %v5227 = vmul.f32 %v5217, %v5225
        %5228 = vrot.lane.b32.xlu0 %v4706, 56
        %v5229 = vpop.permute.xlu0 %5228
        %v5232 = vsel %vm1149, %v5226, 0
        %5234 = vmatprep.subr.mxu0 0.0
        %5235 = vmatpush1.msra.mxu0 %v5229
        %5236 = vmatprep.subr.mxu0 0.0
        %5237 = vmatpush1.msra.mxu0 0.0
        %5238 = vmatprep.subr.mxu0 0.0
        %5239 = vmatpush1.msra.mxu0 0.0
        %5240 = vmatprep.subr.mxu0 0.0
        %5241 = vmatpush1.msra.mxu0 0.0
        %5242 = vmatprep.subr.mxu0 0.0
        %5243 = vmatpush1.msra.mxu0 0.0
        %5244 = vmatprep.subr.mxu0 0.0
        %5245 = vmatpush1.msra.mxu0 0.0
        %5246 = vmatprep.subr.mxu0 0.0
        %5247 = vmatpush1.msra.mxu0 0.0
        %5248 = vmatprep.subr.mxu0 0.0
        %5249 = vmatpush1.msra.mxu0 0.0
        %5250 = vmatprep.subr.mxu0 0.0
        %5251 = vmatpush1.msra.mxu0 0.0
        %5252 = vmatprep.subr.mxu0 0.0
        %5253 = vmatpush1.msra.mxu0 0.0
        %5254 = vmatprep.subr.mxu0 0.0
        %5255 = vmatpush1.msra.mxu0 0.0
        %5256 = vmatprep.subr.mxu0 0.0
        %5257 = vmatpush1.msra.mxu0 0.0
        %5258 = vmatprep.subr.mxu0 0.0
        %5259 = vmatpush1.msra.mxu0 0.0
        %5260 = vmatprep.subr.mxu0 0.0
        %5261 = vmatpush1.msra.mxu0 0.0
        %5262 = vmatprep.subr.mxu0 0.0
        %5263 = vmatpush1.msra.mxu0 0.0
        %5264 = vmatprep.subr.mxu0 0.0
        %5265 = vmatpush1.msra.mxu0 0.0
        %5266 = vmatprep.subr.mxu0 0.0
        %5267 = vmatpush1.msra.mxu0 0.0
        %5268 = vmatprep.subr.mxu0 0.0
        %5269 = vmatpush1.msra.mxu0 0.0
        %5270 = vmatprep.subr.mxu0 0.0
        %5271 = vmatpush1.msra.mxu0 0.0
        %5272 = vmatprep.subr.mxu0 0.0
        %5273 = vmatpush1.msra.mxu0 0.0
        %5274 = vmatprep.subr.mxu0 0.0
        %5275 = vmatpush1.msra.mxu0 0.0
        %5276 = vmatprep.subr.mxu0 0.0
        %5277 = vmatpush1.msra.mxu0 0.0
        %5278 = vmatprep.subr.mxu0 0.0
        %5279 = vmatpush1.msra.mxu0 0.0
        %5280 = vmatprep.subr.mxu0 0.0
        %5281 = vmatpush1.msra.mxu0 0.0
        %5282 = vmatprep.subr.mxu0 0.0
        %5283 = vmatpush1.msra.mxu0 0.0
        %5284 = vmatprep.subr.mxu0 0.0
        %5285 = vmatpush1.msra.mxu0 0.0
        %5286 = vmatprep.subr.mxu0 0.0
        %5287 = vmatpush1.msra.mxu0 0.0
        %5288 = vmatprep.subr.mxu0 0.0
        %5289 = vmatpush1.msra.mxu0 0.0
        %5290 = vmatprep.subr.mxu0 0.0
        %5291 = vmatpush1.msra.mxu0 0.0
        %5292 = vmatprep.subr.mxu0 0.0
        %5293 = vmatpush1.msra.mxu0 0.0
        %5294 = vmatprep.subr.mxu0 0.0
        %5295 = vmatpush1.msra.mxu0 0.0
        %5296 = vmatprep.subr.mxu0 0.0
        %5297 = vmatpush1.msra.mxu0 0.0
        %5298 = vmatprep.mubr.f32.mxu0 0.0
        %5299 = vmatmul.mubr.f32.gmra.mrb[0].mxu0 %v5232
        %v5300 = vpop.f32.mrb[0].mxu0
        %v5301 = vadd.f32 0.0, %v5300
        %v5302 = vpop.f32.mrb[0].mxu0
        %5303 = vdwg.mxu0
        %5304 = vrot.lane.b32.xlu0 %v4711, 56
        %v5305 = vpop.permute.xlu0 %5304
        %v5308 = vsel %vm1149, %v5227, 0
        %5310 = vmatprep.subr.mxu0 0.0
        %5311 = vmatpush1.msra.mxu0 %v5305
        %5312 = vmatprep.subr.mxu0 0.0
        %5313 = vmatpush1.msra.mxu0 0.0
        %5314 = vmatprep.subr.mxu0 0.0
        %5315 = vmatpush1.msra.mxu0 0.0
        %5316 = vmatprep.subr.mxu0 0.0
        %5317 = vmatpush1.msra.mxu0 0.0
        %5318 = vmatprep.subr.mxu0 0.0
        %5319 = vmatpush1.msra.mxu0 0.0
        %5320 = vmatprep.subr.mxu0 0.0
        %5321 = vmatpush1.msra.mxu0 0.0
        %5322 = vmatprep.subr.mxu0 0.0
        %5323 = vmatpush1.msra.mxu0 0.0
        %5324 = vmatprep.subr.mxu0 0.0
        %5325 = vmatpush1.msra.mxu0 0.0
        %5326 = vmatprep.subr.mxu0 0.0
        %5327 = vmatpush1.msra.mxu0 0.0
        %5328 = vmatprep.subr.mxu0 0.0
        %5329 = vmatpush1.msra.mxu0 0.0
        %5330 = vmatprep.subr.mxu0 0.0
        %5331 = vmatpush1.msra.mxu0 0.0
        %5332 = vmatprep.subr.mxu0 0.0
        %5333 = vmatpush1.msra.mxu0 0.0
        %5334 = vmatprep.subr.mxu0 0.0
        %5335 = vmatpush1.msra.mxu0 0.0
        %5336 = vmatprep.subr.mxu0 0.0
        %5337 = vmatpush1.msra.mxu0 0.0
        %5338 = vmatprep.subr.mxu0 0.0
        %5339 = vmatpush1.msra.mxu0 0.0
        %5340 = vmatprep.subr.mxu0 0.0
        %5341 = vmatpush1.msra.mxu0 0.0
        %5342 = vmatprep.subr.mxu0 0.0
        %5343 = vmatpush1.msra.mxu0 0.0
        %5344 = vmatprep.subr.mxu0 0.0
        %5345 = vmatpush1.msra.mxu0 0.0
        %5346 = vmatprep.subr.mxu0 0.0
        %5347 = vmatpush1.msra.mxu0 0.0
        %5348 = vmatprep.subr.mxu0 0.0
        %5349 = vmatpush1.msra.mxu0 0.0
        %5350 = vmatprep.subr.mxu0 0.0
        %5351 = vmatpush1.msra.mxu0 0.0
        %5352 = vmatprep.subr.mxu0 0.0
        %5353 = vmatpush1.msra.mxu0 0.0
        %5354 = vmatprep.subr.mxu0 0.0
        %5355 = vmatpush1.msra.mxu0 0.0
        %5356 = vmatprep.subr.mxu0 0.0
        %5357 = vmatpush1.msra.mxu0 0.0
        %5358 = vmatprep.subr.mxu0 0.0
        %5359 = vmatpush1.msra.mxu0 0.0
        %5360 = vmatprep.subr.mxu0 0.0
        %5361 = vmatpush1.msra.mxu0 0.0
        %5362 = vmatprep.subr.mxu0 0.0
        %5363 = vmatpush1.msra.mxu0 0.0
        %5364 = vmatprep.subr.mxu0 0.0
        %5365 = vmatpush1.msra.mxu0 0.0
        %5366 = vmatprep.subr.mxu0 0.0
        %5367 = vmatpush1.msra.mxu0 0.0
        %5368 = vmatprep.subr.mxu0 0.0
        %5369 = vmatpush1.msra.mxu0 0.0
        %5370 = vmatprep.subr.mxu0 0.0
        %5371 = vmatpush1.msra.mxu0 0.0
        %5372 = vmatprep.subr.mxu0 0.0
        %5373 = vmatpush1.msra.mxu0 0.0
        %5374 = vmatprep.mubr.f32.mxu0 0.0
        %5375 = vmatmul.mubr.f32.gmra.mrb[0].mxu0 %v5308
        %v5376 = vpop.f32.mrb[0].mxu0
        %v5377 = vadd.f32 0.0, %v5376
        %v5378 = vpop.f32.mrb[0].mxu0
        %5379 = vdwg.mxu0
        %5380 = vrot.lane.b32.xlu0 %v4706, 112
        %v5381 = vpop.permute.xlu0 %5380
        %5382 = vrot.lane.b32.xlu0 %v4706, 80
        %v5383 = vpop.permute.xlu0 %5382
        %v5384 = vsel %vm1149, %v5381, 0
        %v5386 = vsel %vm1149, %v5383, 0
        %5388 = vmatprep.subr.mxu0 0.0
        %5389 = vmatpush1.xpose.msra.mxu0 %v5386
        %5390 = vmatprep.subr.mxu0 0.0
        %5391 = vmatpush1.xpose.msra.mxu0 0.0
        %5392 = vmatprep.subr.mxu0 0.0
        %5393 = vmatpush1.xpose.msra.mxu0 0.0
        %5394 = vmatprep.subr.mxu0 0.0
        %5395 = vmatpush1.xpose.msra.mxu0 0.0
        %5396 = vmatprep.subr.mxu0 0.0
        %5397 = vmatpush1.xpose.msra.mxu0 0.0
        %5398 = vmatprep.subr.mxu0 0.0
        %5399 = vmatpush1.xpose.msra.mxu0 0.0
        %5400 = vmatprep.subr.mxu0 0.0
        %5401 = vmatpush1.xpose.msra.mxu0 0.0
        %5402 = vmatprep.subr.mxu0 0.0
        %5403 = vmatpush1.xpose.msra.mxu0 0.0
        %5404 = vmatprep.subr.mxu0 0.0
        %5405 = vmatpush1.xpose.msra.mxu0 0.0
        %5406 = vmatprep.subr.mxu0 0.0
        %5407 = vmatpush1.xpose.msra.mxu0 0.0
        %5408 = vmatprep.subr.mxu0 0.0
        %5409 = vmatpush1.xpose.msra.mxu0 0.0
        %5410 = vmatprep.subr.mxu0 0.0
        %5411 = vmatpush1.xpose.msra.mxu0 0.0
        %5412 = vmatprep.subr.mxu0 0.0
        %5413 = vmatpush1.xpose.msra.mxu0 0.0
        %5414 = vmatprep.subr.mxu0 0.0
        %5415 = vmatpush1.xpose.msra.mxu0 0.0
        %5416 = vmatprep.subr.mxu0 0.0
        %5417 = vmatpush1.xpose.msra.mxu0 0.0
        %5418 = vmatprep.subr.mxu0 0.0
        %5419 = vmatpush1.xpose.msra.mxu0 0.0
        %5420 = vmatprep.subr.mxu0 0.0
        %5421 = vmatpush1.xpose.msra.mxu0 0.0
        %5422 = vmatprep.subr.mxu0 0.0
        %5423 = vmatpush1.xpose.msra.mxu0 0.0
        %5424 = vmatprep.subr.mxu0 0.0
        %5425 = vmatpush1.xpose.msra.mxu0 0.0
        %5426 = vmatprep.subr.mxu0 0.0
        %5427 = vmatpush1.xpose.msra.mxu0 0.0
        %5428 = vmatprep.subr.mxu0 0.0
        %5429 = vmatpush1.xpose.msra.mxu0 0.0
        %5430 = vmatprep.subr.mxu0 0.0
        %5431 = vmatpush1.xpose.msra.mxu0 0.0
        %5432 = vmatprep.subr.mxu0 0.0
        %5433 = vmatpush1.xpose.msra.mxu0 0.0
        %5434 = vmatprep.subr.mxu0 0.0
        %5435 = vmatpush1.xpose.msra.mxu0 0.0
        %5436 = vmatprep.subr.mxu0 0.0
        %5437 = vmatpush1.xpose.msra.mxu0 0.0
        %5438 = vmatprep.subr.mxu0 0.0
        %5439 = vmatpush1.xpose.msra.mxu0 0.0
        %5440 = vmatprep.subr.mxu0 0.0
        %5441 = vmatpush1.xpose.msra.mxu0 0.0
        %5442 = vmatprep.subr.mxu0 0.0
        %5443 = vmatpush1.xpose.msra.mxu0 0.0
        %5444 = vmatprep.subr.mxu0 0.0
        %5445 = vmatpush1.xpose.msra.mxu0 0.0
        %5446 = vmatprep.subr.mxu0 0.0
        %5447 = vmatpush1.xpose.msra.mxu0 0.0
        %5448 = vmatprep.subr.mxu0 0.0
        %5449 = vmatpush1.xpose.msra.mxu0 0.0
        %5450 = vmatprep.subr.mxu0 0.0
        %5451 = vmatpush1.xpose.msra.mxu0 0.0
        %5452 = vmatprep.mubr.f32.mxu0 0.0
        %5453 = vmatmul.mubr.f32.gmra.mrb[0].mxu0 %v5384
        %v5454 = vpop.f32.mrb[0].mxu0
        %v5455 = vadd.f32 0.0, %v5454
        %v5456 = vpop.f32.mrb[0].mxu0
        %5457 = vdwg.mxu0
        %5458 = vrot.lane.b32.xlu0 %v4711, 112
        %v5459 = vpop.permute.xlu0 %5458
        %5460 = vrot.lane.b32.xlu0 %v4711, 80
        %v5461 = vpop.permute.xlu0 %5460
        %v5462 = vsel %vm1149, %v5459, 0
        %v5464 = vsel %vm1149, %v5461, 0
        %5466 = vmatprep.subr.mxu0 0.0
        %5467 = vmatpush1.xpose.msra.mxu0 %v5464
        %5468 = vmatprep.subr.mxu0 0.0
        %5469 = vmatpush1.xpose.msra.mxu0 0.0
        %5470 = vmatprep.subr.mxu0 0.0
        %5471 = vmatpush1.xpose.msra.mxu0 0.0
        %5472 = vmatprep.subr.mxu0 0.0
        %5473 = vmatpush1.xpose.msra.mxu0 0.0
        %5474 = vmatprep.subr.mxu0 0.0
        %5475 = vmatpush1.xpose.msra.mxu0 0.0
        %5476 = vmatprep.subr.mxu0 0.0
        %5477 = vmatpush1.xpose.msra.mxu0 0.0
        %5478 = vmatprep.subr.mxu0 0.0
        %5479 = vmatpush1.xpose.msra.mxu0 0.0
        %5480 = vmatprep.subr.mxu0 0.0
        %5481 = vmatpush1.xpose.msra.mxu0 0.0
        %5482 = vmatprep.subr.mxu0 0.0
        %5483 = vmatpush1.xpose.msra.mxu0 0.0
        %5484 = vmatprep.subr.mxu0 0.0
        %5485 = vmatpush1.xpose.msra.mxu0 0.0
        %5486 = vmatprep.subr.mxu0 0.0
        %5487 = vmatpush1.xpose.msra.mxu0 0.0
        %5488 = vmatprep.subr.mxu0 0.0
        %5489 = vmatpush1.xpose.msra.mxu0 0.0
        %5490 = vmatprep.subr.mxu0 0.0
        %5491 = vmatpush1.xpose.msra.mxu0 0.0
        %5492 = vmatprep.subr.mxu0 0.0
        %5493 = vmatpush1.xpose.msra.mxu0 0.0
        %5494 = vmatprep.subr.mxu0 0.0
        %5495 = vmatpush1.xpose.msra.mxu0 0.0
        %5496 = vmatprep.subr.mxu0 0.0
        %5497 = vmatpush1.xpose.msra.mxu0 0.0
        %5498 = vmatprep.subr.mxu0 0.0
        %5499 = vmatpush1.xpose.msra.mxu0 0.0
        %5500 = vmatprep.subr.mxu0 0.0
        %5501 = vmatpush1.xpose.msra.mxu0 0.0
        %5502 = vmatprep.subr.mxu0 0.0
        %5503 = vmatpush1.xpose.msra.mxu0 0.0
        %5504 = vmatprep.subr.mxu0 0.0
        %5505 = vmatpush1.xpose.msra.mxu0 0.0
        %5506 = vmatprep.subr.mxu0 0.0
        %5507 = vmatpush1.xpose.msra.mxu0 0.0
        %5508 = vmatprep.subr.mxu0 0.0
        %5509 = vmatpush1.xpose.msra.mxu0 0.0
        %5510 = vmatprep.subr.mxu0 0.0
        %5511 = vmatpush1.xpose.msra.mxu0 0.0
        %5512 = vmatprep.subr.mxu0 0.0
        %5513 = vmatpush1.xpose.msra.mxu0 0.0
        %5514 = vmatprep.subr.mxu0 0.0
        %5515 = vmatpush1.xpose.msra.mxu0 0.0
        %5516 = vmatprep.subr.mxu0 0.0
        %5517 = vmatpush1.xpose.msra.mxu0 0.0
        %5518 = vmatprep.subr.mxu0 0.0
        %5519 = vmatpush1.xpose.msra.mxu0 0.0
        %5520 = vmatprep.subr.mxu0 0.0
        %5521 = vmatpush1.xpose.msra.mxu0 0.0
        %5522 = vmatprep.subr.mxu0 0.0
        %5523 = vmatpush1.xpose.msra.mxu0 0.0
        %5524 = vmatprep.subr.mxu0 0.0
        %5525 = vmatpush1.xpose.msra.mxu0 0.0
        %5526 = vmatprep.subr.mxu0 0.0
        %5527 = vmatpush1.xpose.msra.mxu0 0.0
        %5528 = vmatprep.subr.mxu0 0.0
        %5529 = vmatpush1.xpose.msra.mxu0 0.0
        %5530 = vmatprep.mubr.f32.mxu0 0.0
        %5531 = vmatmul.mubr.f32.gmra.mrb[0].mxu0 %v5462
        %v5532 = vpop.f32.mrb[0].mxu0
        %v5533 = vadd.f32 0.0, %v5532
        %v5534 = vpop.f32.mrb[0].mxu0
        %5535 = vdwg.mxu0
        %v5536 = vmul.f32 %v5455, 0.35355338
        %v5537 = vmul.f32 %v5533, 0.35355338
        %v5538 = vsel %vm987, %v5536, -1e+09
        %v5539 = vsel %vm988, %v5537, -1e+09
        %v5540 = vsel %vm1149, %v5538, -inf
        %5541 = vmax.xlane.f32.xlu0 %v5540
        %v5542 = vpop.xlane.xlu0 %5541
        %v5543 = vsel %vm1149, %v5539, -inf
        %5544 = vmax.xlane.f32.xlu0 %v5543
        %v5545 = vpop.xlane.xlu0 %5544
        %v5546 = vsub.f32 %v5538, %v5542
        %v5547 = vsub.f32 %v5539, %v5545
        %v5548 = vmul.f32 %v5546, 1.442695
        %v5549 = vpow.pop %v5548
        %v5550 = vmul.f32 %v5547, 1.442695
        %v5551 = vpow.pop %v5550
        %v5552 = vsel %vm1149, %v5549, 0.0
        %5553 = vadd.xlane.f32.xlu0 %v5552
        %v5554 = vpop.xlane.xlu0 %5553
        %v5555 = vsel %vm1149, %v5551, 0.0
        %5556 = vadd.xlane.f32.xlu0 %v5555
        %v5557 = vpop.xlane.xlu0 %5556
        %v5558 = vrcp.pop %v5554
        %v5559 = vrcp.pop %v5557
        %v5560 = vmul.f32 %v5549, %v5558
        %v5561 = vmul.f32 %v5551, %v5559
        %5562 = vrot.lane.b32.xlu0 %v4706, 48
        %v5563 = vpop.permute.xlu0 %5562
        %v5566 = vsel %vm1149, %v5560, 0
        %5568 = vmatprep.subr.mxu0 0.0
        %5569 = vmatpush1.msra.mxu0 %v5563
        %5570 = vmatprep.subr.mxu0 0.0
        %5571 = vmatpush1.msra.mxu0 0.0
        %5572 = vmatprep.subr.mxu0 0.0
        %5573 = vmatpush1.msra.mxu0 0.0
        %5574 = vmatprep.subr.mxu0 0.0
        %5575 = vmatpush1.msra.mxu0 0.0
        %5576 = vmatprep.subr.mxu0 0.0
        %5577 = vmatpush1.msra.mxu0 0.0
        %5578 = vmatprep.subr.mxu0 0.0
        %5579 = vmatpush1.msra.mxu0 0.0
        %5580 = vmatprep.subr.mxu0 0.0
        %5581 = vmatpush1.msra.mxu0 0.0
        %5582 = vmatprep.subr.mxu0 0.0
        %5583 = vmatpush1.msra.mxu0 0.0
        %5584 = vmatprep.subr.mxu0 0.0
        %5585 = vmatpush1.msra.mxu0 0.0
        %5586 = vmatprep.subr.mxu0 0.0
        %5587 = vmatpush1.msra.mxu0 0.0
        %5588 = vmatprep.subr.mxu0 0.0
        %5589 = vmatpush1.msra.mxu0 0.0
        %5590 = vmatprep.subr.mxu0 0.0
        %5591 = vmatpush1.msra.mxu0 0.0
        %5592 = vmatprep.subr.mxu0 0.0
        %5593 = vmatpush1.msra.mxu0 0.0
        %5594 = vmatprep.subr.mxu0 0.0
        %5595 = vmatpush1.msra.mxu0 0.0
        %5596 = vmatprep.subr.mxu0 0.0
        %5597 = vmatpush1.msra.mxu0 0.0
        %5598 = vmatprep.subr.mxu0 0.0
        %5599 = vmatpush1.msra.mxu0 0.0
        %5600 = vmatprep.subr.mxu0 0.0
        %5601 = vmatpush1.msra.mxu0 0.0
        %5602 = vmatprep.subr.mxu0 0.0
        %5603 = vmatpush1.msra.mxu0 0.0
        %5604 = vmatprep.subr.mxu0 0.0
        %5605 = vmatpush1.msra.mxu0 0.0
        %5606 = vmatprep.subr.mxu0 0.0
        %5607 = vmatpush1.msra.mxu0 0.0
        %5608 = vmatprep.subr.mxu0 0.0
        %5609 = vmatpush1.msra.mxu0 0.0
        %5610 = vmatprep.subr.mxu0 0.0
        %5611 = vmatpush1.msra.mxu0 0.0
        %5612 = vmatprep.subr.mxu0 0.0
        %5613 = vmatpush1.msra.mxu0 0.0
        %5614 = vmatprep.subr.mxu0 0.0
        %5615 = vmatpush1.msra.mxu0 0.0
        %5616 = vmatprep.subr.mxu0 0.0
        %5617 = vmatpush1.msra.mxu0 0.0
        %5618 = vmatprep.subr.mxu0 0.0
        %5619 = vmatpush1.msra.mxu0 0.0
        %5620 = vmatprep.subr.mxu0 0.0
        %5621 = vmatpush1.msra.mxu0 0.0
        %5622 = vmatprep.subr.mxu0 0.0
        %5623 = vmatpush1.msra.mxu0 0.0
        %5624 = vmatprep.subr.mxu0 0.0
        %5625 = vmatpush1.msra.mxu0 0.0
        %5626 = vmatprep.subr.mxu0 0.0
        %5627 = vmatpush1.msra.mxu0 0.0
        %5628 = vmatprep.subr.mxu0 0.0
        %5629 = vmatpush1.msra.mxu0 0.0
        %5630 = vmatprep.subr.mxu0 0.0
        %5631 = vmatpush1.msra.mxu0 0.0
        %5632 = vmatprep.mubr.f32.mxu0 0.0
        %5633 = vmatmul.mubr.f32.gmra.mrb[0].mxu0 %v5566
        %v5634 = vpop.f32.mrb[0].mxu0
        %v5635 = vadd.f32 0.0, %v5634
        %v5636 = vpop.f32.mrb[0].mxu0
        %5637 = vdwg.mxu0
        %5638 = vrot.lane.b32.xlu0 %v4711, 48
        %v5639 = vpop.permute.xlu0 %5638
        %v5642 = vsel %vm1149, %v5561, 0
        %5644 = vmatprep.subr.mxu0 0.0
        %5645 = vmatpush1.msra.mxu0 %v5639
        %5646 = vmatprep.subr.mxu0 0.0
        %5647 = vmatpush1.msra.mxu0 0.0
        %5648 = vmatprep.subr.mxu0 0.0
        %5649 = vmatpush1.msra.mxu0 0.0
        %5650 = vmatprep.subr.mxu0 0.0
        %5651 = vmatpush1.msra.mxu0 0.0
        %5652 = vmatprep.subr.mxu0 0.0
        %5653 = vmatpush1.msra.mxu0 0.0
        %5654 = vmatprep.subr.mxu0 0.0
        %5655 = vmatpush1.msra.mxu0 0.0
        %5656 = vmatprep.subr.mxu0 0.0
        %5657 = vmatpush1.msra.mxu0 0.0
        %5658 = vmatprep.subr.mxu0 0.0
        %5659 = vmatpush1.msra.mxu0 0.0
        %5660 = vmatprep.subr.mxu0 0.0
        %5661 = vmatpush1.msra.mxu0 0.0
        %5662 = vmatprep.subr.mxu0 0.0
        %5663 = vmatpush1.msra.mxu0 0.0
        %5664 = vmatprep.subr.mxu0 0.0
        %5665 = vmatpush1.msra.mxu0 0.0
        %5666 = vmatprep.subr.mxu0 0.0
        %5667 = vmatpush1.msra.mxu0 0.0
        %5668 = vmatprep.subr.mxu0 0.0
        %5669 = vmatpush1.msra.mxu0 0.0
        %5670 = vmatprep.subr.mxu0 0.0
        %5671 = vmatpush1.msra.mxu0 0.0
        %5672 = vmatprep.subr.mxu0 0.0
        %5673 = vmatpush1.msra.mxu0 0.0
        %5674 = vmatprep.subr.mxu0 0.0
        %5675 = vmatpush1.msra.mxu0 0.0
        %5676 = vmatprep.subr.mxu0 0.0
        %5677 = vmatpush1.msra.mxu0 0.0
        %5678 = vmatprep.subr.mxu0 0.0
        %5679 = vmatpush1.msra.mxu0 0.0
        %5680 = vmatprep.subr.mxu0 0.0
        %5681 = vmatpush1.msra.mxu0 0.0
        %5682 = vmatprep.subr.mxu0 0.0
        %5683 = vmatpush1.msra.mxu0 0.0
        %5684 = vmatprep.subr.mxu0 0.0
        %5685 = vmatpush1.msra.mxu0 0.0
        %5686 = vmatprep.subr.mxu0 0.0
        %5687 = vmatpush1.msra.mxu0 0.0
        %5688 = vmatprep.subr.mxu0 0.0
        %5689 = vmatpush1.msra.mxu0 0.0
        %5690 = vmatprep.subr.mxu0 0.0
        %5691 = vmatpush1.msra.mxu0 0.0
        %5692 = vmatprep.subr.mxu0 0.0
        %5693 = vmatpush1.msra.mxu0 0.0
        %5694 = vmatprep.subr.mxu0 0.0
        %5695 = vmatpush1.msra.mxu0 0.0
        %5696 = vmatprep.subr.mxu0 0.0
        %5697 = vmatpush1.msra.mxu0 0.0
        %5698 = vmatprep.subr.mxu0 0.0
        %5699 = vmatpush1.msra.mxu0 0.0
        %5700 = vmatprep.subr.mxu0 0.0
        %5701 = vmatpush1.msra.mxu0 0.0
        %5702 = vmatprep.subr.mxu0 0.0
        %5703 = vmatpush1.msra.mxu0 0.0
        %5704 = vmatprep.subr.mxu0 0.0
        %5705 = vmatpush1.msra.mxu0 0.0
        %5706 = vmatprep.subr.mxu0 0.0
        %5707 = vmatpush1.msra.mxu0 0.0
        %5708 = vmatprep.mubr.f32.mxu0 0.0
        %5709 = vmatmul.mubr.f32.gmra.mrb[0].mxu0 %v5642
        %v5710 = vpop.f32.mrb[0].mxu0
        %v5711 = vadd.f32 0.0, %v5710
        %v5712 = vpop.f32.mrb[0].mxu0
        %5713 = vdwg.mxu0
        %5714 = vrot.lane.b32.xlu0 %v4706, 104
        %v5715 = vpop.permute.xlu0 %5714
        %5716 = vrot.lane.b32.xlu0 %v4706, 72
        %v5717 = vpop.permute.xlu0 %5716
        %v5718 = vsel %vm1149, %v5715, 0
        %v5720 = vsel %vm1149, %v5717, 0
        %5722 = vmatprep.subr.mxu0 0.0
        %5723 = vmatpush1.xpose.msra.mxu0 %v5720
        %5724 = vmatprep.subr.mxu0 0.0
        %5725 = vmatpush1.xpose.msra.mxu0 0.0
        %5726 = vmatprep.subr.mxu0 0.0
        %5727 = vmatpush1.xpose.msra.mxu0 0.0
        %5728 = vmatprep.subr.mxu0 0.0
        %5729 = vmatpush1.xpose.msra.mxu0 0.0
        %5730 = vmatprep.subr.mxu0 0.0
        %5731 = vmatpush1.xpose.msra.mxu0 0.0
        %5732 = vmatprep.subr.mxu0 0.0
        %5733 = vmatpush1.xpose.msra.mxu0 0.0
        %5734 = vmatprep.subr.mxu0 0.0
        %5735 = vmatpush1.xpose.msra.mxu0 0.0
        %5736 = vmatprep.subr.mxu0 0.0
        %5737 = vmatpush1.xpose.msra.mxu0 0.0
        %5738 = vmatprep.subr.mxu0 0.0
        %5739 = vmatpush1.xpose.msra.mxu0 0.0
        %5740 = vmatprep.subr.mxu0 0.0
        %5741 = vmatpush1.xpose.msra.mxu0 0.0
        %5742 = vmatprep.subr.mxu0 0.0
        %5743 = vmatpush1.xpose.msra.mxu0 0.0
        %5744 = vmatprep.subr.mxu0 0.0
        %5745 = vmatpush1.xpose.msra.mxu0 0.0
        %5746 = vmatprep.subr.mxu0 0.0
        %5747 = vmatpush1.xpose.msra.mxu0 0.0
        %5748 = vmatprep.subr.mxu0 0.0
        %5749 = vmatpush1.xpose.msra.mxu0 0.0
        %5750 = vmatprep.subr.mxu0 0.0
        %5751 = vmatpush1.xpose.msra.mxu0 0.0
        %5752 = vmatprep.subr.mxu0 0.0
        %5753 = vmatpush1.xpose.msra.mxu0 0.0
        %5754 = vmatprep.subr.mxu0 0.0
        %5755 = vmatpush1.xpose.msra.mxu0 0.0
        %5756 = vmatprep.subr.mxu0 0.0
        %5757 = vmatpush1.xpose.msra.mxu0 0.0
        %5758 = vmatprep.subr.mxu0 0.0
        %5759 = vmatpush1.xpose.msra.mxu0 0.0
        %5760 = vmatprep.subr.mxu0 0.0
        %5761 = vmatpush1.xpose.msra.mxu0 0.0
        %5762 = vmatprep.subr.mxu0 0.0
        %5763 = vmatpush1.xpose.msra.mxu0 0.0
        %5764 = vmatprep.subr.mxu0 0.0
        %5765 = vmatpush1.xpose.msra.mxu0 0.0
        %5766 = vmatprep.subr.mxu0 0.0
        %5767 = vmatpush1.xpose.msra.mxu0 0.0
        %5768 = vmatprep.subr.mxu0 0.0
        %5769 = vmatpush1.xpose.msra.mxu0 0.0
        %5770 = vmatprep.subr.mxu0 0.0
        %5771 = vmatpush1.xpose.msra.mxu0 0.0
        %5772 = vmatprep.subr.mxu0 0.0
        %5773 = vmatpush1.xpose.msra.mxu0 0.0
        %5774 = vmatprep.subr.mxu0 0.0
        %5775 = vmatpush1.xpose.msra.mxu0 0.0
        %5776 = vmatprep.subr.mxu0 0.0
        %5777 = vmatpush1.xpose.msra.mxu0 0.0
        %5778 = vmatprep.subr.mxu0 0.0
        %5779 = vmatpush1.xpose.msra.mxu0 0.0
        %5780 = vmatprep.subr.mxu0 0.0
        %5781 = vmatpush1.xpose.msra.mxu0 0.0
        %5782 = vmatprep.subr.mxu0 0.0
        %5783 = vmatpush1.xpose.msra.mxu0 0.0
        %5784 = vmatprep.subr.mxu0 0.0
        %5785 = vmatpush1.xpose.msra.mxu0 0.0
        %5786 = vmatprep.mubr.f32.mxu0 0.0
        %5787 = vmatmul.mubr.f32.gmra.mrb[0].mxu0 %v5718
        %v5788 = vpop.f32.mrb[0].mxu0
        %v5789 = vadd.f32 0.0, %v5788
        %v5790 = vpop.f32.mrb[0].mxu0
        %5791 = vdwg.mxu0
        %5792 = vrot.lane.b32.xlu0 %v4711, 104
        %v5793 = vpop.permute.xlu0 %5792
        %5794 = vrot.lane.b32.xlu0 %v4711, 72
        %v5795 = vpop.permute.xlu0 %5794
        %v5796 = vsel %vm1149, %v5793, 0
        %v5798 = vsel %vm1149, %v5795, 0
        %5800 = vmatprep.subr.mxu0 0.0
        %5801 = vmatpush1.xpose.msra.mxu0 %v5798
        %5802 = vmatprep.subr.mxu0 0.0
        %5803 = vmatpush1.xpose.msra.mxu0 0.0
        %5804 = vmatprep.subr.mxu0 0.0
        %5805 = vmatpush1.xpose.msra.mxu0 0.0
        %5806 = vmatprep.subr.mxu0 0.0
        %5807 = vmatpush1.xpose.msra.mxu0 0.0
        %5808 = vmatprep.subr.mxu0 0.0
        %5809 = vmatpush1.xpose.msra.mxu0 0.0
        %5810 = vmatprep.subr.mxu0 0.0
        %5811 = vmatpush1.xpose.msra.mxu0 0.0
        %5812 = vmatprep.subr.mxu0 0.0
        %5813 = vmatpush1.xpose.msra.mxu0 0.0
        %5814 = vmatprep.subr.mxu0 0.0
        %5815 = vmatpush1.xpose.msra.mxu0 0.0
        %5816 = vmatprep.subr.mxu0 0.0
        %5817 = vmatpush1.xpose.msra.mxu0 0.0
        %5818 = vmatprep.subr.mxu0 0.0
        %5819 = vmatpush1.xpose.msra.mxu0 0.0
        %5820 = vmatprep.subr.mxu0 0.0
        %5821 = vmatpush1.xpose.msra.mxu0 0.0
        %5822 = vmatprep.subr.mxu0 0.0
        %5823 = vmatpush1.xpose.msra.mxu0 0.0
        %5824 = vmatprep.subr.mxu0 0.0
        %5825 = vmatpush1.xpose.msra.mxu0 0.0
        %5826 = vmatprep.subr.mxu0 0.0
        %5827 = vmatpush1.xpose.msra.mxu0 0.0
        %5828 = vmatprep.subr.mxu0 0.0
        %5829 = vmatpush1.xpose.msra.mxu0 0.0
        %5830 = vmatprep.subr.mxu0 0.0
        %5831 = vmatpush1.xpose.msra.mxu0 0.0
        %5832 = vmatprep.subr.mxu0 0.0
        %5833 = vmatpush1.xpose.msra.mxu0 0.0
        %5834 = vmatprep.subr.mxu0 0.0
        %5835 = vmatpush1.xpose.msra.mxu0 0.0
        %5836 = vmatprep.subr.mxu0 0.0
        %5837 = vmatpush1.xpose.msra.mxu0 0.0
        %5838 = vmatprep.subr.mxu0 0.0
        %5839 = vmatpush1.xpose.msra.mxu0 0.0
        %5840 = vmatprep.subr.mxu0 0.0
        %5841 = vmatpush1.xpose.msra.mxu0 0.0
        %5842 = vmatprep.subr.mxu0 0.0
        %5843 = vmatpush1.xpose.msra.mxu0 0.0
        %5844 = vmatprep.subr.mxu0 0.0
        %5845 = vmatpush1.xpose.msra.mxu0 0.0
        %5846 = vmatprep.subr.mxu0 0.0
        %5847 = vmatpush1.xpose.msra.mxu0 0.0
        %5848 = vmatprep.subr.mxu0 0.0
        %5849 = vmatpush1.xpose.msra.mxu0 0.0
        %5850 = vmatprep.subr.mxu0 0.0
        %5851 = vmatpush1.xpose.msra.mxu0 0.0
        %5852 = vmatprep.subr.mxu0 0.0
        %5853 = vmatpush1.xpose.msra.mxu0 0.0
        %5854 = vmatprep.subr.mxu0 0.0
        %5855 = vmatpush1.xpose.msra.mxu0 0.0
        %5856 = vmatprep.subr.mxu0 0.0
        %5857 = vmatpush1.xpose.msra.mxu0 0.0
        %5858 = vmatprep.subr.mxu0 0.0
        %5859 = vmatpush1.xpose.msra.mxu0 0.0
        %5860 = vmatprep.subr.mxu0 0.0
        %5861 = vmatpush1.xpose.msra.mxu0 0.0
        %5862 = vmatprep.subr.mxu0 0.0
        %5863 = vmatpush1.xpose.msra.mxu0 0.0
        %5864 = vmatprep.mubr.f32.mxu0 0.0
        %5865 = vmatmul.mubr.f32.gmra.mrb[0].mxu0 %v5796
        %v5866 = vpop.f32.mrb[0].mxu0
        %v5867 = vadd.f32 0.0, %v5866
        %v5868 = vpop.f32.mrb[0].mxu0
        %5869 = vdwg.mxu0
        %v5870 = vmul.f32 %v5789, 0.35355338
        %v5871 = vmul.f32 %v5867, 0.35355338
        %v5872 = vsel %vm987, %v5870, -1e+09
        %v5873 = vsel %vm988, %v5871, -1e+09
        %v5874 = vsel %vm1149, %v5872, -inf
        %5875 = vmax.xlane.f32.xlu0 %v5874
        %v5876 = vpop.xlane.xlu0 %5875
        %v5877 = vsel %vm1149, %v5873, -inf
        %5878 = vmax.xlane.f32.xlu0 %v5877
        %v5879 = vpop.xlane.xlu0 %5878
        %v5880 = vsub.f32 %v5872, %v5876
        %v5881 = vsub.f32 %v5873, %v5879
        %v5882 = vmul.f32 %v5880, 1.442695
        %v5883 = vpow.pop %v5882
        %v5884 = vmul.f32 %v5881, 1.442695
        %v5885 = vpow.pop %v5884
        %v5886 = vsel %vm1149, %v5883, 0.0
        %5887 = vadd.xlane.f32.xlu0 %v5886
        %v5888 = vpop.xlane.xlu0 %5887
        %v5889 = vsel %vm1149, %v5885, 0.0
        %5890 = vadd.xlane.f32.xlu0 %v5889
        %v5891 = vpop.xlane.xlu0 %5890
        %v5892 = vrcp.pop %v5888
        %v5893 = vrcp.pop %v5891
        %v5894 = vmul.f32 %v5883, %v5892
        %v5895 = vmul.f32 %v5885, %v5893
        %5896 = vrot.lane.b32.xlu0 %v4706, 40
        %v5897 = vpop.permute.xlu0 %5896
        %v5900 = vsel %vm1149, %v5894, 0
        %5902 = vmatprep.subr.mxu0 0.0
        %5903 = vmatpush1.msra.mxu0 %v5897
        %5904 = vmatprep.subr.mxu0 0.0
        %5905 = vmatpush1.msra.mxu0 0.0
        %5906 = vmatprep.subr.mxu0 0.0
        %5907 = vmatpush1.msra.mxu0 0.0
        %5908 = vmatprep.subr.mxu0 0.0
        %5909 = vmatpush1.msra.mxu0 0.0
        %5910 = vmatprep.subr.mxu0 0.0
        %5911 = vmatpush1.msra.mxu0 0.0
        %5912 = vmatprep.subr.mxu0 0.0
        %5913 = vmatpush1.msra.mxu0 0.0
        %5914 = vmatprep.subr.mxu0 0.0
        %5915 = vmatpush1.msra.mxu0 0.0
        %5916 = vmatprep.subr.mxu0 0.0
        %5917 = vmatpush1.msra.mxu0 0.0
        %5918 = vmatprep.subr.mxu0 0.0
        %5919 = vmatpush1.msra.mxu0 0.0
        %5920 = vmatprep.subr.mxu0 0.0
        %5921 = vmatpush1.msra.mxu0 0.0
        %5922 = vmatprep.subr.mxu0 0.0
        %5923 = vmatpush1.msra.mxu0 0.0
        %5924 = vmatprep.subr.mxu0 0.0
        %5925 = vmatpush1.msra.mxu0 0.0
        %5926 = vmatprep.subr.mxu0 0.0
        %5927 = vmatpush1.msra.mxu0 0.0
        %5928 = vmatprep.subr.mxu0 0.0
        %5929 = vmatpush1.msra.mxu0 0.0
        %5930 = vmatprep.subr.mxu0 0.0
        %5931 = vmatpush1.msra.mxu0 0.0
        %5932 = vmatprep.subr.mxu0 0.0
        %5933 = vmatpush1.msra.mxu0 0.0
        %5934 = vmatprep.subr.mxu0 0.0
        %5935 = vmatpush1.msra.mxu0 0.0
        %5936 = vmatprep.subr.mxu0 0.0
        %5937 = vmatpush1.msra.mxu0 0.0
        %5938 = vmatprep.subr.mxu0 0.0
        %5939 = vmatpush1.msra.mxu0 0.0
        %5940 = vmatprep.subr.mxu0 0.0
        %5941 = vmatpush1.msra.mxu0 0.0
        %5942 = vmatprep.subr.mxu0 0.0
        %5943 = vmatpush1.msra.mxu0 0.0
        %5944 = vmatprep.subr.mxu0 0.0
        %5945 = vmatpush1.msra.mxu0 0.0
        %5946 = vmatprep.subr.mxu0 0.0
        %5947 = vmatpush1.msra.mxu0 0.0
        %5948 = vmatprep.subr.mxu0 0.0
        %5949 = vmatpush1.msra.mxu0 0.0
        %5950 = vmatprep.subr.mxu0 0.0
        %5951 = vmatpush1.msra.mxu0 0.0
        %5952 = vmatprep.subr.mxu0 0.0
        %5953 = vmatpush1.msra.mxu0 0.0
        %5954 = vmatprep.subr.mxu0 0.0
        %5955 = vmatpush1.msra.mxu0 0.0
        %5956 = vmatprep.subr.mxu0 0.0
        %5957 = vmatpush1.msra.mxu0 0.0
        %5958 = vmatprep.subr.mxu0 0.0
        %5959 = vmatpush1.msra.mxu0 0.0
        %5960 = vmatprep.subr.mxu0 0.0
        %5961 = vmatpush1.msra.mxu0 0.0
        %5962 = vmatprep.subr.mxu0 0.0
        %5963 = vmatpush1.msra.mxu0 0.0
        %5964 = vmatprep.subr.mxu0 0.0
        %5965 = vmatpush1.msra.mxu0 0.0
        %5966 = vmatprep.mubr.f32.mxu0 0.0
        %5967 = vmatmul.mubr.f32.gmra.mrb[0].mxu0 %v5900
        %v5968 = vpop.f32.mrb[0].mxu0
        %v5969 = vadd.f32 0.0, %v5968
        %v5970 = vpop.f32.mrb[0].mxu0
        %5971 = vdwg.mxu0
        %5972 = vrot.lane.b32.xlu0 %v4711, 40
        %v5973 = vpop.permute.xlu0 %5972
        %v5976 = vsel %vm1149, %v5895, 0
        %5978 = vmatprep.subr.mxu0 0.0
        %5979 = vmatpush1.msra.mxu0 %v5973
        %5980 = vmatprep.subr.mxu0 0.0
        %5981 = vmatpush1.msra.mxu0 0.0
        %5982 = vmatprep.subr.mxu0 0.0
        %5983 = vmatpush1.msra.mxu0 0.0
        %5984 = vmatprep.subr.mxu0 0.0
        %5985 = vmatpush1.msra.mxu0 0.0
        %5986 = vmatprep.subr.mxu0 0.0
        %5987 = vmatpush1.msra.mxu0 0.0
        %5988 = vmatprep.subr.mxu0 0.0
        %5989 = vmatpush1.msra.mxu0 0.0
        %5990 = vmatprep.subr.mxu0 0.0
        %5991 = vmatpush1.msra.mxu0 0.0
        %5992 = vmatprep.subr.mxu0 0.0
        %5993 = vmatpush1.msra.mxu0 0.0
        %5994 = vmatprep.subr.mxu0 0.0
        %5995 = vmatpush1.msra.mxu0 0.0
        %5996 = vmatprep.subr.mxu0 0.0
        %5997 = vmatpush1.msra.mxu0 0.0
        %5998 = vmatprep.subr.mxu0 0.0
        %5999 = vmatpush1.msra.mxu0 0.0
        %6000 = vmatprep.subr.mxu0 0.0
        %6001 = vmatpush1.msra.mxu0 0.0
        %6002 = vmatprep.subr.mxu0 0.0
        %6003 = vmatpush1.msra.mxu0 0.0
        %6004 = vmatprep.subr.mxu0 0.0
        %6005 = vmatpush1.msra.mxu0 0.0
        %6006 = vmatprep.subr.mxu0 0.0
        %6007 = vmatpush1.msra.mxu0 0.0
        %6008 = vmatprep.subr.mxu0 0.0
        %6009 = vmatpush1.msra.mxu0 0.0
        %6010 = vmatprep.subr.mxu0 0.0
        %6011 = vmatpush1.msra.mxu0 0.0
        %6012 = vmatprep.subr.mxu0 0.0
        %6013 = vmatpush1.msra.mxu0 0.0
        %6014 = vmatprep.subr.mxu0 0.0
        %6015 = vmatpush1.msra.mxu0 0.0
        %6016 = vmatprep.subr.mxu0 0.0
        %6017 = vmatpush1.msra.mxu0 0.0
        %6018 = vmatprep.subr.mxu0 0.0
        %6019 = vmatpush1.msra.mxu0 0.0
        %6020 = vmatprep.subr.mxu0 0.0
        %6021 = vmatpush1.msra.mxu0 0.0
        %6022 = vmatprep.subr.mxu0 0.0
        %6023 = vmatpush1.msra.mxu0 0.0
        %6024 = vmatprep.subr.mxu0 0.0
        %6025 = vmatpush1.msra.mxu0 0.0
        %6026 = vmatprep.subr.mxu0 0.0
        %6027 = vmatpush1.msra.mxu0 0.0
        %6028 = vmatprep.subr.mxu0 0.0
        %6029 = vmatpush1.msra.mxu0 0.0
        %6030 = vmatprep.subr.mxu0 0.0
        %6031 = vmatpush1.msra.mxu0 0.0
        %6032 = vmatprep.subr.mxu0 0.0
        %6033 = vmatpush1.msra.mxu0 0.0
        %6034 = vmatprep.subr.mxu0 0.0
        %6035 = vmatpush1.msra.mxu0 0.0
        %6036 = vmatprep.subr.mxu0 0.0
        %6037 = vmatpush1.msra.mxu0 0.0
        %6038 = vmatprep.subr.mxu0 0.0
        %6039 = vmatpush1.msra.mxu0 0.0
        %6040 = vmatprep.subr.mxu0 0.0
        %6041 = vmatpush1.msra.mxu0 0.0
        %6042 = vmatprep.mubr.f32.mxu0 0.0
        %6043 = vmatmul.mubr.f32.gmra.mrb[0].mxu0 %v5976
        %v6044 = vpop.f32.mrb[0].mxu0
        %v6045 = vadd.f32 0.0, %v6044
        %v6046 = vpop.f32.mrb[0].mxu0
        %6047 = vdwg.mxu0
        %6050 = vrot.lane.b32.xlu0 %v5301, 8
        %v6051 = vpop.permute.xlu0 %6050
        %6052 = vrot.lane.b32.xlu0 %v5377, 8
        %v6053 = vpop.permute.xlu0 %6052
        %6058 = vrot.lane.b32.xlu0 %v5635, 16
        %v6059 = vpop.permute.xlu0 %6058
        %6060 = vrot.lane.b32.xlu0 %v5711, 16
        %v6061 = vpop.permute.xlu0 %6060
        %6066 = vrot.lane.b32.xlu0 %v5969, 24
        %v6067 = vpop.permute.xlu0 %6066
        %6068 = vrot.lane.b32.xlu0 %v6045, 24
        %v6069 = vpop.permute.xlu0 %6068
        %v6072 = vsel %vm1149, %v4967, %v6051
        %v6073 = vsel %vm1149, %v5043, %v6053
        %v6074 = vsel %vm2507, %v6072, %v6059
        %v6075 = vsel %vm2507, %v6073, %v6061
        %v6076 = vsel %vm2510, %v6074, %v6067
        %v6077 = vsel %vm2510, %v6075, %v6069
        %s6078 = scalar_lea.vmem %s931, 32
        %v6079 = vld [vmem:[%s6078] sm:$0xff]
        %v6080 = vld [vmem:[%s6078 + $0x8] sm:$0xff]
        %v6081 = vld [vmem:[%s6078 + $0x10] sm:$0xff]
        %v6082 = vld [vmem:[%s6078 + $0x18] sm:$0xff]
        %s6083 = scalar_lea.vmem %s935, 1
        %v6084 = vld [vmem:[%s6083] sm:$0x1]
        %v6086 = vlaneseq
        %v6087 = vshrl.u32 %v6086, 7
        %v6088 = vsub.s32 0, %v6087
        %v6089 = vrot.slane %v6084, %v6088
        %v6092 = vsel %vm995, %v6076, 0
        %v6095 = vsel %vm995, %v6077, 0
        %6097 = vmatprep.subr.mxu0 0.0
        %6098 = vmatpush1.msra.mxu0 %v6079
        %6099 = vmatprep.subr.mxu0 0.0
        %6100 = vmatpush1.msra.mxu0 %v6080
        %6101 = vmatprep.subr.mxu0 0.0
        %6102 = vmatpush1.msra.mxu0 %v6081
        %6103 = vmatprep.subr.mxu0 0.0
        %6104 = vmatpush1.msra.mxu0 %v6082
        %6105 = vmatprep.subr.mxu0 0.0
        %6106 = vmatpush1.msra.mxu0 0.0
        %6107 = vmatprep.subr.mxu0 0.0
        %6108 = vmatpush1.msra.mxu0 0.0
        %6109 = vmatprep.subr.mxu0 0.0
        %6110 = vmatpush1.msra.mxu0 0.0
        %6111 = vmatprep.subr.mxu0 0.0
        %6112 = vmatpush1.msra.mxu0 0.0
        %6113 = vmatprep.subr.mxu0 0.0
        %6114 = vmatpush1.msra.mxu0 0.0
        %6115 = vmatprep.subr.mxu0 0.0
        %6116 = vmatpush1.msra.mxu0 0.0
        %6117 = vmatprep.subr.mxu0 0.0
        %6118 = vmatpush1.msra.mxu0 0.0
        %6119 = vmatprep.subr.mxu0 0.0
        %6120 = vmatpush1.msra.mxu0 0.0
        %6121 = vmatprep.subr.mxu0 0.0
        %6122 = vmatpush1.msra.mxu0 0.0
        %6123 = vmatprep.subr.mxu0 0.0
        %6124 = vmatpush1.msra.mxu0 0.0
        %6125 = vmatprep.subr.mxu0 0.0
        %6126 = vmatpush1.msra.mxu0 0.0
        %6127 = vmatprep.subr.mxu0 0.0
        %6128 = vmatpush1.msra.mxu0 0.0
        %6129 = vmatprep.subr.mxu0 0.0
        %6130 = vmatpush1.msra.mxu0 0.0
        %6131 = vmatprep.subr.mxu0 0.0
        %6132 = vmatpush1.msra.mxu0 0.0
        %6133 = vmatprep.subr.mxu0 0.0
        %6134 = vmatpush1.msra.mxu0 0.0
        %6135 = vmatprep.subr.mxu0 0.0
        %6136 = vmatpush1.msra.mxu0 0.0
        %6137 = vmatprep.subr.mxu0 0.0
        %6138 = vmatpush1.msra.mxu0 0.0
        %6139 = vmatprep.subr.mxu0 0.0
        %6140 = vmatpush1.msra.mxu0 0.0
        %6141 = vmatprep.subr.mxu0 0.0
        %6142 = vmatpush1.msra.mxu0 0.0
        %6143 = vmatprep.subr.mxu0 0.0
        %6144 = vmatpush1.msra.mxu0 0.0
        %6145 = vmatprep.subr.mxu0 0.0
        %6146 = vmatpush1.msra.mxu0 0.0
        %6147 = vmatprep.subr.mxu0 0.0
        %6148 = vmatpush1.msra.mxu0 0.0
        %6149 = vmatprep.subr.mxu0 0.0
        %6150 = vmatpush1.msra.mxu0 0.0
        %6151 = vmatprep.subr.mxu0 0.0
        %6152 = vmatpush1.msra.mxu0 0.0
        %6153 = vmatprep.subr.mxu0 0.0
        %6154 = vmatpush1.msra.mxu0 0.0
        %6155 = vmatprep.subr.mxu0 0.0
        %6156 = vmatpush1.msra.mxu0 0.0
        %6157 = vmatprep.subr.mxu0 0.0
        %6158 = vmatpush1.msra.mxu0 0.0
        %6159 = vmatprep.subr.mxu0 0.0
        %6160 = vmatpush1.msra.mxu0 0.0
        %6161 = vmatprep.mubr.f32.mxu0 0.0
        %6162 = vmatmul.mubr.f32.gmra.mrb[0].mxu0 %v6092
        %v6163 = vpop.f32.mrb[0].mxu0
        %v6164 = vadd.f32 %v6089, %v6163
        %v6165 = vpop.f32.mrb[0].mxu0
        %6166 = vmatprep.mubr.f32.mxu0 0.0
        %6167 = vmatmul.mubr.f32.gmra.mrb[0].mxu0 %v6095
        %v6168 = vpop.f32.mrb[0].mxu0
        %v6169 = vadd.f32 %v6089, %v6168
        %v6170 = vpop.f32.mrb[0].mxu0
        %6171 = vdwg.mxu0
        %v6172 = vadd.f32 %v4558, %v6164
        %v6173 = vadd.f32 %v4559, %v6169
        %s6174 = scalar_lea.vmem %s913, 4
        %v6175 = vld [vmem:[%s6174] sm:$0x1]
        %s6176 = scalar_lea.vmem %s917, 4
        %v6177 = vld [vmem:[%s6176] sm:$0x1]
        %v6178 = vsel %vm995, %v6172, 0.0
        %6179 = vadd.xlane.f32.xlu0 %v6178
        %v6180 = vpop.xlane.xlu0 %6179
        %v6181 = vsel %vm995, %v6173, 0.0
        %6182 = vadd.xlane.f32.xlu0 %v6181
        %v6183 = vpop.xlane.xlu0 %6182
        %v6184 = vmul.f32 %v6180, %v1002
        %v6185 = vmul.f32 %v6183, %v1002
        %v6186 = vsub.f32 %v6172, %v6184
        %v6187 = vsub.f32 %v6173, %v6185
        %v6188 = vmul.f32 %v6186, %v6186
        %v6189 = vmul.f32 %v6187, %v6187
        %v6190 = vsel %vm995, %v6188, 0.0
        %6191 = vadd.xlane.f32.xlu0 %v6190
        %v6192 = vpop.xlane.xlu0 %6191
        %v6193 = vsel %vm995, %v6189, 0.0
        %6194 = vadd.xlane.f32.xlu0 %v6193
        %v6195 = vpop.xlane.xlu0 %6194
        %v6196 = vmul.f32 %v6192, %v1015
        %v6197 = vmul.f32 %v6195, %v1015
        %v6198 = vrsqrt.pop %v6196
        %v6199 = vmul.f32 %v6196, %v6198
        %vm6200 = vcmp.eq.f32.partialorder %v6196, inf
        %v6201 = vsel %vm6200, %v6196, %v6199
        %vm6202 = vcmp.eq.f32.partialorder %v6196, 0.0
        %v6203 = vand.u32 %v6196, 2147483648
        %v6204 = vsel %vm6202, %v6203, %v6201
        %v6205 = vrsqrt.pop %v6197
        %v6206 = vmul.f32 %v6197, %v6205
        %vm6207 = vcmp.eq.f32.partialorder %v6197, inf
        %v6208 = vsel %vm6207, %v6197, %v6206
        %vm6209 = vcmp.eq.f32.partialorder %v6197, 0.0
        %v6210 = vand.u32 %v6197, 2147483648
        %v6211 = vsel %vm6209, %v6210, %v6208
        %v6212 = vadd.f32 %v6204, 1e-06
        %v6213 = vadd.f32 %v6211, 1e-06
        %v6214 = vrcp.pop %v6212
        %v6215 = vrcp.pop %v6213
        %v6217 = vlaneseq
        %v6218 = vshrl.u32 %v6217, 7
        %v6219 = vsub.s32 0, %v6218
        %v6220 = vrot.slane %v6175, %v6219
        %v6222 = vmul.f32 %v6220, %v6186
        %v6223 = vmul.f32 %v6220, %v6187
        %v6224 = vmul.f32 %v6222, %v6214
        %v6225 = vmul.f32 %v6223, %v6215
        %v6227 = vlaneseq
        %v6228 = vshrl.u32 %v6227, 7
        %v6229 = vsub.s32 0, %v6228
        %v6230 = vrot.slane %v6177, %v6229
        %v6232 = vadd.f32 %v6224, %v6230
        %v6233 = vadd.f32 %v6225, %v6230
        %s6234 = scalar_lea.vmem %s940, 32
        %v6235 = vld [vmem:[%s6234] sm:$0xff]
        %v6236 = vld [vmem:[%s6234 + $0x8] sm:$0xff]
        %v6237 = vld [vmem:[%s6234 + $0x10] sm:$0xff]
        %v6238 = vld [vmem:[%s6234 + $0x18] sm:$0xff]
        %s6239 = scalar_lea.vmem %s944, 1
        %v6240 = vld [vmem:[%s6239] sm:$0x1]
        %v6242 = vlaneseq
        %v6243 = vshrl.u32 %v6242, 7
        %v6244 = vsub.s32 0, %v6243
        %v6245 = vrot.slane %v6240, %v6244
        %v6248 = vsel %vm995, %v6232, 0
        %v6251 = vsel %vm995, %v6233, 0
        %6253 = vmatprep.subr.mxu0 0.0
        %6254 = vmatpush1.msra.mxu0 %v6235
        %6255 = vmatprep.subr.mxu0 0.0
        %6256 = vmatpush1.msra.mxu0 %v6236
        %6257 = vmatprep.subr.mxu0 0.0
        %6258 = vmatpush1.msra.mxu0 %v6237
        %6259 = vmatprep.subr.mxu0 0.0
        %6260 = vmatpush1.msra.mxu0 %v6238
        %6261 = vmatprep.subr.mxu0 0.0
        %6262 = vmatpush1.msra.mxu0 0.0
        %6263 = vmatprep.subr.mxu0 0.0
        %6264 = vmatpush1.msra.mxu0 0.0
        %6265 = vmatprep.subr.mxu0 0.0
        %6266 = vmatpush1.msra.mxu0 0.0
        %6267 = vmatprep.subr.mxu0 0.0
        %6268 = vmatpush1.msra.mxu0 0.0
        %6269 = vmatprep.subr.mxu0 0.0
        %6270 = vmatpush1.msra.mxu0 0.0
        %6271 = vmatprep.subr.mxu0 0.0
        %6272 = vmatpush1.msra.mxu0 0.0
        %6273 = vmatprep.subr.mxu0 0.0
        %6274 = vmatpush1.msra.mxu0 0.0
        %6275 = vmatprep.subr.mxu0 0.0
        %6276 = vmatpush1.msra.mxu0 0.0
        %6277 = vmatprep.subr.mxu0 0.0
        %6278 = vmatpush1.msra.mxu0 0.0
        %6279 = vmatprep.subr.mxu0 0.0
        %6280 = vmatpush1.msra.mxu0 0.0
        %6281 = vmatprep.subr.mxu0 0.0
        %6282 = vmatpush1.msra.mxu0 0.0
        %6283 = vmatprep.subr.mxu0 0.0
        %6284 = vmatpush1.msra.mxu0 0.0
        %6285 = vmatprep.subr.mxu0 0.0
        %6286 = vmatpush1.msra.mxu0 0.0
        %6287 = vmatprep.subr.mxu0 0.0
        %6288 = vmatpush1.msra.mxu0 0.0
        %6289 = vmatprep.subr.mxu0 0.0
        %6290 = vmatpush1.msra.mxu0 0.0
        %6291 = vmatprep.subr.mxu0 0.0
        %6292 = vmatpush1.msra.mxu0 0.0
        %6293 = vmatprep.subr.mxu0 0.0
        %6294 = vmatpush1.msra.mxu0 0.0
        %6295 = vmatprep.subr.mxu0 0.0
        %6296 = vmatpush1.msra.mxu0 0.0
        %6297 = vmatprep.subr.mxu0 0.0
        %6298 = vmatpush1.msra.mxu0 0.0
        %6299 = vmatprep.subr.mxu0 0.0
        %6300 = vmatpush1.msra.mxu0 0.0
        %6301 = vmatprep.subr.mxu0 0.0
        %6302 = vmatpush1.msra.mxu0 0.0
        %6303 = vmatprep.subr.mxu0 0.0
        %6304 = vmatpush1.msra.mxu0 0.0
        %6305 = vmatprep.subr.mxu0 0.0
        %6306 = vmatpush1.msra.mxu0 0.0
        %6307 = vmatprep.subr.mxu0 0.0
        %6308 = vmatpush1.msra.mxu0 0.0
        %6309 = vmatprep.subr.mxu0 0.0
        %6310 = vmatpush1.msra.mxu0 0.0
        %6311 = vmatprep.subr.mxu0 0.0
        %6312 = vmatpush1.msra.mxu0 0.0
        %6313 = vmatprep.subr.mxu0 0.0
        %6314 = vmatpush1.msra.mxu0 0.0
        %6315 = vmatprep.subr.mxu0 0.0
        %6316 = vmatpush1.msra.mxu0 0.0
        %6317 = vmatprep.mubr.f32.mxu0 0.0
        %6318 = vmatmul.mubr.f32.gmra.mrb[0].mxu0 %v6248
        %v6319 = vpop.f32.mrb[0].mxu0
        %v6320 = vadd.f32 %v6245, %v6319
        %v6321 = vpop.f32.mrb[0].mxu0
        %6322 = vmatprep.mubr.f32.mxu0 0.0
        %6323 = vmatmul.mubr.f32.gmra.mrb[0].mxu0 %v6251
        %v6324 = vpop.f32.mrb[0].mxu0
        %v6325 = vadd.f32 %v6245, %v6324
        %v6326 = vpop.f32.mrb[0].mxu0
        %6327 = vdwg.mxu0
        %s6328 = scalar_lea.vmem %s949, 32
        %v6329 = vld [vmem:[%s6328] sm:$0xff]
        %v6330 = vld [vmem:[%s6328 + $0x8] sm:$0xff]
        %v6331 = vld [vmem:[%s6328 + $0x10] sm:$0xff]
        %v6332 = vld [vmem:[%s6328 + $0x18] sm:$0xff]
        %s6333 = scalar_lea.vmem %s953, 1
        %v6334 = vld [vmem:[%s6333] sm:$0x1]
        %v6336 = vlaneseq
        %v6337 = vshrl.u32 %v6336, 7
        %v6338 = vsub.s32 0, %v6337
        %v6339 = vrot.slane %v6334, %v6338
        %6341 = vmatprep.subr.mxu0 0.0
        %6342 = vmatpush1.msra.mxu0 %v6329
        %6343 = vmatprep.subr.mxu0 0.0
        %6344 = vmatpush1.msra.mxu0 %v6330
        %6345 = vmatprep.subr.mxu0 0.0
        %6346 = vmatpush1.msra.mxu0 %v6331
        %6347 = vmatprep.subr.mxu0 0.0
        %6348 = vmatpush1.msra.mxu0 %v6332
        %6349 = vmatprep.subr.mxu0 0.0
        %6350 = vmatpush1.msra.mxu0 0.0
        %6351 = vmatprep.subr.mxu0 0.0
        %6352 = vmatpush1.msra.mxu0 0.0
        %6353 = vmatprep.subr.mxu0 0.0
        %6354 = vmatpush1.msra.mxu0 0.0
        %6355 = vmatprep.subr.mxu0 0.0
        %6356 = vmatpush1.msra.mxu0 0.0
        %6357 = vmatprep.subr.mxu0 0.0
        %6358 = vmatpush1.msra.mxu0 0.0
        %6359 = vmatprep.subr.mxu0 0.0
        %6360 = vmatpush1.msra.mxu0 0.0
        %6361 = vmatprep.subr.mxu0 0.0
        %6362 = vmatpush1.msra.mxu0 0.0
        %6363 = vmatprep.subr.mxu0 0.0
        %6364 = vmatpush1.msra.mxu0 0.0
        %6365 = vmatprep.subr.mxu0 0.0
        %6366 = vmatpush1.msra.mxu0 0.0
        %6367 = vmatprep.subr.mxu0 0.0
        %6368 = vmatpush1.msra.mxu0 0.0
        %6369 = vmatprep.subr.mxu0 0.0
        %6370 = vmatpush1.msra.mxu0 0.0
        %6371 = vmatprep.subr.mxu0 0.0
        %6372 = vmatpush1.msra.mxu0 0.0
        %6373 = vmatprep.subr.mxu0 0.0
        %6374 = vmatpush1.msra.mxu0 0.0
        %6375 = vmatprep.subr.mxu0 0.0
        %6376 = vmatpush1.msra.mxu0 0.0
        %6377 = vmatprep.subr.mxu0 0.0
        %6378 = vmatpush1.msra.mxu0 0.0
        %6379 = vmatprep.subr.mxu0 0.0
        %6380 = vmatpush1.msra.mxu0 0.0
        %6381 = vmatprep.subr.mxu0 0.0
        %6382 = vmatpush1.msra.mxu0 0.0
        %6383 = vmatprep.subr.mxu0 0.0
        %6384 = vmatpush1.msra.mxu0 0.0
        %6385 = vmatprep.subr.mxu0 0.0
        %6386 = vmatpush1.msra.mxu0 0.0
        %6387 = vmatprep.subr.mxu0 0.0
        %6388 = vmatpush1.msra.mxu0 0.0
        %6389 = vmatprep.subr.mxu0 0.0
        %6390 = vmatpush1.msra.mxu0 0.0
        %6391 = vmatprep.subr.mxu0 0.0
        %6392 = vmatpush1.msra.mxu0 0.0
        %6393 = vmatprep.subr.mxu0 0.0
        %6394 = vmatpush1.msra.mxu0 0.0
        %6395 = vmatprep.subr.mxu0 0.0
        %6396 = vmatpush1.msra.mxu0 0.0
        %6397 = vmatprep.subr.mxu0 0.0
        %6398 = vmatpush1.msra.mxu0 0.0
        %6399 = vmatprep.subr.mxu0 0.0
        %6400 = vmatpush1.msra.mxu0 0.0
        %6401 = vmatprep.subr.mxu0 0.0
        %6402 = vmatpush1.msra.mxu0 0.0
        %6403 = vmatprep.subr.mxu0 0.0
        %6404 = vmatpush1.msra.mxu0 0.0
        %6405 = vmatprep.mubr.f32.mxu0 0.0
        %6406 = vmatmul.mubr.f32.gmra.mrb[0].mxu0 %v2771
        %v6407 = vpop.f32.mrb[0].mxu0
        %v6408 = vadd.f32 %v6339, %v6407
        %v6409 = vpop.f32.mrb[0].mxu0
        %6410 = vmatprep.mubr.f32.mxu0 0.0
        %6411 = vmatmul.mubr.f32.gmra.mrb[0].mxu0 %v2774
        %v6412 = vpop.f32.mrb[0].mxu0
        %v6413 = vadd.f32 %v6339, %v6412
        %v6414 = vpop.f32.mrb[0].mxu0
        %6415 = vdwg.mxu0
        %v6417 = vsel %vm1149, %v6320, 0
        %v6420 = vsel %vm1149, %v6408, 0
        %6422 = vmatprep.subr.mxu0 0.0
        %6423 = vmatpush1.xpose.msra.mxu0 %v6420
        %6424 = vmatprep.subr.mxu0 0.0
        %6425 = vmatpush1.xpose.msra.mxu0 0.0
        %6426 = vmatprep.subr.mxu0 0.0
        %6427 = vmatpush1.xpose.msra.mxu0 0.0
        %6428 = vmatprep.subr.mxu0 0.0
        %6429 = vmatpush1.xpose.msra.mxu0 0.0
        %6430 = vmatprep.subr.mxu0 0.0
        %6431 = vmatpush1.xpose.msra.mxu0 0.0
        %6432 = vmatprep.subr.mxu0 0.0
        %6433 = vmatpush1.xpose.msra.mxu0 0.0
        %6434 = vmatprep.subr.mxu0 0.0
        %6435 = vmatpush1.xpose.msra.mxu0 0.0
        %6436 = vmatprep.subr.mxu0 0.0
        %6437 = vmatpush1.xpose.msra.mxu0 0.0
        %6438 = vmatprep.subr.mxu0 0.0
        %6439 = vmatpush1.xpose.msra.mxu0 0.0
        %6440 = vmatprep.subr.mxu0 0.0
        %6441 = vmatpush1.xpose.msra.mxu0 0.0
        %6442 = vmatprep.subr.mxu0 0.0
        %6443 = vmatpush1.xpose.msra.mxu0 0.0
        %6444 = vmatprep.subr.mxu0 0.0
        %6445 = vmatpush1.xpose.msra.mxu0 0.0
        %6446 = vmatprep.subr.mxu0 0.0
        %6447 = vmatpush1.xpose.msra.mxu0 0.0
        %6448 = vmatprep.subr.mxu0 0.0
        %6449 = vmatpush1.xpose.msra.mxu0 0.0
        %6450 = vmatprep.subr.mxu0 0.0
        %6451 = vmatpush1.xpose.msra.mxu0 0.0
        %6452 = vmatprep.subr.mxu0 0.0
        %6453 = vmatpush1.xpose.msra.mxu0 0.0
        %6454 = vmatprep.subr.mxu0 0.0
        %6455 = vmatpush1.xpose.msra.mxu0 0.0
        %6456 = vmatprep.subr.mxu0 0.0
        %6457 = vmatpush1.xpose.msra.mxu0 0.0
        %6458 = vmatprep.subr.mxu0 0.0
        %6459 = vmatpush1.xpose.msra.mxu0 0.0
        %6460 = vmatprep.subr.mxu0 0.0
        %6461 = vmatpush1.xpose.msra.mxu0 0.0
        %6462 = vmatprep.subr.mxu0 0.0
        %6463 = vmatpush1.xpose.msra.mxu0 0.0
        %6464 = vmatprep.subr.mxu0 0.0
        %6465 = vmatpush1.xpose.msra.mxu0 0.0
        %6466 = vmatprep.subr.mxu0 0.0
        %6467 = vmatpush1.xpose.msra.mxu0 0.0
        %6468 = vmatprep.subr.mxu0 0.0
        %6469 = vmatpush1.xpose.msra.mxu0 0.0
        %6470 = vmatprep.subr.mxu0 0.0
        %6471 = vmatpush1.xpose.msra.mxu0 0.0
        %6472 = vmatprep.subr.mxu0 0.0
        %6473 = vmatpush1.xpose.msra.mxu0 0.0
        %6474 = vmatprep.subr.mxu0 0.0
        %6475 = vmatpush1.xpose.msra.mxu0 0.0
        %6476 = vmatprep.subr.mxu0 0.0
        %6477 = vmatpush1.xpose.msra.mxu0 0.0
        %6478 = vmatprep.subr.mxu0 0.0
        %6479 = vmatpush1.xpose.msra.mxu0 0.0
        %6480 = vmatprep.subr.mxu0 0.0
        %6481 = vmatpush1.xpose.msra.mxu0 0.0
        %6482 = vmatprep.subr.mxu0 0.0
        %6483 = vmatpush1.xpose.msra.mxu0 0.0
        %6484 = vmatprep.subr.mxu0 0.0
        %6485 = vmatpush1.xpose.msra.mxu0 0.0
        %6486 = vmatprep.mubr.f32.mxu0 0.0
        %6487 = vmatmul.mubr.f32.gmra.mrb[0].mxu0 %v6417
        %v6488 = vpop.f32.mrb[0].mxu0
        %v6489 = vadd.f32 0.0, %v6488
        %v6490 = vpop.f32.mrb[0].mxu0
        %6491 = vdwg.mxu0
        %v6493 = vsel %vm1149, %v6325, 0
        %v6496 = vsel %vm1149, %v6413, 0
        %6498 = vmatprep.subr.mxu0 0.0
        %6499 = vmatpush1.xpose.msra.mxu0 %v6496
        %6500 = vmatprep.subr.mxu0 0.0
        %6501 = vmatpush1.xpose.msra.mxu0 0.0
        %6502 = vmatprep.subr.mxu0 0.0
        %6503 = vmatpush1.xpose.msra.mxu0 0.0
        %6504 = vmatprep.subr.mxu0 0.0
        %6505 = vmatpush1.xpose.msra.mxu0 0.0
        %6506 = vmatprep.subr.mxu0 0.0
        %6507 = vmatpush1.xpose.msra.mxu0 0.0
        %6508 = vmatprep.subr.mxu0 0.0
        %6509 = vmatpush1.xpose.msra.mxu0 0.0
        %6510 = vmatprep.subr.mxu0 0.0
        %6511 = vmatpush1.xpose.msra.mxu0 0.0
        %6512 = vmatprep.subr.mxu0 0.0
        %6513 = vmatpush1.xpose.msra.mxu0 0.0
        %6514 = vmatprep.subr.mxu0 0.0
        %6515 = vmatpush1.xpose.msra.mxu0 0.0
        %6516 = vmatprep.subr.mxu0 0.0
        %6517 = vmatpush1.xpose.msra.mxu0 0.0
        %6518 = vmatprep.subr.mxu0 0.0
        %6519 = vmatpush1.xpose.msra.mxu0 0.0
        %6520 = vmatprep.subr.mxu0 0.0
        %6521 = vmatpush1.xpose.msra.mxu0 0.0
        %6522 = vmatprep.subr.mxu0 0.0
        %6523 = vmatpush1.xpose.msra.mxu0 0.0
        %6524 = vmatprep.subr.mxu0 0.0
        %6525 = vmatpush1.xpose.msra.mxu0 0.0
        %6526 = vmatprep.subr.mxu0 0.0
        %6527 = vmatpush1.xpose.msra.mxu0 0.0
        %6528 = vmatprep.subr.mxu0 0.0
        %6529 = vmatpush1.xpose.msra.mxu0 0.0
        %6530 = vmatprep.subr.mxu0 0.0
        %6531 = vmatpush1.xpose.msra.mxu0 0.0
        %6532 = vmatprep.subr.mxu0 0.0
        %6533 = vmatpush1.xpose.msra.mxu0 0.0
        %6534 = vmatprep.subr.mxu0 0.0
        %6535 = vmatpush1.xpose.msra.mxu0 0.0
        %6536 = vmatprep.subr.mxu0 0.0
        %6537 = vmatpush1.xpose.msra.mxu0 0.0
        %6538 = vmatprep.subr.mxu0 0.0
        %6539 = vmatpush1.xpose.msra.mxu0 0.0
        %6540 = vmatprep.subr.mxu0 0.0
        %6541 = vmatpush1.xpose.msra.mxu0 0.0
        %6542 = vmatprep.subr.mxu0 0.0
        %6543 = vmatpush1.xpose.msra.mxu0 0.0
        %6544 = vmatprep.subr.mxu0 0.0
        %6545 = vmatpush1.xpose.msra.mxu0 0.0
        %6546 = vmatprep.subr.mxu0 0.0
        %6547 = vmatpush1.xpose.msra.mxu0 0.0
        %6548 = vmatprep.subr.mxu0 0.0
        %6549 = vmatpush1.xpose.msra.mxu0 0.0
        %6550 = vmatprep.subr.mxu0 0.0
        %6551 = vmatpush1.xpose.msra.mxu0 0.0
        %6552 = vmatprep.subr.mxu0 0.0
        %6553 = vmatpush1.xpose.msra.mxu0 0.0
        %6554 = vmatprep.subr.mxu0 0.0
        %6555 = vmatpush1.xpose.msra.mxu0 0.0
        %6556 = vmatprep.subr.mxu0 0.0
        %6557 = vmatpush1.xpose.msra.mxu0 0.0
        %6558 = vmatprep.subr.mxu0 0.0
        %6559 = vmatpush1.xpose.msra.mxu0 0.0
        %6560 = vmatprep.subr.mxu0 0.0
        %6561 = vmatpush1.xpose.msra.mxu0 0.0
        %6562 = vmatprep.mubr.f32.mxu0 0.0
        %6563 = vmatmul.mubr.f32.gmra.mrb[0].mxu0 %v6493
        %v6564 = vpop.f32.mrb[0].mxu0
        %v6565 = vadd.f32 0.0, %v6564
        %v6566 = vpop.f32.mrb[0].mxu0
        %6567 = vdwg.mxu0
        %v6568 = vmul.f32 %v6489, 0.35355338
        %v6569 = vmul.f32 %v6565, 0.35355338
        %v6570 = vsel %vm991, %v6568, -1e+09
        %v6571 = vsel %vm992, %v6569, -1e+09
        %v6572 = vsel %vm1149, %v6570, -inf
        %6573 = vmax.xlane.f32.xlu0 %v6572
        %v6574 = vpop.xlane.xlu0 %6573
        %v6575 = vsel %vm1149, %v6571, -inf
        %6576 = vmax.xlane.f32.xlu0 %v6575
        %v6577 = vpop.xlane.xlu0 %6576
        %v6578 = vsub.f32 %v6570, %v6574
        %v6579 = vsub.f32 %v6571, %v6577
        %v6580 = vmul.f32 %v6578, 1.442695
        %v6581 = vpow.pop %v6580
        %v6582 = vmul.f32 %v6579, 1.442695
        %v6583 = vpow.pop %v6582
        %v6584 = vsel %vm1149, %v6581, 0.0
        %6585 = vadd.xlane.f32.xlu0 %v6584
        %v6586 = vpop.xlane.xlu0 %6585
        %v6587 = vsel %vm1149, %v6583, 0.0
        %6588 = vadd.xlane.f32.xlu0 %v6587
        %v6589 = vpop.xlane.xlu0 %6588
        %v6590 = vrcp.pop %v6586
        %v6591 = vrcp.pop %v6589
        %v6592 = vmul.f32 %v6581, %v6590
        %v6593 = vmul.f32 %v6583, %v6591
        %6594 = vrot.lane.b32.xlu0 %v6408, 96
        %v6595 = vpop.permute.xlu0 %6594
        %v6598 = vsel %vm1149, %v6592, 0
        %6600 = vmatprep.subr.mxu0 0.0
        %6601 = vmatpush1.msra.mxu0 %v6595
        %6602 = vmatprep.subr.mxu0 0.0
        %6603 = vmatpush1.msra.mxu0 0.0
        %6604 = vmatprep.subr.mxu0 0.0
        %6605 = vmatpush1.msra.mxu0 0.0
        %6606 = vmatprep.subr.mxu0 0.0
        %6607 = vmatpush1.msra.mxu0 0.0
        %6608 = vmatprep.subr.mxu0 0.0
        %6609 = vmatpush1.msra.mxu0 0.0
        %6610 = vmatprep.subr.mxu0 0.0
        %6611 = vmatpush1.msra.mxu0 0.0
        %6612 = vmatprep.subr.mxu0 0.0
        %6613 = vmatpush1.msra.mxu0 0.0
        %6614 = vmatprep.subr.mxu0 0.0
        %6615 = vmatpush1.msra.mxu0 0.0
        %6616 = vmatprep.subr.mxu0 0.0
        %6617 = vmatpush1.msra.mxu0 0.0
        %6618 = vmatprep.subr.mxu0 0.0
        %6619 = vmatpush1.msra.mxu0 0.0
        %6620 = vmatprep.subr.mxu0 0.0
        %6621 = vmatpush1.msra.mxu0 0.0
        %6622 = vmatprep.subr.mxu0 0.0
        %6623 = vmatpush1.msra.mxu0 0.0
        %6624 = vmatprep.subr.mxu0 0.0
        %6625 = vmatpush1.msra.mxu0 0.0
        %6626 = vmatprep.subr.mxu0 0.0
        %6627 = vmatpush1.msra.mxu0 0.0
        %6628 = vmatprep.subr.mxu0 0.0
        %6629 = vmatpush1.msra.mxu0 0.0
        %6630 = vmatprep.subr.mxu0 0.0
        %6631 = vmatpush1.msra.mxu0 0.0
        %6632 = vmatprep.subr.mxu0 0.0
        %6633 = vmatpush1.msra.mxu0 0.0
        %6634 = vmatprep.subr.mxu0 0.0
        %6635 = vmatpush1.msra.mxu0 0.0
        %6636 = vmatprep.subr.mxu0 0.0
        %6637 = vmatpush1.msra.mxu0 0.0
        %6638 = vmatprep.subr.mxu0 0.0
        %6639 = vmatpush1.msra.mxu0 0.0
        %6640 = vmatprep.subr.mxu0 0.0
        %6641 = vmatpush1.msra.mxu0 0.0
        %6642 = vmatprep.subr.mxu0 0.0
        %6643 = vmatpush1.msra.mxu0 0.0
        %6644 = vmatprep.subr.mxu0 0.0
        %6645 = vmatpush1.msra.mxu0 0.0
        %6646 = vmatprep.subr.mxu0 0.0
        %6647 = vmatpush1.msra.mxu0 0.0
        %6648 = vmatprep.subr.mxu0 0.0
        %6649 = vmatpush1.msra.mxu0 0.0
        %6650 = vmatprep.subr.mxu0 0.0
        %6651 = vmatpush1.msra.mxu0 0.0
        %6652 = vmatprep.subr.mxu0 0.0
        %6653 = vmatpush1.msra.mxu0 0.0
        %6654 = vmatprep.subr.mxu0 0.0
        %6655 = vmatpush1.msra.mxu0 0.0
        %6656 = vmatprep.subr.mxu0 0.0
        %6657 = vmatpush1.msra.mxu0 0.0
        %6658 = vmatprep.subr.mxu0 0.0
        %6659 = vmatpush1.msra.mxu0 0.0
        %6660 = vmatprep.subr.mxu0 0.0
        %6661 = vmatpush1.msra.mxu0 0.0
        %6662 = vmatprep.subr.mxu0 0.0
        %6663 = vmatpush1.msra.mxu0 0.0
        %6664 = vmatprep.mubr.f32.mxu0 0.0
        %6665 = vmatmul.mubr.f32.gmra.mrb[0].mxu0 %v6598
        %v6666 = vpop.f32.mrb[0].mxu0
        %v6667 = vadd.f32 0.0, %v6666
        %v6668 = vpop.f32.mrb[0].mxu0
        %6669 = vdwg.mxu0
        %6670 = vrot.lane.b32.xlu0 %v6413, 96
        %v6671 = vpop.permute.xlu0 %6670
        %v6674 = vsel %vm1149, %v6593, 0
        %6676 = vmatprep.subr.mxu0 0.0
        %6677 = vmatpush1.msra.mxu0 %v6671
        %6678 = vmatprep.subr.mxu0 0.0
        %6679 = vmatpush1.msra.mxu0 0.0
        %6680 = vmatprep.subr.mxu0 0.0
        %6681 = vmatpush1.msra.mxu0 0.0
        %6682 = vmatprep.subr.mxu0 0.0
        %6683 = vmatpush1.msra.mxu0 0.0
        %6684 = vmatprep.subr.mxu0 0.0
        %6685 = vmatpush1.msra.mxu0 0.0
        %6686 = vmatprep.subr.mxu0 0.0
        %6687 = vmatpush1.msra.mxu0 0.0
        %6688 = vmatprep.subr.mxu0 0.0
        %6689 = vmatpush1.msra.mxu0 0.0
        %6690 = vmatprep.subr.mxu0 0.0
        %6691 = vmatpush1.msra.mxu0 0.0
        %6692 = vmatprep.subr.mxu0 0.0
        %6693 = vmatpush1.msra.mxu0 0.0
        %6694 = vmatprep.subr.mxu0 0.0
        %6695 = vmatpush1.msra.mxu0 0.0
        %6696 = vmatprep.subr.mxu0 0.0
        %6697 = vmatpush1.msra.mxu0 0.0
        %6698 = vmatprep.subr.mxu0 0.0
        %6699 = vmatpush1.msra.mxu0 0.0
        %6700 = vmatprep.subr.mxu0 0.0
        %6701 = vmatpush1.msra.mxu0 0.0
        %6702 = vmatprep.subr.mxu0 0.0
        %6703 = vmatpush1.msra.mxu0 0.0
        %6704 = vmatprep.subr.mxu0 0.0
        %6705 = vmatpush1.msra.mxu0 0.0
        %6706 = vmatprep.subr.mxu0 0.0
        %6707 = vmatpush1.msra.mxu0 0.0
        %6708 = vmatprep.subr.mxu0 0.0
        %6709 = vmatpush1.msra.mxu0 0.0
        %6710 = vmatprep.subr.mxu0 0.0
        %6711 = vmatpush1.msra.mxu0 0.0
        %6712 = vmatprep.subr.mxu0 0.0
        %6713 = vmatpush1.msra.mxu0 0.0
        %6714 = vmatprep.subr.mxu0 0.0
        %6715 = vmatpush1.msra.mxu0 0.0
        %6716 = vmatprep.subr.mxu0 0.0
        %6717 = vmatpush1.msra.mxu0 0.0
        %6718 = vmatprep.subr.mxu0 0.0
        %6719 = vmatpush1.msra.mxu0 0.0
        %6720 = vmatprep.subr.mxu0 0.0
        %6721 = vmatpush1.msra.mxu0 0.0
        %6722 = vmatprep.subr.mxu0 0.0
        %6723 = vmatpush1.msra.mxu0 0.0
        %6724 = vmatprep.subr.mxu0 0.0
        %6725 = vmatpush1.msra.mxu0 0.0
        %6726 = vmatprep.subr.mxu0 0.0
        %6727 = vmatpush1.msra.mxu0 0.0
        %6728 = vmatprep.subr.mxu0 0.0
        %6729 = vmatpush1.msra.mxu0 0.0
        %6730 = vmatprep.subr.mxu0 0.0
        %6731 = vmatpush1.msra.mxu0 0.0
        %6732 = vmatprep.subr.mxu0 0.0
        %6733 = vmatpush1.msra.mxu0 0.0
        %6734 = vmatprep.subr.mxu0 0.0
        %6735 = vmatpush1.msra.mxu0 0.0
        %6736 = vmatprep.subr.mxu0 0.0
        %6737 = vmatpush1.msra.mxu0 0.0
        %6738 = vmatprep.subr.mxu0 0.0
        %6739 = vmatpush1.msra.mxu0 0.0
        %6740 = vmatprep.mubr.f32.mxu0 0.0
        %6741 = vmatmul.mubr.f32.gmra.mrb[0].mxu0 %v6674
        %v6742 = vpop.f32.mrb[0].mxu0
        %v6743 = vadd.f32 0.0, %v6742
        %v6744 = vpop.f32.mrb[0].mxu0
        %6745 = vdwg.mxu0
        %6746 = vrot.lane.b32.xlu0 %v6320, 120
        %v6747 = vpop.permute.xlu0 %6746
        %6748 = vrot.lane.b32.xlu0 %v6408, 120
        %v6749 = vpop.permute.xlu0 %6748
        %v6750 = vsel %vm1149, %v6747, 0
        %v6752 = vsel %vm1149, %v6749, 0
        %6754 = vmatprep.subr.mxu0 0.0
        %6755 = vmatpush1.xpose.msra.mxu0 %v6752
        %6756 = vmatprep.subr.mxu0 0.0
        %6757 = vmatpush1.xpose.msra.mxu0 0.0
        %6758 = vmatprep.subr.mxu0 0.0
        %6759 = vmatpush1.xpose.msra.mxu0 0.0
        %6760 = vmatprep.subr.mxu0 0.0
        %6761 = vmatpush1.xpose.msra.mxu0 0.0
        %6762 = vmatprep.subr.mxu0 0.0
        %6763 = vmatpush1.xpose.msra.mxu0 0.0
        %6764 = vmatprep.subr.mxu0 0.0
        %6765 = vmatpush1.xpose.msra.mxu0 0.0
        %6766 = vmatprep.subr.mxu0 0.0
        %6767 = vmatpush1.xpose.msra.mxu0 0.0
        %6768 = vmatprep.subr.mxu0 0.0
        %6769 = vmatpush1.xpose.msra.mxu0 0.0
        %6770 = vmatprep.subr.mxu0 0.0
        %6771 = vmatpush1.xpose.msra.mxu0 0.0
        %6772 = vmatprep.subr.mxu0 0.0
        %6773 = vmatpush1.xpose.msra.mxu0 0.0
        %6774 = vmatprep.subr.mxu0 0.0
        %6775 = vmatpush1.xpose.msra.mxu0 0.0
        %6776 = vmatprep.subr.mxu0 0.0
        %6777 = vmatpush1.xpose.msra.mxu0 0.0
        %6778 = vmatprep.subr.mxu0 0.0
        %6779 = vmatpush1.xpose.msra.mxu0 0.0
        %6780 = vmatprep.subr.mxu0 0.0
        %6781 = vmatpush1.xpose.msra.mxu0 0.0
        %6782 = vmatprep.subr.mxu0 0.0
        %6783 = vmatpush1.xpose.msra.mxu0 0.0
        %6784 = vmatprep.subr.mxu0 0.0
        %6785 = vmatpush1.xpose.msra.mxu0 0.0
        %6786 = vmatprep.subr.mxu0 0.0
        %6787 = vmatpush1.xpose.msra.mxu0 0.0
        %6788 = vmatprep.subr.mxu0 0.0
        %6789 = vmatpush1.xpose.msra.mxu0 0.0
        %6790 = vmatprep.subr.mxu0 0.0
        %6791 = vmatpush1.xpose.msra.mxu0 0.0
        %6792 = vmatprep.subr.mxu0 0.0
        %6793 = vmatpush1.xpose.msra.mxu0 0.0
        %6794 = vmatprep.subr.mxu0 0.0
        %6795 = vmatpush1.xpose.msra.mxu0 0.0
        %6796 = vmatprep.subr.mxu0 0.0
        %6797 = vmatpush1.xpose.msra.mxu0 0.0
        %6798 = vmatprep.subr.mxu0 0.0
        %6799 = vmatpush1.xpose.msra.mxu0 0.0
        %6800 = vmatprep.subr.mxu0 0.0
        %6801 = vmatpush1.xpose.msra.mxu0 0.0
        %6802 = vmatprep.subr.mxu0 0.0
        %6803 = vmatpush1.xpose.msra.mxu0 0.0
        %6804 = vmatprep.subr.mxu0 0.0
        %6805 = vmatpush1.xpose.msra.mxu0 0.0
        %6806 = vmatprep.subr.mxu0 0.0
        %6807 = vmatpush1.xpose.msra.mxu0 0.0
        %6808 = vmatprep.subr.mxu0 0.0
        %6809 = vmatpush1.xpose.msra.mxu0 0.0
        %6810 = vmatprep.subr.mxu0 0.0
        %6811 = vmatpush1.xpose.msra.mxu0 0.0
        %6812 = vmatprep.subr.mxu0 0.0
        %6813 = vmatpush1.xpose.msra.mxu0 0.0
        %6814 = vmatprep.subr.mxu0 0.0
        %6815 = vmatpush1.xpose.msra.mxu0 0.0
        %6816 = vmatprep.subr.mxu0 0.0
        %6817 = vmatpush1.xpose.msra.mxu0 0.0
        %6818 = vmatprep.mubr.f32.mxu0 0.0
        %6819 = vmatmul.mubr.f32.gmra.mrb[0].mxu0 %v6750
        %v6820 = vpop.f32.mrb[0].mxu0
        %v6821 = vadd.f32 0.0, %v6820
        %v6822 = vpop.f32.mrb[0].mxu0
        %6823 = vdwg.mxu0
        %6824 = vrot.lane.b32.xlu0 %v6325, 120
        %v6825 = vpop.permute.xlu0 %6824
        %6826 = vrot.lane.b32.xlu0 %v6413, 120
        %v6827 = vpop.permute.xlu0 %6826
        %v6828 = vsel %vm1149, %v6825, 0
        %v6830 = vsel %vm1149, %v6827, 0
        %6832 = vmatprep.subr.mxu0 0.0
        %6833 = vmatpush1.xpose.msra.mxu0 %v6830
        %6834 = vmatprep.subr.mxu0 0.0
        %6835 = vmatpush1.xpose.msra.mxu0 0.0
        %6836 = vmatprep.subr.mxu0 0.0
        %6837 = vmatpush1.xpose.msra.mxu0 0.0
        %6838 = vmatprep.subr.mxu0 0.0
        %6839 = vmatpush1.xpose.msra.mxu0 0.0
        %6840 = vmatprep.subr.mxu0 0.0
        %6841 = vmatpush1.xpose.msra.mxu0 0.0
        %6842 = vmatprep.subr.mxu0 0.0
        %6843 = vmatpush1.xpose.msra.mxu0 0.0
        %6844 = vmatprep.subr.mxu0 0.0
        %6845 = vmatpush1.xpose.msra.mxu0 0.0
        %6846 = vmatprep.subr.mxu0 0.0
        %6847 = vmatpush1.xpose.msra.mxu0 0.0
        %6848 = vmatprep.subr.mxu0 0.0
        %6849 = vmatpush1.xpose.msra.mxu0 0.0
        %6850 = vmatprep.subr.mxu0 0.0
        %6851 = vmatpush1.xpose.msra.mxu0 0.0
        %6852 = vmatprep.subr.mxu0 0.0
        %6853 = vmatpush1.xpose.msra.mxu0 0.0
        %6854 = vmatprep.subr.mxu0 0.0
        %6855 = vmatpush1.xpose.msra.mxu0 0.0
        %6856 = vmatprep.subr.mxu0 0.0
        %6857 = vmatpush1.xpose.msra.mxu0 0.0
        %6858 = vmatprep.subr.mxu0 0.0
        %6859 = vmatpush1.xpose.msra.mxu0 0.0
        %6860 = vmatprep.subr.mxu0 0.0
        %6861 = vmatpush1.xpose.msra.mxu0 0.0
        %6862 = vmatprep.subr.mxu0 0.0
        %6863 = vmatpush1.xpose.msra.mxu0 0.0
        %6864 = vmatprep.subr.mxu0 0.0
        %6865 = vmatpush1.xpose.msra.mxu0 0.0
        %6866 = vmatprep.subr.mxu0 0.0
        %6867 = vmatpush1.xpose.msra.mxu0 0.0
        %6868 = vmatprep.subr.mxu0 0.0
        %6869 = vmatpush1.xpose.msra.mxu0 0.0
        %6870 = vmatprep.subr.mxu0 0.0
        %6871 = vmatpush1.xpose.msra.mxu0 0.0
        %6872 = vmatprep.subr.mxu0 0.0
        %6873 = vmatpush1.xpose.msra.mxu0 0.0
        %6874 = vmatprep.subr.mxu0 0.0
        %6875 = vmatpush1.xpose.msra.mxu0 0.0
        %6876 = vmatprep.subr.mxu0 0.0
        %6877 = vmatpush1.xpose.msra.mxu0 0.0
        %6878 = vmatprep.subr.mxu0 0.0
        %6879 = vmatpush1.xpose.msra.mxu0 0.0
        %6880 = vmatprep.subr.mxu0 0.0
        %6881 = vmatpush1.xpose.msra.mxu0 0.0
        %6882 = vmatprep.subr.mxu0 0.0
        %6883 = vmatpush1.xpose.msra.mxu0 0.0
        %6884 = vmatprep.subr.mxu0 0.0
        %6885 = vmatpush1.xpose.msra.mxu0 0.0
        %6886 = vmatprep.subr.mxu0 0.0
        %6887 = vmatpush1.xpose.msra.mxu0 0.0
        %6888 = vmatprep.subr.mxu0 0.0
        %6889 = vmatpush1.xpose.msra.mxu0 0.0
        %6890 = vmatprep.subr.mxu0 0.0
        %6891 = vmatpush1.xpose.msra.mxu0 0.0
        %6892 = vmatprep.subr.mxu0 0.0
        %6893 = vmatpush1.xpose.msra.mxu0 0.0
        %6894 = vmatprep.subr.mxu0 0.0
        %6895 = vmatpush1.xpose.msra.mxu0 0.0
        %6896 = vmatprep.mubr.f32.mxu0 0.0
        %6897 = vmatmul.mubr.f32.gmra.mrb[0].mxu0 %v6828
        %v6898 = vpop.f32.mrb[0].mxu0
        %v6899 = vadd.f32 0.0, %v6898
        %v6900 = vpop.f32.mrb[0].mxu0
        %6901 = vdwg.mxu0
        %v6902 = vmul.f32 %v6821, 0.35355338
        %v6903 = vmul.f32 %v6899, 0.35355338
        %v6904 = vsel %vm991, %v6902, -1e+09
        %v6905 = vsel %vm992, %v6903, -1e+09
        %v6906 = vsel %vm1149, %v6904, -inf
        %6907 = vmax.xlane.f32.xlu0 %v6906
        %v6908 = vpop.xlane.xlu0 %6907
        %v6909 = vsel %vm1149, %v6905, -inf
        %6910 = vmax.xlane.f32.xlu0 %v6909
        %v6911 = vpop.xlane.xlu0 %6910
        %v6912 = vsub.f32 %v6904, %v6908
        %v6913 = vsub.f32 %v6905, %v6911
        %v6914 = vmul.f32 %v6912, 1.442695
        %v6915 = vpow.pop %v6914
        %v6916 = vmul.f32 %v6913, 1.442695
        %v6917 = vpow.pop %v6916
        %v6918 = vsel %vm1149, %v6915, 0.0
        %6919 = vadd.xlane.f32.xlu0 %v6918
        %v6920 = vpop.xlane.xlu0 %6919
        %v6921 = vsel %vm1149, %v6917, 0.0
        %6922 = vadd.xlane.f32.xlu0 %v6921
        %v6923 = vpop.xlane.xlu0 %6922
        %v6924 = vrcp.pop %v6920
        %v6925 = vrcp.pop %v6923
        %v6926 = vmul.f32 %v6915, %v6924
        %v6927 = vmul.f32 %v6917, %v6925
        %6928 = vrot.lane.b32.xlu0 %v6408, 88
        %v6929 = vpop.permute.xlu0 %6928
        %v6932 = vsel %vm1149, %v6926, 0
        %6934 = vmatprep.subr.mxu0 0.0
        %6935 = vmatpush1.msra.mxu0 %v6929
        %6936 = vmatprep.subr.mxu0 0.0
        %6937 = vmatpush1.msra.mxu0 0.0
        %6938 = vmatprep.subr.mxu0 0.0
        %6939 = vmatpush1.msra.mxu0 0.0
        %6940 = vmatprep.subr.mxu0 0.0
        %6941 = vmatpush1.msra.mxu0 0.0
        %6942 = vmatprep.subr.mxu0 0.0
        %6943 = vmatpush1.msra.mxu0 0.0
        %6944 = vmatprep.subr.mxu0 0.0
        %6945 = vmatpush1.msra.mxu0 0.0
        %6946 = vmatprep.subr.mxu0 0.0
        %6947 = vmatpush1.msra.mxu0 0.0
        %6948 = vmatprep.subr.mxu0 0.0
        %6949 = vmatpush1.msra.mxu0 0.0
        %6950 = vmatprep.subr.mxu0 0.0
        %6951 = vmatpush1.msra.mxu0 0.0
        %6952 = vmatprep.subr.mxu0 0.0
        %6953 = vmatpush1.msra.mxu0 0.0
        %6954 = vmatprep.subr.mxu0 0.0
        %6955 = vmatpush1.msra.mxu0 0.0
        %6956 = vmatprep.subr.mxu0 0.0
        %6957 = vmatpush1.msra.mxu0 0.0
        %6958 = vmatprep.subr.mxu0 0.0
        %6959 = vmatpush1.msra.mxu0 0.0
        %6960 = vmatprep.subr.mxu0 0.0
        %6961 = vmatpush1.msra.mxu0 0.0
        %6962 = vmatprep.subr.mxu0 0.0
        %6963 = vmatpush1.msra.mxu0 0.0
        %6964 = vmatprep.subr.mxu0 0.0
        %6965 = vmatpush1.msra.mxu0 0.0
        %6966 = vmatprep.subr.mxu0 0.0
        %6967 = vmatpush1.msra.mxu0 0.0
        %6968 = vmatprep.subr.mxu0 0.0
        %6969 = vmatpush1.msra.mxu0 0.0
        %6970 = vmatprep.subr.mxu0 0.0
        %6971 = vmatpush1.msra.mxu0 0.0
        %6972 = vmatprep.subr.mxu0 0.0
        %6973 = vmatpush1.msra.mxu0 0.0
        %6974 = vmatprep.subr.mxu0 0.0
        %6975 = vmatpush1.msra.mxu0 0.0
        %6976 = vmatprep.subr.mxu0 0.0
        %6977 = vmatpush1.msra.mxu0 0.0
        %6978 = vmatprep.subr.mxu0 0.0
        %6979 = vmatpush1.msra.mxu0 0.0
        %6980 = vmatprep.subr.mxu0 0.0
        %6981 = vmatpush1.msra.mxu0 0.0
        %6982 = vmatprep.subr.mxu0 0.0
        %6983 = vmatpush1.msra.mxu0 0.0
        %6984 = vmatprep.subr.mxu0 0.0
        %6985 = vmatpush1.msra.mxu0 0.0
        %6986 = vmatprep.subr.mxu0 0.0
        %6987 = vmatpush1.msra.mxu0 0.0
        %6988 = vmatprep.subr.mxu0 0.0
        %6989 = vmatpush1.msra.mxu0 0.0
        %6990 = vmatprep.subr.mxu0 0.0
        %6991 = vmatpush1.msra.mxu0 0.0
        %6992 = vmatprep.subr.mxu0 0.0
        %6993 = vmatpush1.msra.mxu0 0.0
        %6994 = vmatprep.subr.mxu0 0.0
        %6995 = vmatpush1.msra.mxu0 0.0
        %6996 = vmatprep.subr.mxu0 0.0
        %6997 = vmatpush1.msra.mxu0 0.0
        %6998 = vmatprep.mubr.f32.mxu0 0.0
        %6999 = vmatmul.mubr.f32.gmra.mrb[0].mxu0 %v6932
        %v7000 = vpop.f32.mrb[0].mxu0
        %v7001 = vadd.f32 0.0, %v7000
        %v7002 = vpop.f32.mrb[0].mxu0
        %7003 = vdwg.mxu0
        %7004 = vrot.lane.b32.xlu0 %v6413, 88
        %v7005 = vpop.permute.xlu0 %7004
        %v7008 = vsel %vm1149, %v6927, 0
        %7010 = vmatprep.subr.mxu0 0.0
        %7011 = vmatpush1.msra.mxu0 %v7005
        %7012 = vmatprep.subr.mxu0 0.0
        %7013 = vmatpush1.msra.mxu0 0.0
        %7014 = vmatprep.subr.mxu0 0.0
        %7015 = vmatpush1.msra.mxu0 0.0
        %7016 = vmatprep.subr.mxu0 0.0
        %7017 = vmatpush1.msra.mxu0 0.0
        %7018 = vmatprep.subr.mxu0 0.0
        %7019 = vmatpush1.msra.mxu0 0.0
        %7020 = vmatprep.subr.mxu0 0.0
        %7021 = vmatpush1.msra.mxu0 0.0
        %7022 = vmatprep.subr.mxu0 0.0
        %7023 = vmatpush1.msra.mxu0 0.0
        %7024 = vmatprep.subr.mxu0 0.0
        %7025 = vmatpush1.msra.mxu0 0.0
        %7026 = vmatprep.subr.mxu0 0.0
        %7027 = vmatpush1.msra.mxu0 0.0
        %7028 = vmatprep.subr.mxu0 0.0
        %7029 = vmatpush1.msra.mxu0 0.0
        %7030 = vmatprep.subr.mxu0 0.0
        %7031 = vmatpush1.msra.mxu0 0.0
        %7032 = vmatprep.subr.mxu0 0.0
        %7033 = vmatpush1.msra.mxu0 0.0
        %7034 = vmatprep.subr.mxu0 0.0
        %7035 = vmatpush1.msra.mxu0 0.0
        %7036 = vmatprep.subr.mxu0 0.0
        %7037 = vmatpush1.msra.mxu0 0.0
        %7038 = vmatprep.subr.mxu0 0.0
        %7039 = vmatpush1.msra.mxu0 0.0
        %7040 = vmatprep.subr.mxu0 0.0
        %7041 = vmatpush1.msra.mxu0 0.0
        %7042 = vmatprep.subr.mxu0 0.0
        %7043 = vmatpush1.msra.mxu0 0.0
        %7044 = vmatprep.subr.mxu0 0.0
        %7045 = vmatpush1.msra.mxu0 0.0
        %7046 = vmatprep.subr.mxu0 0.0
        %7047 = vmatpush1.msra.mxu0 0.0
        %7048 = vmatprep.subr.mxu0 0.0
        %7049 = vmatpush1.msra.mxu0 0.0
        %7050 = vmatprep.subr.mxu0 0.0
        %7051 = vmatpush1.msra.mxu0 0.0
        %7052 = vmatprep.subr.mxu0 0.0
        %7053 = vmatpush1.msra.mxu0 0.0
        %7054 = vmatprep.subr.mxu0 0.0
        %7055 = vmatpush1.msra.mxu0 0.0
        %7056 = vmatprep.subr.mxu0 0.0
        %7057 = vmatpush1.msra.mxu0 0.0
        %7058 = vmatprep.subr.mxu0 0.0
        %7059 = vmatpush1.msra.mxu0 0.0
        %7060 = vmatprep.subr.mxu0 0.0
        %7061 = vmatpush1.msra.mxu0 0.0
        %7062 = vmatprep.subr.mxu0 0.0
        %7063 = vmatpush1.msra.mxu0 0.0
        %7064 = vmatprep.subr.mxu0 0.0
        %7065 = vmatpush1.msra.mxu0 0.0
        %7066 = vmatprep.subr.mxu0 0.0
        %7067 = vmatpush1.msra.mxu0 0.0
        %7068 = vmatprep.subr.mxu0 0.0
        %7069 = vmatpush1.msra.mxu0 0.0
        %7070 = vmatprep.subr.mxu0 0.0
        %7071 = vmatpush1.msra.mxu0 0.0
        %7072 = vmatprep.subr.mxu0 0.0
        %7073 = vmatpush1.msra.mxu0 0.0
        %7074 = vmatprep.mubr.f32.mxu0 0.0
        %7075 = vmatmul.mubr.f32.gmra.mrb[0].mxu0 %v7008
        %v7076 = vpop.f32.mrb[0].mxu0
        %v7077 = vadd.f32 0.0, %v7076
        %v7078 = vpop.f32.mrb[0].mxu0
        %7079 = vdwg.mxu0
        %7080 = vrot.lane.b32.xlu0 %v6320, 112
        %v7081 = vpop.permute.xlu0 %7080
        %7082 = vrot.lane.b32.xlu0 %v6408, 112
        %v7083 = vpop.permute.xlu0 %7082
        %v7084 = vsel %vm1149, %v7081, 0
        %v7086 = vsel %vm1149, %v7083, 0
        %7088 = vmatprep.subr.mxu0 0.0
        %7089 = vmatpush1.xpose.msra.mxu0 %v7086
        %7090 = vmatprep.subr.mxu0 0.0
        %7091 = vmatpush1.xpose.msra.mxu0 0.0
        %7092 = vmatprep.subr.mxu0 0.0
        %7093 = vmatpush1.xpose.msra.mxu0 0.0
        %7094 = vmatprep.subr.mxu0 0.0
        %7095 = vmatpush1.xpose.msra.mxu0 0.0
        %7096 = vmatprep.subr.mxu0 0.0
        %7097 = vmatpush1.xpose.msra.mxu0 0.0
        %7098 = vmatprep.subr.mxu0 0.0
        %7099 = vmatpush1.xpose.msra.mxu0 0.0
        %7100 = vmatprep.subr.mxu0 0.0
        %7101 = vmatpush1.xpose.msra.mxu0 0.0
        %7102 = vmatprep.subr.mxu0 0.0
        %7103 = vmatpush1.xpose.msra.mxu0 0.0
        %7104 = vmatprep.subr.mxu0 0.0
        %7105 = vmatpush1.xpose.msra.mxu0 0.0
        %7106 = vmatprep.subr.mxu0 0.0
        %7107 = vmatpush1.xpose.msra.mxu0 0.0
        %7108 = vmatprep.subr.mxu0 0.0
        %7109 = vmatpush1.xpose.msra.mxu0 0.0
        %7110 = vmatprep.subr.mxu0 0.0
        %7111 = vmatpush1.xpose.msra.mxu0 0.0
        %7112 = vmatprep.subr.mxu0 0.0
        %7113 = vmatpush1.xpose.msra.mxu0 0.0
        %7114 = vmatprep.subr.mxu0 0.0
        %7115 = vmatpush1.xpose.msra.mxu0 0.0
        %7116 = vmatprep.subr.mxu0 0.0
        %7117 = vmatpush1.xpose.msra.mxu0 0.0
        %7118 = vmatprep.subr.mxu0 0.0
        %7119 = vmatpush1.xpose.msra.mxu0 0.0
        %7120 = vmatprep.subr.mxu0 0.0
        %7121 = vmatpush1.xpose.msra.mxu0 0.0
        %7122 = vmatprep.subr.mxu0 0.0
        %7123 = vmatpush1.xpose.msra.mxu0 0.0
        %7124 = vmatprep.subr.mxu0 0.0
        %7125 = vmatpush1.xpose.msra.mxu0 0.0
        %7126 = vmatprep.subr.mxu0 0.0
        %7127 = vmatpush1.xpose.msra.mxu0 0.0
        %7128 = vmatprep.subr.mxu0 0.0
        %7129 = vmatpush1.xpose.msra.mxu0 0.0
        %7130 = vmatprep.subr.mxu0 0.0
        %7131 = vmatpush1.xpose.msra.mxu0 0.0
        %7132 = vmatprep.subr.mxu0 0.0
        %7133 = vmatpush1.xpose.msra.mxu0 0.0
        %7134 = vmatprep.subr.mxu0 0.0
        %7135 = vmatpush1.xpose.msra.mxu0 0.0
        %7136 = vmatprep.subr.mxu0 0.0
        %7137 = vmatpush1.xpose.msra.mxu0 0.0
        %7138 = vmatprep.subr.mxu0 0.0
        %7139 = vmatpush1.xpose.msra.mxu0 0.0
        %7140 = vmatprep.subr.mxu0 0.0
        %7141 = vmatpush1.xpose.msra.mxu0 0.0
        %7142 = vmatprep.subr.mxu0 0.0
        %7143 = vmatpush1.xpose.msra.mxu0 0.0
        %7144 = vmatprep.subr.mxu0 0.0
        %7145 = vmatpush1.xpose.msra.mxu0 0.0
        %7146 = vmatprep.subr.mxu0 0.0
        %7147 = vmatpush1.xpose.msra.mxu0 0.0
        %7148 = vmatprep.subr.mxu0 0.0
        %7149 = vmatpush1.xpose.msra.mxu0 0.0
        %7150 = vmatprep.subr.mxu0 0.0
        %7151 = vmatpush1.xpose.msra.mxu0 0.0
        %7152 = vmatprep.mubr.f32.mxu0 0.0
        %7153 = vmatmul.mubr.f32.gmra.mrb[0].mxu0 %v7084
        %v7154 = vpop.f32.mrb[0].mxu0
        %v7155 = vadd.f32 0.0, %v7154
        %v7156 = vpop.f32.mrb[0].mxu0
        %7157 = vdwg.mxu0
        %7158 = vrot.lane.b32.xlu0 %v6325, 112
        %v7159 = vpop.permute.xlu0 %7158
        %7160 = vrot.lane.b32.xlu0 %v6413, 112
        %v7161 = vpop.permute.xlu0 %7160
        %v7162 = vsel %vm1149, %v7159, 0
        %v7164 = vsel %vm1149, %v7161, 0
        %7166 = vmatprep.subr.mxu0 0.0
        %7167 = vmatpush1.xpose.msra.mxu0 %v7164
        %7168 = vmatprep.subr.mxu0 0.0
        %7169 = vmatpush1.xpose.msra.mxu0 0.0
        %7170 = vmatprep.subr.mxu0 0.0
        %7171 = vmatpush1.xpose.msra.mxu0 0.0
        %7172 = vmatprep.subr.mxu0 0.0
        %7173 = vmatpush1.xpose.msra.mxu0 0.0
        %7174 = vmatprep.subr.mxu0 0.0
        %7175 = vmatpush1.xpose.msra.mxu0 0.0
        %7176 = vmatprep.subr.mxu0 0.0
        %7177 = vmatpush1.xpose.msra.mxu0 0.0
        %7178 = vmatprep.subr.mxu0 0.0
        %7179 = vmatpush1.xpose.msra.mxu0 0.0
        %7180 = vmatprep.subr.mxu0 0.0
        %7181 = vmatpush1.xpose.msra.mxu0 0.0
        %7182 = vmatprep.subr.mxu0 0.0
        %7183 = vmatpush1.xpose.msra.mxu0 0.0
        %7184 = vmatprep.subr.mxu0 0.0
        %7185 = vmatpush1.xpose.msra.mxu0 0.0
        %7186 = vmatprep.subr.mxu0 0.0
        %7187 = vmatpush1.xpose.msra.mxu0 0.0
        %7188 = vmatprep.subr.mxu0 0.0
        %7189 = vmatpush1.xpose.msra.mxu0 0.0
        %7190 = vmatprep.subr.mxu0 0.0
        %7191 = vmatpush1.xpose.msra.mxu0 0.0
        %7192 = vmatprep.subr.mxu0 0.0
        %7193 = vmatpush1.xpose.msra.mxu0 0.0
        %7194 = vmatprep.subr.mxu0 0.0
        %7195 = vmatpush1.xpose.msra.mxu0 0.0
        %7196 = vmatprep.subr.mxu0 0.0
        %7197 = vmatpush1.xpose.msra.mxu0 0.0
        %7198 = vmatprep.subr.mxu0 0.0
        %7199 = vmatpush1.xpose.msra.mxu0 0.0
        %7200 = vmatprep.subr.mxu0 0.0
        %7201 = vmatpush1.xpose.msra.mxu0 0.0
        %7202 = vmatprep.subr.mxu0 0.0
        %7203 = vmatpush1.xpose.msra.mxu0 0.0
        %7204 = vmatprep.subr.mxu0 0.0
        %7205 = vmatpush1.xpose.msra.mxu0 0.0
        %7206 = vmatprep.subr.mxu0 0.0
        %7207 = vmatpush1.xpose.msra.mxu0 0.0
        %7208 = vmatprep.subr.mxu0 0.0
        %7209 = vmatpush1.xpose.msra.mxu0 0.0
        %7210 = vmatprep.subr.mxu0 0.0
        %7211 = vmatpush1.xpose.msra.mxu0 0.0
        %7212 = vmatprep.subr.mxu0 0.0
        %7213 = vmatpush1.xpose.msra.mxu0 0.0
        %7214 = vmatprep.subr.mxu0 0.0
        %7215 = vmatpush1.xpose.msra.mxu0 0.0
        %7216 = vmatprep.subr.mxu0 0.0
        %7217 = vmatpush1.xpose.msra.mxu0 0.0
        %7218 = vmatprep.subr.mxu0 0.0
        %7219 = vmatpush1.xpose.msra.mxu0 0.0
        %7220 = vmatprep.subr.mxu0 0.0
        %7221 = vmatpush1.xpose.msra.mxu0 0.0
        %7222 = vmatprep.subr.mxu0 0.0
        %7223 = vmatpush1.xpose.msra.mxu0 0.0
        %7224 = vmatprep.subr.mxu0 0.0
        %7225 = vmatpush1.xpose.msra.mxu0 0.0
        %7226 = vmatprep.subr.mxu0 0.0
        %7227 = vmatpush1.xpose.msra.mxu0 0.0
        %7228 = vmatprep.subr.mxu0 0.0
        %7229 = vmatpush1.xpose.msra.mxu0 0.0
        %7230 = vmatprep.mubr.f32.mxu0 0.0
        %7231 = vmatmul.mubr.f32.gmra.mrb[0].mxu0 %v7162
        %v7232 = vpop.f32.mrb[0].mxu0
        %v7233 = vadd.f32 0.0, %v7232
        %v7234 = vpop.f32.mrb[0].mxu0
        %7235 = vdwg.mxu0
        %v7236 = vmul.f32 %v7155, 0.35355338
        %v7237 = vmul.f32 %v7233, 0.35355338
        %v7238 = vsel %vm991, %v7236, -1e+09
        %v7239 = vsel %vm992, %v7237, -1e+09
        %v7240 = vsel %vm1149, %v7238, -inf
        %7241 = vmax.xlane.f32.xlu0 %v7240
        %v7242 = vpop.xlane.xlu0 %7241
        %v7243 = vsel %vm1149, %v7239, -inf
        %7244 = vmax.xlane.f32.xlu0 %v7243
        %v7245 = vpop.xlane.xlu0 %7244
        %v7246 = vsub.f32 %v7238, %v7242
        %v7247 = vsub.f32 %v7239, %v7245
        %v7248 = vmul.f32 %v7246, 1.442695
        %v7249 = vpow.pop %v7248
        %v7250 = vmul.f32 %v7247, 1.442695
        %v7251 = vpow.pop %v7250
        %v7252 = vsel %vm1149, %v7249, 0.0
        %7253 = vadd.xlane.f32.xlu0 %v7252
        %v7254 = vpop.xlane.xlu0 %7253
        %v7255 = vsel %vm1149, %v7251, 0.0
        %7256 = vadd.xlane.f32.xlu0 %v7255
        %v7257 = vpop.xlane.xlu0 %7256
        %v7258 = vrcp.pop %v7254
        %v7259 = vrcp.pop %v7257
        %v7260 = vmul.f32 %v7249, %v7258
        %v7261 = vmul.f32 %v7251, %v7259
        %7262 = vrot.lane.b32.xlu0 %v6408, 80
        %v7263 = vpop.permute.xlu0 %7262
        %v7266 = vsel %vm1149, %v7260, 0
        %7268 = vmatprep.subr.mxu0 0.0
        %7269 = vmatpush1.msra.mxu0 %v7263
        %7270 = vmatprep.subr.mxu0 0.0
        %7271 = vmatpush1.msra.mxu0 0.0
        %7272 = vmatprep.subr.mxu0 0.0
        %7273 = vmatpush1.msra.mxu0 0.0
        %7274 = vmatprep.subr.mxu0 0.0
        %7275 = vmatpush1.msra.mxu0 0.0
        %7276 = vmatprep.subr.mxu0 0.0
        %7277 = vmatpush1.msra.mxu0 0.0
        %7278 = vmatprep.subr.mxu0 0.0
        %7279 = vmatpush1.msra.mxu0 0.0
        %7280 = vmatprep.subr.mxu0 0.0
        %7281 = vmatpush1.msra.mxu0 0.0
        %7282 = vmatprep.subr.mxu0 0.0
        %7283 = vmatpush1.msra.mxu0 0.0
        %7284 = vmatprep.subr.mxu0 0.0
        %7285 = vmatpush1.msra.mxu0 0.0
        %7286 = vmatprep.subr.mxu0 0.0
        %7287 = vmatpush1.msra.mxu0 0.0
        %7288 = vmatprep.subr.mxu0 0.0
        %7289 = vmatpush1.msra.mxu0 0.0
        %7290 = vmatprep.subr.mxu0 0.0
        %7291 = vmatpush1.msra.mxu0 0.0
        %7292 = vmatprep.subr.mxu0 0.0
        %7293 = vmatpush1.msra.mxu0 0.0
        %7294 = vmatprep.subr.mxu0 0.0
        %7295 = vmatpush1.msra.mxu0 0.0
        %7296 = vmatprep.subr.mxu0 0.0
        %7297 = vmatpush1.msra.mxu0 0.0
        %7298 = vmatprep.subr.mxu0 0.0
        %7299 = vmatpush1.msra.mxu0 0.0
        %7300 = vmatprep.subr.mxu0 0.0
        %7301 = vmatpush1.msra.mxu0 0.0
        %7302 = vmatprep.subr.mxu0 0.0
        %7303 = vmatpush1.msra.mxu0 0.0
        %7304 = vmatprep.subr.mxu0 0.0
        %7305 = vmatpush1.msra.mxu0 0.0
        %7306 = vmatprep.subr.mxu0 0.0
        %7307 = vmatpush1.msra.mxu0 0.0
        %7308 = vmatprep.subr.mxu0 0.0
        %7309 = vmatpush1.msra.mxu0 0.0
        %7310 = vmatprep.subr.mxu0 0.0
        %7311 = vmatpush1.msra.mxu0 0.0
        %7312 = vmatprep.subr.mxu0 0.0
        %7313 = vmatpush1.msra.mxu0 0.0
        %7314 = vmatprep.subr.mxu0 0.0
        %7315 = vmatpush1.msra.mxu0 0.0
        %7316 = vmatprep.subr.mxu0 0.0
        %7317 = vmatpush1.msra.mxu0 0.0
        %7318 = vmatprep.subr.mxu0 0.0
        %7319 = vmatpush1.msra.mxu0 0.0
        %7320 = vmatprep.subr.mxu0 0.0
        %7321 = vmatpush1.msra.mxu0 0.0
        %7322 = vmatprep.subr.mxu0 0.0
        %7323 = vmatpush1.msra.mxu0 0.0
        %7324 = vmatprep.subr.mxu0 0.0
        %7325 = vmatpush1.msra.mxu0 0.0
        %7326 = vmatprep.subr.mxu0 0.0
        %7327 = vmatpush1.msra.mxu0 0.0
        %7328 = vmatprep.subr.mxu0 0.0
        %7329 = vmatpush1.msra.mxu0 0.0
        %7330 = vmatprep.subr.mxu0 0.0
        %7331 = vmatpush1.msra.mxu0 0.0
        %7332 = vmatprep.mubr.f32.mxu0 0.0
        %7333 = vmatmul.mubr.f32.gmra.mrb[0].mxu0 %v7266
        %v7334 = vpop.f32.mrb[0].mxu0
        %v7335 = vadd.f32 0.0, %v7334
        %v7336 = vpop.f32.mrb[0].mxu0
        %7337 = vdwg.mxu0
        %7338 = vrot.lane.b32.xlu0 %v6413, 80
        %v7339 = vpop.permute.xlu0 %7338
        %v7342 = vsel %vm1149, %v7261, 0
        %7344 = vmatprep.subr.mxu0 0.0
        %7345 = vmatpush1.msra.mxu0 %v7339
        %7346 = vmatprep.subr.mxu0 0.0
        %7347 = vmatpush1.msra.mxu0 0.0
        %7348 = vmatprep.subr.mxu0 0.0
        %7349 = vmatpush1.msra.mxu0 0.0
        %7350 = vmatprep.subr.mxu0 0.0
        %7351 = vmatpush1.msra.mxu0 0.0
        %7352 = vmatprep.subr.mxu0 0.0
        %7353 = vmatpush1.msra.mxu0 0.0
        %7354 = vmatprep.subr.mxu0 0.0
        %7355 = vmatpush1.msra.mxu0 0.0
        %7356 = vmatprep.subr.mxu0 0.0
        %7357 = vmatpush1.msra.mxu0 0.0
        %7358 = vmatprep.subr.mxu0 0.0
        %7359 = vmatpush1.msra.mxu0 0.0
        %7360 = vmatprep.subr.mxu0 0.0
        %7361 = vmatpush1.msra.mxu0 0.0
        %7362 = vmatprep.subr.mxu0 0.0
        %7363 = vmatpush1.msra.mxu0 0.0
        %7364 = vmatprep.subr.mxu0 0.0
        %7365 = vmatpush1.msra.mxu0 0.0
        %7366 = vmatprep.subr.mxu0 0.0
        %7367 = vmatpush1.msra.mxu0 0.0
        %7368 = vmatprep.subr.mxu0 0.0
        %7369 = vmatpush1.msra.mxu0 0.0
        %7370 = vmatprep.subr.mxu0 0.0
        %7371 = vmatpush1.msra.mxu0 0.0
        %7372 = vmatprep.subr.mxu0 0.0
        %7373 = vmatpush1.msra.mxu0 0.0
        %7374 = vmatprep.subr.mxu0 0.0
        %7375 = vmatpush1.msra.mxu0 0.0
        %7376 = vmatprep.subr.mxu0 0.0
        %7377 = vmatpush1.msra.mxu0 0.0
        %7378 = vmatprep.subr.mxu0 0.0
        %7379 = vmatpush1.msra.mxu0 0.0
        %7380 = vmatprep.subr.mxu0 0.0
        %7381 = vmatpush1.msra.mxu0 0.0
        %7382 = vmatprep.subr.mxu0 0.0
        %7383 = vmatpush1.msra.mxu0 0.0
        %7384 = vmatprep.subr.mxu0 0.0
        %7385 = vmatpush1.msra.mxu0 0.0
        %7386 = vmatprep.subr.mxu0 0.0
        %7387 = vmatpush1.msra.mxu0 0.0
        %7388 = vmatprep.subr.mxu0 0.0
        %7389 = vmatpush1.msra.mxu0 0.0
        %7390 = vmatprep.subr.mxu0 0.0
        %7391 = vmatpush1.msra.mxu0 0.0
        %7392 = vmatprep.subr.mxu0 0.0
        %7393 = vmatpush1.msra.mxu0 0.0
        %7394 = vmatprep.subr.mxu0 0.0
        %7395 = vmatpush1.msra.mxu0 0.0
        %7396 = vmatprep.subr.mxu0 0.0
        %7397 = vmatpush1.msra.mxu0 0.0
        %7398 = vmatprep.subr.mxu0 0.0
        %7399 = vmatpush1.msra.mxu0 0.0
        %7400 = vmatprep.subr.mxu0 0.0
        %7401 = vmatpush1.msra.mxu0 0.0
        %7402 = vmatprep.subr.mxu0 0.0
        %7403 = vmatpush1.msra.mxu0 0.0
        %7404 = vmatprep.subr.mxu0 0.0
        %7405 = vmatpush1.msra.mxu0 0.0
        %7406 = vmatprep.subr.mxu0 0.0
        %7407 = vmatpush1.msra.mxu0 0.0
        %7408 = vmatprep.mubr.f32.mxu0 0.0
        %7409 = vmatmul.mubr.f32.gmra.mrb[0].mxu0 %v7342
        %v7410 = vpop.f32.mrb[0].mxu0
        %v7411 = vadd.f32 0.0, %v7410
        %v7412 = vpop.f32.mrb[0].mxu0
        %7413 = vdwg.mxu0
        %7414 = vrot.lane.b32.xlu0 %v6320, 104
        %v7415 = vpop.permute.xlu0 %7414
        %7416 = vrot.lane.b32.xlu0 %v6408, 104
        %v7417 = vpop.permute.xlu0 %7416
        %v7418 = vsel %vm1149, %v7415, 0
        %v7420 = vsel %vm1149, %v7417, 0
        %7422 = vmatprep.subr.mxu0 0.0
        %7423 = vmatpush1.xpose.msra.mxu0 %v7420
        %7424 = vmatprep.subr.mxu0 0.0
        %7425 = vmatpush1.xpose.msra.mxu0 0.0
        %7426 = vmatprep.subr.mxu0 0.0
        %7427 = vmatpush1.xpose.msra.mxu0 0.0
        %7428 = vmatprep.subr.mxu0 0.0
        %7429 = vmatpush1.xpose.msra.mxu0 0.0
        %7430 = vmatprep.subr.mxu0 0.0
        %7431 = vmatpush1.xpose.msra.mxu0 0.0
        %7432 = vmatprep.subr.mxu0 0.0
        %7433 = vmatpush1.xpose.msra.mxu0 0.0
        %7434 = vmatprep.subr.mxu0 0.0
        %7435 = vmatpush1.xpose.msra.mxu0 0.0
        %7436 = vmatprep.subr.mxu0 0.0
        %7437 = vmatpush1.xpose.msra.mxu0 0.0
        %7438 = vmatprep.subr.mxu0 0.0
        %7439 = vmatpush1.xpose.msra.mxu0 0.0
        %7440 = vmatprep.subr.mxu0 0.0
        %7441 = vmatpush1.xpose.msra.mxu0 0.0
        %7442 = vmatprep.subr.mxu0 0.0
        %7443 = vmatpush1.xpose.msra.mxu0 0.0
        %7444 = vmatprep.subr.mxu0 0.0
        %7445 = vmatpush1.xpose.msra.mxu0 0.0
        %7446 = vmatprep.subr.mxu0 0.0
        %7447 = vmatpush1.xpose.msra.mxu0 0.0
        %7448 = vmatprep.subr.mxu0 0.0
        %7449 = vmatpush1.xpose.msra.mxu0 0.0
        %7450 = vmatprep.subr.mxu0 0.0
        %7451 = vmatpush1.xpose.msra.mxu0 0.0
        %7452 = vmatprep.subr.mxu0 0.0
        %7453 = vmatpush1.xpose.msra.mxu0 0.0
        %7454 = vmatprep.subr.mxu0 0.0
        %7455 = vmatpush1.xpose.msra.mxu0 0.0
        %7456 = vmatprep.subr.mxu0 0.0
        %7457 = vmatpush1.xpose.msra.mxu0 0.0
        %7458 = vmatprep.subr.mxu0 0.0
        %7459 = vmatpush1.xpose.msra.mxu0 0.0
        %7460 = vmatprep.subr.mxu0 0.0
        %7461 = vmatpush1.xpose.msra.mxu0 0.0
        %7462 = vmatprep.subr.mxu0 0.0
        %7463 = vmatpush1.xpose.msra.mxu0 0.0
        %7464 = vmatprep.subr.mxu0 0.0
        %7465 = vmatpush1.xpose.msra.mxu0 0.0
        %7466 = vmatprep.subr.mxu0 0.0
        %7467 = vmatpush1.xpose.msra.mxu0 0.0
        %7468 = vmatprep.subr.mxu0 0.0
        %7469 = vmatpush1.xpose.msra.mxu0 0.0
        %7470 = vmatprep.subr.mxu0 0.0
        %7471 = vmatpush1.xpose.msra.mxu0 0.0
        %7472 = vmatprep.subr.mxu0 0.0
        %7473 = vmatpush1.xpose.msra.mxu0 0.0
        %7474 = vmatprep.subr.mxu0 0.0
        %7475 = vmatpush1.xpose.msra.mxu0 0.0
        %7476 = vmatprep.subr.mxu0 0.0
        %7477 = vmatpush1.xpose.msra.mxu0 0.0
        %7478 = vmatprep.subr.mxu0 0.0
        %7479 = vmatpush1.xpose.msra.mxu0 0.0
        %7480 = vmatprep.subr.mxu0 0.0
        %7481 = vmatpush1.xpose.msra.mxu0 0.0
        %7482 = vmatprep.subr.mxu0 0.0
        %7483 = vmatpush1.xpose.msra.mxu0 0.0
        %7484 = vmatprep.subr.mxu0 0.0
        %7485 = vmatpush1.xpose.msra.mxu0 0.0
        %7486 = vmatprep.mubr.f32.mxu0 0.0
        %7487 = vmatmul.mubr.f32.gmra.mrb[0].mxu0 %v7418
        %v7488 = vpop.f32.mrb[0].mxu0
        %v7489 = vadd.f32 0.0, %v7488
        %v7490 = vpop.f32.mrb[0].mxu0
        %7491 = vdwg.mxu0
        %7492 = vrot.lane.b32.xlu0 %v6325, 104
        %v7493 = vpop.permute.xlu0 %7492
        %7494 = vrot.lane.b32.xlu0 %v6413, 104
        %v7495 = vpop.permute.xlu0 %7494
        %v7496 = vsel %vm1149, %v7493, 0
        %v7498 = vsel %vm1149, %v7495, 0
        %7500 = vmatprep.subr.mxu0 0.0
        %7501 = vmatpush1.xpose.msra.mxu0 %v7498
        %7502 = vmatprep.subr.mxu0 0.0
        %7503 = vmatpush1.xpose.msra.mxu0 0.0
        %7504 = vmatprep.subr.mxu0 0.0
        %7505 = vmatpush1.xpose.msra.mxu0 0.0
        %7506 = vmatprep.subr.mxu0 0.0
        %7507 = vmatpush1.xpose.msra.mxu0 0.0
        %7508 = vmatprep.subr.mxu0 0.0
        %7509 = vmatpush1.xpose.msra.mxu0 0.0
        %7510 = vmatprep.subr.mxu0 0.0
        %7511 = vmatpush1.xpose.msra.mxu0 0.0
        %7512 = vmatprep.subr.mxu0 0.0
        %7513 = vmatpush1.xpose.msra.mxu0 0.0
        %7514 = vmatprep.subr.mxu0 0.0
        %7515 = vmatpush1.xpose.msra.mxu0 0.0
        %7516 = vmatprep.subr.mxu0 0.0
        %7517 = vmatpush1.xpose.msra.mxu0 0.0
        %7518 = vmatprep.subr.mxu0 0.0
        %7519 = vmatpush1.xpose.msra.mxu0 0.0
        %7520 = vmatprep.subr.mxu0 0.0
        %7521 = vmatpush1.xpose.msra.mxu0 0.0
        %7522 = vmatprep.subr.mxu0 0.0
        %7523 = vmatpush1.xpose.msra.mxu0 0.0
        %7524 = vmatprep.subr.mxu0 0.0
        %7525 = vmatpush1.xpose.msra.mxu0 0.0
        %7526 = vmatprep.subr.mxu0 0.0
        %7527 = vmatpush1.xpose.msra.mxu0 0.0
        %7528 = vmatprep.subr.mxu0 0.0
        %7529 = vmatpush1.xpose.msra.mxu0 0.0
        %7530 = vmatprep.subr.mxu0 0.0
        %7531 = vmatpush1.xpose.msra.mxu0 0.0
        %7532 = vmatprep.subr.mxu0 0.0
        %7533 = vmatpush1.xpose.msra.mxu0 0.0
        %7534 = vmatprep.subr.mxu0 0.0
        %7535 = vmatpush1.xpose.msra.mxu0 0.0
        %7536 = vmatprep.subr.mxu0 0.0
        %7537 = vmatpush1.xpose.msra.mxu0 0.0
        %7538 = vmatprep.subr.mxu0 0.0
        %7539 = vmatpush1.xpose.msra.mxu0 0.0
        %7540 = vmatprep.subr.mxu0 0.0
        %7541 = vmatpush1.xpose.msra.mxu0 0.0
        %7542 = vmatprep.subr.mxu0 0.0
        %7543 = vmatpush1.xpose.msra.mxu0 0.0
        %7544 = vmatprep.subr.mxu0 0.0
        %7545 = vmatpush1.xpose.msra.mxu0 0.0
        %7546 = vmatprep.subr.mxu0 0.0
        %7547 = vmatpush1.xpose.msra.mxu0 0.0
        %7548 = vmatprep.subr.mxu0 0.0
        %7549 = vmatpush1.xpose.msra.mxu0 0.0
        %7550 = vmatprep.subr.mxu0 0.0
        %7551 = vmatpush1.xpose.msra.mxu0 0.0
        %7552 = vmatprep.subr.mxu0 0.0
        %7553 = vmatpush1.xpose.msra.mxu0 0.0
        %7554 = vmatprep.subr.mxu0 0.0
        %7555 = vmatpush1.xpose.msra.mxu0 0.0
        %7556 = vmatprep.subr.mxu0 0.0
        %7557 = vmatpush1.xpose.msra.mxu0 0.0
        %7558 = vmatprep.subr.mxu0 0.0
        %7559 = vmatpush1.xpose.msra.mxu0 0.0
        %7560 = vmatprep.subr.mxu0 0.0
        %7561 = vmatpush1.xpose.msra.mxu0 0.0
        %7562 = vmatprep.subr.mxu0 0.0
        %7563 = vmatpush1.xpose.msra.mxu0 0.0
        %7564 = vmatprep.mubr.f32.mxu0 0.0
        %7565 = vmatmul.mubr.f32.gmra.mrb[0].mxu0 %v7496
        %v7566 = vpop.f32.mrb[0].mxu0
        %v7567 = vadd.f32 0.0, %v7566
        %v7568 = vpop.f32.mrb[0].mxu0
        %7569 = vdwg.mxu0
        %v7570 = vmul.f32 %v7489, 0.35355338
        %v7571 = vmul.f32 %v7567, 0.35355338
        %v7572 = vsel %vm991, %v7570, -1e+09
        %v7573 = vsel %vm992, %v7571, -1e+09
        %v7574 = vsel %vm1149, %v7572, -inf
        %7575 = vmax.xlane.f32.xlu0 %v7574
        %v7576 = vpop.xlane.xlu0 %7575
        %v7577 = vsel %vm1149, %v7573, -inf
        %7578 = vmax.xlane.f32.xlu0 %v7577
        %v7579 = vpop.xlane.xlu0 %7578
        %v7580 = vsub.f32 %v7572, %v7576
        %v7581 = vsub.f32 %v7573, %v7579
        %v7582 = vmul.f32 %v7580, 1.442695
        %v7583 = vpow.pop %v7582
        %v7584 = vmul.f32 %v7581, 1.442695
        %v7585 = vpow.pop %v7584
        %v7586 = vsel %vm1149, %v7583, 0.0
        %7587 = vadd.xlane.f32.xlu0 %v7586
        %v7588 = vpop.xlane.xlu0 %7587
        %v7589 = vsel %vm1149, %v7585, 0.0
        %7590 = vadd.xlane.f32.xlu0 %v7589
        %v7591 = vpop.xlane.xlu0 %7590
        %v7592 = vrcp.pop %v7588
        %v7593 = vrcp.pop %v7591
        %v7594 = vmul.f32 %v7583, %v7592
        %v7595 = vmul.f32 %v7585, %v7593
        %7596 = vrot.lane.b32.xlu0 %v6408, 72
        %v7597 = vpop.permute.xlu0 %7596
        %v7600 = vsel %vm1149, %v7594, 0
        %7602 = vmatprep.subr.mxu0 0.0
        %7603 = vmatpush1.msra.mxu0 %v7597
        %7604 = vmatprep.subr.mxu0 0.0
        %7605 = vmatpush1.msra.mxu0 0.0
        %7606 = vmatprep.subr.mxu0 0.0
        %7607 = vmatpush1.msra.mxu0 0.0
        %7608 = vmatprep.subr.mxu0 0.0
        %7609 = vmatpush1.msra.mxu0 0.0
        %7610 = vmatprep.subr.mxu0 0.0
        %7611 = vmatpush1.msra.mxu0 0.0
        %7612 = vmatprep.subr.mxu0 0.0
        %7613 = vmatpush1.msra.mxu0 0.0
        %7614 = vmatprep.subr.mxu0 0.0
        %7615 = vmatpush1.msra.mxu0 0.0
        %7616 = vmatprep.subr.mxu0 0.0
        %7617 = vmatpush1.msra.mxu0 0.0
        %7618 = vmatprep.subr.mxu0 0.0
        %7619 = vmatpush1.msra.mxu0 0.0
        %7620 = vmatprep.subr.mxu0 0.0
        %7621 = vmatpush1.msra.mxu0 0.0
        %7622 = vmatprep.subr.mxu0 0.0
        %7623 = vmatpush1.msra.mxu0 0.0
        %7624 = vmatprep.subr.mxu0 0.0
        %7625 = vmatpush1.msra.mxu0 0.0
        %7626 = vmatprep.subr.mxu0 0.0
        %7627 = vmatpush1.msra.mxu0 0.0
        %7628 = vmatprep.subr.mxu0 0.0
        %7629 = vmatpush1.msra.mxu0 0.0
        %7630 = vmatprep.subr.mxu0 0.0
        %7631 = vmatpush1.msra.mxu0 0.0
        %7632 = vmatprep.subr.mxu0 0.0
        %7633 = vmatpush1.msra.mxu0 0.0
        %7634 = vmatprep.subr.mxu0 0.0
        %7635 = vmatpush1.msra.mxu0 0.0
        %7636 = vmatprep.subr.mxu0 0.0
        %7637 = vmatpush1.msra.mxu0 0.0
        %7638 = vmatprep.subr.mxu0 0.0
        %7639 = vmatpush1.msra.mxu0 0.0
        %7640 = vmatprep.subr.mxu0 0.0
        %7641 = vmatpush1.msra.mxu0 0.0
        %7642 = vmatprep.subr.mxu0 0.0
        %7643 = vmatpush1.msra.mxu0 0.0
        %7644 = vmatprep.subr.mxu0 0.0
        %7645 = vmatpush1.msra.mxu0 0.0
        %7646 = vmatprep.subr.mxu0 0.0
        %7647 = vmatpush1.msra.mxu0 0.0
        %7648 = vmatprep.subr.mxu0 0.0
        %7649 = vmatpush1.msra.mxu0 0.0
        %7650 = vmatprep.subr.mxu0 0.0
        %7651 = vmatpush1.msra.mxu0 0.0
        %7652 = vmatprep.subr.mxu0 0.0
        %7653 = vmatpush1.msra.mxu0 0.0
        %7654 = vmatprep.subr.mxu0 0.0
        %7655 = vmatpush1.msra.mxu0 0.0
        %7656 = vmatprep.subr.mxu0 0.0
        %7657 = vmatpush1.msra.mxu0 0.0
        %7658 = vmatprep.subr.mxu0 0.0
        %7659 = vmatpush1.msra.mxu0 0.0
        %7660 = vmatprep.subr.mxu0 0.0
        %7661 = vmatpush1.msra.mxu0 0.0
        %7662 = vmatprep.subr.mxu0 0.0
        %7663 = vmatpush1.msra.mxu0 0.0
        %7664 = vmatprep.subr.mxu0 0.0
        %7665 = vmatpush1.msra.mxu0 0.0
        %7666 = vmatprep.mubr.f32.mxu0 0.0
        %7667 = vmatmul.mubr.f32.gmra.mrb[0].mxu0 %v7600
        %v7668 = vpop.f32.mrb[0].mxu0
        %v7669 = vadd.f32 0.0, %v7668
        %v7670 = vpop.f32.mrb[0].mxu0
        %7671 = vdwg.mxu0
        %7672 = vrot.lane.b32.xlu0 %v6413, 72
        %v7673 = vpop.permute.xlu0 %7672
        %v7676 = vsel %vm1149, %v7595, 0
        %7678 = vmatprep.subr.mxu0 0.0
        %7679 = vmatpush1.msra.mxu0 %v7673
        %7680 = vmatprep.subr.mxu0 0.0
        %7681 = vmatpush1.msra.mxu0 0.0
        %7682 = vmatprep.subr.mxu0 0.0
        %7683 = vmatpush1.msra.mxu0 0.0
        %7684 = vmatprep.subr.mxu0 0.0
        %7685 = vmatpush1.msra.mxu0 0.0
        %7686 = vmatprep.subr.mxu0 0.0
        %7687 = vmatpush1.msra.mxu0 0.0
        %7688 = vmatprep.subr.mxu0 0.0
        %7689 = vmatpush1.msra.mxu0 0.0
        %7690 = vmatprep.subr.mxu0 0.0
        %7691 = vmatpush1.msra.mxu0 0.0
        %7692 = vmatprep.subr.mxu0 0.0
        %7693 = vmatpush1.msra.mxu0 0.0
        %7694 = vmatprep.subr.mxu0 0.0
        %7695 = vmatpush1.msra.mxu0 0.0
        %7696 = vmatprep.subr.mxu0 0.0
        %7697 = vmatpush1.msra.mxu0 0.0
        %7698 = vmatprep.subr.mxu0 0.0
        %7699 = vmatpush1.msra.mxu0 0.0
        %7700 = vmatprep.subr.mxu0 0.0
        %7701 = vmatpush1.msra.mxu0 0.0
        %7702 = vmatprep.subr.mxu0 0.0
        %7703 = vmatpush1.msra.mxu0 0.0
        %7704 = vmatprep.subr.mxu0 0.0
        %7705 = vmatpush1.msra.mxu0 0.0
        %7706 = vmatprep.subr.mxu0 0.0
        %7707 = vmatpush1.msra.mxu0 0.0
        %7708 = vmatprep.subr.mxu0 0.0
        %7709 = vmatpush1.msra.mxu0 0.0
        %7710 = vmatprep.subr.mxu0 0.0
        %7711 = vmatpush1.msra.mxu0 0.0
        %7712 = vmatprep.subr.mxu0 0.0
        %7713 = vmatpush1.msra.mxu0 0.0
        %7714 = vmatprep.subr.mxu0 0.0
        %7715 = vmatpush1.msra.mxu0 0.0
        %7716 = vmatprep.subr.mxu0 0.0
        %7717 = vmatpush1.msra.mxu0 0.0
        %7718 = vmatprep.subr.mxu0 0.0
        %7719 = vmatpush1.msra.mxu0 0.0
        %7720 = vmatprep.subr.mxu0 0.0
        %7721 = vmatpush1.msra.mxu0 0.0
        %7722 = vmatprep.subr.mxu0 0.0
        %7723 = vmatpush1.msra.mxu0 0.0
        %7724 = vmatprep.subr.mxu0 0.0
        %7725 = vmatpush1.msra.mxu0 0.0
        %7726 = vmatprep.subr.mxu0 0.0
        %7727 = vmatpush1.msra.mxu0 0.0
        %7728 = vmatprep.subr.mxu0 0.0
        %7729 = vmatpush1.msra.mxu0 0.0
        %7730 = vmatprep.subr.mxu0 0.0
        %7731 = vmatpush1.msra.mxu0 0.0
        %7732 = vmatprep.subr.mxu0 0.0
        %7733 = vmatpush1.msra.mxu0 0.0
        %7734 = vmatprep.subr.mxu0 0.0
        %7735 = vmatpush1.msra.mxu0 0.0
        %7736 = vmatprep.subr.mxu0 0.0
        %7737 = vmatpush1.msra.mxu0 0.0
        %7738 = vmatprep.subr.mxu0 0.0
        %7739 = vmatpush1.msra.mxu0 0.0
        %7740 = vmatprep.subr.mxu0 0.0
        %7741 = vmatpush1.msra.mxu0 0.0
        %7742 = vmatprep.mubr.f32.mxu0 0.0
        %7743 = vmatmul.mubr.f32.gmra.mrb[0].mxu0 %v7676
        %v7744 = vpop.f32.mrb[0].mxu0
        %v7745 = vadd.f32 0.0, %v7744
        %v7746 = vpop.f32.mrb[0].mxu0
        %7747 = vdwg.mxu0
        %7750 = vrot.lane.b32.xlu0 %v7001, 8
        %v7751 = vpop.permute.xlu0 %7750
        %7752 = vrot.lane.b32.xlu0 %v7077, 8
        %v7753 = vpop.permute.xlu0 %7752
        %7758 = vrot.lane.b32.xlu0 %v7335, 16
        %v7759 = vpop.permute.xlu0 %7758
        %7760 = vrot.lane.b32.xlu0 %v7411, 16
        %v7761 = vpop.permute.xlu0 %7760
        %7766 = vrot.lane.b32.xlu0 %v7669, 24
        %v7767 = vpop.permute.xlu0 %7766
        %7768 = vrot.lane.b32.xlu0 %v7745, 24
        %v7769 = vpop.permute.xlu0 %7768
        %v7772 = vsel %vm1149, %v6667, %v7751
        %v7773 = vsel %vm1149, %v6743, %v7753
        %v7774 = vsel %vm2507, %v7772, %v7759
        %v7775 = vsel %vm2507, %v7773, %v7761
        %v7776 = vsel %vm2510, %v7774, %v7767
        %v7777 = vsel %vm2510, %v7775, %v7769
        %s7778 = scalar_lea.vmem %s958, 32
        %v7779 = vld [vmem:[%s7778] sm:$0xff]
        %v7780 = vld [vmem:[%s7778 + $0x8] sm:$0xff]
        %v7781 = vld [vmem:[%s7778 + $0x10] sm:$0xff]
        %v7782 = vld [vmem:[%s7778 + $0x18] sm:$0xff]
        %s7783 = scalar_lea.vmem %s962, 1
        %v7784 = vld [vmem:[%s7783] sm:$0x1]
        %v7786 = vlaneseq
        %v7787 = vshrl.u32 %v7786, 7
        %v7788 = vsub.s32 0, %v7787
        %v7789 = vrot.slane %v7784, %v7788
        %v7792 = vsel %vm995, %v7776, 0
        %v7795 = vsel %vm995, %v7777, 0
        %7797 = vmatprep.subr.mxu0 0.0
        %7798 = vmatpush1.msra.mxu0 %v7779
        %7799 = vmatprep.subr.mxu0 0.0
        %7800 = vmatpush1.msra.mxu0 %v7780
        %7801 = vmatprep.subr.mxu0 0.0
        %7802 = vmatpush1.msra.mxu0 %v7781
        %7803 = vmatprep.subr.mxu0 0.0
        %7804 = vmatpush1.msra.mxu0 %v7782
        %7805 = vmatprep.subr.mxu0 0.0
        %7806 = vmatpush1.msra.mxu0 0.0
        %7807 = vmatprep.subr.mxu0 0.0
        %7808 = vmatpush1.msra.mxu0 0.0
        %7809 = vmatprep.subr.mxu0 0.0
        %7810 = vmatpush1.msra.mxu0 0.0
        %7811 = vmatprep.subr.mxu0 0.0
        %7812 = vmatpush1.msra.mxu0 0.0
        %7813 = vmatprep.subr.mxu0 0.0
        %7814 = vmatpush1.msra.mxu0 0.0
        %7815 = vmatprep.subr.mxu0 0.0
        %7816 = vmatpush1.msra.mxu0 0.0
        %7817 = vmatprep.subr.mxu0 0.0
        %7818 = vmatpush1.msra.mxu0 0.0
        %7819 = vmatprep.subr.mxu0 0.0
        %7820 = vmatpush1.msra.mxu0 0.0
        %7821 = vmatprep.subr.mxu0 0.0
        %7822 = vmatpush1.msra.mxu0 0.0
        %7823 = vmatprep.subr.mxu0 0.0
        %7824 = vmatpush1.msra.mxu0 0.0
        %7825 = vmatprep.subr.mxu0 0.0
        %7826 = vmatpush1.msra.mxu0 0.0
        %7827 = vmatprep.subr.mxu0 0.0
        %7828 = vmatpush1.msra.mxu0 0.0
        %7829 = vmatprep.subr.mxu0 0.0
        %7830 = vmatpush1.msra.mxu0 0.0
        %7831 = vmatprep.subr.mxu0 0.0
        %7832 = vmatpush1.msra.mxu0 0.0
        %7833 = vmatprep.subr.mxu0 0.0
        %7834 = vmatpush1.msra.mxu0 0.0
        %7835 = vmatprep.subr.mxu0 0.0
        %7836 = vmatpush1.msra.mxu0 0.0
        %7837 = vmatprep.subr.mxu0 0.0
        %7838 = vmatpush1.msra.mxu0 0.0
        %7839 = vmatprep.subr.mxu0 0.0
        %7840 = vmatpush1.msra.mxu0 0.0
        %7841 = vmatprep.subr.mxu0 0.0
        %7842 = vmatpush1.msra.mxu0 0.0
        %7843 = vmatprep.subr.mxu0 0.0
        %7844 = vmatpush1.msra.mxu0 0.0
        %7845 = vmatprep.subr.mxu0 0.0
        %7846 = vmatpush1.msra.mxu0 0.0
        %7847 = vmatprep.subr.mxu0 0.0
        %7848 = vmatpush1.msra.mxu0 0.0
        %7849 = vmatprep.subr.mxu0 0.0
        %7850 = vmatpush1.msra.mxu0 0.0
        %7851 = vmatprep.subr.mxu0 0.0
        %7852 = vmatpush1.msra.mxu0 0.0
        %7853 = vmatprep.subr.mxu0 0.0
        %7854 = vmatpush1.msra.mxu0 0.0
        %7855 = vmatprep.subr.mxu0 0.0
        %7856 = vmatpush1.msra.mxu0 0.0
        %7857 = vmatprep.subr.mxu0 0.0
        %7858 = vmatpush1.msra.mxu0 0.0
        %7859 = vmatprep.subr.mxu0 0.0
        %7860 = vmatpush1.msra.mxu0 0.0
        %7861 = vmatprep.mubr.f32.mxu0 0.0
        %7862 = vmatmul.mubr.f32.gmra.mrb[0].mxu0 %v7792
        %v7863 = vpop.f32.mrb[0].mxu0
        %v7864 = vadd.f32 %v7789, %v7863
        %v7865 = vpop.f32.mrb[0].mxu0
        %7866 = vmatprep.mubr.f32.mxu0 0.0
        %7867 = vmatmul.mubr.f32.gmra.mrb[0].mxu0 %v7795
        %v7868 = vpop.f32.mrb[0].mxu0
        %v7869 = vadd.f32 %v7789, %v7868
        %v7870 = vpop.f32.mrb[0].mxu0
        %7871 = vdwg.mxu0
        %v7872 = vadd.f32 %v6172, %v7864
        %v7873 = vadd.f32 %v6173, %v7869
        %s7874 = scalar_lea.vmem %s913, 5
        %v7875 = vld [vmem:[%s7874] sm:$0x1]
        %s7876 = scalar_lea.vmem %s917, 5
        %v7877 = vld [vmem:[%s7876] sm:$0x1]
        %v7878 = vsel %vm995, %v7872, 0.0
        %7879 = vadd.xlane.f32.xlu0 %v7878
        %v7880 = vpop.xlane.xlu0 %7879
        %v7881 = vsel %vm995, %v7873, 0.0
        %7882 = vadd.xlane.f32.xlu0 %v7881
        %v7883 = vpop.xlane.xlu0 %7882
        %v7884 = vmul.f32 %v7880, %v1002
        %v7885 = vmul.f32 %v7883, %v1002
        %v7886 = vsub.f32 %v7872, %v7884
        %v7887 = vsub.f32 %v7873, %v7885
        %v7888 = vmul.f32 %v7886, %v7886
        %v7889 = vmul.f32 %v7887, %v7887
        %v7890 = vsel %vm995, %v7888, 0.0
        %7891 = vadd.xlane.f32.xlu0 %v7890
        %v7892 = vpop.xlane.xlu0 %7891
        %v7893 = vsel %vm995, %v7889, 0.0
        %7894 = vadd.xlane.f32.xlu0 %v7893
        %v7895 = vpop.xlane.xlu0 %7894
        %v7896 = vmul.f32 %v7892, %v1015
        %v7897 = vmul.f32 %v7895, %v1015
        %v7898 = vrsqrt.pop %v7896
        %v7899 = vmul.f32 %v7896, %v7898
        %vm7900 = vcmp.eq.f32.partialorder %v7896, inf
        %v7901 = vsel %vm7900, %v7896, %v7899
        %vm7902 = vcmp.eq.f32.partialorder %v7896, 0.0
        %v7903 = vand.u32 %v7896, 2147483648
        %v7904 = vsel %vm7902, %v7903, %v7901
        %v7905 = vrsqrt.pop %v7897
        %v7906 = vmul.f32 %v7897, %v7905
        %vm7907 = vcmp.eq.f32.partialorder %v7897, inf
        %v7908 = vsel %vm7907, %v7897, %v7906
        %vm7909 = vcmp.eq.f32.partialorder %v7897, 0.0
        %v7910 = vand.u32 %v7897, 2147483648
        %v7911 = vsel %vm7909, %v7910, %v7908
        %v7912 = vadd.f32 %v7904, 1e-06
        %v7913 = vadd.f32 %v7911, 1e-06
        %v7914 = vrcp.pop %v7912
        %v7915 = vrcp.pop %v7913
        %v7917 = vlaneseq
        %v7918 = vshrl.u32 %v7917, 7
        %v7919 = vsub.s32 0, %v7918
        %v7920 = vrot.slane %v7875, %v7919
        %v7922 = vmul.f32 %v7920, %v7886
        %v7923 = vmul.f32 %v7920, %v7887
        %v7924 = vmul.f32 %v7922, %v7914
        %v7925 = vmul.f32 %v7923, %v7915
        %v7927 = vlaneseq
        %v7928 = vshrl.u32 %v7927, 7
        %v7929 = vsub.s32 0, %v7928
        %v7930 = vrot.slane %v7877, %v7929
        %v7932 = vadd.f32 %v7924, %v7930
        %v7933 = vadd.f32 %v7925, %v7930
        %s7934 = scalar_lea.vmem %s967, 32
        %v7935 = vld [vmem:[%s7934] sm:$0xff]
        %v7936 = vld [vmem:[%s7934 + $0x8] sm:$0xff]
        %v7937 = vld [vmem:[%s7934 + $0x10] sm:$0xff]
        %v7938 = vld [vmem:[%s7934 + $0x18] sm:$0xff]
        %s7939 = scalar_lea.vmem %s971, 1
        %v7940 = vld [vmem:[%s7939] sm:$0x1]
        %v7942 = vlaneseq
        %v7943 = vshrl.u32 %v7942, 7
        %v7944 = vsub.s32 0, %v7943
        %v7945 = vrot.slane %v7940, %v7944
        %v7948 = vsel %vm995, %v7932, 0
        %v7951 = vsel %vm995, %v7933, 0
        %7953 = vmatprep.subr.mxu0 0.0
        %7954 = vmatpush1.msra.mxu0 %v7935
        %7955 = vmatprep.subr.mxu0 0.0
        %7956 = vmatpush1.msra.mxu0 %v7936
        %7957 = vmatprep.subr.mxu0 0.0
        %7958 = vmatpush1.msra.mxu0 %v7937
        %7959 = vmatprep.subr.mxu0 0.0
        %7960 = vmatpush1.msra.mxu0 %v7938
        %7961 = vmatprep.subr.mxu0 0.0
        %7962 = vmatpush1.msra.mxu0 0.0
        %7963 = vmatprep.subr.mxu0 0.0
        %7964 = vmatpush1.msra.mxu0 0.0
        %7965 = vmatprep.subr.mxu0 0.0
        %7966 = vmatpush1.msra.mxu0 0.0
        %7967 = vmatprep.subr.mxu0 0.0
        %7968 = vmatpush1.msra.mxu0 0.0
        %7969 = vmatprep.subr.mxu0 0.0
        %7970 = vmatpush1.msra.mxu0 0.0
        %7971 = vmatprep.subr.mxu0 0.0
        %7972 = vmatpush1.msra.mxu0 0.0
        %7973 = vmatprep.subr.mxu0 0.0
        %7974 = vmatpush1.msra.mxu0 0.0
        %7975 = vmatprep.subr.mxu0 0.0
        %7976 = vmatpush1.msra.mxu0 0.0
        %7977 = vmatprep.subr.mxu0 0.0
        %7978 = vmatpush1.msra.mxu0 0.0
        %7979 = vmatprep.subr.mxu0 0.0
        %7980 = vmatpush1.msra.mxu0 0.0
        %7981 = vmatprep.subr.mxu0 0.0
        %7982 = vmatpush1.msra.mxu0 0.0
        %7983 = vmatprep.subr.mxu0 0.0
        %7984 = vmatpush1.msra.mxu0 0.0
        %7985 = vmatprep.subr.mxu0 0.0
        %7986 = vmatpush1.msra.mxu0 0.0
        %7987 = vmatprep.subr.mxu0 0.0
        %7988 = vmatpush1.msra.mxu0 0.0
        %7989 = vmatprep.subr.mxu0 0.0
        %7990 = vmatpush1.msra.mxu0 0.0
        %7991 = vmatprep.subr.mxu0 0.0
        %7992 = vmatpush1.msra.mxu0 0.0
        %7993 = vmatprep.subr.mxu0 0.0
        %7994 = vmatpush1.msra.mxu0 0.0
        %7995 = vmatprep.subr.mxu0 0.0
        %7996 = vmatpush1.msra.mxu0 0.0
        %7997 = vmatprep.subr.mxu0 0.0
        %7998 = vmatpush1.msra.mxu0 0.0
        %7999 = vmatprep.subr.mxu0 0.0
        %8000 = vmatpush1.msra.mxu0 0.0
        %8001 = vmatprep.subr.mxu0 0.0
        %8002 = vmatpush1.msra.mxu0 0.0
        %8003 = vmatprep.subr.mxu0 0.0
        %8004 = vmatpush1.msra.mxu0 0.0
        %8005 = vmatprep.subr.mxu0 0.0
        %8006 = vmatpush1.msra.mxu0 0.0
        %8007 = vmatprep.subr.mxu0 0.0
        %8008 = vmatpush1.msra.mxu0 0.0
        %8009 = vmatprep.subr.mxu0 0.0
        %8010 = vmatpush1.msra.mxu0 0.0
        %8011 = vmatprep.subr.mxu0 0.0
        %8012 = vmatpush1.msra.mxu0 0.0
        %8013 = vmatprep.subr.mxu0 0.0
        %8014 = vmatpush1.msra.mxu0 0.0
        %8015 = vmatprep.subr.mxu0 0.0
        %8016 = vmatpush1.msra.mxu0 0.0
        %8017 = vmatprep.mubr.f32.mxu0 0.0
        %8018 = vmatmul.mubr.f32.gmra.mrb[0].mxu0 %v7948
        %v8019 = vpop.f32.mrb[0].mxu0
        %v8020 = vadd.f32 %v7945, %v8019
        %v8021 = vpop.f32.mrb[0].mxu0
        %8022 = vmatprep.mubr.f32.mxu0 0.0
        %8023 = vmatmul.mubr.f32.gmra.mrb[0].mxu0 %v7951
        %v8024 = vpop.f32.mrb[0].mxu0
        %v8025 = vadd.f32 %v7945, %v8024
        %v8026 = vpop.f32.mrb[0].mxu0
        %8027 = vdwg.mxu0
        %v8028 = vmax.f32 %v8020, 0.0
        %v8029 = vmax.f32 %v8025, 0.0
        %s8030 = scalar_lea.vmem %s976, 64
        %v8031 = vld [vmem:[%s8030] sm:$0xff]
        %v8032 = vld [vmem:[%s8030 + $0x8] sm:$0xff]
        %v8033 = vld [vmem:[%s8030 + $0x10] sm:$0xff]
        %v8034 = vld [vmem:[%s8030 + $0x18] sm:$0xff]
        %v8035 = vld [vmem:[%s8030 + $0x20] sm:$0xff]
        %v8036 = vld [vmem:[%s8030 + $0x28] sm:$0xff]
        %v8037 = vld [vmem:[%s8030 + $0x30] sm:$0xff]
        %v8038 = vld [vmem:[%s8030 + $0x38] sm:$0xff]
        %s8039 = scalar_lea.vmem %s980, 1
        %v8040 = vld [vmem:[%s8039] sm:$0x1]
        %v8042 = vlaneseq
        %v8043 = vshrl.u32 %v8042, 7
        %v8044 = vsub.s32 0, %v8043
        %v8045 = vrot.slane %v8040, %v8044
        %v8048 = vsel %vm4476, %v8028, 0
        %v8051 = vsel %vm4476, %v8029, 0
        %8053 = vmatprep.subr.mxu0 0.0
        %8054 = vmatpush1.msra.mxu0 %v8031
        %8055 = vmatprep.subr.mxu0 0.0
        %8056 = vmatpush1.msra.mxu0 %v8032
        %8057 = vmatprep.subr.mxu0 0.0
        %8058 = vmatpush1.msra.mxu0 %v8033
        %8059 = vmatprep.subr.mxu0 0.0
        %8060 = vmatpush1.msra.mxu0 %v8034
        %8061 = vmatprep.subr.mxu0 0.0
        %8062 = vmatpush1.msra.mxu0 %v8035
        %8063 = vmatprep.subr.mxu0 0.0
        %8064 = vmatpush1.msra.mxu0 %v8036
        %8065 = vmatprep.subr.mxu0 0.0
        %8066 = vmatpush1.msra.mxu0 %v8037
        %8067 = vmatprep.subr.mxu0 0.0
        %8068 = vmatpush1.msra.mxu0 %v8038
        %8069 = vmatprep.subr.mxu0 0.0
        %8070 = vmatpush1.msra.mxu0 0.0
        %8071 = vmatprep.subr.mxu0 0.0
        %8072 = vmatpush1.msra.mxu0 0.0
        %8073 = vmatprep.subr.mxu0 0.0
        %8074 = vmatpush1.msra.mxu0 0.0
        %8075 = vmatprep.subr.mxu0 0.0
        %8076 = vmatpush1.msra.mxu0 0.0
        %8077 = vmatprep.subr.mxu0 0.0
        %8078 = vmatpush1.msra.mxu0 0.0
        %8079 = vmatprep.subr.mxu0 0.0
        %8080 = vmatpush1.msra.mxu0 0.0
        %8081 = vmatprep.subr.mxu0 0.0
        %8082 = vmatpush1.msra.mxu0 0.0
        %8083 = vmatprep.subr.mxu0 0.0
        %8084 = vmatpush1.msra.mxu0 0.0
        %8085 = vmatprep.subr.mxu0 0.0
        %8086 = vmatpush1.msra.mxu0 0.0
        %8087 = vmatprep.subr.mxu0 0.0
        %8088 = vmatpush1.msra.mxu0 0.0
        %8089 = vmatprep.subr.mxu0 0.0
        %8090 = vmatpush1.msra.mxu0 0.0
        %8091 = vmatprep.subr.mxu0 0.0
        %8092 = vmatpush1.msra.mxu0 0.0
        %8093 = vmatprep.subr.mxu0 0.0
        %8094 = vmatpush1.msra.mxu0 0.0
        %8095 = vmatprep.subr.mxu0 0.0
        %8096 = vmatpush1.msra.mxu0 0.0
        %8097 = vmatprep.subr.mxu0 0.0
        %8098 = vmatpush1.msra.mxu0 0.0
        %8099 = vmatprep.subr.mxu0 0.0
        %8100 = vmatpush1.msra.mxu0 0.0
        %8101 = vmatprep.subr.mxu0 0.0
        %8102 = vmatpush1.msra.mxu0 0.0
        %8103 = vmatprep.subr.mxu0 0.0
        %8104 = vmatpush1.msra.mxu0 0.0
        %8105 = vmatprep.subr.mxu0 0.0
        %8106 = vmatpush1.msra.mxu0 0.0
        %8107 = vmatprep.subr.mxu0 0.0
        %8108 = vmatpush1.msra.mxu0 0.0
        %8109 = vmatprep.subr.mxu0 0.0
        %8110 = vmatpush1.msra.mxu0 0.0
        %8111 = vmatprep.subr.mxu0 0.0
        %8112 = vmatpush1.msra.mxu0 0.0
        %8113 = vmatprep.subr.mxu0 0.0
        %8114 = vmatpush1.msra.mxu0 0.0
        %8115 = vmatprep.subr.mxu0 0.0
        %8116 = vmatpush1.msra.mxu0 0.0
        %8117 = vmatprep.mubr.f32.mxu0 0.0
        %8118 = vmatmul.mubr.f32.gmra.mrb[0].mxu0 %v8048
        %v8119 = vpop.f32.mrb[0].mxu0
        %v8120 = vadd.f32 %v8045, %v8119
        %v8121 = vpop.f32.mrb[0].mxu0
        %8122 = vmatprep.mubr.f32.mxu0 0.0
        %8123 = vmatmul.mubr.f32.gmra.mrb[0].mxu0 %v8051
        %v8124 = vpop.f32.mrb[0].mxu0
        %v8125 = vadd.f32 %v8045, %v8124
        %v8126 = vpop.f32.mrb[0].mxu0
        %8127 = vdwg.mxu0
        %v8128 = vadd.f32 %v7872, %v8120
        %v8129 = vadd.f32 %v7873, %v8125
        %s8130 = scalar_lea.vmem %s913, 6
        %v8131 = vld [vmem:[%s8130] sm:$0x1]
        %s8132 = scalar_lea.vmem %s917, 6
        %v8133 = vld [vmem:[%s8132] sm:$0x1]
        %v8134 = vsel %vm995, %v8128, 0.0
        %8135 = vadd.xlane.f32.xlu0 %v8134
        %v8136 = vpop.xlane.xlu0 %8135
        %v8137 = vsel %vm995, %v8129, 0.0
        %8138 = vadd.xlane.f32.xlu0 %v8137
        %v8139 = vpop.xlane.xlu0 %8138
        %v8140 = vmul.f32 %v8136, %v1002
        %v8141 = vmul.f32 %v8139, %v1002
        %v8142 = vsub.f32 %v8128, %v8140
        %v8143 = vsub.f32 %v8129, %v8141
        %v8144 = vmul.f32 %v8142, %v8142
        %v8145 = vmul.f32 %v8143, %v8143
        %v8146 = vsel %vm995, %v8144, 0.0
        %8147 = vadd.xlane.f32.xlu0 %v8146
        %v8148 = vpop.xlane.xlu0 %8147
        %v8149 = vsel %vm995, %v8145, 0.0
        %8150 = vadd.xlane.f32.xlu0 %v8149
        %v8151 = vpop.xlane.xlu0 %8150
        %v8152 = vmul.f32 %v8148, %v1015
        %v8153 = vmul.f32 %v8151, %v1015
        %v8154 = vrsqrt.pop %v8152
        %v8155 = vmul.f32 %v8152, %v8154
        %vm8156 = vcmp.eq.f32.partialorder %v8152, inf
        %v8157 = vsel %vm8156, %v8152, %v8155
        %vm8158 = vcmp.eq.f32.partialorder %v8152, 0.0
        %v8159 = vand.u32 %v8152, 2147483648
        %v8160 = vsel %vm8158, %v8159, %v8157
        %v8161 = vrsqrt.pop %v8153
        %v8162 = vmul.f32 %v8153, %v8161
        %vm8163 = vcmp.eq.f32.partialorder %v8153, inf
        %v8164 = vsel %vm8163, %v8153, %v8162
        %vm8165 = vcmp.eq.f32.partialorder %v8153, 0.0
        %v8166 = vand.u32 %v8153, 2147483648
        %v8167 = vsel %vm8165, %v8166, %v8164
        %v8168 = vadd.f32 %v8160, 1e-06
        %v8169 = vadd.f32 %v8167, 1e-06
        %v8170 = vrcp.pop %v8168
        %v8171 = vrcp.pop %v8169
        %v8173 = vlaneseq
        %v8174 = vshrl.u32 %v8173, 7
        %v8175 = vsub.s32 0, %v8174
        %v8176 = vrot.slane %v8131, %v8175
        %v8178 = vmul.f32 %v8176, %v8142
        %v8179 = vmul.f32 %v8176, %v8143
        %v8180 = vmul.f32 %v8178, %v8170
        %v8181 = vmul.f32 %v8179, %v8171
        %v8183 = vlaneseq
        %v8184 = vshrl.u32 %v8183, 7
        %v8185 = vsub.s32 0, %v8184
        %v8186 = vrot.slane %v8133, %v8185
        %v8188 = vadd.f32 %v8180, %v8186
        %v8189 = vadd.f32 %v8181, %v8186
        %8190 = vst.msk [vmem:[%s889] sm:$0xff] %vm995, %v8188
        %8191 = vst.msk [vmem:[%s889 + $0x8] sm:$0xff] %vm995, %v8189
        %s8192 = sand.u32 %s562, 1
        %s8193 = scalar_lea.sflag [#allocation3], %s8192
        %s8194 = sand.u32 %s562, 1
        %s8195 = smul.addr %s8194, 16
        %s8196 = scalar_lea.vmem [#allocation2], %s8195
        // Predicated region
        $region101: #{music_decoder_forward.1} parent=99 // pred_check
          %p8197 = pneg %p572
        $region102: #{music_decoder_forward.1} parent=99 // pred_check_branch
          %8199 = sbr.rel (%p8197) target = $region104
        $region103: #{music_decoder_forward.1} parent=99 // pred_region
          %s8201 = ssub.s32 256, 256
          %8202 = vsyncadd %s8193, %s8201
          %s8203 = smul.addr %s34, 2
          %s8204 = smul.addr %s8203, 128
          %s8205 = scalar_lea.hbm %s20, %s8204
          %s8206 = sshll.u32 %s8196, 4
          %s8207 = int_to_ptr.vmem [resolvable:$true] %s8206
          %8212 = dma.vmem_to_hbm [thread:$0]  %s8207, 256, %s8205, %s8193, 128, 128, 8
        $region104: #{music_decoder_forward.1} parent=99 // pred_fallthru
          _
      $region100: #{music_decoder_forward.1} parent=5 // pred_fallthru
        _
      %p8213 = scmp.le.s32.totalorder 2, %s29
      // Predicated region
      $region105: #{music_decoder_forward.1} parent=5 // pred_check
        %p8214 = pneg %p8213
      $region106: #{music_decoder_forward.1} parent=5 // pred_check_branch
        %8216 = sbr.rel (%p8214) target = $region108
      $region107: #{music_decoder_forward.1} parent=5 // pred_region
        %s8217 = ssub.s32 %s29, 2
        // Predicated region
        $region109: #{music_decoder_forward.1} parent=107 // pred_check
          %p8218 = pneg %p578
        $region110: #{music_decoder_forward.1} parent=107 // pred_check_branch
          %8220 = sbr.rel (%p8218) target = $region112
        $region111: #{music_decoder_forward.1} parent=107 // pred_region
          %s8221 = sand.u32 %s563, 1
          %s8222 = scalar_lea.sflag [#allocation3], %s8221
          %s8223 = sand.u32 %s563, 1
          %s8224 = smul.addr %s8223, 16
          %s8225 = scalar_lea.vmem [#allocation2], %s8224
          %8226 = dma.done %s8222, 256
        $region112: #{music_decoder_forward.1} parent=107 // pred_fallthru
          _
      $region108: #{music_decoder_forward.1} parent=5 // pred_fallthru
        _
    $region6: #{music_decoder_forward.1} parent=1 // loop_footer
      %s33 = sadd.s32 1, %s29
    $region7: #{music_decoder_forward.1} parent=1 // loop_footer_branch
      %28 = sbr.rel target = $region3
    $region8: #{music_decoder_forward.1} parent=1 // loop_exit
      _
    %8227 = vsyncpa [#allocation3], 1
    %s8228 = scalar_lea.sflag [#allocation3], 1
    %8229 = vsyncpa %s8228, 1

</llo_original>
